<compile_context>
chip_gen: v7x
topology: tpu7x:2x2x1
jax: 0.10.0
libtpu: 0.0.40
codegen_flags: <defaults>
</compile_context>

<pallas_src>
import functools
import math

import jax
import jax.numpy as jnp
from jax import lax
from jax.experimental import pallas as pl
from jax.experimental.pallas import tpu as pltpu  # noqa: F401  (TPU backend)

# ----------------------------- hyper-parameters ------------------------------
B = 2           # batch
C_IN = 3        # point dimensionality
N_PTS = 16      # points per cloud (small test size)
K = 8           # neighbours (reference default k=20 needs K <= N, so 8 here)
C1, C2, C3, C4 = 64, 64, 128, 256
EMB = 128       # embedding dim (reference default 1024; kept small, lane-dense)
NEG_SLOPE = 0.2
BN_EPS = 1e-5   # nn.BatchNorm2d default

_HI = jax.lax.Precision.HIGHEST


# ------------------------------- fused kernel --------------------------------
def _dgcnn_kernel(xt_ref, w1n_ref, w1c_ref, b1_ref,
                  w2_ref, b2_ref, w3_ref, b3_ref, w4_ref, b4_ref,
                  w5_ref, b5_ref, o_ref, *, k, slope):
    f32, bf16 = jnp.float32, jnp.bfloat16
    nb, n, c = xt_ref.shape                           # (B, N, C) whole block

    def lrelu(v):                                     # LeakyReLU, f32
        return jnp.maximum(v, slope * v)

    def bdot(a, b):                                   # bf16 MXU pass, f32 acc
        return jnp.dot(a.astype(bf16), b.astype(bf16),
                       preferred_element_type=f32)

    w1n = w1n_ref[...]
    w1c = w1c_ref[...]
    b1 = b1_ref[...]
    w2 = w2_ref[...]; b2 = b2_ref[...]
    w3 = w3_ref[...]; b3 = b3_ref[...]
    w4 = w4_ref[...]; b4 = b4_ref[...]
    w5 = w5_ref[...]; b5 = b5_ref[...]

    colf = lax.broadcasted_iota(jnp.int32, (n, n), 1).astype(f32)
    ones_row = jnp.ones((1, c), f32)

    # ---- Phase 1 (per batch, B is tiny & static): kNN selection + ONE stacked
    #      gather matmul producing conv1 activations for all k*N edges. --------
    h1_blocks = []
    for b in range(nb):
        x_b = xt_ref[b]                                               # (N, C)

        # conv1 (BN folded) in split-weight form (the explicit concat of
        # [x_j - x_i, x_i] never exists):
        #   [x_j - x_i, x_i] @ W1 = x_j @ W1n + x_i @ (W1c - W1n)
        # Contraction width is only C=3, so true-f32 precision here is free.
        proj_nb = jnp.dot(x_b, w1n, preferred_element_type=f32,
                          precision=_HI)                              # (N, C1)
        proj_ct = jnp.dot(x_b, w1c, preferred_element_type=f32,
                          precision=_HI)                              # (N, C1)
        base1 = proj_ct - proj_nb + b1                                # (N, C1)

        # pairwise (negative squared) distances, true-f32 so the top-k
        # ordering matches the f32 reference.
        gram = lax.dot_general(x_b, x_b, (((1,), (1,)), ((), ())),
                               preferred_element_type=f32, precision=_HI)
        xsq = x_b * x_b
        sq_col = jnp.sum(xsq, axis=-1, keepdims=True)                 # (N, 1)
        sq_row = lax.dot_general(ones_row, xsq, (((1,), (1,)), ((), ())),
                                 preferred_element_type=f32,
                                 precision=_HI)                       # (1, N)
        pd = 2.0 * gram - sq_col - sq_row                             # (N, N)

        # k rounds of (first-)argmax with masking -> stacked one-hot rows.
        # Only small (N, N) elementwise/reduce work; k is small so a static
        # unroll keeps the live set tiny and gives the scheduler visibility.
        work = pd
        sel_rows = []
        for _ in range(k):
            mx = jnp.max(work, axis=-1, keepdims=True)                # (N, 1)
            first = jnp.min(jnp.where(work == mx, colf, float(n)),
                            axis=-1, keepdims=True)                   # first argmax
            sel = colf == first                                       # (N, N)
            sel_rows.append(sel.astype(f32))
            work = jnp.where(sel, -jnp.inf, work)
        sel_mat = jnp.concatenate(sel_rows, axis=0)                   # (k*N, N)

        # ONE gather matmul for all k neighbours of every point of this batch.
        gath = bdot(sel_mat, proj_nb)                                 # (k*N, C1)
        base1_t = jnp.concatenate([base1] * k, axis=0)                # (k*N, C1)
        h1_blocks.append(lrelu(gath + base1_t))

    # ---- Phase 2: batch folded into rows -> conv2..conv4 run ONCE on
    #      B*k*N (=256) stacked rows: full-height bf16 MXU passes. ------------
    h1 = jnp.concatenate(h1_blocks, axis=0)                           # (B*k*N, C1)
    h2 = lrelu(bdot(h1, w2) + b2)                                     # (B*k*N, C2)
    h3 = lrelu(bdot(h2, w3) + b3)                                     # (B*k*N, C3)
    h4 = lrelu(bdot(h3, w4) + b4)                                     # (B*k*N, C4)

    # ---- Phase 3: neighbour max-pool (static, tile-aligned row slices),
    #      lane-dense concat of the pooled features, one K=512 conv5 matmul. --
    kn = k * n
    pooled = []
    for h in (h1, h2, h3, h4):
        per_batch = []
        for b in range(nb):
            base = b * kn
            acc = h[base:base + n]
            for s in range(1, k):
                acc = jnp.maximum(acc, h[base + s * n:base + (s + 1) * n])
            per_batch.append(acc)
        pooled.append(jnp.concatenate(per_batch, axis=0))             # (B*N, C_l)
    cat = jnp.concatenate(pooled, axis=-1)                            # (B*N, 512)
    out = lrelu(bdot(cat, w5) + b5)                                   # (B*N, EMB)

    for b in range(nb):
        o_ref[b] = out[b * n:(b + 1) * n]                             # (N, EMB)


# ------------------------------- host wrapper --------------------------------
def _fold_bn(w, bn):
    """Fold eval-mode BatchNorm (running stats) into the 1x1-conv weight/bias."""
    s = bn["gamma"] / jnp.sqrt(bn["var"] + BN_EPS)
    return w * s[None, :], (bn["beta"] - bn["mean"] * s)[None, :]


@jax.jit
def dgcnn_forward(x, params):
    """x: (B, C_IN, N) -> (B, EMB, N), matching torch.squeeze(conv5(...))."""
    b, c, n = x.shape
    xt = jnp.transpose(x, (0, 2, 1))                  # (B, N, C): channels on lanes

    w1, b1 = _fold_bn(params["w1"], params["bn1"])    # (2C, C1), (1, C1)
    w2, b2 = _fold_bn(params["w2"], params["bn2"])
    w3, b3 = _fold_bn(params["w3"], params["bn3"])
    w4, b4 = _fold_bn(params["w4"], params["bn4"])
    w5, b5 = _fold_bn(params["w5"], params["bn5"])
    w1n, w1c = w1[:c], w1[c:]                         # neighbour / centre halves
    # conv2..conv5 weights feed single-pass bf16 MXU matmuls (f32 accumulate);
    # conv1 / distances stay f32 so the kNN selection matches the reference.
    w2 = w2.astype(jnp.bfloat16)
    w3 = w3.astype(jnp.bfloat16)
    w4 = w4.astype(jnp.bfloat16)
    w5 = w5.astype(jnp.bfloat16)

    def whole(a):                                     # whole-array VMEM operand
        nd = a.ndim
        return pl.BlockSpec(a.shape, lambda i, _nd=nd: (0,) * _nd)

    args = (xt, w1n, w1c, b1, w2, b2, w3, b3, w4, b4, w5, b5)
    out = pl.pallas_call(
        functools.partial(_dgcnn_kernel, k=K, slope=NEG_SLOPE),
        out_shape=jax.ShapeDtypeStruct((b, n, EMB), jnp.float32),
        grid=(1,),                                    # single step: whole problem
        in_specs=[whole(a) for a in args],
        out_specs=pl.BlockSpec((b, n, EMB), lambda i: (0, 0, 0)),
    )(*args)

    return jnp.transpose(out, (0, 2, 1))              # (B, EMB, N)


# ------------------------- pure-JAX reference (check) ------------------------
def dgcnn_reference(x, params):
    """PyTorch-structured, full-f32 (HIGHEST precision) gold reference."""
    xt = jnp.transpose(x, (0, 2, 1))                                # (B, N, C)
    inner = -2.0 * jnp.einsum('bcn,bcm->bnm', x, x, precision=_HI)
    xx = jnp.sum(x * x, axis=1, keepdims=True)                      # (B, 1, N)
    pd = -xx - inner - jnp.transpose(xx, (0, 2, 1))                 # (B, N, N)
    idx = lax.top_k(pd, K)[1]                                       # (B, N, K)
    nbrs = jax.vmap(lambda pts, ind: pts[ind])(xt, idx)             # (B, N, K, C)
    ctr = jnp.broadcast_to(xt[:, :, None, :], nbrs.shape)
    e = jnp.concatenate([nbrs - ctr, ctr], axis=-1)                 # (B, N, K, 2C)

    def block(h, w, bn):
        y = jnp.einsum('...c,cd->...d', h, w, precision=_HI)
        y = (y - bn["mean"]) / jnp.sqrt(bn["var"] + BN_EPS) * bn["gamma"] + bn["beta"]
        return jnp.where(y > 0, y, NEG_SLOPE * y)

    h1 = block(e, params["w1"], params["bn1"]);  x1 = jnp.max(h1, axis=2)
    h2 = block(h1, params["w2"], params["bn2"]); x2 = jnp.max(h2, axis=2)
    h3 = block(h2, params["w3"], params["bn3"]); x3 = jnp.max(h3, axis=2)
    h4 = block(h3, params["w4"], params["bn4"]); x4 = jnp.max(h4, axis=2)
    cat = jnp.concatenate([x1, x2, x3, x4], axis=-1)                # (B, N, 512)
    out = block(cat, params["w5"], params["bn5"])                   # (B, N, EMB)
    return jnp.transpose(out, (0, 2, 1))                            # (B, EMB, N)


# --------------------------------- parameters --------------------------------
def init_params(key):
    def conv(k, cin, cout):
        return jax.random.normal(k, (cin, cout), jnp.float32) / math.sqrt(cin)

    def bn(k, c):
        k1, k2, k3, k4 = jax.random.split(k, 4)
        return dict(gamma=1.0 + 0.1 * jax.random.normal(k1, (c,), jnp.float32),
                    beta=0.1 * jax.random.normal(k2, (c,), jnp.float32),
                    mean=0.1 * jax.random.normal(k3, (c,), jnp.float32),
                    var=0.5 + jax.random.uniform(k4, (c,), jnp.float32))

    ks = jax.random.split(key, 10)
    return dict(
        w1=conv(ks[0], 2 * C_IN, C1), bn1=bn(ks[1], C1),
        w2=conv(ks[2], C1, C2),       bn2=bn(ks[3], C2),
        w3=conv(ks[4], C2, C3),       bn3=bn(ks[5], C3),
        w4=conv(ks[6], C3, C4),       bn4=bn(ks[7], C4),
        w5=conv(ks[8], C1 + C2 + C3 + C4, EMB), bn5=bn(ks[9], EMB),
    )


# ------------------------------------ main ------------------------------------
if __name__ == "__main__":
    key = jax.random.PRNGKey(0)
    kx, kp = jax.random.split(key)
    x = jax.random.normal(kx, (B, C_IN, N_PTS), jnp.float32)
    params = init_params(kp)

    out = jax.block_until_ready(dgcnn_forward(x, params))
    assert out.shape == (B, EMB, N_PTS), out.shape
    assert bool(jnp.all(jnp.isfinite(out)))

    ref = dgcnn_reference(x, params)
    # conv2..conv5 deliberately run with bf16 MXU operands (f32 accumulation)
    # per the performance review, so compare against the full-f32 gold
    # reference with a relative tolerance; the kNN selection itself is kept in
    # true f32 so the neighbour sets are identical.
    err = float(jnp.max(jnp.abs(out - ref)))
    scale = float(jnp.max(jnp.abs(ref)))
    assert err <= 5e-2 * max(scale, 1.0), f"mismatch vs reference: {err} (scale {scale})"

    print("KERNEL_OK")
</pallas_src>

<mosaic_0001>
module attributes {stable_mosaic.version = 11 : i64} {
  func.func @_dgcnn_kernel(%arg0: i32, %arg1: memref<2x16x3xf32, #tpu.memory_space<vmem>>, %arg2: memref<3x64xf32, #tpu.memory_space<vmem>>, %arg3: memref<3x64xf32, #tpu.memory_space<vmem>>, %arg4: memref<1x64xf32, #tpu.memory_space<vmem>>, %arg5: memref<64x64xbf16, #tpu.memory_space<vmem>>, %arg6: memref<1x64xf32, #tpu.memory_space<vmem>>, %arg7: memref<64x128xbf16, #tpu.memory_space<vmem>>, %arg8: memref<1x128xf32, #tpu.memory_space<vmem>>, %arg9: memref<128x256xbf16, #tpu.memory_space<vmem>>, %arg10: memref<1x256xf32, #tpu.memory_space<vmem>>, %arg11: memref<512x128xbf16, #tpu.memory_space<vmem>>, %arg12: memref<1x128xf32, #tpu.memory_space<vmem>>, %arg13: memref<2x16x128xf32, #tpu.memory_space<vmem>>) attributes {dimension_semantics = [#tpu.dimension_semantics<arbitrary>], iteration_bounds = array<i64: 1>, scalar_prefetch = 0 : i64, scratch_operands = 0 : i64, tpu.core_type = #tpu.core_type<tc>, window_params = [{pipeline_mode = #tpu.pipeline_mode<synchronous>, transform_indices = @transform_0, window_bounds = array<i64: 2, 16, 3>}, {pipeline_mode = #tpu.pipeline_mode<synchronous>, transform_indices = @transform_1, window_bounds = array<i64: 3, 64>}, {pipeline_mode = #tpu.pipeline_mode<synchronous>, transform_indices = @transform_2, window_bounds = array<i64: 3, 64>}, {pipeline_mode = #tpu.pipeline_mode<synchronous>, transform_indices = @transform_3, window_bounds = array<i64: 1, 64>}, {pipeline_mode = #tpu.pipeline_mode<synchronous>, transform_indices = @transform_4, window_bounds = array<i64: 64, 64>}, {pipeline_mode = #tpu.pipeline_mode<synchronous>, transform_indices = @transform_5, window_bounds = array<i64: 1, 64>}, {pipeline_mode = #tpu.pipeline_mode<synchronous>, transform_indices = @transform_6, window_bounds = array<i64: 64, 128>}, {pipeline_mode = #tpu.pipeline_mode<synchronous>, transform_indices = @transform_7, window_bounds = array<i64: 1, 128>}, {pipeline_mode = #tpu.pipeline_mode<synchronous>, transform_indices = @transform_8, window_bounds = array<i64: 128, 256>}, {pipeline_mode = #tpu.pipeline_mode<synchronous>, transform_indices = @transform_9, window_bounds = array<i64: 1, 256>}, {pipeline_mode = #tpu.pipeline_mode<synchronous>, transform_indices = @transform_10, window_bounds = array<i64: 512, 128>}, {pipeline_mode = #tpu.pipeline_mode<synchronous>, transform_indices = @transform_11, window_bounds = array<i64: 1, 128>}, {pipeline_mode = #tpu.pipeline_mode<synchronous>, transform_indices = @transform_12, window_bounds = array<i64: 2, 16, 128>}]} {
    %c0 = arith.constant 0 : index
    %c0_0 = arith.constant 0 : index
    %0 = vector.load %arg2[%c0, %c0_0] : memref<3x64xf32, #tpu.memory_space<vmem>>, vector<3x64xf32>
    %c0_1 = arith.constant 0 : index
    %c0_2 = arith.constant 0 : index
    %1 = vector.load %arg3[%c0_1, %c0_2] : memref<3x64xf32, #tpu.memory_space<vmem>>, vector<3x64xf32>
    %c0_3 = arith.constant 0 : index
    %c0_4 = arith.constant 0 : index
    %2 = vector.load %arg4[%c0_3, %c0_4] : memref<1x64xf32, #tpu.memory_space<vmem>>, vector<1x64xf32>
    %c0_5 = arith.constant 0 : index
    %c0_6 = arith.constant 0 : index
    %3 = vector.load %arg5[%c0_5, %c0_6] : memref<64x64xbf16, #tpu.memory_space<vmem>>, vector<64x64xbf16>
    %c0_7 = arith.constant 0 : index
    %c0_8 = arith.constant 0 : index
    %4 = vector.load %arg6[%c0_7, %c0_8] : memref<1x64xf32, #tpu.memory_space<vmem>>, vector<1x64xf32>
    %c0_9 = arith.constant 0 : index
    %c0_10 = arith.constant 0 : index
    %5 = vector.load %arg7[%c0_9, %c0_10] : memref<64x128xbf16, #tpu.memory_space<vmem>>, vector<64x128xbf16>
    %c0_11 = arith.constant 0 : index
    %c0_12 = arith.constant 0 : index
    %6 = vector.load %arg8[%c0_11, %c0_12] : memref<1x128xf32, #tpu.memory_space<vmem>>, vector<1x128xf32>
    %c0_13 = arith.constant 0 : index
    %c0_14 = arith.constant 0 : index
    %7 = vector.load %arg9[%c0_13, %c0_14] : memref<128x256xbf16, #tpu.memory_space<vmem>>, vector<128x256xbf16>
    %c0_15 = arith.constant 0 : index
    %c0_16 = arith.constant 0 : index
    %8 = vector.load %arg10[%c0_15, %c0_16] : memref<1x256xf32, #tpu.memory_space<vmem>>, vector<1x256xf32>
    %c0_17 = arith.constant 0 : index
    %c0_18 = arith.constant 0 : index
    %9 = vector.load %arg11[%c0_17, %c0_18] : memref<512x128xbf16, #tpu.memory_space<vmem>>, vector<512x128xbf16>
    %c0_19 = arith.constant 0 : index
    %c0_20 = arith.constant 0 : index
    %10 = vector.load %arg12[%c0_19, %c0_20] : memref<1x128xf32, #tpu.memory_space<vmem>>, vector<1x128xf32>
    %11 = tpu.iota {dimensions = array<i32: 1>} : vector<16x16xi32>
    %12 = arith.sitofp %11 : vector<16x16xi32> to vector<16x16xf32>
    %cst = arith.constant 1.000000e+00 : f32
    %13 = vector.broadcast %cst : f32 to vector<1x3xf32>
    %c0_21 = arith.constant 0 : index
    %c0_22 = arith.constant 0 : index
    %c0_23 = arith.constant 0 : index
    %14 = vector.load %arg1[%c0_21, %c0_22, %c0_23] : memref<2x16x3xf32, #tpu.memory_space<vmem>>, vector<1x16x3xf32>
    %15 = vector.shape_cast %14 : vector<1x16x3xf32> to vector<16x3xf32>
    %cst_24 = arith.constant dense<0.000000e+00> : vector<16x64xf32>
    %16 = tpu.matmul %15, %0, %cst_24 {dimension_numbers = #tpu.dot_dimension_numbers<[1], [0], [0], [1], [0, 0, 1, 1], [], []>, precision = #tpu.contract_precision<fp32>} : vector<16x3xf32>, vector<3x64xf32>, vector<16x64xf32> -> vector<16x64xf32>
    %cst_25 = arith.constant dense<0.000000e+00> : vector<16x64xf32>
    %17 = tpu.matmul %15, %1, %cst_25 {dimension_numbers = #tpu.dot_dimension_numbers<[1], [0], [0], [1], [0, 0, 1, 1], [], []>, precision = #tpu.contract_precision<fp32>} : vector<16x3xf32>, vector<3x64xf32>, vector<16x64xf32> -> vector<16x64xf32>
    %18 = arith.subf %17, %16 : vector<16x64xf32>
    %19 = vector.broadcast %2 : vector<1x64xf32> to vector<16x64xf32>
    %20 = arith.addf %18, %19 : vector<16x64xf32>
    %cst_26 = arith.constant dense<0.000000e+00> : vector<16x16xf32>
    %21 = tpu.matmul %15, %15, %cst_26 {dimension_numbers = #tpu.dot_dimension_numbers<[1], [1], [0], [0], [0, 0, 1, 0], [], []>, precision = #tpu.contract_precision<fp32>} : vector<16x3xf32>, vector<16x3xf32>, vector<16x16xf32> -> vector<16x16xf32>
    %22 = arith.mulf %15, %15 : vector<16x3xf32>
    %cst_27 = arith.constant dense<0.000000e+00> : vector<16xf32>
    %23 = vector.multi_reduction <add>, %22, %cst_27 [1] : vector<16x3xf32> to vector<16xf32>
    %24 = vector.shape_cast %23 : vector<16xf32> to vector<16x1xf32>
    %cst_28 = arith.constant dense<0.000000e+00> : vector<1x16xf32>
    %25 = tpu.matmul %13, %22, %cst_28 {dimension_numbers = #tpu.dot_dimension_numbers<[1], [1], [0], [0], [0, 0, 1, 0], [], []>, precision = #tpu.contract_precision<fp32>} : vector<1x3xf32>, vector<16x3xf32>, vector<1x16xf32> -> vector<1x16xf32>
    %cst_29 = arith.constant 2.000000e+00 : f32
    %26 = vector.broadcast %cst_29 : f32 to vector<16x16xf32>
    %27 = arith.mulf %26, %21 : vector<16x16xf32>
    %28 = vector.broadcast %24 : vector<16x1xf32> to vector<16x16xf32>
    %29 = arith.subf %27, %28 : vector<16x16xf32>
    %30 = vector.broadcast %25 : vector<1x16xf32> to vector<16x16xf32>
    %31 = arith.subf %29, %30 : vector<16x16xf32>
    %cst_30 = arith.constant dense<0xFF800000> : vector<16xf32>
    %32 = vector.multi_reduction <maximumf>, %31, %cst_30 [1] : vector<16x16xf32> to vector<16xf32>
    %33 = vector.shape_cast %32 : vector<16xf32> to vector<16x1xf32>
    %34 = vector.broadcast %33 : vector<16x1xf32> to vector<16x16xf32>
    %35 = arith.cmpf oeq, %31, %34 : vector<16x16xf32>
    %cst_31 = arith.constant 1.600000e+01 : f32
    %36 = vector.broadcast %cst_31 : f32 to vector<16x16xf32>
    %37 = arith.select %35, %12, %36 : vector<16x16xi1>, vector<16x16xf32>
    %cst_32 = arith.constant dense<0x7F800000> : vector<16xf32>
    %38 = vector.multi_reduction <minimumf>, %37, %cst_32 [1] : vector<16x16xf32> to vector<16xf32>
    %39 = vector.shape_cast %38 : vector<16xf32> to vector<16x1xf32>
    %40 = vector.broadcast %39 : vector<16x1xf32> to vector<16x16xf32>
    %41 = arith.cmpf oeq, %12, %40 : vector<16x16xf32>
    %42 = arith.extui %41 : vector<16x16xi1> to vector<16x16xi32>
    %43 = arith.sitofp %42 : vector<16x16xi32> to vector<16x16xf32>
    %cst_33 = arith.constant 0xFF800000 : f32
    %44 = vector.broadcast %cst_33 : f32 to vector<16x16xf32>
    %45 = arith.select %41, %44, %31 : vector<16x16xi1>, vector<16x16xf32>
    %cst_34 = arith.constant dense<0xFF800000> : vector<16xf32>
    %46 = vector.multi_reduction <maximumf>, %45, %cst_34 [1] : vector<16x16xf32> to vector<16xf32>
    %47 = vector.shape_cast %46 : vector<16xf32> to vector<16x1xf32>
    %48 = vector.broadcast %47 : vector<16x1xf32> to vector<16x16xf32>
    %49 = arith.cmpf oeq, %45, %48 : vector<16x16xf32>
    %cst_35 = arith.constant 1.600000e+01 : f32
    %50 = vector.broadcast %cst_35 : f32 to vector<16x16xf32>
    %51 = arith.select %49, %12, %50 : vector<16x16xi1>, vector<16x16xf32>
    %cst_36 = arith.constant dense<0x7F800000> : vector<16xf32>
    %52 = vector.multi_reduction <minimumf>, %51, %cst_36 [1] : vector<16x16xf32> to vector<16xf32>
    %53 = vector.shape_cast %52 : vector<16xf32> to vector<16x1xf32>
    %54 = vector.broadcast %53 : vector<16x1xf32> to vector<16x16xf32>
    %55 = arith.cmpf oeq, %12, %54 : vector<16x16xf32>
    %56 = arith.extui %55 : vector<16x16xi1> to vector<16x16xi32>
    %57 = arith.sitofp %56 : vector<16x16xi32> to vector<16x16xf32>
    %cst_37 = arith.constant 0xFF800000 : f32
    %58 = vector.broadcast %cst_37 : f32 to vector<16x16xf32>
    %59 = arith.select %55, %58, %45 : vector<16x16xi1>, vector<16x16xf32>
    %cst_38 = arith.constant dense<0xFF800000> : vector<16xf32>
    %60 = vector.multi_reduction <maximumf>, %59, %cst_38 [1] : vector<16x16xf32> to vector<16xf32>
    %61 = vector.shape_cast %60 : vector<16xf32> to vector<16x1xf32>
    %62 = vector.broadcast %61 : vector<16x1xf32> to vector<16x16xf32>
    %63 = arith.cmpf oeq, %59, %62 : vector<16x16xf32>
    %cst_39 = arith.constant 1.600000e+01 : f32
    %64 = vector.broadcast %cst_39 : f32 to vector<16x16xf32>
    %65 = arith.select %63, %12, %64 : vector<16x16xi1>, vector<16x16xf32>
    %cst_40 = arith.constant dense<0x7F800000> : vector<16xf32>
    %66 = vector.multi_reduction <minimumf>, %65, %cst_40 [1] : vector<16x16xf32> to vector<16xf32>
    %67 = vector.shape_cast %66 : vector<16xf32> to vector<16x1xf32>
    %68 = vector.broadcast %67 : vector<16x1xf32> to vector<16x16xf32>
    %69 = arith.cmpf oeq, %12, %68 : vector<16x16xf32>
    %70 = arith.extui %69 : vector<16x16xi1> to vector<16x16xi32>
    %71 = arith.sitofp %70 : vector<16x16xi32> to vector<16x16xf32>
    %cst_41 = arith.constant 0xFF800000 : f32
    %72 = vector.broadcast %cst_41 : f32 to vector<16x16xf32>
    %73 = arith.select %69, %72, %59 : vector<16x16xi1>, vector<16x16xf32>
    %cst_42 = arith.constant dense<0xFF800000> : vector<16xf32>
    %74 = vector.multi_reduction <maximumf>, %73, %cst_42 [1] : vector<16x16xf32> to vector<16xf32>
    %75 = vector.shape_cast %74 : vector<16xf32> to vector<16x1xf32>
    %76 = vector.broadcast %75 : vector<16x1xf32> to vector<16x16xf32>
    %77 = arith.cmpf oeq, %73, %76 : vector<16x16xf32>
    %cst_43 = arith.constant 1.600000e+01 : f32
    %78 = vector.broadcast %cst_43 : f32 to vector<16x16xf32>
    %79 = arith.select %77, %12, %78 : vector<16x16xi1>, vector<16x16xf32>
    %cst_44 = arith.constant dense<0x7F800000> : vector<16xf32>
    %80 = vector.multi_reduction <minimumf>, %79, %cst_44 [1] : vector<16x16xf32> to vector<16xf32>
    %81 = vector.shape_cast %80 : vector<16xf32> to vector<16x1xf32>
    %82 = vector.broadcast %81 : vector<16x1xf32> to vector<16x16xf32>
    %83 = arith.cmpf oeq, %12, %82 : vector<16x16xf32>
    %84 = arith.extui %83 : vector<16x16xi1> to vector<16x16xi32>
    %85 = arith.sitofp %84 : vector<16x16xi32> to vector<16x16xf32>
    %cst_45 = arith.constant 0xFF800000 : f32
    %86 = vector.broadcast %cst_45 : f32 to vector<16x16xf32>
    %87 = arith.select %83, %86, %73 : vector<16x16xi1>, vector<16x16xf32>
    %cst_46 = arith.constant dense<0xFF800000> : vector<16xf32>
    %88 = vector.multi_reduction <maximumf>, %87, %cst_46 [1] : vector<16x16xf32> to vector<16xf32>
    %89 = vector.shape_cast %88 : vector<16xf32> to vector<16x1xf32>
    %90 = vector.broadcast %89 : vector<16x1xf32> to vector<16x16xf32>
    %91 = arith.cmpf oeq, %87, %90 : vector<16x16xf32>
    %cst_47 = arith.constant 1.600000e+01 : f32
    %92 = vector.broadcast %cst_47 : f32 to vector<16x16xf32>
    %93 = arith.select %91, %12, %92 : vector<16x16xi1>, vector<16x16xf32>
    %cst_48 = arith.constant dense<0x7F800000> : vector<16xf32>
    %94 = vector.multi_reduction <minimumf>, %93, %cst_48 [1] : vector<16x16xf32> to vector<16xf32>
    %95 = vector.shape_cast %94 : vector<16xf32> to vector<16x1xf32>
    %96 = vector.broadcast %95 : vector<16x1xf32> to vector<16x16xf32>
    %97 = arith.cmpf oeq, %12, %96 : vector<16x16xf32>
    %98 = arith.extui %97 : vector<16x16xi1> to vector<16x16xi32>
    %99 = arith.sitofp %98 : vector<16x16xi32> to vector<16x16xf32>
    %cst_49 = arith.constant 0xFF800000 : f32
    %100 = vector.broadcast %cst_49 : f32 to vector<16x16xf32>
    %101 = arith.select %97, %100, %87 : vector<16x16xi1>, vector<16x16xf32>
    %cst_50 = arith.constant dense<0xFF800000> : vector<16xf32>
    %102 = vector.multi_reduction <maximumf>, %101, %cst_50 [1] : vector<16x16xf32> to vector<16xf32>
    %103 = vector.shape_cast %102 : vector<16xf32> to vector<16x1xf32>
    %104 = vector.broadcast %103 : vector<16x1xf32> to vector<16x16xf32>
    %105 = arith.cmpf oeq, %101, %104 : vector<16x16xf32>
    %cst_51 = arith.constant 1.600000e+01 : f32
    %106 = vector.broadcast %cst_51 : f32 to vector<16x16xf32>
    %107 = arith.select %105, %12, %106 : vector<16x16xi1>, vector<16x16xf32>
    %cst_52 = arith.constant dense<0x7F800000> : vector<16xf32>
    %108 = vector.multi_reduction <minimumf>, %107, %cst_52 [1] : vector<16x16xf32> to vector<16xf32>
    %109 = vector.shape_cast %108 : vector<16xf32> to vector<16x1xf32>
    %110 = vector.broadcast %109 : vector<16x1xf32> to vector<16x16xf32>
    %111 = arith.cmpf oeq, %12, %110 : vector<16x16xf32>
    %112 = arith.extui %111 : vector<16x16xi1> to vector<16x16xi32>
    %113 = arith.sitofp %112 : vector<16x16xi32> to vector<16x16xf32>
    %cst_53 = arith.constant 0xFF800000 : f32
    %114 = vector.broadcast %cst_53 : f32 to vector<16x16xf32>
    %115 = arith.select %111, %114, %101 : vector<16x16xi1>, vector<16x16xf32>
    %cst_54 = arith.constant dense<0xFF800000> : vector<16xf32>
    %116 = vector.multi_reduction <maximumf>, %115, %cst_54 [1] : vector<16x16xf32> to vector<16xf32>
    %117 = vector.shape_cast %116 : vector<16xf32> to vector<16x1xf32>
    %118 = vector.broadcast %117 : vector<16x1xf32> to vector<16x16xf32>
    %119 = arith.cmpf oeq, %115, %118 : vector<16x16xf32>
    %cst_55 = arith.constant 1.600000e+01 : f32
    %120 = vector.broadcast %cst_55 : f32 to vector<16x16xf32>
    %121 = arith.select %119, %12, %120 : vector<16x16xi1>, vector<16x16xf32>
    %cst_56 = arith.constant dense<0x7F800000> : vector<16xf32>
    %122 = vector.multi_reduction <minimumf>, %121, %cst_56 [1] : vector<16x16xf32> to vector<16xf32>
    %123 = vector.shape_cast %122 : vector<16xf32> to vector<16x1xf32>
    %124 = vector.broadcast %123 : vector<16x1xf32> to vector<16x16xf32>
    %125 = arith.cmpf oeq, %12, %124 : vector<16x16xf32>
    %126 = arith.extui %125 : vector<16x16xi1> to vector<16x16xi32>
    %127 = arith.sitofp %126 : vector<16x16xi32> to vector<16x16xf32>
    %cst_57 = arith.constant 0xFF800000 : f32
    %128 = vector.broadcast %cst_57 : f32 to vector<16x16xf32>
    %129 = arith.select %125, %128, %115 : vector<16x16xi1>, vector<16x16xf32>
    %cst_58 = arith.constant dense<0xFF800000> : vector<16xf32>
    %130 = vector.multi_reduction <maximumf>, %129, %cst_58 [1] : vector<16x16xf32> to vector<16xf32>
    %131 = vector.shape_cast %130 : vector<16xf32> to vector<16x1xf32>
    %132 = vector.broadcast %131 : vector<16x1xf32> to vector<16x16xf32>
    %133 = arith.cmpf oeq, %129, %132 : vector<16x16xf32>
    %cst_59 = arith.constant 1.600000e+01 : f32
    %134 = vector.broadcast %cst_59 : f32 to vector<16x16xf32>
    %135 = arith.select %133, %12, %134 : vector<16x16xi1>, vector<16x16xf32>
    %cst_60 = arith.constant dense<0x7F800000> : vector<16xf32>
    %136 = vector.multi_reduction <minimumf>, %135, %cst_60 [1] : vector<16x16xf32> to vector<16xf32>
    %137 = vector.shape_cast %136 : vector<16xf32> to vector<16x1xf32>
    %138 = vector.broadcast %137 : vector<16x1xf32> to vector<16x16xf32>
    %139 = arith.cmpf oeq, %12, %138 : vector<16x16xf32>
    %140 = arith.extui %139 : vector<16x16xi1> to vector<16x16xi32>
    %141 = arith.sitofp %140 : vector<16x16xi32> to vector<16x16xf32>
    %142 = tpu.concatenate %43, %57, %71, %85, %99, %113, %127, %141 in 0 : vector<16x16xf32>, vector<16x16xf32>, vector<16x16xf32>, vector<16x16xf32>, vector<16x16xf32>, vector<16x16xf32>, vector<16x16xf32>, vector<16x16xf32> -> vector<128x16xf32>
    %143 = arith.truncf %142 : vector<128x16xf32> to vector<128x16xbf16>
    %144 = arith.truncf %16 : vector<16x64xf32> to vector<16x64xbf16>
    %cst_61 = arith.constant dense<0.000000e+00> : vector<128x64xf32>
    %145 = tpu.matmul %143, %144, %cst_61 {dimension_numbers = #tpu.dot_dimension_numbers<[1], [0], [0], [1], [0, 0, 1, 1], [], []>} : vector<128x16xbf16>, vector<16x64xbf16>, vector<128x64xf32> -> vector<128x64xf32>
    %146 = tpu.concatenate %20, %20, %20, %20, %20, %20, %20, %20 in 0 : vector<16x64xf32>, vector<16x64xf32>, vector<16x64xf32>, vector<16x64xf32>, vector<16x64xf32>, vector<16x64xf32>, vector<16x64xf32>, vector<16x64xf32> -> vector<128x64xf32>
    %147 = arith.addf %145, %146 : vector<128x64xf32>
    %cst_62 = arith.constant 2.000000e-01 : f32
    %148 = vector.broadcast %cst_62 : f32 to vector<128x64xf32>
    %149 = arith.mulf %148, %147 : vector<128x64xf32>
    %150 = arith.maximumf %147, %149 : vector<128x64xf32>
    %c1 = arith.constant 1 : index
    %c0_63 = arith.constant 0 : index
    %c0_64 = arith.constant 0 : index
    %151 = vector.load %arg1[%c1, %c0_63, %c0_64] : memref<2x16x3xf32, #tpu.memory_space<vmem>>, vector<1x16x3xf32>
    %152 = vector.shape_cast %151 : vector<1x16x3xf32> to vector<16x3xf32>
    %cst_65 = arith.constant dense<0.000000e+00> : vector<16x64xf32>
    %153 = tpu.matmul %152, %0, %cst_65 {dimension_numbers = #tpu.dot_dimension_numbers<[1], [0], [0], [1], [0, 0, 1, 1], [], []>, precision = #tpu.contract_precision<fp32>} : vector<16x3xf32>, vector<3x64xf32>, vector<16x64xf32> -> vector<16x64xf32>
    %cst_66 = arith.constant dense<0.000000e+00> : vector<16x64xf32>
    %154 = tpu.matmul %152, %1, %cst_66 {dimension_numbers = #tpu.dot_dimension_numbers<[1], [0], [0], [1], [0, 0, 1, 1], [], []>, precision = #tpu.contract_precision<fp32>} : vector<16x3xf32>, vector<3x64xf32>, vector<16x64xf32> -> vector<16x64xf32>
    %155 = arith.subf %154, %153 : vector<16x64xf32>
    %156 = vector.broadcast %2 : vector<1x64xf32> to vector<16x64xf32>
    %157 = arith.addf %155, %156 : vector<16x64xf32>
    %cst_67 = arith.constant dense<0.000000e+00> : vector<16x16xf32>
    %158 = tpu.matmul %152, %152, %cst_67 {dimension_numbers = #tpu.dot_dimension_numbers<[1], [1], [0], [0], [0, 0, 1, 0], [], []>, precision = #tpu.contract_precision<fp32>} : vector<16x3xf32>, vector<16x3xf32>, vector<16x16xf32> -> vector<16x16xf32>
    %159 = arith.mulf %152, %152 : vector<16x3xf32>
    %cst_68 = arith.constant dense<0.000000e+00> : vector<16xf32>
    %160 = vector.multi_reduction <add>, %159, %cst_68 [1] : vector<16x3xf32> to vector<16xf32>
    %161 = vector.shape_cast %160 : vector<16xf32> to vector<16x1xf32>
    %cst_69 = arith.constant dense<0.000000e+00> : vector<1x16xf32>
    %162 = tpu.matmul %13, %159, %cst_69 {dimension_numbers = #tpu.dot_dimension_numbers<[1], [1], [0], [0], [0, 0, 1, 0], [], []>, precision = #tpu.contract_precision<fp32>} : vector<1x3xf32>, vector<16x3xf32>, vector<1x16xf32> -> vector<1x16xf32>
    %cst_70 = arith.constant 2.000000e+00 : f32
    %163 = vector.broadcast %cst_70 : f32 to vector<16x16xf32>
    %164 = arith.mulf %163, %158 : vector<16x16xf32>
    %165 = vector.broadcast %161 : vector<16x1xf32> to vector<16x16xf32>
    %166 = arith.subf %164, %165 : vector<16x16xf32>
    %167 = vector.broadcast %162 : vector<1x16xf32> to vector<16x16xf32>
    %168 = arith.subf %166, %167 : vector<16x16xf32>
    %cst_71 = arith.constant dense<0xFF800000> : vector<16xf32>
    %169 = vector.multi_reduction <maximumf>, %168, %cst_71 [1] : vector<16x16xf32> to vector<16xf32>
    %170 = vector.shape_cast %169 : vector<16xf32> to vector<16x1xf32>
    %171 = vector.broadcast %170 : vector<16x1xf32> to vector<16x16xf32>
    %172 = arith.cmpf oeq, %168, %171 : vector<16x16xf32>
    %cst_72 = arith.constant 1.600000e+01 : f32
    %173 = vector.broadcast %cst_72 : f32 to vector<16x16xf32>
    %174 = arith.select %172, %12, %173 : vector<16x16xi1>, vector<16x16xf32>
    %cst_73 = arith.constant dense<0x7F800000> : vector<16xf32>
    %175 = vector.multi_reduction <minimumf>, %174, %cst_73 [1] : vector<16x16xf32> to vector<16xf32>
    %176 = vector.shape_cast %175 : vector<16xf32> to vector<16x1xf32>
    %177 = vector.broadcast %176 : vector<16x1xf32> to vector<16x16xf32>
    %178 = arith.cmpf oeq, %12, %177 : vector<16x16xf32>
    %179 = arith.extui %178 : vector<16x16xi1> to vector<16x16xi32>
    %180 = arith.sitofp %179 : vector<16x16xi32> to vector<16x16xf32>
    %cst_74 = arith.constant 0xFF800000 : f32
    %181 = vector.broadcast %cst_74 : f32 to vector<16x16xf32>
    %182 = arith.select %178, %181, %168 : vector<16x16xi1>, vector<16x16xf32>
    %cst_75 = arith.constant dense<0xFF800000> : vector<16xf32>
    %183 = vector.multi_reduction <maximumf>, %182, %cst_75 [1] : vector<16x16xf32> to vector<16xf32>
    %184 = vector.shape_cast %183 : vector<16xf32> to vector<16x1xf32>
    %185 = vector.broadcast %184 : vector<16x1xf32> to vector<16x16xf32>
    %186 = arith.cmpf oeq, %182, %185 : vector<16x16xf32>
    %cst_76 = arith.constant 1.600000e+01 : f32
    %187 = vector.broadcast %cst_76 : f32 to vector<16x16xf32>
    %188 = arith.select %186, %12, %187 : vector<16x16xi1>, vector<16x16xf32>
    %cst_77 = arith.constant dense<0x7F800000> : vector<16xf32>
    %189 = vector.multi_reduction <minimumf>, %188, %cst_77 [1] : vector<16x16xf32> to vector<16xf32>
    %190 = vector.shape_cast %189 : vector<16xf32> to vector<16x1xf32>
    %191 = vector.broadcast %190 : vector<16x1xf32> to vector<16x16xf32>
    %192 = arith.cmpf oeq, %12, %191 : vector<16x16xf32>
    %193 = arith.extui %192 : vector<16x16xi1> to vector<16x16xi32>
    %194 = arith.sitofp %193 : vector<16x16xi32> to vector<16x16xf32>
    %cst_78 = arith.constant 0xFF800000 : f32
    %195 = vector.broadcast %cst_78 : f32 to vector<16x16xf32>
    %196 = arith.select %192, %195, %182 : vector<16x16xi1>, vector<16x16xf32>
    %cst_79 = arith.constant dense<0xFF800000> : vector<16xf32>
    %197 = vector.multi_reduction <maximumf>, %196, %cst_79 [1] : vector<16x16xf32> to vector<16xf32>
    %198 = vector.shape_cast %197 : vector<16xf32> to vector<16x1xf32>
    %199 = vector.broadcast %198 : vector<16x1xf32> to vector<16x16xf32>
    %200 = arith.cmpf oeq, %196, %199 : vector<16x16xf32>
    %cst_80 = arith.constant 1.600000e+01 : f32
    %201 = vector.broadcast %cst_80 : f32 to vector<16x16xf32>
    %202 = arith.select %200, %12, %201 : vector<16x16xi1>, vector<16x16xf32>
    %cst_81 = arith.constant dense<0x7F800000> : vector<16xf32>
    %203 = vector.multi_reduction <minimumf>, %202, %cst_81 [1] : vector<16x16xf32> to vector<16xf32>
    %204 = vector.shape_cast %203 : vector<16xf32> to vector<16x1xf32>
    %205 = vector.broadcast %204 : vector<16x1xf32> to vector<16x16xf32>
    %206 = arith.cmpf oeq, %12, %205 : vector<16x16xf32>
    %207 = arith.extui %206 : vector<16x16xi1> to vector<16x16xi32>
    %208 = arith.sitofp %207 : vector<16x16xi32> to vector<16x16xf32>
    %cst_82 = arith.constant 0xFF800000 : f32
    %209 = vector.broadcast %cst_82 : f32 to vector<16x16xf32>
    %210 = arith.select %206, %209, %196 : vector<16x16xi1>, vector<16x16xf32>
    %cst_83 = arith.constant dense<0xFF800000> : vector<16xf32>
    %211 = vector.multi_reduction <maximumf>, %210, %cst_83 [1] : vector<16x16xf32> to vector<16xf32>
    %212 = vector.shape_cast %211 : vector<16xf32> to vector<16x1xf32>
    %213 = vector.broadcast %212 : vector<16x1xf32> to vector<16x16xf32>
    %214 = arith.cmpf oeq, %210, %213 : vector<16x16xf32>
    %cst_84 = arith.constant 1.600000e+01 : f32
    %215 = vector.broadcast %cst_84 : f32 to vector<16x16xf32>
    %216 = arith.select %214, %12, %215 : vector<16x16xi1>, vector<16x16xf32>
    %cst_85 = arith.constant dense<0x7F800000> : vector<16xf32>
    %217 = vector.multi_reduction <minimumf>, %216, %cst_85 [1] : vector<16x16xf32> to vector<16xf32>
    %218 = vector.shape_cast %217 : vector<16xf32> to vector<16x1xf32>
    %219 = vector.broadcast %218 : vector<16x1xf32> to vector<16x16xf32>
    %220 = arith.cmpf oeq, %12, %219 : vector<16x16xf32>
    %221 = arith.extui %220 : vector<16x16xi1> to vector<16x16xi32>
    %222 = arith.sitofp %221 : vector<16x16xi32> to vector<16x16xf32>
    %cst_86 = arith.constant 0xFF800000 : f32
    %223 = vector.broadcast %cst_86 : f32 to vector<16x16xf32>
    %224 = arith.select %220, %223, %210 : vector<16x16xi1>, vector<16x16xf32>
    %cst_87 = arith.constant dense<0xFF800000> : vector<16xf32>
    %225 = vector.multi_reduction <maximumf>, %224, %cst_87 [1] : vector<16x16xf32> to vector<16xf32>
    %226 = vector.shape_cast %225 : vector<16xf32> to vector<16x1xf32>
    %227 = vector.broadcast %226 : vector<16x1xf32> to vector<16x16xf32>
    %228 = arith.cmpf oeq, %224, %227 : vector<16x16xf32>
    %cst_88 = arith.constant 1.600000e+01 : f32
    %229 = vector.broadcast %cst_88 : f32 to vector<16x16xf32>
    %230 = arith.select %228, %12, %229 : vector<16x16xi1>, vector<16x16xf32>
    %cst_89 = arith.constant dense<0x7F800000> : vector<16xf32>
    %231 = vector.multi_reduction <minimumf>, %230, %cst_89 [1] : vector<16x16xf32> to vector<16xf32>
    %232 = vector.shape_cast %231 : vector<16xf32> to vector<16x1xf32>
    %233 = vector.broadcast %232 : vector<16x1xf32> to vector<16x16xf32>
    %234 = arith.cmpf oeq, %12, %233 : vector<16x16xf32>
    %235 = arith.extui %234 : vector<16x16xi1> to vector<16x16xi32>
    %236 = arith.sitofp %235 : vector<16x16xi32> to vector<16x16xf32>
    %cst_90 = arith.constant 0xFF800000 : f32
    %237 = vector.broadcast %cst_90 : f32 to vector<16x16xf32>
    %238 = arith.select %234, %237, %224 : vector<16x16xi1>, vector<16x16xf32>
    %cst_91 = arith.constant dense<0xFF800000> : vector<16xf32>
    %239 = vector.multi_reduction <maximumf>, %238, %cst_91 [1] : vector<16x16xf32> to vector<16xf32>
    %240 = vector.shape_cast %239 : vector<16xf32> to vector<16x1xf32>
    %241 = vector.broadcast %240 : vector<16x1xf32> to vector<16x16xf32>
    %242 = arith.cmpf oeq, %238, %241 : vector<16x16xf32>
    %cst_92 = arith.constant 1.600000e+01 : f32
    %243 = vector.broadcast %cst_92 : f32 to vector<16x16xf32>
    %244 = arith.select %242, %12, %243 : vector<16x16xi1>, vector<16x16xf32>
    %cst_93 = arith.constant dense<0x7F800000> : vector<16xf32>
    %245 = vector.multi_reduction <minimumf>, %244, %cst_93 [1] : vector<16x16xf32> to vector<16xf32>
    %246 = vector.shape_cast %245 : vector<16xf32> to vector<16x1xf32>
    %247 = vector.broadcast %246 : vector<16x1xf32> to vector<16x16xf32>
    %248 = arith.cmpf oeq, %12, %247 : vector<16x16xf32>
    %249 = arith.extui %248 : vector<16x16xi1> to vector<16x16xi32>
    %250 = arith.sitofp %249 : vector<16x16xi32> to vector<16x16xf32>
    %cst_94 = arith.constant 0xFF800000 : f32
    %251 = vector.broadcast %cst_94 : f32 to vector<16x16xf32>
    %252 = arith.select %248, %251, %238 : vector<16x16xi1>, vector<16x16xf32>
    %cst_95 = arith.constant dense<0xFF800000> : vector<16xf32>
    %253 = vector.multi_reduction <maximumf>, %252, %cst_95 [1] : vector<16x16xf32> to vector<16xf32>
    %254 = vector.shape_cast %253 : vector<16xf32> to vector<16x1xf32>
    %255 = vector.broadcast %254 : vector<16x1xf32> to vector<16x16xf32>
    %256 = arith.cmpf oeq, %252, %255 : vector<16x16xf32>
    %cst_96 = arith.constant 1.600000e+01 : f32
    %257 = vector.broadcast %cst_96 : f32 to vector<16x16xf32>
    %258 = arith.select %256, %12, %257 : vector<16x16xi1>, vector<16x16xf32>
    %cst_97 = arith.constant dense<0x7F800000> : vector<16xf32>
    %259 = vector.multi_reduction <minimumf>, %258, %cst_97 [1] : vector<16x16xf32> to vector<16xf32>
    %260 = vector.shape_cast %259 : vector<16xf32> to vector<16x1xf32>
    %261 = vector.broadcast %260 : vector<16x1xf32> to vector<16x16xf32>
    %262 = arith.cmpf oeq, %12, %261 : vector<16x16xf32>
    %263 = arith.extui %262 : vector<16x16xi1> to vector<16x16xi32>
    %264 = arith.sitofp %263 : vector<16x16xi32> to vector<16x16xf32>
    %cst_98 = arith.constant 0xFF800000 : f32
    %265 = vector.broadcast %cst_98 : f32 to vector<16x16xf32>
    %266 = arith.select %262, %265, %252 : vector<16x16xi1>, vector<16x16xf32>
    %cst_99 = arith.constant dense<0xFF800000> : vector<16xf32>
    %267 = vector.multi_reduction <maximumf>, %266, %cst_99 [1] : vector<16x16xf32> to vector<16xf32>
    %268 = vector.shape_cast %267 : vector<16xf32> to vector<16x1xf32>
    %269 = vector.broadcast %268 : vector<16x1xf32> to vector<16x16xf32>
    %270 = arith.cmpf oeq, %266, %269 : vector<16x16xf32>
    %cst_100 = arith.constant 1.600000e+01 : f32
    %271 = vector.broadcast %cst_100 : f32 to vector<16x16xf32>
    %272 = arith.select %270, %12, %271 : vector<16x16xi1>, vector<16x16xf32>
    %cst_101 = arith.constant dense<0x7F800000> : vector<16xf32>
    %273 = vector.multi_reduction <minimumf>, %272, %cst_101 [1] : vector<16x16xf32> to vector<16xf32>
    %274 = vector.shape_cast %273 : vector<16xf32> to vector<16x1xf32>
    %275 = vector.broadcast %274 : vector<16x1xf32> to vector<16x16xf32>
    %276 = arith.cmpf oeq, %12, %275 : vector<16x16xf32>
    %277 = arith.extui %276 : vector<16x16xi1> to vector<16x16xi32>
    %278 = arith.sitofp %277 : vector<16x16xi32> to vector<16x16xf32>
    %279 = tpu.concatenate %180, %194, %208, %222, %236, %250, %264, %278 in 0 : vector<16x16xf32>, vector<16x16xf32>, vector<16x16xf32>, vector<16x16xf32>, vector<16x16xf32>, vector<16x16xf32>, vector<16x16xf32>, vector<16x16xf32> -> vector<128x16xf32>
    %280 = arith.truncf %279 : vector<128x16xf32> to vector<128x16xbf16>
    %281 = arith.truncf %153 : vector<16x64xf32> to vector<16x64xbf16>
    %cst_102 = arith.constant dense<0.000000e+00> : vector<128x64xf32>
    %282 = tpu.matmul %280, %281, %cst_102 {dimension_numbers = #tpu.dot_dimension_numbers<[1], [0], [0], [1], [0, 0, 1, 1], [], []>} : vector<128x16xbf16>, vector<16x64xbf16>, vector<128x64xf32> -> vector<128x64xf32>
    %283 = tpu.concatenate %157, %157, %157, %157, %157, %157, %157, %157 in 0 : vector<16x64xf32>, vector<16x64xf32>, vector<16x64xf32>, vector<16x64xf32>, vector<16x64xf32>, vector<16x64xf32>, vector<16x64xf32>, vector<16x64xf32> -> vector<128x64xf32>
    %284 = arith.addf %282, %283 : vector<128x64xf32>
    %cst_103 = arith.constant 2.000000e-01 : f32
    %285 = vector.broadcast %cst_103 : f32 to vector<128x64xf32>
    %286 = arith.mulf %285, %284 : vector<128x64xf32>
    %287 = arith.maximumf %284, %286 : vector<128x64xf32>
    %288 = tpu.concatenate %150, %287 in 0 : vector<128x64xf32>, vector<128x64xf32> -> vector<256x64xf32>
    %289 = arith.truncf %288 : vector<256x64xf32> to vector<256x64xbf16>
    %cst_104 = arith.constant dense<0.000000e+00> : vector<256x64xf32>
    %290 = tpu.matmul %289, %3, %cst_104 {dimension_numbers = #tpu.dot_dimension_numbers<[1], [0], [0], [1], [0, 0, 1, 1], [], []>} : vector<256x64xbf16>, vector<64x64xbf16>, vector<256x64xf32> -> vector<256x64xf32>
    %291 = vector.broadcast %4 : vector<1x64xf32> to vector<256x64xf32>
    %292 = arith.addf %290, %291 : vector<256x64xf32>
    %cst_105 = arith.constant 2.000000e-01 : f32
    %293 = vector.broadcast %cst_105 : f32 to vector<256x64xf32>
    %294 = arith.mulf %293, %292 : vector<256x64xf32>
    %295 = arith.maximumf %292, %294 : vector<256x64xf32>
    %296 = arith.truncf %295 : vector<256x64xf32> to vector<256x64xbf16>
    %cst_106 = arith.constant dense<0.000000e+00> : vector<256x128xf32>
    %297 = tpu.matmul %296, %5, %cst_106 {dimension_numbers = #tpu.dot_dimension_numbers<[1], [0], [0], [1], [0, 0, 1, 1], [], []>} : vector<256x64xbf16>, vector<64x128xbf16>, vector<256x128xf32> -> vector<256x128xf32>
    %298 = vector.broadcast %6 : vector<1x128xf32> to vector<256x128xf32>
    %299 = arith.addf %297, %298 : vector<256x128xf32>
    %cst_107 = arith.constant 2.000000e-01 : f32
    %300 = vector.broadcast %cst_107 : f32 to vector<256x128xf32>
    %301 = arith.mulf %300, %299 : vector<256x128xf32>
    %302 = arith.maximumf %299, %301 : vector<256x128xf32>
    %303 = arith.truncf %302 : vector<256x128xf32> to vector<256x128xbf16>
    %cst_108 = arith.constant dense<0.000000e+00> : vector<256x256xf32>
    %304 = tpu.matmul %303, %7, %cst_108 {dimension_numbers = #tpu.dot_dimension_numbers<[1], [0], [0], [1], [0, 0, 1, 1], [], []>} : vector<256x128xbf16>, vector<128x256xbf16>, vector<256x256xf32> -> vector<256x256xf32>
    %305 = vector.broadcast %8 : vector<1x256xf32> to vector<256x256xf32>
    %306 = arith.addf %304, %305 : vector<256x256xf32>
    %cst_109 = arith.constant 2.000000e-01 : f32
    %307 = vector.broadcast %cst_109 : f32 to vector<256x256xf32>
    %308 = arith.mulf %307, %306 : vector<256x256xf32>
    %309 = arith.maximumf %306, %308 : vector<256x256xf32>
    %310 = vector.extract_strided_slice %288 {offsets = [0, 0], sizes = [16, 64], strides = [1, 1]} : vector<256x64xf32> to vector<16x64xf32>
    %311 = vector.extract_strided_slice %288 {offsets = [16, 0], sizes = [16, 64], strides = [1, 1]} : vector<256x64xf32> to vector<16x64xf32>
    %312 = arith.maximumf %310, %311 : vector<16x64xf32>
    %313 = vector.extract_strided_slice %288 {offsets = [32, 0], sizes = [16, 64], strides = [1, 1]} : vector<256x64xf32> to vector<16x64xf32>
    %314 = arith.maximumf %312, %313 : vector<16x64xf32>
    %315 = vector.extract_strided_slice %288 {offsets = [48, 0], sizes = [16, 64], strides = [1, 1]} : vector<256x64xf32> to vector<16x64xf32>
    %316 = arith.maximumf %314, %315 : vector<16x64xf32>
    %317 = vector.extract_strided_slice %288 {offsets = [64, 0], sizes = [16, 64], strides = [1, 1]} : vector<256x64xf32> to vector<16x64xf32>
    %318 = arith.maximumf %316, %317 : vector<16x64xf32>
    %319 = vector.extract_strided_slice %288 {offsets = [80, 0], sizes = [16, 64], strides = [1, 1]} : vector<256x64xf32> to vector<16x64xf32>
    %320 = arith.maximumf %318, %319 : vector<16x64xf32>
    %321 = vector.extract_strided_slice %288 {offsets = [96, 0], sizes = [16, 64], strides = [1, 1]} : vector<256x64xf32> to vector<16x64xf32>
    %322 = arith.maximumf %320, %321 : vector<16x64xf32>
    %323 = vector.extract_strided_slice %288 {offsets = [112, 0], sizes = [16, 64], strides = [1, 1]} : vector<256x64xf32> to vector<16x64xf32>
    %324 = arith.maximumf %322, %323 : vector<16x64xf32>
    %325 = vector.extract_strided_slice %288 {offsets = [128, 0], sizes = [16, 64], strides = [1, 1]} : vector<256x64xf32> to vector<16x64xf32>
    %326 = vector.extract_strided_slice %288 {offsets = [144, 0], sizes = [16, 64], strides = [1, 1]} : vector<256x64xf32> to vector<16x64xf32>
    %327 = arith.maximumf %325, %326 : vector<16x64xf32>
    %328 = vector.extract_strided_slice %288 {offsets = [160, 0], sizes = [16, 64], strides = [1, 1]} : vector<256x64xf32> to vector<16x64xf32>
    %329 = arith.maximumf %327, %328 : vector<16x64xf32>
    %330 = vector.extract_strided_slice %288 {offsets = [176, 0], sizes = [16, 64], strides = [1, 1]} : vector<256x64xf32> to vector<16x64xf32>
    %331 = arith.maximumf %329, %330 : vector<16x64xf32>
    %332 = vector.extract_strided_slice %288 {offsets = [192, 0], sizes = [16, 64], strides = [1, 1]} : vector<256x64xf32> to vector<16x64xf32>
    %333 = arith.maximumf %331, %332 : vector<16x64xf32>
    %334 = vector.extract_strided_slice %288 {offsets = [208, 0], sizes = [16, 64], strides = [1, 1]} : vector<256x64xf32> to vector<16x64xf32>
    %335 = arith.maximumf %333, %334 : vector<16x64xf32>
    %336 = vector.extract_strided_slice %288 {offsets = [224, 0], sizes = [16, 64], strides = [1, 1]} : vector<256x64xf32> to vector<16x64xf32>
    %337 = arith.maximumf %335, %336 : vector<16x64xf32>
    %338 = vector.extract_strided_slice %288 {offsets = [240, 0], sizes = [16, 64], strides = [1, 1]} : vector<256x64xf32> to vector<16x64xf32>
    %339 = arith.maximumf %337, %338 : vector<16x64xf32>
    %340 = tpu.concatenate %324, %339 in 0 : vector<16x64xf32>, vector<16x64xf32> -> vector<32x64xf32>
    %341 = vector.extract_strided_slice %295 {offsets = [0, 0], sizes = [16, 64], strides = [1, 1]} : vector<256x64xf32> to vector<16x64xf32>
    %342 = vector.extract_strided_slice %295 {offsets = [16, 0], sizes = [16, 64], strides = [1, 1]} : vector<256x64xf32> to vector<16x64xf32>
    %343 = arith.maximumf %341, %342 : vector<16x64xf32>
    %344 = vector.extract_strided_slice %295 {offsets = [32, 0], sizes = [16, 64], strides = [1, 1]} : vector<256x64xf32> to vector<16x64xf32>
    %345 = arith.maximumf %343, %344 : vector<16x64xf32>
    %346 = vector.extract_strided_slice %295 {offsets = [48, 0], sizes = [16, 64], strides = [1, 1]} : vector<256x64xf32> to vector<16x64xf32>
    %347 = arith.maximumf %345, %346 : vector<16x64xf32>
    %348 = vector.extract_strided_slice %295 {offsets = [64, 0], sizes = [16, 64], strides = [1, 1]} : vector<256x64xf32> to vector<16x64xf32>
    %349 = arith.maximumf %347, %348 : vector<16x64xf32>
    %350 = vector.extract_strided_slice %295 {offsets = [80, 0], sizes = [16, 64], strides = [1, 1]} : vector<256x64xf32> to vector<16x64xf32>
    %351 = arith.maximumf %349, %350 : vector<16x64xf32>
    %352 = vector.extract_strided_slice %295 {offsets = [96, 0], sizes = [16, 64], strides = [1, 1]} : vector<256x64xf32> to vector<16x64xf32>
    %353 = arith.maximumf %351, %352 : vector<16x64xf32>
    %354 = vector.extract_strided_slice %295 {offsets = [112, 0], sizes = [16, 64], strides = [1, 1]} : vector<256x64xf32> to vector<16x64xf32>
    %355 = arith.maximumf %353, %354 : vector<16x64xf32>
    %356 = vector.extract_strided_slice %295 {offsets = [128, 0], sizes = [16, 64], strides = [1, 1]} : vector<256x64xf32> to vector<16x64xf32>
    %357 = vector.extract_strided_slice %295 {offsets = [144, 0], sizes = [16, 64], strides = [1, 1]} : vector<256x64xf32> to vector<16x64xf32>
    %358 = arith.maximumf %356, %357 : vector<16x64xf32>
    %359 = vector.extract_strided_slice %295 {offsets = [160, 0], sizes = [16, 64], strides = [1, 1]} : vector<256x64xf32> to vector<16x64xf32>
    %360 = arith.maximumf %358, %359 : vector<16x64xf32>
    %361 = vector.extract_strided_slice %295 {offsets = [176, 0], sizes = [16, 64], strides = [1, 1]} : vector<256x64xf32> to vector<16x64xf32>
    %362 = arith.maximumf %360, %361 : vector<16x64xf32>
    %363 = vector.extract_strided_slice %295 {offsets = [192, 0], sizes = [16, 64], strides = [1, 1]} : vector<256x64xf32> to vector<16x64xf32>
    %364 = arith.maximumf %362, %363 : vector<16x64xf32>
    %365 = vector.extract_strided_slice %295 {offsets = [208, 0], sizes = [16, 64], strides = [1, 1]} : vector<256x64xf32> to vector<16x64xf32>
    %366 = arith.maximumf %364, %365 : vector<16x64xf32>
    %367 = vector.extract_strided_slice %295 {offsets = [224, 0], sizes = [16, 64], strides = [1, 1]} : vector<256x64xf32> to vector<16x64xf32>
    %368 = arith.maximumf %366, %367 : vector<16x64xf32>
    %369 = vector.extract_strided_slice %295 {offsets = [240, 0], sizes = [16, 64], strides = [1, 1]} : vector<256x64xf32> to vector<16x64xf32>
    %370 = arith.maximumf %368, %369 : vector<16x64xf32>
    %371 = tpu.concatenate %355, %370 in 0 : vector<16x64xf32>, vector<16x64xf32> -> vector<32x64xf32>
    %372 = vector.extract_strided_slice %302 {offsets = [0, 0], sizes = [16, 128], strides = [1, 1]} : vector<256x128xf32> to vector<16x128xf32>
    %373 = vector.extract_strided_slice %302 {offsets = [16, 0], sizes = [16, 128], strides = [1, 1]} : vector<256x128xf32> to vector<16x128xf32>
    %374 = arith.maximumf %372, %373 : vector<16x128xf32>
    %375 = vector.extract_strided_slice %302 {offsets = [32, 0], sizes = [16, 128], strides = [1, 1]} : vector<256x128xf32> to vector<16x128xf32>
    %376 = arith.maximumf %374, %375 : vector<16x128xf32>
    %377 = vector.extract_strided_slice %302 {offsets = [48, 0], sizes = [16, 128], strides = [1, 1]} : vector<256x128xf32> to vector<16x128xf32>
    %378 = arith.maximumf %376, %377 : vector<16x128xf32>
    %379 = vector.extract_strided_slice %302 {offsets = [64, 0], sizes = [16, 128], strides = [1, 1]} : vector<256x128xf32> to vector<16x128xf32>
    %380 = arith.maximumf %378, %379 : vector<16x128xf32>
    %381 = vector.extract_strided_slice %302 {offsets = [80, 0], sizes = [16, 128], strides = [1, 1]} : vector<256x128xf32> to vector<16x128xf32>
    %382 = arith.maximumf %380, %381 : vector<16x128xf32>
    %383 = vector.extract_strided_slice %302 {offsets = [96, 0], sizes = [16, 128], strides = [1, 1]} : vector<256x128xf32> to vector<16x128xf32>
    %384 = arith.maximumf %382, %383 : vector<16x128xf32>
    %385 = vector.extract_strided_slice %302 {offsets = [112, 0], sizes = [16, 128], strides = [1, 1]} : vector<256x128xf32> to vector<16x128xf32>
    %386 = arith.maximumf %384, %385 : vector<16x128xf32>
    %387 = vector.extract_strided_slice %302 {offsets = [128, 0], sizes = [16, 128], strides = [1, 1]} : vector<256x128xf32> to vector<16x128xf32>
    %388 = vector.extract_strided_slice %302 {offsets = [144, 0], sizes = [16, 128], strides = [1, 1]} : vector<256x128xf32> to vector<16x128xf32>
    %389 = arith.maximumf %387, %388 : vector<16x128xf32>
    %390 = vector.extract_strided_slice %302 {offsets = [160, 0], sizes = [16, 128], strides = [1, 1]} : vector<256x128xf32> to vector<16x128xf32>
    %391 = arith.maximumf %389, %390 : vector<16x128xf32>
    %392 = vector.extract_strided_slice %302 {offsets = [176, 0], sizes = [16, 128], strides = [1, 1]} : vector<256x128xf32> to vector<16x128xf32>
    %393 = arith.maximumf %391, %392 : vector<16x128xf32>
    %394 = vector.extract_strided_slice %302 {offsets = [192, 0], sizes = [16, 128], strides = [1, 1]} : vector<256x128xf32> to vector<16x128xf32>
    %395 = arith.maximumf %393, %394 : vector<16x128xf32>
    %396 = vector.extract_strided_slice %302 {offsets = [208, 0], sizes = [16, 128], strides = [1, 1]} : vector<256x128xf32> to vector<16x128xf32>
    %397 = arith.maximumf %395, %396 : vector<16x128xf32>
    %398 = vector.extract_strided_slice %302 {offsets = [224, 0], sizes = [16, 128], strides = [1, 1]} : vector<256x128xf32> to vector<16x128xf32>
    %399 = arith.maximumf %397, %398 : vector<16x128xf32>
    %400 = vector.extract_strided_slice %302 {offsets = [240, 0], sizes = [16, 128], strides = [1, 1]} : vector<256x128xf32> to vector<16x128xf32>
    %401 = arith.maximumf %399, %400 : vector<16x128xf32>
    %402 = tpu.concatenate %386, %401 in 0 : vector<16x128xf32>, vector<16x128xf32> -> vector<32x128xf32>
    %403 = vector.extract_strided_slice %309 {offsets = [0, 0], sizes = [16, 256], strides = [1, 1]} : vector<256x256xf32> to vector<16x256xf32>
    %404 = vector.extract_strided_slice %309 {offsets = [16, 0], sizes = [16, 256], strides = [1, 1]} : vector<256x256xf32> to vector<16x256xf32>
    %405 = arith.maximumf %403, %404 : vector<16x256xf32>
    %406 = vector.extract_strided_slice %309 {offsets = [32, 0], sizes = [16, 256], strides = [1, 1]} : vector<256x256xf32> to vector<16x256xf32>
    %407 = arith.maximumf %405, %406 : vector<16x256xf32>
    %408 = vector.extract_strided_slice %309 {offsets = [48, 0], sizes = [16, 256], strides = [1, 1]} : vector<256x256xf32> to vector<16x256xf32>
    %409 = arith.maximumf %407, %408 : vector<16x256xf32>
    %410 = vector.extract_strided_slice %309 {offsets = [64, 0], sizes = [16, 256], strides = [1, 1]} : vector<256x256xf32> to vector<16x256xf32>
    %411 = arith.maximumf %409, %410 : vector<16x256xf32>
    %412 = vector.extract_strided_slice %309 {offsets = [80, 0], sizes = [16, 256], strides = [1, 1]} : vector<256x256xf32> to vector<16x256xf32>
    %413 = arith.maximumf %411, %412 : vector<16x256xf32>
    %414 = vector.extract_strided_slice %309 {offsets = [96, 0], sizes = [16, 256], strides = [1, 1]} : vector<256x256xf32> to vector<16x256xf32>
    %415 = arith.maximumf %413, %414 : vector<16x256xf32>
    %416 = vector.extract_strided_slice %309 {offsets = [112, 0], sizes = [16, 256], strides = [1, 1]} : vector<256x256xf32> to vector<16x256xf32>
    %417 = arith.maximumf %415, %416 : vector<16x256xf32>
    %418 = vector.extract_strided_slice %309 {offsets = [128, 0], sizes = [16, 256], strides = [1, 1]} : vector<256x256xf32> to vector<16x256xf32>
    %419 = vector.extract_strided_slice %309 {offsets = [144, 0], sizes = [16, 256], strides = [1, 1]} : vector<256x256xf32> to vector<16x256xf32>
    %420 = arith.maximumf %418, %419 : vector<16x256xf32>
    %421 = vector.extract_strided_slice %309 {offsets = [160, 0], sizes = [16, 256], strides = [1, 1]} : vector<256x256xf32> to vector<16x256xf32>
    %422 = arith.maximumf %420, %421 : vector<16x256xf32>
    %423 = vector.extract_strided_slice %309 {offsets = [176, 0], sizes = [16, 256], strides = [1, 1]} : vector<256x256xf32> to vector<16x256xf32>
    %424 = arith.maximumf %422, %423 : vector<16x256xf32>
    %425 = vector.extract_strided_slice %309 {offsets = [192, 0], sizes = [16, 256], strides = [1, 1]} : vector<256x256xf32> to vector<16x256xf32>
    %426 = arith.maximumf %424, %425 : vector<16x256xf32>
    %427 = vector.extract_strided_slice %309 {offsets = [208, 0], sizes = [16, 256], strides = [1, 1]} : vector<256x256xf32> to vector<16x256xf32>
    %428 = arith.maximumf %426, %427 : vector<16x256xf32>
    %429 = vector.extract_strided_slice %309 {offsets = [224, 0], sizes = [16, 256], strides = [1, 1]} : vector<256x256xf32> to vector<16x256xf32>
    %430 = arith.maximumf %428, %429 : vector<16x256xf32>
    %431 = vector.extract_strided_slice %309 {offsets = [240, 0], sizes = [16, 256], strides = [1, 1]} : vector<256x256xf32> to vector<16x256xf32>
    %432 = arith.maximumf %430, %431 : vector<16x256xf32>
    %433 = tpu.concatenate %417, %432 in 0 : vector<16x256xf32>, vector<16x256xf32> -> vector<32x256xf32>
    %434 = tpu.concatenate %340, %371, %402, %433 in 1 : vector<32x64xf32>, vector<32x64xf32>, vector<32x128xf32>, vector<32x256xf32> -> vector<32x512xf32>
    %435 = arith.truncf %434 : vector<32x512xf32> to vector<32x512xbf16>
    %cst_110 = arith.constant dense<0.000000e+00> : vector<32x128xf32>
    %436 = tpu.matmul %435, %9, %cst_110 {dimension_numbers = #tpu.dot_dimension_numbers<[1], [0], [0], [1], [0, 0, 1, 1], [], []>} : vector<32x512xbf16>, vector<512x128xbf16>, vector<32x128xf32> -> vector<32x128xf32>
    %437 = vector.broadcast %10 : vector<1x128xf32> to vector<32x128xf32>
    %438 = arith.addf %436, %437 : vector<32x128xf32>
    %cst_111 = arith.constant 2.000000e-01 : f32
    %439 = vector.broadcast %cst_111 : f32 to vector<32x128xf32>
    %440 = arith.mulf %439, %438 : vector<32x128xf32>
    %441 = arith.maximumf %438, %440 : vector<32x128xf32>
    %442 = vector.extract_strided_slice %441 {offsets = [0, 0], sizes = [16, 128], strides = [1, 1]} : vector<32x128xf32> to vector<16x128xf32>
    %c0_112 = arith.constant 0 : index
    %c0_113 = arith.constant 0 : index
    %c0_114 = arith.constant 0 : index
    %443 = vector.load %arg13[%c0_112, %c0_113, %c0_114] : memref<2x16x128xf32, #tpu.memory_space<vmem>>, vector<1x16x128xf32>
    %444 = vector.shape_cast %443 : vector<1x16x128xf32> to vector<16x128xf32>
    %445 = vector.shape_cast %442 : vector<16x128xf32> to vector<1x16x128xf32>
    tpu.vector_store %arg13[%c0_112, %c0_113, %c0_114], %445 {strides = array<i32>} : memref<2x16x128xf32, #tpu.memory_space<vmem>>, vector<1x16x128xf32>,
    %446 = vector.extract_strided_slice %441 {offsets = [16, 0], sizes = [16, 128], strides = [1, 1]} : vector<32x128xf32> to vector<16x128xf32>
    %c1_115 = arith.constant 1 : index
    %c0_116 = arith.constant 0 : index
    %c0_117 = arith.constant 0 : index
    %447 = vector.load %arg13[%c1_115, %c0_116, %c0_117] : memref<2x16x128xf32, #tpu.memory_space<vmem>>, vector<1x16x128xf32>
    %448 = vector.shape_cast %447 : vector<1x16x128xf32> to vector<16x128xf32>
    %449 = vector.shape_cast %446 : vector<16x128xf32> to vector<1x16x128xf32>
    tpu.vector_store %arg13[%c1_115, %c0_116, %c0_117], %449 {strides = array<i32>} : memref<2x16x128xf32, #tpu.memory_space<vmem>>, vector<1x16x128xf32>,
    return
  }
  func.func @transform_0(%arg0: i32) -> (i32, i32, i32) {
    %c0_i32 = arith.constant 0 : i32
    %c0_i32_0 = arith.constant 0 : i32
    %c0_i32_1 = arith.constant 0 : i32
    %c0_i32_2 = arith.constant 0 : i32
    return %c0_i32, %c0_i32_0, %c0_i32_1 : i32, i32, i32
  }
  func.func @transform_1(%arg0: i32) -> (i32, i32) {
    %c0_i32 = arith.constant 0 : i32
    %c0_i32_0 = arith.constant 0 : i32
    %c0_i32_1 = arith.constant 0 : i32
    return %c0_i32, %c0_i32_0 : i32, i32
  }
  func.func @transform_2(%arg0: i32) -> (i32, i32) {
    %c0_i32 = arith.constant 0 : i32
    %c0_i32_0 = arith.constant 0 : i32
    %c0_i32_1 = arith.constant 0 : i32
    return %c0_i32, %c0_i32_0 : i32, i32
  }
  func.func @transform_3(%arg0: i32) -> (i32, i32) {
    %c0_i32 = arith.constant 0 : i32
    %c0_i32_0 = arith.constant 0 : i32
    %c0_i32_1 = arith.constant 0 : i32
    return %c0_i32, %c0_i32_0 : i32, i32
  }
  func.func @transform_4(%arg0: i32) -> (i32, i32) {
    %c0_i32 = arith.constant 0 : i32
    %c0_i32_0 = arith.constant 0 : i32
    %c0_i32_1 = arith.constant 0 : i32
    return %c0_i32, %c0_i32_0 : i32, i32
  }
  func.func @transform_5(%arg0: i32) -> (i32, i32) {
    %c0_i32 = arith.constant 0 : i32
    %c0_i32_0 = arith.constant 0 : i32
    %c0_i32_1 = arith.constant 0 : i32
    return %c0_i32, %c0_i32_0 : i32, i32
  }
  func.func @transform_6(%arg0: i32) -> (i32, i32) {
    %c0_i32 = arith.constant 0 : i32
    %c0_i32_0 = arith.constant 0 : i32
    %c0_i32_1 = arith.constant 0 : i32
    return %c0_i32, %c0_i32_0 : i32, i32
  }
  func.func @transform_7(%arg0: i32) -> (i32, i32) {
    %c0_i32 = arith.constant 0 : i32
    %c0_i32_0 = arith.constant 0 : i32
    %c0_i32_1 = arith.constant 0 : i32
    return %c0_i32, %c0_i32_0 : i32, i32
  }
  func.func @transform_8(%arg0: i32) -> (i32, i32) {
    %c0_i32 = arith.constant 0 : i32
    %c0_i32_0 = arith.constant 0 : i32
    %c0_i32_1 = arith.constant 0 : i32
    return %c0_i32, %c0_i32_0 : i32, i32
  }
  func.func @transform_9(%arg0: i32) -> (i32, i32) {
    %c0_i32 = arith.constant 0 : i32
    %c0_i32_0 = arith.constant 0 : i32
    %c0_i32_1 = arith.constant 0 : i32
    return %c0_i32, %c0_i32_0 : i32, i32
  }
  func.func @transform_10(%arg0: i32) -> (i32, i32) {
    %c0_i32 = arith.constant 0 : i32
    %c0_i32_0 = arith.constant 0 : i32
    %c0_i32_1 = arith.constant 0 : i32
    return %c0_i32, %c0_i32_0 : i32, i32
  }
  func.func @transform_11(%arg0: i32) -> (i32, i32) {
    %c0_i32 = arith.constant 0 : i32
    %c0_i32_0 = arith.constant 0 : i32
    %c0_i32_1 = arith.constant 0 : i32
    return %c0_i32, %c0_i32_0 : i32, i32
  }
  func.func @transform_12(%arg0: i32) -> (i32, i32, i32) {
    %c0_i32 = arith.constant 0 : i32
    %c0_i32_0 = arith.constant 0 : i32
    %c0_i32_1 = arith.constant 0 : i32
    %c0_i32_2 = arith.constant 0 : i32
    return %c0_i32, %c0_i32_0, %c0_i32_1 : i32, i32, i32
  }
}

</mosaic_0001>

<llo_original>
// kernel: dgcnn_forward.1
$region0: #{dgcnn_forward.1}
  #allocation0 [shape = 'u32[]', space=smem, size = 0x4, offset = 0x4, fixed_abs, tag = 'smem constant byte address 0x4 - core index']
  #allocation1 [shape = 'u32[144,128]{1,0:T(1,128)}', space=vmem, size = 0x12000, scoped, tag = 'internal scratch']
  %s0 = inlined_call_operand.vmem [shape: f32[2,16,3], index: 0, kind: input, shape index: {}]
  %s1 = inlined_call_operand.vmem [shape: f32[3,64], index: 1, kind: input, shape index: {}]
  %s2 = inlined_call_operand.vmem [shape: f32[3,64], index: 2, kind: input, shape index: {}]
  %s3 = inlined_call_operand.vmem [shape: f32[1,64], index: 3, kind: input, shape index: {}]
  %s4 = inlined_call_operand.vmem [shape: bf16[64,64], index: 4, kind: input, shape index: {}]
  %s5 = inlined_call_operand.vmem [shape: f32[1,64], index: 5, kind: input, shape index: {}]
  %s6 = inlined_call_operand.vmem [shape: bf16[64,128], index: 6, kind: input, shape index: {}]
  %s7 = inlined_call_operand.vmem [shape: f32[1,128], index: 7, kind: input, shape index: {}]
  %s8 = inlined_call_operand.vmem [shape: bf16[128,256], index: 8, kind: input, shape index: {}]
  %s9 = inlined_call_operand.vmem [shape: f32[1,256], index: 9, kind: input, shape index: {}]
  %s10 = inlined_call_operand.vmem [shape: bf16[512,128], index: 10, kind: input, shape index: {}]
  %s11 = inlined_call_operand.vmem [shape: f32[1,128], index: 11, kind: input, shape index: {}]
  %s12 = inlined_call_operand.hbm [shape: f32[2,16,128], index: 12, kind: output, shape index: {}]
  %s13 = sld [smem:[#allocation0]]
  $region58: #{dgcnn_forward.1} parent=0
    _
  %s15 = ssub.s32 1, %s13
  %s16 = scalar_select 0, %s15, %s13
  $region1: #{dgcnn_forward.1} parent=0
    #allocation2 [shape = 'u8[16384]{0}', space=vmem, size = 0x4000, scoped, tag = 'output window, operand 0, single buffered']
    #allocation3 [shape = 's32[1]{0}', space=sflag, size = 0x4, scoped, tag = 'scoped memory for dgcnn_forward.1']
    %17 = vsyncpa [#allocation3], 0
    // Predicated region
    $region2: #{dgcnn_forward.1} parent=1 // pred_check
      _
    $region3: #{dgcnn_forward.1} parent=1 // pred_check_branch
      %19 = sbr.rel (0) target = $region5
    $region4: #{dgcnn_forward.1} parent=1 // pred_region
      _
    $region5: #{dgcnn_forward.1} parent=1 // pred_fallthru
      _
    // Predicated region
    $region6: #{dgcnn_forward.1} parent=1 // pred_check
      _
    $region7: #{dgcnn_forward.1} parent=1 // pred_check_branch
      %21 = sbr.rel (0) target = $region9
    $region8: #{dgcnn_forward.1} parent=1 // pred_region
      _
    $region9: #{dgcnn_forward.1} parent=1 // pred_fallthru
      _
    // Predicated region
    $region10: #{dgcnn_forward.1} parent=1 // pred_check
      _
    $region11: #{dgcnn_forward.1} parent=1 // pred_check_branch
      %23 = sbr.rel (0) target = $region13
    $region12: #{dgcnn_forward.1} parent=1 // pred_region
      _
    $region13: #{dgcnn_forward.1} parent=1 // pred_fallthru
      _
    // Predicated region
    $region14: #{dgcnn_forward.1} parent=1 // pred_check
      _
    $region15: #{dgcnn_forward.1} parent=1 // pred_check_branch
      %25 = sbr.rel (0) target = $region17
    $region16: #{dgcnn_forward.1} parent=1 // pred_region
      _
    $region17: #{dgcnn_forward.1} parent=1 // pred_fallthru
      _
    // Predicated region
    $region18: #{dgcnn_forward.1} parent=1 // pred_check
      _
    $region19: #{dgcnn_forward.1} parent=1 // pred_check_branch
      %27 = sbr.rel (0) target = $region21
    $region20: #{dgcnn_forward.1} parent=1 // pred_region
      _
    $region21: #{dgcnn_forward.1} parent=1 // pred_fallthru
      _
    // Predicated region
    $region22: #{dgcnn_forward.1} parent=1 // pred_check
      _
    $region23: #{dgcnn_forward.1} parent=1 // pred_check_branch
      %29 = sbr.rel (0) target = $region25
    $region24: #{dgcnn_forward.1} parent=1 // pred_region
      _
    $region25: #{dgcnn_forward.1} parent=1 // pred_fallthru
      _
    // Predicated region
    $region26: #{dgcnn_forward.1} parent=1 // pred_check
      _
    $region27: #{dgcnn_forward.1} parent=1 // pred_check_branch
      %31 = sbr.rel (0) target = $region29
    $region28: #{dgcnn_forward.1} parent=1 // pred_region
      _
    $region29: #{dgcnn_forward.1} parent=1 // pred_fallthru
      _
    // Predicated region
    $region30: #{dgcnn_forward.1} parent=1 // pred_check
      _
    $region31: #{dgcnn_forward.1} parent=1 // pred_check_branch
      %33 = sbr.rel (0) target = $region33
    $region32: #{dgcnn_forward.1} parent=1 // pred_region
      _
    $region33: #{dgcnn_forward.1} parent=1 // pred_fallthru
      _
    // Predicated region
    $region34: #{dgcnn_forward.1} parent=1 // pred_check
      _
    $region35: #{dgcnn_forward.1} parent=1 // pred_check_branch
      %35 = sbr.rel (0) target = $region37
    $region36: #{dgcnn_forward.1} parent=1 // pred_region
      _
    $region37: #{dgcnn_forward.1} parent=1 // pred_fallthru
      _
    // Predicated region
    $region38: #{dgcnn_forward.1} parent=1 // pred_check
      _
    $region39: #{dgcnn_forward.1} parent=1 // pred_check_branch
      %37 = sbr.rel (0) target = $region41
    $region40: #{dgcnn_forward.1} parent=1 // pred_region
      _
    $region41: #{dgcnn_forward.1} parent=1 // pred_fallthru
      _
    // Predicated region
    $region42: #{dgcnn_forward.1} parent=1 // pred_check
      _
    $region43: #{dgcnn_forward.1} parent=1 // pred_check_branch
      %39 = sbr.rel (0) target = $region45
    $region44: #{dgcnn_forward.1} parent=1 // pred_region
      _
    $region45: #{dgcnn_forward.1} parent=1 // pred_fallthru
      _
    // Predicated region
    $region46: #{dgcnn_forward.1} parent=1 // pred_check
      _
    $region47: #{dgcnn_forward.1} parent=1 // pred_check_branch
      %41 = sbr.rel (0) target = $region49
    $region48: #{dgcnn_forward.1} parent=1 // pred_region
      _
    $region49: #{dgcnn_forward.1} parent=1 // pred_fallthru
      _
    %v43 = vld [vmem:[%s1] sm:$0x7]
    %v44 = vld [vmem:[%s2] sm:$0x7]
    %v45 = vld [vmem:[%s3] sm:$0x1]
    %v46 = vld [vmem:[%s4] sm:$0xf]
    %v47 = vld [vmem:[%s4 + $0x4] sm:$0xf]
    %v48 = vld [vmem:[%s4 + $0x8] sm:$0xf]
    %v49 = vld [vmem:[%s4 + $0xc] sm:$0xf]
    %v50 = vld [vmem:[%s4 + $0x10] sm:$0xf]
    %v51 = vld [vmem:[%s4 + $0x14] sm:$0xf]
    %v52 = vld [vmem:[%s4 + $0x18] sm:$0xf]
    %v53 = vld [vmem:[%s4 + $0x1c] sm:$0xf]
    %v54 = vld [vmem:[%s5] sm:$0x1]
    %v55 = vld [vmem:[%s6] sm:$0xf]
    %v56 = vld [vmem:[%s6 + $0x4] sm:$0xf]
    %v57 = vld [vmem:[%s6 + $0x8] sm:$0xf]
    %v58 = vld [vmem:[%s6 + $0xc] sm:$0xf]
    %v59 = vld [vmem:[%s6 + $0x10] sm:$0xf]
    %v60 = vld [vmem:[%s6 + $0x14] sm:$0xf]
    %v61 = vld [vmem:[%s6 + $0x18] sm:$0xf]
    %v62 = vld [vmem:[%s6 + $0x1c] sm:$0xf]
    %v63 = vld [vmem:[%s7] sm:$0x1]
    %v64 = vld [vmem:[%s8] sm:$0xff]
    %v65 = vld [vmem:[%s8 + $0x8] sm:$0xff]
    %v66 = vld [vmem:[%s8 + $0x10] sm:$0xff]
    %v67 = vld [vmem:[%s8 + $0x18] sm:$0xff]
    %v68 = vld [vmem:[%s8 + $0x20] sm:$0xff]
    %v69 = vld [vmem:[%s8 + $0x28] sm:$0xff]
    %v70 = vld [vmem:[%s8 + $0x30] sm:$0xff]
    %v71 = vld [vmem:[%s8 + $0x38] sm:$0xff]
    %v72 = vld [vmem:[%s8 + $0x40] sm:$0xff]
    %v73 = vld [vmem:[%s8 + $0x48] sm:$0xff]
    %v74 = vld [vmem:[%s8 + $0x50] sm:$0xff]
    %v75 = vld [vmem:[%s8 + $0x58] sm:$0xff]
    %v76 = vld [vmem:[%s8 + $0x60] sm:$0xff]
    %v77 = vld [vmem:[%s8 + $0x68] sm:$0xff]
    %v78 = vld [vmem:[%s8 + $0x70] sm:$0xff]
    %v79 = vld [vmem:[%s8 + $0x78] sm:$0xff]
    %v80 = vld [vmem:[%s9] sm:$0x3]
    %v81 = vld [vmem:[%s10] sm:$0xf]
    %v82 = vld [vmem:[%s10 + $0x4] sm:$0xf]
    %v83 = vld [vmem:[%s10 + $0x8] sm:$0xf]
    %v84 = vld [vmem:[%s10 + $0xc] sm:$0xf]
    %v85 = vld [vmem:[%s10 + $0x10] sm:$0xf]
    %v86 = vld [vmem:[%s10 + $0x14] sm:$0xf]
    %v87 = vld [vmem:[%s10 + $0x18] sm:$0xf]
    %v88 = vld [vmem:[%s10 + $0x1c] sm:$0xf]
    %v89 = vld [vmem:[%s10 + $0x20] sm:$0xf]
    %v90 = vld [vmem:[%s10 + $0x24] sm:$0xf]
    %v91 = vld [vmem:[%s10 + $0x28] sm:$0xf]
    %v92 = vld [vmem:[%s10 + $0x2c] sm:$0xf]
    %v93 = vld [vmem:[%s10 + $0x30] sm:$0xf]
    %v94 = vld [vmem:[%s10 + $0x34] sm:$0xf]
    %v95 = vld [vmem:[%s10 + $0x38] sm:$0xf]
    %v96 = vld [vmem:[%s10 + $0x3c] sm:$0xf]
    %v97 = vld [vmem:[%s10 + $0x40] sm:$0xf]
    %v98 = vld [vmem:[%s10 + $0x44] sm:$0xf]
    %v99 = vld [vmem:[%s10 + $0x48] sm:$0xf]
    %v100 = vld [vmem:[%s10 + $0x4c] sm:$0xf]
    %v101 = vld [vmem:[%s10 + $0x50] sm:$0xf]
    %v102 = vld [vmem:[%s10 + $0x54] sm:$0xf]
    %v103 = vld [vmem:[%s10 + $0x58] sm:$0xf]
    %v104 = vld [vmem:[%s10 + $0x5c] sm:$0xf]
    %v105 = vld [vmem:[%s10 + $0x60] sm:$0xf]
    %v106 = vld [vmem:[%s10 + $0x64] sm:$0xf]
    %v107 = vld [vmem:[%s10 + $0x68] sm:$0xf]
    %v108 = vld [vmem:[%s10 + $0x6c] sm:$0xf]
    %v109 = vld [vmem:[%s10 + $0x70] sm:$0xf]
    %v110 = vld [vmem:[%s10 + $0x74] sm:$0xf]
    %v111 = vld [vmem:[%s10 + $0x78] sm:$0xf]
    %v112 = vld [vmem:[%s10 + $0x7c] sm:$0xf]
    %v113 = vld [vmem:[%s10 + $0x80] sm:$0xf]
    %v114 = vld [vmem:[%s10 + $0x84] sm:$0xf]
    %v115 = vld [vmem:[%s10 + $0x88] sm:$0xf]
    %v116 = vld [vmem:[%s10 + $0x8c] sm:$0xf]
    %v117 = vld [vmem:[%s10 + $0x90] sm:$0xf]
    %v118 = vld [vmem:[%s10 + $0x94] sm:$0xf]
    %v119 = vld [vmem:[%s10 + $0x98] sm:$0xf]
    %v120 = vld [vmem:[%s10 + $0x9c] sm:$0xf]
    %v121 = vld [vmem:[%s10 + $0xa0] sm:$0xf]
    %v122 = vld [vmem:[%s10 + $0xa4] sm:$0xf]
    %v123 = vld [vmem:[%s10 + $0xa8] sm:$0xf]
    %v124 = vld [vmem:[%s10 + $0xac] sm:$0xf]
    %v125 = vld [vmem:[%s10 + $0xb0] sm:$0xf]
    %v126 = vld [vmem:[%s10 + $0xb4] sm:$0xf]
    %v127 = vld [vmem:[%s10 + $0xb8] sm:$0xf]
    %v128 = vld [vmem:[%s10 + $0xbc] sm:$0xf]
    %v129 = vld [vmem:[%s10 + $0xc0] sm:$0xf]
    %v130 = vld [vmem:[%s10 + $0xc4] sm:$0xf]
    %v131 = vld [vmem:[%s10 + $0xc8] sm:$0xf]
    %v132 = vld [vmem:[%s10 + $0xcc] sm:$0xf]
    %v133 = vld [vmem:[%s10 + $0xd0] sm:$0xf]
    %v134 = vld [vmem:[%s10 + $0xd4] sm:$0xf]
    %v135 = vld [vmem:[%s10 + $0xd8] sm:$0xf]
    %v136 = vld [vmem:[%s10 + $0xdc] sm:$0xf]
    %v137 = vld [vmem:[%s10 + $0xe0] sm:$0xf]
    %v138 = vld [vmem:[%s10 + $0xe4] sm:$0xf]
    %v139 = vld [vmem:[%s10 + $0xe8] sm:$0xf]
    %v140 = vld [vmem:[%s10 + $0xec] sm:$0xf]
    %v141 = vld [vmem:[%s10 + $0xf0] sm:$0xf]
    %v142 = vld [vmem:[%s10 + $0xf4] sm:$0xf]
    %v143 = vld [vmem:[%s10 + $0xf8] sm:$0xf]
    %v144 = vld [vmem:[%s10 + $0xfc] sm:$0xf]
    %v145 = vld [vmem:[%s11] sm:$0x1]
    %v146 = vlaneseq
    %v147 = vand.u32 %v146, 127
    %v148 = vcvt.s32.f32 %v147
    %v149 = vld [vmem:[%s0] sm:$0xff]
    %v150 = vld [vmem:[%s0 + $0x8] sm:$0xff]
    %vm151 = vcmask 23552
    %v153 = vsel %vm151, %v149, 0
    %v156 = vsel %vm151, %v150, 0
    %vm158 = vcmask 1042432
    %v160 = vsel %vm158, %v43, 0
    %162 = vmatprep.subr.mxu0 0.0
    %v163 = vand.u32 %v160, 4294901760
    %164 = vmatpush1.msra.mxu0 %v163
    %165 = vmatprep.subr.mxu0 0.0
    %166 = vmatpush1.msra.mxu0 0.0
    %167 = vmatprep.subr.mxu0 0.0
    %168 = vmatpush1.msra.mxu0 0.0
    %169 = vmatprep.subr.mxu0 0.0
    %170 = vmatpush1.msra.mxu0 0.0
    %171 = vmatprep.subr.mxu0 0.0
    %172 = vmatpush1.msra.mxu0 0.0
    %173 = vmatprep.subr.mxu0 0.0
    %174 = vmatpush1.msra.mxu0 0.0
    %175 = vmatprep.subr.mxu0 0.0
    %176 = vmatpush1.msra.mxu0 0.0
    %177 = vmatprep.subr.mxu0 0.0
    %178 = vmatpush1.msra.mxu0 0.0
    %179 = vmatprep.subr.mxu0 0.0
    %180 = vmatpush1.msra.mxu0 0.0
    %181 = vmatprep.subr.mxu0 0.0
    %182 = vmatpush1.msra.mxu0 0.0
    %183 = vmatprep.subr.mxu0 0.0
    %184 = vmatpush1.msra.mxu0 0.0
    %185 = vmatprep.subr.mxu0 0.0
    %186 = vmatpush1.msra.mxu0 0.0
    %187 = vmatprep.subr.mxu0 0.0
    %188 = vmatpush1.msra.mxu0 0.0
    %189 = vmatprep.subr.mxu0 0.0
    %190 = vmatpush1.msra.mxu0 0.0
    %191 = vmatprep.subr.mxu0 0.0
    %192 = vmatpush1.msra.mxu0 0.0
    %193 = vmatprep.subr.mxu0 0.0
    %194 = vmatpush1.msra.mxu0 0.0
    %195 = vmatprep.subr.mxu0 0.0
    %196 = vmatpush1.msra.mxu0 0.0
    %197 = vmatprep.subr.mxu0 0.0
    %198 = vmatpush1.msra.mxu0 0.0
    %199 = vmatprep.subr.mxu0 0.0
    %200 = vmatpush1.msra.mxu0 0.0
    %201 = vmatprep.subr.mxu0 0.0
    %202 = vmatpush1.msra.mxu0 0.0
    %203 = vmatprep.subr.mxu0 0.0
    %204 = vmatpush1.msra.mxu0 0.0
    %205 = vmatprep.subr.mxu0 0.0
    %206 = vmatpush1.msra.mxu0 0.0
    %207 = vmatprep.subr.mxu0 0.0
    %208 = vmatpush1.msra.mxu0 0.0
    %209 = vmatprep.subr.mxu0 0.0
    %210 = vmatpush1.msra.mxu0 0.0
    %211 = vmatprep.subr.mxu0 0.0
    %212 = vmatpush1.msra.mxu0 0.0
    %213 = vmatprep.subr.mxu0 0.0
    %214 = vmatpush1.msra.mxu0 0.0
    %215 = vmatprep.subr.mxu0 0.0
    %216 = vmatpush1.msra.mxu0 0.0
    %217 = vmatprep.subr.mxu0 0.0
    %218 = vmatpush1.msra.mxu0 0.0
    %219 = vmatprep.subr.mxu0 0.0
    %220 = vmatpush1.msra.mxu0 0.0
    %221 = vmatprep.subr.mxu0 0.0
    %222 = vmatpush1.msra.mxu0 0.0
    %223 = vmatprep.subr.mxu0 0.0
    %224 = vmatpush1.msra.mxu0 0.0
    %225 = vmatprep.subr.mxu0 0.0
    %226 = vmatpush1.msra.mxu0 0.0
    %227 = vmatprep.mubr.f32.mxu0 0.0
    %v228 = vand.u32 %v153, 4294901760
    %v229 = vsub.f32 %v153, %v228
    %v230 = vand.u32 %v229, 4294901760
    %v231 = vsub.f32 %v229, %v230
    %v232 = vand.u32 %v231, 4294901760
    %233 = vmatmul.mubr.f32.gmra.mrb[0].mxu0 %v232
    %v234 = vpop.f32.mrb[0].mxu0
    %v235 = vadd.f32 0.0, %v234
    %v236 = vpop.f32.mrb[0].mxu0
    %237 = vmatprep.mubr.f32.mxu0 0.0
    %v238 = vand.u32 %v156, 4294901760
    %v239 = vsub.f32 %v156, %v238
    %v240 = vand.u32 %v239, 4294901760
    %v241 = vsub.f32 %v239, %v240
    %v242 = vand.u32 %v241, 4294901760
    %243 = vmatmul.mubr.f32.gmra.mrb[0].mxu0 %v242
    %v244 = vpop.f32.mrb[0].mxu0
    %v245 = vadd.f32 0.0, %v244
    %v246 = vpop.f32.mrb[0].mxu0
    %247 = vdwg.mxu0
    %248 = vmatprep.subr.mxu0 0.0
    %v249 = vand.u32 %v160, 4294901760
    %v250 = vsub.f32 %v160, %v249
    %v251 = vand.u32 %v250, 4294901760
    %v252 = vsub.f32 %v250, %v251
    %v253 = vand.u32 %v252, 4294901760
    %254 = vmatpush1.msra.mxu0 %v253
    %255 = vmatprep.subr.mxu0 0.0
    %256 = vmatpush1.msra.mxu0 0.0
    %257 = vmatprep.subr.mxu0 0.0
    %258 = vmatpush1.msra.mxu0 0.0
    %259 = vmatprep.subr.mxu0 0.0
    %260 = vmatpush1.msra.mxu0 0.0
    %261 = vmatprep.subr.mxu0 0.0
    %262 = vmatpush1.msra.mxu0 0.0
    %263 = vmatprep.subr.mxu0 0.0
    %264 = vmatpush1.msra.mxu0 0.0
    %265 = vmatprep.subr.mxu0 0.0
    %266 = vmatpush1.msra.mxu0 0.0
    %267 = vmatprep.subr.mxu0 0.0
    %268 = vmatpush1.msra.mxu0 0.0
    %269 = vmatprep.subr.mxu0 0.0
    %270 = vmatpush1.msra.mxu0 0.0
    %271 = vmatprep.subr.mxu0 0.0
    %272 = vmatpush1.msra.mxu0 0.0
    %273 = vmatprep.subr.mxu0 0.0
    %274 = vmatpush1.msra.mxu0 0.0
    %275 = vmatprep.subr.mxu0 0.0
    %276 = vmatpush1.msra.mxu0 0.0
    %277 = vmatprep.subr.mxu0 0.0
    %278 = vmatpush1.msra.mxu0 0.0
    %279 = vmatprep.subr.mxu0 0.0
    %280 = vmatpush1.msra.mxu0 0.0
    %281 = vmatprep.subr.mxu0 0.0
    %282 = vmatpush1.msra.mxu0 0.0
    %283 = vmatprep.subr.mxu0 0.0
    %284 = vmatpush1.msra.mxu0 0.0
    %285 = vmatprep.subr.mxu0 0.0
    %286 = vmatpush1.msra.mxu0 0.0
    %287 = vmatprep.subr.mxu0 0.0
    %288 = vmatpush1.msra.mxu0 0.0
    %289 = vmatprep.subr.mxu0 0.0
    %290 = vmatpush1.msra.mxu0 0.0
    %291 = vmatprep.subr.mxu0 0.0
    %292 = vmatpush1.msra.mxu0 0.0
    %293 = vmatprep.subr.mxu0 0.0
    %294 = vmatpush1.msra.mxu0 0.0
    %295 = vmatprep.subr.mxu0 0.0
    %296 = vmatpush1.msra.mxu0 0.0
    %297 = vmatprep.subr.mxu0 0.0
    %298 = vmatpush1.msra.mxu0 0.0
    %299 = vmatprep.subr.mxu0 0.0
    %300 = vmatpush1.msra.mxu0 0.0
    %301 = vmatprep.subr.mxu0 0.0
    %302 = vmatpush1.msra.mxu0 0.0
    %303 = vmatprep.subr.mxu0 0.0
    %304 = vmatpush1.msra.mxu0 0.0
    %305 = vmatprep.subr.mxu0 0.0
    %306 = vmatpush1.msra.mxu0 0.0
    %307 = vmatprep.subr.mxu0 0.0
    %308 = vmatpush1.msra.mxu0 0.0
    %309 = vmatprep.subr.mxu0 0.0
    %310 = vmatpush1.msra.mxu0 0.0
    %311 = vmatprep.subr.mxu0 0.0
    %312 = vmatpush1.msra.mxu0 0.0
    %313 = vmatprep.subr.mxu0 0.0
    %314 = vmatpush1.msra.mxu0 0.0
    %315 = vmatprep.subr.mxu0 0.0
    %316 = vmatpush1.msra.mxu0 0.0
    %317 = vmatprep.mubr.f32.mxu0 0.0
    %v318 = vand.u32 %v153, 4294901760
    %319 = vmatmul.mubr.f32.gmra.mrb[0].mxu0 %v318
    %v320 = vpop.f32.mrb[0].mxu0
    %v321 = vadd.f32 %v235, %v320
    %v322 = vpop.f32.mrb[0].mxu0
    %323 = vmatprep.mubr.f32.mxu0 0.0
    %v324 = vand.u32 %v156, 4294901760
    %325 = vmatmul.mubr.f32.gmra.mrb[0].mxu0 %v324
    %v326 = vpop.f32.mrb[0].mxu0
    %v327 = vadd.f32 %v245, %v326
    %v328 = vpop.f32.mrb[0].mxu0
    %329 = vdwg.mxu0
    %330 = vmatprep.subr.mxu0 0.0
    %v331 = vand.u32 %v160, 4294901760
    %v332 = vsub.f32 %v160, %v331
    %333 = vmatpush1.msra.mxu0 %v332
    %334 = vmatprep.subr.mxu0 0.0
    %335 = vmatpush1.msra.mxu0 0.0
    %336 = vmatprep.subr.mxu0 0.0
    %337 = vmatpush1.msra.mxu0 0.0
    %338 = vmatprep.subr.mxu0 0.0
    %339 = vmatpush1.msra.mxu0 0.0
    %340 = vmatprep.subr.mxu0 0.0
    %341 = vmatpush1.msra.mxu0 0.0
    %342 = vmatprep.subr.mxu0 0.0
    %343 = vmatpush1.msra.mxu0 0.0
    %344 = vmatprep.subr.mxu0 0.0
    %345 = vmatpush1.msra.mxu0 0.0
    %346 = vmatprep.subr.mxu0 0.0
    %347 = vmatpush1.msra.mxu0 0.0
    %348 = vmatprep.subr.mxu0 0.0
    %349 = vmatpush1.msra.mxu0 0.0
    %350 = vmatprep.subr.mxu0 0.0
    %351 = vmatpush1.msra.mxu0 0.0
    %352 = vmatprep.subr.mxu0 0.0
    %353 = vmatpush1.msra.mxu0 0.0
    %354 = vmatprep.subr.mxu0 0.0
    %355 = vmatpush1.msra.mxu0 0.0
    %356 = vmatprep.subr.mxu0 0.0
    %357 = vmatpush1.msra.mxu0 0.0
    %358 = vmatprep.subr.mxu0 0.0
    %359 = vmatpush1.msra.mxu0 0.0
    %360 = vmatprep.subr.mxu0 0.0
    %361 = vmatpush1.msra.mxu0 0.0
    %362 = vmatprep.subr.mxu0 0.0
    %363 = vmatpush1.msra.mxu0 0.0
    %364 = vmatprep.subr.mxu0 0.0
    %365 = vmatpush1.msra.mxu0 0.0
    %366 = vmatprep.subr.mxu0 0.0
    %367 = vmatpush1.msra.mxu0 0.0
    %368 = vmatprep.subr.mxu0 0.0
    %369 = vmatpush1.msra.mxu0 0.0
    %370 = vmatprep.subr.mxu0 0.0
    %371 = vmatpush1.msra.mxu0 0.0
    %372 = vmatprep.subr.mxu0 0.0
    %373 = vmatpush1.msra.mxu0 0.0
    %374 = vmatprep.subr.mxu0 0.0
    %375 = vmatpush1.msra.mxu0 0.0
    %376 = vmatprep.subr.mxu0 0.0
    %377 = vmatpush1.msra.mxu0 0.0
    %378 = vmatprep.subr.mxu0 0.0
    %379 = vmatpush1.msra.mxu0 0.0
    %380 = vmatprep.subr.mxu0 0.0
    %381 = vmatpush1.msra.mxu0 0.0
    %382 = vmatprep.subr.mxu0 0.0
    %383 = vmatpush1.msra.mxu0 0.0
    %384 = vmatprep.subr.mxu0 0.0
    %385 = vmatpush1.msra.mxu0 0.0
    %386 = vmatprep.subr.mxu0 0.0
    %387 = vmatpush1.msra.mxu0 0.0
    %388 = vmatprep.subr.mxu0 0.0
    %389 = vmatpush1.msra.mxu0 0.0
    %390 = vmatprep.subr.mxu0 0.0
    %391 = vmatpush1.msra.mxu0 0.0
    %392 = vmatprep.subr.mxu0 0.0
    %393 = vmatpush1.msra.mxu0 0.0
    %394 = vmatprep.subr.mxu0 0.0
    %395 = vmatpush1.msra.mxu0 0.0
    %396 = vmatprep.mubr.f32.mxu0 0.0
    %v397 = vand.u32 %v153, 4294901760
    %v398 = vsub.f32 %v153, %v397
    %399 = vmatmul.mubr.f32.gmra.mrb[0].mxu0 %v398
    %v400 = vpop.f32.mrb[0].mxu0
    %v401 = vadd.f32 %v321, %v400
    %v402 = vpop.f32.mrb[0].mxu0
    %403 = vmatprep.mubr.f32.mxu0 0.0
    %v404 = vand.u32 %v156, 4294901760
    %v405 = vsub.f32 %v156, %v404
    %406 = vmatmul.mubr.f32.gmra.mrb[0].mxu0 %v405
    %v407 = vpop.f32.mrb[0].mxu0
    %v408 = vadd.f32 %v327, %v407
    %v409 = vpop.f32.mrb[0].mxu0
    %410 = vdwg.mxu0
    %411 = vmatprep.subr.mxu0 0.0
    %v412 = vand.u32 %v160, 4294901760
    %413 = vmatpush1.msra.mxu0 %v412
    %414 = vmatprep.subr.mxu0 0.0
    %415 = vmatpush1.msra.mxu0 0.0
    %416 = vmatprep.subr.mxu0 0.0
    %417 = vmatpush1.msra.mxu0 0.0
    %418 = vmatprep.subr.mxu0 0.0
    %419 = vmatpush1.msra.mxu0 0.0
    %420 = vmatprep.subr.mxu0 0.0
    %421 = vmatpush1.msra.mxu0 0.0
    %422 = vmatprep.subr.mxu0 0.0
    %423 = vmatpush1.msra.mxu0 0.0
    %424 = vmatprep.subr.mxu0 0.0
    %425 = vmatpush1.msra.mxu0 0.0
    %426 = vmatprep.subr.mxu0 0.0
    %427 = vmatpush1.msra.mxu0 0.0
    %428 = vmatprep.subr.mxu0 0.0
    %429 = vmatpush1.msra.mxu0 0.0
    %430 = vmatprep.subr.mxu0 0.0
    %431 = vmatpush1.msra.mxu0 0.0
    %432 = vmatprep.subr.mxu0 0.0
    %433 = vmatpush1.msra.mxu0 0.0
    %434 = vmatprep.subr.mxu0 0.0
    %435 = vmatpush1.msra.mxu0 0.0
    %436 = vmatprep.subr.mxu0 0.0
    %437 = vmatpush1.msra.mxu0 0.0
    %438 = vmatprep.subr.mxu0 0.0
    %439 = vmatpush1.msra.mxu0 0.0
    %440 = vmatprep.subr.mxu0 0.0
    %441 = vmatpush1.msra.mxu0 0.0
    %442 = vmatprep.subr.mxu0 0.0
    %443 = vmatpush1.msra.mxu0 0.0
    %444 = vmatprep.subr.mxu0 0.0
    %445 = vmatpush1.msra.mxu0 0.0
    %446 = vmatprep.subr.mxu0 0.0
    %447 = vmatpush1.msra.mxu0 0.0
    %448 = vmatprep.subr.mxu0 0.0
    %449 = vmatpush1.msra.mxu0 0.0
    %450 = vmatprep.subr.mxu0 0.0
    %451 = vmatpush1.msra.mxu0 0.0
    %452 = vmatprep.subr.mxu0 0.0
    %453 = vmatpush1.msra.mxu0 0.0
    %454 = vmatprep.subr.mxu0 0.0
    %455 = vmatpush1.msra.mxu0 0.0
    %456 = vmatprep.subr.mxu0 0.0
    %457 = vmatpush1.msra.mxu0 0.0
    %458 = vmatprep.subr.mxu0 0.0
    %459 = vmatpush1.msra.mxu0 0.0
    %460 = vmatprep.subr.mxu0 0.0
    %461 = vmatpush1.msra.mxu0 0.0
    %462 = vmatprep.subr.mxu0 0.0
    %463 = vmatpush1.msra.mxu0 0.0
    %464 = vmatprep.subr.mxu0 0.0
    %465 = vmatpush1.msra.mxu0 0.0
    %466 = vmatprep.subr.mxu0 0.0
    %467 = vmatpush1.msra.mxu0 0.0
    %468 = vmatprep.subr.mxu0 0.0
    %469 = vmatpush1.msra.mxu0 0.0
    %470 = vmatprep.subr.mxu0 0.0
    %471 = vmatpush1.msra.mxu0 0.0
    %472 = vmatprep.subr.mxu0 0.0
    %473 = vmatpush1.msra.mxu0 0.0
    %474 = vmatprep.subr.mxu0 0.0
    %475 = vmatpush1.msra.mxu0 0.0
    %476 = vmatprep.mubr.f32.mxu0 0.0
    %v477 = vand.u32 %v153, 4294901760
    %v478 = vsub.f32 %v153, %v477
    %v479 = vand.u32 %v478, 4294901760
    %480 = vmatmul.mubr.f32.gmra.mrb[0].mxu0 %v479
    %v481 = vpop.f32.mrb[0].mxu0
    %v482 = vadd.f32 %v401, %v481
    %v483 = vpop.f32.mrb[0].mxu0
    %484 = vmatprep.mubr.f32.mxu0 0.0
    %v485 = vand.u32 %v156, 4294901760
    %v486 = vsub.f32 %v156, %v485
    %v487 = vand.u32 %v486, 4294901760
    %488 = vmatmul.mubr.f32.gmra.mrb[0].mxu0 %v487
    %v489 = vpop.f32.mrb[0].mxu0
    %v490 = vadd.f32 %v408, %v489
    %v491 = vpop.f32.mrb[0].mxu0
    %492 = vdwg.mxu0
    %493 = vmatprep.subr.mxu0 0.0
    %v494 = vand.u32 %v160, 4294901760
    %v495 = vsub.f32 %v160, %v494
    %v496 = vand.u32 %v495, 4294901760
    %497 = vmatpush1.msra.mxu0 %v496
    %498 = vmatprep.subr.mxu0 0.0
    %499 = vmatpush1.msra.mxu0 0.0
    %500 = vmatprep.subr.mxu0 0.0
    %501 = vmatpush1.msra.mxu0 0.0
    %502 = vmatprep.subr.mxu0 0.0
    %503 = vmatpush1.msra.mxu0 0.0
    %504 = vmatprep.subr.mxu0 0.0
    %505 = vmatpush1.msra.mxu0 0.0
    %506 = vmatprep.subr.mxu0 0.0
    %507 = vmatpush1.msra.mxu0 0.0
    %508 = vmatprep.subr.mxu0 0.0
    %509 = vmatpush1.msra.mxu0 0.0
    %510 = vmatprep.subr.mxu0 0.0
    %511 = vmatpush1.msra.mxu0 0.0
    %512 = vmatprep.subr.mxu0 0.0
    %513 = vmatpush1.msra.mxu0 0.0
    %514 = vmatprep.subr.mxu0 0.0
    %515 = vmatpush1.msra.mxu0 0.0
    %516 = vmatprep.subr.mxu0 0.0
    %517 = vmatpush1.msra.mxu0 0.0
    %518 = vmatprep.subr.mxu0 0.0
    %519 = vmatpush1.msra.mxu0 0.0
    %520 = vmatprep.subr.mxu0 0.0
    %521 = vmatpush1.msra.mxu0 0.0
    %522 = vmatprep.subr.mxu0 0.0
    %523 = vmatpush1.msra.mxu0 0.0
    %524 = vmatprep.subr.mxu0 0.0
    %525 = vmatpush1.msra.mxu0 0.0
    %526 = vmatprep.subr.mxu0 0.0
    %527 = vmatpush1.msra.mxu0 0.0
    %528 = vmatprep.subr.mxu0 0.0
    %529 = vmatpush1.msra.mxu0 0.0
    %530 = vmatprep.subr.mxu0 0.0
    %531 = vmatpush1.msra.mxu0 0.0
    %532 = vmatprep.subr.mxu0 0.0
    %533 = vmatpush1.msra.mxu0 0.0
    %534 = vmatprep.subr.mxu0 0.0
    %535 = vmatpush1.msra.mxu0 0.0
    %536 = vmatprep.subr.mxu0 0.0
    %537 = vmatpush1.msra.mxu0 0.0
    %538 = vmatprep.subr.mxu0 0.0
    %539 = vmatpush1.msra.mxu0 0.0
    %540 = vmatprep.subr.mxu0 0.0
    %541 = vmatpush1.msra.mxu0 0.0
    %542 = vmatprep.subr.mxu0 0.0
    %543 = vmatpush1.msra.mxu0 0.0
    %544 = vmatprep.subr.mxu0 0.0
    %545 = vmatpush1.msra.mxu0 0.0
    %546 = vmatprep.subr.mxu0 0.0
    %547 = vmatpush1.msra.mxu0 0.0
    %548 = vmatprep.subr.mxu0 0.0
    %549 = vmatpush1.msra.mxu0 0.0
    %550 = vmatprep.subr.mxu0 0.0
    %551 = vmatpush1.msra.mxu0 0.0
    %552 = vmatprep.subr.mxu0 0.0
    %553 = vmatpush1.msra.mxu0 0.0
    %554 = vmatprep.subr.mxu0 0.0
    %555 = vmatpush1.msra.mxu0 0.0
    %556 = vmatprep.subr.mxu0 0.0
    %557 = vmatpush1.msra.mxu0 0.0
    %558 = vmatprep.subr.mxu0 0.0
    %559 = vmatpush1.msra.mxu0 0.0
    %560 = vmatprep.mubr.f32.mxu0 0.0
    %v561 = vand.u32 %v153, 4294901760
    %562 = vmatmul.mubr.f32.gmra.mrb[0].mxu0 %v561
    %v563 = vpop.f32.mrb[0].mxu0
    %v564 = vadd.f32 %v482, %v563
    %v565 = vpop.f32.mrb[0].mxu0
    %566 = vmatprep.mubr.f32.mxu0 0.0
    %v567 = vand.u32 %v156, 4294901760
    %568 = vmatmul.mubr.f32.gmra.mrb[0].mxu0 %v567
    %v569 = vpop.f32.mrb[0].mxu0
    %v570 = vadd.f32 %v490, %v569
    %v571 = vpop.f32.mrb[0].mxu0
    %572 = vdwg.mxu0
    %573 = vmatprep.subr.mxu0 0.0
    %v574 = vand.u32 %v160, 4294901760
    %575 = vmatpush1.msra.mxu0 %v574
    %576 = vmatprep.subr.mxu0 0.0
    %577 = vmatpush1.msra.mxu0 0.0
    %578 = vmatprep.subr.mxu0 0.0
    %579 = vmatpush1.msra.mxu0 0.0
    %580 = vmatprep.subr.mxu0 0.0
    %581 = vmatpush1.msra.mxu0 0.0
    %582 = vmatprep.subr.mxu0 0.0
    %583 = vmatpush1.msra.mxu0 0.0
    %584 = vmatprep.subr.mxu0 0.0
    %585 = vmatpush1.msra.mxu0 0.0
    %586 = vmatprep.subr.mxu0 0.0
    %587 = vmatpush1.msra.mxu0 0.0
    %588 = vmatprep.subr.mxu0 0.0
    %589 = vmatpush1.msra.mxu0 0.0
    %590 = vmatprep.subr.mxu0 0.0
    %591 = vmatpush1.msra.mxu0 0.0
    %592 = vmatprep.subr.mxu0 0.0
    %593 = vmatpush1.msra.mxu0 0.0
    %594 = vmatprep.subr.mxu0 0.0
    %595 = vmatpush1.msra.mxu0 0.0
    %596 = vmatprep.subr.mxu0 0.0
    %597 = vmatpush1.msra.mxu0 0.0
    %598 = vmatprep.subr.mxu0 0.0
    %599 = vmatpush1.msra.mxu0 0.0
    %600 = vmatprep.subr.mxu0 0.0
    %601 = vmatpush1.msra.mxu0 0.0
    %602 = vmatprep.subr.mxu0 0.0
    %603 = vmatpush1.msra.mxu0 0.0
    %604 = vmatprep.subr.mxu0 0.0
    %605 = vmatpush1.msra.mxu0 0.0
    %606 = vmatprep.subr.mxu0 0.0
    %607 = vmatpush1.msra.mxu0 0.0
    %608 = vmatprep.subr.mxu0 0.0
    %609 = vmatpush1.msra.mxu0 0.0
    %610 = vmatprep.subr.mxu0 0.0
    %611 = vmatpush1.msra.mxu0 0.0
    %612 = vmatprep.subr.mxu0 0.0
    %613 = vmatpush1.msra.mxu0 0.0
    %614 = vmatprep.subr.mxu0 0.0
    %615 = vmatpush1.msra.mxu0 0.0
    %616 = vmatprep.subr.mxu0 0.0
    %617 = vmatpush1.msra.mxu0 0.0
    %618 = vmatprep.subr.mxu0 0.0
    %619 = vmatpush1.msra.mxu0 0.0
    %620 = vmatprep.subr.mxu0 0.0
    %621 = vmatpush1.msra.mxu0 0.0
    %622 = vmatprep.subr.mxu0 0.0
    %623 = vmatpush1.msra.mxu0 0.0
    %624 = vmatprep.subr.mxu0 0.0
    %625 = vmatpush1.msra.mxu0 0.0
    %626 = vmatprep.subr.mxu0 0.0
    %627 = vmatpush1.msra.mxu0 0.0
    %628 = vmatprep.subr.mxu0 0.0
    %629 = vmatpush1.msra.mxu0 0.0
    %630 = vmatprep.subr.mxu0 0.0
    %631 = vmatpush1.msra.mxu0 0.0
    %632 = vmatprep.subr.mxu0 0.0
    %633 = vmatpush1.msra.mxu0 0.0
    %634 = vmatprep.subr.mxu0 0.0
    %635 = vmatpush1.msra.mxu0 0.0
    %636 = vmatprep.subr.mxu0 0.0
    %637 = vmatpush1.msra.mxu0 0.0
    %638 = vmatprep.mubr.f32.mxu0 0.0
    %v639 = vand.u32 %v153, 4294901760
    %640 = vmatmul.mubr.f32.gmra.mrb[0].mxu0 %v639
    %v641 = vpop.f32.mrb[0].mxu0
    %v642 = vadd.f32 %v564, %v641
    %v643 = vpop.f32.mrb[0].mxu0
    %644 = vmatprep.mubr.f32.mxu0 0.0
    %v645 = vand.u32 %v156, 4294901760
    %646 = vmatmul.mubr.f32.gmra.mrb[0].mxu0 %v645
    %v647 = vpop.f32.mrb[0].mxu0
    %v648 = vadd.f32 %v570, %v647
    %v649 = vpop.f32.mrb[0].mxu0
    %650 = vdwg.mxu0
    %v652 = vsel %vm158, %v44, 0
    %654 = vmatprep.subr.mxu0 0.0
    %v655 = vand.u32 %v652, 4294901760
    %656 = vmatpush1.msra.mxu0 %v655
    %657 = vmatprep.subr.mxu0 0.0
    %658 = vmatpush1.msra.mxu0 0.0
    %659 = vmatprep.subr.mxu0 0.0
    %660 = vmatpush1.msra.mxu0 0.0
    %661 = vmatprep.subr.mxu0 0.0
    %662 = vmatpush1.msra.mxu0 0.0
    %663 = vmatprep.subr.mxu0 0.0
    %664 = vmatpush1.msra.mxu0 0.0
    %665 = vmatprep.subr.mxu0 0.0
    %666 = vmatpush1.msra.mxu0 0.0
    %667 = vmatprep.subr.mxu0 0.0
    %668 = vmatpush1.msra.mxu0 0.0
    %669 = vmatprep.subr.mxu0 0.0
    %670 = vmatpush1.msra.mxu0 0.0
    %671 = vmatprep.subr.mxu0 0.0
    %672 = vmatpush1.msra.mxu0 0.0
    %673 = vmatprep.subr.mxu0 0.0
    %674 = vmatpush1.msra.mxu0 0.0
    %675 = vmatprep.subr.mxu0 0.0
    %676 = vmatpush1.msra.mxu0 0.0
    %677 = vmatprep.subr.mxu0 0.0
    %678 = vmatpush1.msra.mxu0 0.0
    %679 = vmatprep.subr.mxu0 0.0
    %680 = vmatpush1.msra.mxu0 0.0
    %681 = vmatprep.subr.mxu0 0.0
    %682 = vmatpush1.msra.mxu0 0.0
    %683 = vmatprep.subr.mxu0 0.0
    %684 = vmatpush1.msra.mxu0 0.0
    %685 = vmatprep.subr.mxu0 0.0
    %686 = vmatpush1.msra.mxu0 0.0
    %687 = vmatprep.subr.mxu0 0.0
    %688 = vmatpush1.msra.mxu0 0.0
    %689 = vmatprep.subr.mxu0 0.0
    %690 = vmatpush1.msra.mxu0 0.0
    %691 = vmatprep.subr.mxu0 0.0
    %692 = vmatpush1.msra.mxu0 0.0
    %693 = vmatprep.subr.mxu0 0.0
    %694 = vmatpush1.msra.mxu0 0.0
    %695 = vmatprep.subr.mxu0 0.0
    %696 = vmatpush1.msra.mxu0 0.0
    %697 = vmatprep.subr.mxu0 0.0
    %698 = vmatpush1.msra.mxu0 0.0
    %699 = vmatprep.subr.mxu0 0.0
    %700 = vmatpush1.msra.mxu0 0.0
    %701 = vmatprep.subr.mxu0 0.0
    %702 = vmatpush1.msra.mxu0 0.0
    %703 = vmatprep.subr.mxu0 0.0
    %704 = vmatpush1.msra.mxu0 0.0
    %705 = vmatprep.subr.mxu0 0.0
    %706 = vmatpush1.msra.mxu0 0.0
    %707 = vmatprep.subr.mxu0 0.0
    %708 = vmatpush1.msra.mxu0 0.0
    %709 = vmatprep.subr.mxu0 0.0
    %710 = vmatpush1.msra.mxu0 0.0
    %711 = vmatprep.subr.mxu0 0.0
    %712 = vmatpush1.msra.mxu0 0.0
    %713 = vmatprep.subr.mxu0 0.0
    %714 = vmatpush1.msra.mxu0 0.0
    %715 = vmatprep.subr.mxu0 0.0
    %716 = vmatpush1.msra.mxu0 0.0
    %717 = vmatprep.subr.mxu0 0.0
    %718 = vmatpush1.msra.mxu0 0.0
    %719 = vmatprep.mubr.f32.mxu0 0.0
    %v720 = vand.u32 %v153, 4294901760
    %v721 = vsub.f32 %v153, %v720
    %v722 = vand.u32 %v721, 4294901760
    %v723 = vsub.f32 %v721, %v722
    %v724 = vand.u32 %v723, 4294901760
    %725 = vmatmul.mubr.f32.gmra.mrb[0].mxu0 %v724
    %v726 = vpop.f32.mrb[0].mxu0
    %v727 = vadd.f32 0.0, %v726
    %v728 = vpop.f32.mrb[0].mxu0
    %729 = vmatprep.mubr.f32.mxu0 0.0
    %v730 = vand.u32 %v156, 4294901760
    %v731 = vsub.f32 %v156, %v730
    %v732 = vand.u32 %v731, 4294901760
    %v733 = vsub.f32 %v731, %v732
    %v734 = vand.u32 %v733, 4294901760
    %735 = vmatmul.mubr.f32.gmra.mrb[0].mxu0 %v734
    %v736 = vpop.f32.mrb[0].mxu0
    %v737 = vadd.f32 0.0, %v736
    %v738 = vpop.f32.mrb[0].mxu0
    %739 = vdwg.mxu0
    %740 = vmatprep.subr.mxu0 0.0
    %v741 = vand.u32 %v652, 4294901760
    %v742 = vsub.f32 %v652, %v741
    %v743 = vand.u32 %v742, 4294901760
    %v744 = vsub.f32 %v742, %v743
    %v745 = vand.u32 %v744, 4294901760
    %746 = vmatpush1.msra.mxu0 %v745
    %747 = vmatprep.subr.mxu0 0.0
    %748 = vmatpush1.msra.mxu0 0.0
    %749 = vmatprep.subr.mxu0 0.0
    %750 = vmatpush1.msra.mxu0 0.0
    %751 = vmatprep.subr.mxu0 0.0
    %752 = vmatpush1.msra.mxu0 0.0
    %753 = vmatprep.subr.mxu0 0.0
    %754 = vmatpush1.msra.mxu0 0.0
    %755 = vmatprep.subr.mxu0 0.0
    %756 = vmatpush1.msra.mxu0 0.0
    %757 = vmatprep.subr.mxu0 0.0
    %758 = vmatpush1.msra.mxu0 0.0
    %759 = vmatprep.subr.mxu0 0.0
    %760 = vmatpush1.msra.mxu0 0.0
    %761 = vmatprep.subr.mxu0 0.0
    %762 = vmatpush1.msra.mxu0 0.0
    %763 = vmatprep.subr.mxu0 0.0
    %764 = vmatpush1.msra.mxu0 0.0
    %765 = vmatprep.subr.mxu0 0.0
    %766 = vmatpush1.msra.mxu0 0.0
    %767 = vmatprep.subr.mxu0 0.0
    %768 = vmatpush1.msra.mxu0 0.0
    %769 = vmatprep.subr.mxu0 0.0
    %770 = vmatpush1.msra.mxu0 0.0
    %771 = vmatprep.subr.mxu0 0.0
    %772 = vmatpush1.msra.mxu0 0.0
    %773 = vmatprep.subr.mxu0 0.0
    %774 = vmatpush1.msra.mxu0 0.0
    %775 = vmatprep.subr.mxu0 0.0
    %776 = vmatpush1.msra.mxu0 0.0
    %777 = vmatprep.subr.mxu0 0.0
    %778 = vmatpush1.msra.mxu0 0.0
    %779 = vmatprep.subr.mxu0 0.0
    %780 = vmatpush1.msra.mxu0 0.0
    %781 = vmatprep.subr.mxu0 0.0
    %782 = vmatpush1.msra.mxu0 0.0
    %783 = vmatprep.subr.mxu0 0.0
    %784 = vmatpush1.msra.mxu0 0.0
    %785 = vmatprep.subr.mxu0 0.0
    %786 = vmatpush1.msra.mxu0 0.0
    %787 = vmatprep.subr.mxu0 0.0
    %788 = vmatpush1.msra.mxu0 0.0
    %789 = vmatprep.subr.mxu0 0.0
    %790 = vmatpush1.msra.mxu0 0.0
    %791 = vmatprep.subr.mxu0 0.0
    %792 = vmatpush1.msra.mxu0 0.0
    %793 = vmatprep.subr.mxu0 0.0
    %794 = vmatpush1.msra.mxu0 0.0
    %795 = vmatprep.subr.mxu0 0.0
    %796 = vmatpush1.msra.mxu0 0.0
    %797 = vmatprep.subr.mxu0 0.0
    %798 = vmatpush1.msra.mxu0 0.0
    %799 = vmatprep.subr.mxu0 0.0
    %800 = vmatpush1.msra.mxu0 0.0
    %801 = vmatprep.subr.mxu0 0.0
    %802 = vmatpush1.msra.mxu0 0.0
    %803 = vmatprep.subr.mxu0 0.0
    %804 = vmatpush1.msra.mxu0 0.0
    %805 = vmatprep.subr.mxu0 0.0
    %806 = vmatpush1.msra.mxu0 0.0
    %807 = vmatprep.subr.mxu0 0.0
    %808 = vmatpush1.msra.mxu0 0.0
    %809 = vmatprep.mubr.f32.mxu0 0.0
    %v810 = vand.u32 %v153, 4294901760
    %811 = vmatmul.mubr.f32.gmra.mrb[0].mxu0 %v810
    %v812 = vpop.f32.mrb[0].mxu0
    %v813 = vadd.f32 %v727, %v812
    %v814 = vpop.f32.mrb[0].mxu0
    %815 = vmatprep.mubr.f32.mxu0 0.0
    %v816 = vand.u32 %v156, 4294901760
    %817 = vmatmul.mubr.f32.gmra.mrb[0].mxu0 %v816
    %v818 = vpop.f32.mrb[0].mxu0
    %v819 = vadd.f32 %v737, %v818
    %v820 = vpop.f32.mrb[0].mxu0
    %821 = vdwg.mxu0
    %822 = vmatprep.subr.mxu0 0.0
    %v823 = vand.u32 %v652, 4294901760
    %v824 = vsub.f32 %v652, %v823
    %825 = vmatpush1.msra.mxu0 %v824
    %826 = vmatprep.subr.mxu0 0.0
    %827 = vmatpush1.msra.mxu0 0.0
    %828 = vmatprep.subr.mxu0 0.0
    %829 = vmatpush1.msra.mxu0 0.0
    %830 = vmatprep.subr.mxu0 0.0
    %831 = vmatpush1.msra.mxu0 0.0
    %832 = vmatprep.subr.mxu0 0.0
    %833 = vmatpush1.msra.mxu0 0.0
    %834 = vmatprep.subr.mxu0 0.0
    %835 = vmatpush1.msra.mxu0 0.0
    %836 = vmatprep.subr.mxu0 0.0
    %837 = vmatpush1.msra.mxu0 0.0
    %838 = vmatprep.subr.mxu0 0.0
    %839 = vmatpush1.msra.mxu0 0.0
    %840 = vmatprep.subr.mxu0 0.0
    %841 = vmatpush1.msra.mxu0 0.0
    %842 = vmatprep.subr.mxu0 0.0
    %843 = vmatpush1.msra.mxu0 0.0
    %844 = vmatprep.subr.mxu0 0.0
    %845 = vmatpush1.msra.mxu0 0.0
    %846 = vmatprep.subr.mxu0 0.0
    %847 = vmatpush1.msra.mxu0 0.0
    %848 = vmatprep.subr.mxu0 0.0
    %849 = vmatpush1.msra.mxu0 0.0
    %850 = vmatprep.subr.mxu0 0.0
    %851 = vmatpush1.msra.mxu0 0.0
    %852 = vmatprep.subr.mxu0 0.0
    %853 = vmatpush1.msra.mxu0 0.0
    %854 = vmatprep.subr.mxu0 0.0
    %855 = vmatpush1.msra.mxu0 0.0
    %856 = vmatprep.subr.mxu0 0.0
    %857 = vmatpush1.msra.mxu0 0.0
    %858 = vmatprep.subr.mxu0 0.0
    %859 = vmatpush1.msra.mxu0 0.0
    %860 = vmatprep.subr.mxu0 0.0
    %861 = vmatpush1.msra.mxu0 0.0
    %862 = vmatprep.subr.mxu0 0.0
    %863 = vmatpush1.msra.mxu0 0.0
    %864 = vmatprep.subr.mxu0 0.0
    %865 = vmatpush1.msra.mxu0 0.0
    %866 = vmatprep.subr.mxu0 0.0
    %867 = vmatpush1.msra.mxu0 0.0
    %868 = vmatprep.subr.mxu0 0.0
    %869 = vmatpush1.msra.mxu0 0.0
    %870 = vmatprep.subr.mxu0 0.0
    %871 = vmatpush1.msra.mxu0 0.0
    %872 = vmatprep.subr.mxu0 0.0
    %873 = vmatpush1.msra.mxu0 0.0
    %874 = vmatprep.subr.mxu0 0.0
    %875 = vmatpush1.msra.mxu0 0.0
    %876 = vmatprep.subr.mxu0 0.0
    %877 = vmatpush1.msra.mxu0 0.0
    %878 = vmatprep.subr.mxu0 0.0
    %879 = vmatpush1.msra.mxu0 0.0
    %880 = vmatprep.subr.mxu0 0.0
    %881 = vmatpush1.msra.mxu0 0.0
    %882 = vmatprep.subr.mxu0 0.0
    %883 = vmatpush1.msra.mxu0 0.0
    %884 = vmatprep.subr.mxu0 0.0
    %885 = vmatpush1.msra.mxu0 0.0
    %886 = vmatprep.subr.mxu0 0.0
    %887 = vmatpush1.msra.mxu0 0.0
    %888 = vmatprep.mubr.f32.mxu0 0.0
    %v889 = vand.u32 %v153, 4294901760
    %v890 = vsub.f32 %v153, %v889
    %891 = vmatmul.mubr.f32.gmra.mrb[0].mxu0 %v890
    %v892 = vpop.f32.mrb[0].mxu0
    %v893 = vadd.f32 %v813, %v892
    %v894 = vpop.f32.mrb[0].mxu0
    %895 = vmatprep.mubr.f32.mxu0 0.0
    %v896 = vand.u32 %v156, 4294901760
    %v897 = vsub.f32 %v156, %v896
    %898 = vmatmul.mubr.f32.gmra.mrb[0].mxu0 %v897
    %v899 = vpop.f32.mrb[0].mxu0
    %v900 = vadd.f32 %v819, %v899
    %v901 = vpop.f32.mrb[0].mxu0
    %902 = vdwg.mxu0
    %903 = vmatprep.subr.mxu0 0.0
    %v904 = vand.u32 %v652, 4294901760
    %905 = vmatpush1.msra.mxu0 %v904
    %906 = vmatprep.subr.mxu0 0.0
    %907 = vmatpush1.msra.mxu0 0.0
    %908 = vmatprep.subr.mxu0 0.0
    %909 = vmatpush1.msra.mxu0 0.0
    %910 = vmatprep.subr.mxu0 0.0
    %911 = vmatpush1.msra.mxu0 0.0
    %912 = vmatprep.subr.mxu0 0.0
    %913 = vmatpush1.msra.mxu0 0.0
    %914 = vmatprep.subr.mxu0 0.0
    %915 = vmatpush1.msra.mxu0 0.0
    %916 = vmatprep.subr.mxu0 0.0
    %917 = vmatpush1.msra.mxu0 0.0
    %918 = vmatprep.subr.mxu0 0.0
    %919 = vmatpush1.msra.mxu0 0.0
    %920 = vmatprep.subr.mxu0 0.0
    %921 = vmatpush1.msra.mxu0 0.0
    %922 = vmatprep.subr.mxu0 0.0
    %923 = vmatpush1.msra.mxu0 0.0
    %924 = vmatprep.subr.mxu0 0.0
    %925 = vmatpush1.msra.mxu0 0.0
    %926 = vmatprep.subr.mxu0 0.0
    %927 = vmatpush1.msra.mxu0 0.0
    %928 = vmatprep.subr.mxu0 0.0
    %929 = vmatpush1.msra.mxu0 0.0
    %930 = vmatprep.subr.mxu0 0.0
    %931 = vmatpush1.msra.mxu0 0.0
    %932 = vmatprep.subr.mxu0 0.0
    %933 = vmatpush1.msra.mxu0 0.0
    %934 = vmatprep.subr.mxu0 0.0
    %935 = vmatpush1.msra.mxu0 0.0
    %936 = vmatprep.subr.mxu0 0.0
    %937 = vmatpush1.msra.mxu0 0.0
    %938 = vmatprep.subr.mxu0 0.0
    %939 = vmatpush1.msra.mxu0 0.0
    %940 = vmatprep.subr.mxu0 0.0
    %941 = vmatpush1.msra.mxu0 0.0
    %942 = vmatprep.subr.mxu0 0.0
    %943 = vmatpush1.msra.mxu0 0.0
    %944 = vmatprep.subr.mxu0 0.0
    %945 = vmatpush1.msra.mxu0 0.0
    %946 = vmatprep.subr.mxu0 0.0
    %947 = vmatpush1.msra.mxu0 0.0
    %948 = vmatprep.subr.mxu0 0.0
    %949 = vmatpush1.msra.mxu0 0.0
    %950 = vmatprep.subr.mxu0 0.0
    %951 = vmatpush1.msra.mxu0 0.0
    %952 = vmatprep.subr.mxu0 0.0
    %953 = vmatpush1.msra.mxu0 0.0
    %954 = vmatprep.subr.mxu0 0.0
    %955 = vmatpush1.msra.mxu0 0.0
    %956 = vmatprep.subr.mxu0 0.0
    %957 = vmatpush1.msra.mxu0 0.0
    %958 = vmatprep.subr.mxu0 0.0
    %959 = vmatpush1.msra.mxu0 0.0
    %960 = vmatprep.subr.mxu0 0.0
    %961 = vmatpush1.msra.mxu0 0.0
    %962 = vmatprep.subr.mxu0 0.0
    %963 = vmatpush1.msra.mxu0 0.0
    %964 = vmatprep.subr.mxu0 0.0
    %965 = vmatpush1.msra.mxu0 0.0
    %966 = vmatprep.subr.mxu0 0.0
    %967 = vmatpush1.msra.mxu0 0.0
    %968 = vmatprep.mubr.f32.mxu0 0.0
    %v969 = vand.u32 %v153, 4294901760
    %v970 = vsub.f32 %v153, %v969
    %v971 = vand.u32 %v970, 4294901760
    %972 = vmatmul.mubr.f32.gmra.mrb[0].mxu0 %v971
    %v973 = vpop.f32.mrb[0].mxu0
    %v974 = vadd.f32 %v893, %v973
    %v975 = vpop.f32.mrb[0].mxu0
    %976 = vmatprep.mubr.f32.mxu0 0.0
    %v977 = vand.u32 %v156, 4294901760
    %v978 = vsub.f32 %v156, %v977
    %v979 = vand.u32 %v978, 4294901760
    %980 = vmatmul.mubr.f32.gmra.mrb[0].mxu0 %v979
    %v981 = vpop.f32.mrb[0].mxu0
    %v982 = vadd.f32 %v900, %v981
    %v983 = vpop.f32.mrb[0].mxu0
    %984 = vdwg.mxu0
    %985 = vmatprep.subr.mxu0 0.0
    %v986 = vand.u32 %v652, 4294901760
    %v987 = vsub.f32 %v652, %v986
    %v988 = vand.u32 %v987, 4294901760
    %989 = vmatpush1.msra.mxu0 %v988
    %990 = vmatprep.subr.mxu0 0.0
    %991 = vmatpush1.msra.mxu0 0.0
    %992 = vmatprep.subr.mxu0 0.0
    %993 = vmatpush1.msra.mxu0 0.0
    %994 = vmatprep.subr.mxu0 0.0
    %995 = vmatpush1.msra.mxu0 0.0
    %996 = vmatprep.subr.mxu0 0.0
    %997 = vmatpush1.msra.mxu0 0.0
    %998 = vmatprep.subr.mxu0 0.0
    %999 = vmatpush1.msra.mxu0 0.0
    %1000 = vmatprep.subr.mxu0 0.0
    %1001 = vmatpush1.msra.mxu0 0.0
    %1002 = vmatprep.subr.mxu0 0.0
    %1003 = vmatpush1.msra.mxu0 0.0
    %1004 = vmatprep.subr.mxu0 0.0
    %1005 = vmatpush1.msra.mxu0 0.0
    %1006 = vmatprep.subr.mxu0 0.0
    %1007 = vmatpush1.msra.mxu0 0.0
    %1008 = vmatprep.subr.mxu0 0.0
    %1009 = vmatpush1.msra.mxu0 0.0
    %1010 = vmatprep.subr.mxu0 0.0
    %1011 = vmatpush1.msra.mxu0 0.0
    %1012 = vmatprep.subr.mxu0 0.0
    %1013 = vmatpush1.msra.mxu0 0.0
    %1014 = vmatprep.subr.mxu0 0.0
    %1015 = vmatpush1.msra.mxu0 0.0
    %1016 = vmatprep.subr.mxu0 0.0
    %1017 = vmatpush1.msra.mxu0 0.0
    %1018 = vmatprep.subr.mxu0 0.0
    %1019 = vmatpush1.msra.mxu0 0.0
    %1020 = vmatprep.subr.mxu0 0.0
    %1021 = vmatpush1.msra.mxu0 0.0
    %1022 = vmatprep.subr.mxu0 0.0
    %1023 = vmatpush1.msra.mxu0 0.0
    %1024 = vmatprep.subr.mxu0 0.0
    %1025 = vmatpush1.msra.mxu0 0.0
    %1026 = vmatprep.subr.mxu0 0.0
    %1027 = vmatpush1.msra.mxu0 0.0
    %1028 = vmatprep.subr.mxu0 0.0
    %1029 = vmatpush1.msra.mxu0 0.0
    %1030 = vmatprep.subr.mxu0 0.0
    %1031 = vmatpush1.msra.mxu0 0.0
    %1032 = vmatprep.subr.mxu0 0.0
    %1033 = vmatpush1.msra.mxu0 0.0
    %1034 = vmatprep.subr.mxu0 0.0
    %1035 = vmatpush1.msra.mxu0 0.0
    %1036 = vmatprep.subr.mxu0 0.0
    %1037 = vmatpush1.msra.mxu0 0.0
    %1038 = vmatprep.subr.mxu0 0.0
    %1039 = vmatpush1.msra.mxu0 0.0
    %1040 = vmatprep.subr.mxu0 0.0
    %1041 = vmatpush1.msra.mxu0 0.0
    %1042 = vmatprep.subr.mxu0 0.0
    %1043 = vmatpush1.msra.mxu0 0.0
    %1044 = vmatprep.subr.mxu0 0.0
    %1045 = vmatpush1.msra.mxu0 0.0
    %1046 = vmatprep.subr.mxu0 0.0
    %1047 = vmatpush1.msra.mxu0 0.0
    %1048 = vmatprep.subr.mxu0 0.0
    %1049 = vmatpush1.msra.mxu0 0.0
    %1050 = vmatprep.subr.mxu0 0.0
    %1051 = vmatpush1.msra.mxu0 0.0
    %1052 = vmatprep.mubr.f32.mxu0 0.0
    %v1053 = vand.u32 %v153, 4294901760
    %1054 = vmatmul.mubr.f32.gmra.mrb[0].mxu0 %v1053
    %v1055 = vpop.f32.mrb[0].mxu0
    %v1056 = vadd.f32 %v974, %v1055
    %v1057 = vpop.f32.mrb[0].mxu0
    %1058 = vmatprep.mubr.f32.mxu0 0.0
    %v1059 = vand.u32 %v156, 4294901760
    %1060 = vmatmul.mubr.f32.gmra.mrb[0].mxu0 %v1059
    %v1061 = vpop.f32.mrb[0].mxu0
    %v1062 = vadd.f32 %v982, %v1061
    %v1063 = vpop.f32.mrb[0].mxu0
    %1064 = vdwg.mxu0
    %1065 = vmatprep.subr.mxu0 0.0
    %v1066 = vand.u32 %v652, 4294901760
    %1067 = vmatpush1.msra.mxu0 %v1066
    %1068 = vmatprep.subr.mxu0 0.0
    %1069 = vmatpush1.msra.mxu0 0.0
    %1070 = vmatprep.subr.mxu0 0.0
    %1071 = vmatpush1.msra.mxu0 0.0
    %1072 = vmatprep.subr.mxu0 0.0
    %1073 = vmatpush1.msra.mxu0 0.0
    %1074 = vmatprep.subr.mxu0 0.0
    %1075 = vmatpush1.msra.mxu0 0.0
    %1076 = vmatprep.subr.mxu0 0.0
    %1077 = vmatpush1.msra.mxu0 0.0
    %1078 = vmatprep.subr.mxu0 0.0
    %1079 = vmatpush1.msra.mxu0 0.0
    %1080 = vmatprep.subr.mxu0 0.0
    %1081 = vmatpush1.msra.mxu0 0.0
    %1082 = vmatprep.subr.mxu0 0.0
    %1083 = vmatpush1.msra.mxu0 0.0
    %1084 = vmatprep.subr.mxu0 0.0
    %1085 = vmatpush1.msra.mxu0 0.0
    %1086 = vmatprep.subr.mxu0 0.0
    %1087 = vmatpush1.msra.mxu0 0.0
    %1088 = vmatprep.subr.mxu0 0.0
    %1089 = vmatpush1.msra.mxu0 0.0
    %1090 = vmatprep.subr.mxu0 0.0
    %1091 = vmatpush1.msra.mxu0 0.0
    %1092 = vmatprep.subr.mxu0 0.0
    %1093 = vmatpush1.msra.mxu0 0.0
    %1094 = vmatprep.subr.mxu0 0.0
    %1095 = vmatpush1.msra.mxu0 0.0
    %1096 = vmatprep.subr.mxu0 0.0
    %1097 = vmatpush1.msra.mxu0 0.0
    %1098 = vmatprep.subr.mxu0 0.0
    %1099 = vmatpush1.msra.mxu0 0.0
    %1100 = vmatprep.subr.mxu0 0.0
    %1101 = vmatpush1.msra.mxu0 0.0
    %1102 = vmatprep.subr.mxu0 0.0
    %1103 = vmatpush1.msra.mxu0 0.0
    %1104 = vmatprep.subr.mxu0 0.0
    %1105 = vmatpush1.msra.mxu0 0.0
    %1106 = vmatprep.subr.mxu0 0.0
    %1107 = vmatpush1.msra.mxu0 0.0
    %1108 = vmatprep.subr.mxu0 0.0
    %1109 = vmatpush1.msra.mxu0 0.0
    %1110 = vmatprep.subr.mxu0 0.0
    %1111 = vmatpush1.msra.mxu0 0.0
    %1112 = vmatprep.subr.mxu0 0.0
    %1113 = vmatpush1.msra.mxu0 0.0
    %1114 = vmatprep.subr.mxu0 0.0
    %1115 = vmatpush1.msra.mxu0 0.0
    %1116 = vmatprep.subr.mxu0 0.0
    %1117 = vmatpush1.msra.mxu0 0.0
    %1118 = vmatprep.subr.mxu0 0.0
    %1119 = vmatpush1.msra.mxu0 0.0
    %1120 = vmatprep.subr.mxu0 0.0
    %1121 = vmatpush1.msra.mxu0 0.0
    %1122 = vmatprep.subr.mxu0 0.0
    %1123 = vmatpush1.msra.mxu0 0.0
    %1124 = vmatprep.subr.mxu0 0.0
    %1125 = vmatpush1.msra.mxu0 0.0
    %1126 = vmatprep.subr.mxu0 0.0
    %1127 = vmatpush1.msra.mxu0 0.0
    %1128 = vmatprep.subr.mxu0 0.0
    %1129 = vmatpush1.msra.mxu0 0.0
    %1130 = vmatprep.mubr.f32.mxu0 0.0
    %v1131 = vand.u32 %v153, 4294901760
    %1132 = vmatmul.mubr.f32.gmra.mrb[0].mxu0 %v1131
    %v1133 = vpop.f32.mrb[0].mxu0
    %v1134 = vadd.f32 %v1056, %v1133
    %v1135 = vpop.f32.mrb[0].mxu0
    %1136 = vmatprep.mubr.f32.mxu0 0.0
    %v1137 = vand.u32 %v156, 4294901760
    %1138 = vmatmul.mubr.f32.gmra.mrb[0].mxu0 %v1137
    %v1139 = vpop.f32.mrb[0].mxu0
    %v1140 = vadd.f32 %v1062, %v1139
    %v1141 = vpop.f32.mrb[0].mxu0
    %1142 = vdwg.mxu0
    %v1143 = vsub.f32 %v1134, %v642
    %v1144 = vsub.f32 %v1140, %v648
    %v1146 = vlaneseq
    %v1147 = vshrl.u32 %v1146, 7
    %v1148 = vsub.s32 0, %v1147
    %v1149 = vrot.slane %v45, %v1148
    %v1151 = vadd.f32 %v1143, %v1149
    %v1152 = vadd.f32 %v1144, %v1149
    %1153 = vmatprep.subr.mxu0 0.0
    %v1154 = vand.u32 %v153, 4294901760
    %1155 = vmatpush1.xpose.msra.mxu0 %v1154
    %1156 = vmatprep.subr.mxu0 0.0
    %v1157 = vand.u32 %v156, 4294901760
    %1158 = vmatpush1.xpose.msra.mxu0 %v1157
    %1159 = vmatprep.subr.mxu0 0.0
    %1160 = vmatpush1.xpose.msra.mxu0 0.0
    %1161 = vmatprep.subr.mxu0 0.0
    %1162 = vmatpush1.xpose.msra.mxu0 0.0
    %1163 = vmatprep.subr.mxu0 0.0
    %1164 = vmatpush1.xpose.msra.mxu0 0.0
    %1165 = vmatprep.subr.mxu0 0.0
    %1166 = vmatpush1.xpose.msra.mxu0 0.0
    %1167 = vmatprep.subr.mxu0 0.0
    %1168 = vmatpush1.xpose.msra.mxu0 0.0
    %1169 = vmatprep.subr.mxu0 0.0
    %1170 = vmatpush1.xpose.msra.mxu0 0.0
    %1171 = vmatprep.subr.mxu0 0.0
    %1172 = vmatpush1.xpose.msra.mxu0 0.0
    %1173 = vmatprep.subr.mxu0 0.0
    %1174 = vmatpush1.xpose.msra.mxu0 0.0
    %1175 = vmatprep.subr.mxu0 0.0
    %1176 = vmatpush1.xpose.msra.mxu0 0.0
    %1177 = vmatprep.subr.mxu0 0.0
    %1178 = vmatpush1.xpose.msra.mxu0 0.0
    %1179 = vmatprep.subr.mxu0 0.0
    %1180 = vmatpush1.xpose.msra.mxu0 0.0
    %1181 = vmatprep.subr.mxu0 0.0
    %1182 = vmatpush1.xpose.msra.mxu0 0.0
    %1183 = vmatprep.subr.mxu0 0.0
    %1184 = vmatpush1.xpose.msra.mxu0 0.0
    %1185 = vmatprep.subr.mxu0 0.0
    %1186 = vmatpush1.xpose.msra.mxu0 0.0
    %1187 = vmatprep.subr.mxu0 0.0
    %1188 = vmatpush1.xpose.msra.mxu0 0.0
    %1189 = vmatprep.subr.mxu0 0.0
    %1190 = vmatpush1.xpose.msra.mxu0 0.0
    %1191 = vmatprep.subr.mxu0 0.0
    %1192 = vmatpush1.xpose.msra.mxu0 0.0
    %1193 = vmatprep.subr.mxu0 0.0
    %1194 = vmatpush1.xpose.msra.mxu0 0.0
    %1195 = vmatprep.subr.mxu0 0.0
    %1196 = vmatpush1.xpose.msra.mxu0 0.0
    %1197 = vmatprep.subr.mxu0 0.0
    %1198 = vmatpush1.xpose.msra.mxu0 0.0
    %1199 = vmatprep.subr.mxu0 0.0
    %1200 = vmatpush1.xpose.msra.mxu0 0.0
    %1201 = vmatprep.subr.mxu0 0.0
    %1202 = vmatpush1.xpose.msra.mxu0 0.0
    %1203 = vmatprep.subr.mxu0 0.0
    %1204 = vmatpush1.xpose.msra.mxu0 0.0
    %1205 = vmatprep.subr.mxu0 0.0
    %1206 = vmatpush1.xpose.msra.mxu0 0.0
    %1207 = vmatprep.subr.mxu0 0.0
    %1208 = vmatpush1.xpose.msra.mxu0 0.0
    %1209 = vmatprep.subr.mxu0 0.0
    %1210 = vmatpush1.xpose.msra.mxu0 0.0
    %1211 = vmatprep.subr.mxu0 0.0
    %1212 = vmatpush1.xpose.msra.mxu0 0.0
    %1213 = vmatprep.subr.mxu0 0.0
    %1214 = vmatpush1.xpose.msra.mxu0 0.0
    %1215 = vmatprep.subr.mxu0 0.0
    %1216 = vmatpush1.xpose.msra.mxu0 0.0
    %1217 = vmatprep.subr.mxu0 0.0
    %1218 = vmatpush1.xpose.msra.mxu0 0.0
    %1219 = vmatprep.mubr.f32.mxu0 0.0
    %v1220 = vand.u32 %v153, 4294901760
    %v1221 = vsub.f32 %v153, %v1220
    %v1222 = vand.u32 %v1221, 4294901760
    %v1223 = vsub.f32 %v1221, %v1222
    %v1224 = vand.u32 %v1223, 4294901760
    %1225 = vmatmul.mubr.f32.gmra.mrb[0].mxu0 %v1224
    %v1226 = vpop.f32.mrb[0].mxu0
    %v1227 = vadd.f32 0.0, %v1226
    %v1228 = vpop.f32.mrb[0].mxu0
    %1229 = vmatprep.mubr.f32.mxu0 0.0
    %v1230 = vand.u32 %v156, 4294901760
    %v1231 = vsub.f32 %v156, %v1230
    %v1232 = vand.u32 %v1231, 4294901760
    %v1233 = vsub.f32 %v1231, %v1232
    %v1234 = vand.u32 %v1233, 4294901760
    %1235 = vmatmul.mubr.f32.gmra.mrb[0].mxu0 %v1234
    %v1236 = vpop.f32.mrb[0].mxu0
    %v1237 = vadd.f32 0.0, %v1236
    %v1238 = vpop.f32.mrb[0].mxu0
    %1239 = vdwg.mxu0
    %1240 = vmatprep.subr.mxu0 0.0
    %v1241 = vand.u32 %v153, 4294901760
    %v1242 = vsub.f32 %v153, %v1241
    %v1243 = vand.u32 %v1242, 4294901760
    %v1244 = vsub.f32 %v1242, %v1243
    %v1245 = vand.u32 %v1244, 4294901760
    %1246 = vmatpush1.xpose.msra.mxu0 %v1245
    %1247 = vmatprep.subr.mxu0 0.0
    %v1248 = vand.u32 %v156, 4294901760
    %v1249 = vsub.f32 %v156, %v1248
    %v1250 = vand.u32 %v1249, 4294901760
    %v1251 = vsub.f32 %v1249, %v1250
    %v1252 = vand.u32 %v1251, 4294901760
    %1253 = vmatpush1.xpose.msra.mxu0 %v1252
    %1254 = vmatprep.subr.mxu0 0.0
    %1255 = vmatpush1.xpose.msra.mxu0 0.0
    %1256 = vmatprep.subr.mxu0 0.0
    %1257 = vmatpush1.xpose.msra.mxu0 0.0
    %1258 = vmatprep.subr.mxu0 0.0
    %1259 = vmatpush1.xpose.msra.mxu0 0.0
    %1260 = vmatprep.subr.mxu0 0.0
    %1261 = vmatpush1.xpose.msra.mxu0 0.0
    %1262 = vmatprep.subr.mxu0 0.0
    %1263 = vmatpush1.xpose.msra.mxu0 0.0
    %1264 = vmatprep.subr.mxu0 0.0
    %1265 = vmatpush1.xpose.msra.mxu0 0.0
    %1266 = vmatprep.subr.mxu0 0.0
    %1267 = vmatpush1.xpose.msra.mxu0 0.0
    %1268 = vmatprep.subr.mxu0 0.0
    %1269 = vmatpush1.xpose.msra.mxu0 0.0
    %1270 = vmatprep.subr.mxu0 0.0
    %1271 = vmatpush1.xpose.msra.mxu0 0.0
    %1272 = vmatprep.subr.mxu0 0.0
    %1273 = vmatpush1.xpose.msra.mxu0 0.0
    %1274 = vmatprep.subr.mxu0 0.0
    %1275 = vmatpush1.xpose.msra.mxu0 0.0
    %1276 = vmatprep.subr.mxu0 0.0
    %1277 = vmatpush1.xpose.msra.mxu0 0.0
    %1278 = vmatprep.subr.mxu0 0.0
    %1279 = vmatpush1.xpose.msra.mxu0 0.0
    %1280 = vmatprep.subr.mxu0 0.0
    %1281 = vmatpush1.xpose.msra.mxu0 0.0
    %1282 = vmatprep.subr.mxu0 0.0
    %1283 = vmatpush1.xpose.msra.mxu0 0.0
    %1284 = vmatprep.subr.mxu0 0.0
    %1285 = vmatpush1.xpose.msra.mxu0 0.0
    %1286 = vmatprep.subr.mxu0 0.0
    %1287 = vmatpush1.xpose.msra.mxu0 0.0
    %1288 = vmatprep.subr.mxu0 0.0
    %1289 = vmatpush1.xpose.msra.mxu0 0.0
    %1290 = vmatprep.subr.mxu0 0.0
    %1291 = vmatpush1.xpose.msra.mxu0 0.0
    %1292 = vmatprep.subr.mxu0 0.0
    %1293 = vmatpush1.xpose.msra.mxu0 0.0
    %1294 = vmatprep.subr.mxu0 0.0
    %1295 = vmatpush1.xpose.msra.mxu0 0.0
    %1296 = vmatprep.subr.mxu0 0.0
    %1297 = vmatpush1.xpose.msra.mxu0 0.0
    %1298 = vmatprep.subr.mxu0 0.0
    %1299 = vmatpush1.xpose.msra.mxu0 0.0
    %1300 = vmatprep.subr.mxu0 0.0
    %1301 = vmatpush1.xpose.msra.mxu0 0.0
    %1302 = vmatprep.subr.mxu0 0.0
    %1303 = vmatpush1.xpose.msra.mxu0 0.0
    %1304 = vmatprep.subr.mxu0 0.0
    %1305 = vmatpush1.xpose.msra.mxu0 0.0
    %1306 = vmatprep.subr.mxu0 0.0
    %1307 = vmatpush1.xpose.msra.mxu0 0.0
    %1308 = vmatprep.subr.mxu0 0.0
    %1309 = vmatpush1.xpose.msra.mxu0 0.0
    %1310 = vmatprep.subr.mxu0 0.0
    %1311 = vmatpush1.xpose.msra.mxu0 0.0
    %1312 = vmatprep.subr.mxu0 0.0
    %1313 = vmatpush1.xpose.msra.mxu0 0.0
    %1314 = vmatprep.mubr.f32.mxu0 0.0
    %v1315 = vand.u32 %v153, 4294901760
    %1316 = vmatmul.mubr.f32.gmra.mrb[0].mxu0 %v1315
    %v1317 = vpop.f32.mrb[0].mxu0
    %v1318 = vadd.f32 %v1227, %v1317
    %v1319 = vpop.f32.mrb[0].mxu0
    %1320 = vmatprep.mubr.f32.mxu0 0.0
    %v1321 = vand.u32 %v156, 4294901760
    %1322 = vmatmul.mubr.f32.gmra.mrb[0].mxu0 %v1321
    %v1323 = vpop.f32.mrb[0].mxu0
    %v1324 = vadd.f32 %v1237, %v1323
    %v1325 = vpop.f32.mrb[0].mxu0
    %1326 = vdwg.mxu0
    %1327 = vmatprep.subr.mxu0 0.0
    %v1328 = vand.u32 %v153, 4294901760
    %v1329 = vsub.f32 %v153, %v1328
    %1330 = vmatpush1.xpose.msra.mxu0 %v1329
    %1331 = vmatprep.subr.mxu0 0.0
    %v1332 = vand.u32 %v156, 4294901760
    %v1333 = vsub.f32 %v156, %v1332
    %1334 = vmatpush1.xpose.msra.mxu0 %v1333
    %1335 = vmatprep.subr.mxu0 0.0
    %1336 = vmatpush1.xpose.msra.mxu0 0.0
    %1337 = vmatprep.subr.mxu0 0.0
    %1338 = vmatpush1.xpose.msra.mxu0 0.0
    %1339 = vmatprep.subr.mxu0 0.0
    %1340 = vmatpush1.xpose.msra.mxu0 0.0
    %1341 = vmatprep.subr.mxu0 0.0
    %1342 = vmatpush1.xpose.msra.mxu0 0.0
    %1343 = vmatprep.subr.mxu0 0.0
    %1344 = vmatpush1.xpose.msra.mxu0 0.0
    %1345 = vmatprep.subr.mxu0 0.0
    %1346 = vmatpush1.xpose.msra.mxu0 0.0
    %1347 = vmatprep.subr.mxu0 0.0
    %1348 = vmatpush1.xpose.msra.mxu0 0.0
    %1349 = vmatprep.subr.mxu0 0.0
    %1350 = vmatpush1.xpose.msra.mxu0 0.0
    %1351 = vmatprep.subr.mxu0 0.0
    %1352 = vmatpush1.xpose.msra.mxu0 0.0
    %1353 = vmatprep.subr.mxu0 0.0
    %1354 = vmatpush1.xpose.msra.mxu0 0.0
    %1355 = vmatprep.subr.mxu0 0.0
    %1356 = vmatpush1.xpose.msra.mxu0 0.0
    %1357 = vmatprep.subr.mxu0 0.0
    %1358 = vmatpush1.xpose.msra.mxu0 0.0
    %1359 = vmatprep.subr.mxu0 0.0
    %1360 = vmatpush1.xpose.msra.mxu0 0.0
    %1361 = vmatprep.subr.mxu0 0.0
    %1362 = vmatpush1.xpose.msra.mxu0 0.0
    %1363 = vmatprep.subr.mxu0 0.0
    %1364 = vmatpush1.xpose.msra.mxu0 0.0
    %1365 = vmatprep.subr.mxu0 0.0
    %1366 = vmatpush1.xpose.msra.mxu0 0.0
    %1367 = vmatprep.subr.mxu0 0.0
    %1368 = vmatpush1.xpose.msra.mxu0 0.0
    %1369 = vmatprep.subr.mxu0 0.0
    %1370 = vmatpush1.xpose.msra.mxu0 0.0
    %1371 = vmatprep.subr.mxu0 0.0
    %1372 = vmatpush1.xpose.msra.mxu0 0.0
    %1373 = vmatprep.subr.mxu0 0.0
    %1374 = vmatpush1.xpose.msra.mxu0 0.0
    %1375 = vmatprep.subr.mxu0 0.0
    %1376 = vmatpush1.xpose.msra.mxu0 0.0
    %1377 = vmatprep.subr.mxu0 0.0
    %1378 = vmatpush1.xpose.msra.mxu0 0.0
    %1379 = vmatprep.subr.mxu0 0.0
    %1380 = vmatpush1.xpose.msra.mxu0 0.0
    %1381 = vmatprep.subr.mxu0 0.0
    %1382 = vmatpush1.xpose.msra.mxu0 0.0
    %1383 = vmatprep.subr.mxu0 0.0
    %1384 = vmatpush1.xpose.msra.mxu0 0.0
    %1385 = vmatprep.subr.mxu0 0.0
    %1386 = vmatpush1.xpose.msra.mxu0 0.0
    %1387 = vmatprep.subr.mxu0 0.0
    %1388 = vmatpush1.xpose.msra.mxu0 0.0
    %1389 = vmatprep.subr.mxu0 0.0
    %1390 = vmatpush1.xpose.msra.mxu0 0.0
    %1391 = vmatprep.subr.mxu0 0.0
    %1392 = vmatpush1.xpose.msra.mxu0 0.0
    %1393 = vmatprep.subr.mxu0 0.0
    %1394 = vmatpush1.xpose.msra.mxu0 0.0
    %1395 = vmatprep.mubr.f32.mxu0 0.0
    %v1396 = vand.u32 %v153, 4294901760
    %v1397 = vsub.f32 %v153, %v1396
    %1398 = vmatmul.mubr.f32.gmra.mrb[0].mxu0 %v1397
    %v1399 = vpop.f32.mrb[0].mxu0
    %v1400 = vadd.f32 %v1318, %v1399
    %v1401 = vpop.f32.mrb[0].mxu0
    %1402 = vmatprep.mubr.f32.mxu0 0.0
    %v1403 = vand.u32 %v156, 4294901760
    %v1404 = vsub.f32 %v156, %v1403
    %1405 = vmatmul.mubr.f32.gmra.mrb[0].mxu0 %v1404
    %v1406 = vpop.f32.mrb[0].mxu0
    %v1407 = vadd.f32 %v1324, %v1406
    %v1408 = vpop.f32.mrb[0].mxu0
    %1409 = vdwg.mxu0
    %1410 = vmatprep.subr.mxu0 0.0
    %v1411 = vand.u32 %v153, 4294901760
    %1412 = vmatpush1.xpose.msra.mxu0 %v1411
    %1413 = vmatprep.subr.mxu0 0.0
    %v1414 = vand.u32 %v156, 4294901760
    %1415 = vmatpush1.xpose.msra.mxu0 %v1414
    %1416 = vmatprep.subr.mxu0 0.0
    %1417 = vmatpush1.xpose.msra.mxu0 0.0
    %1418 = vmatprep.subr.mxu0 0.0
    %1419 = vmatpush1.xpose.msra.mxu0 0.0
    %1420 = vmatprep.subr.mxu0 0.0
    %1421 = vmatpush1.xpose.msra.mxu0 0.0
    %1422 = vmatprep.subr.mxu0 0.0
    %1423 = vmatpush1.xpose.msra.mxu0 0.0
    %1424 = vmatprep.subr.mxu0 0.0
    %1425 = vmatpush1.xpose.msra.mxu0 0.0
    %1426 = vmatprep.subr.mxu0 0.0
    %1427 = vmatpush1.xpose.msra.mxu0 0.0
    %1428 = vmatprep.subr.mxu0 0.0
    %1429 = vmatpush1.xpose.msra.mxu0 0.0
    %1430 = vmatprep.subr.mxu0 0.0
    %1431 = vmatpush1.xpose.msra.mxu0 0.0
    %1432 = vmatprep.subr.mxu0 0.0
    %1433 = vmatpush1.xpose.msra.mxu0 0.0
    %1434 = vmatprep.subr.mxu0 0.0
    %1435 = vmatpush1.xpose.msra.mxu0 0.0
    %1436 = vmatprep.subr.mxu0 0.0
    %1437 = vmatpush1.xpose.msra.mxu0 0.0
    %1438 = vmatprep.subr.mxu0 0.0
    %1439 = vmatpush1.xpose.msra.mxu0 0.0
    %1440 = vmatprep.subr.mxu0 0.0
    %1441 = vmatpush1.xpose.msra.mxu0 0.0
    %1442 = vmatprep.subr.mxu0 0.0
    %1443 = vmatpush1.xpose.msra.mxu0 0.0
    %1444 = vmatprep.subr.mxu0 0.0
    %1445 = vmatpush1.xpose.msra.mxu0 0.0
    %1446 = vmatprep.subr.mxu0 0.0
    %1447 = vmatpush1.xpose.msra.mxu0 0.0
    %1448 = vmatprep.subr.mxu0 0.0
    %1449 = vmatpush1.xpose.msra.mxu0 0.0
    %1450 = vmatprep.subr.mxu0 0.0
    %1451 = vmatpush1.xpose.msra.mxu0 0.0
    %1452 = vmatprep.subr.mxu0 0.0
    %1453 = vmatpush1.xpose.msra.mxu0 0.0
    %1454 = vmatprep.subr.mxu0 0.0
    %1455 = vmatpush1.xpose.msra.mxu0 0.0
    %1456 = vmatprep.subr.mxu0 0.0
    %1457 = vmatpush1.xpose.msra.mxu0 0.0
    %1458 = vmatprep.subr.mxu0 0.0
    %1459 = vmatpush1.xpose.msra.mxu0 0.0
    %1460 = vmatprep.subr.mxu0 0.0
    %1461 = vmatpush1.xpose.msra.mxu0 0.0
    %1462 = vmatprep.subr.mxu0 0.0
    %1463 = vmatpush1.xpose.msra.mxu0 0.0
    %1464 = vmatprep.subr.mxu0 0.0
    %1465 = vmatpush1.xpose.msra.mxu0 0.0
    %1466 = vmatprep.subr.mxu0 0.0
    %1467 = vmatpush1.xpose.msra.mxu0 0.0
    %1468 = vmatprep.subr.mxu0 0.0
    %1469 = vmatpush1.xpose.msra.mxu0 0.0
    %1470 = vmatprep.subr.mxu0 0.0
    %1471 = vmatpush1.xpose.msra.mxu0 0.0
    %1472 = vmatprep.subr.mxu0 0.0
    %1473 = vmatpush1.xpose.msra.mxu0 0.0
    %1474 = vmatprep.subr.mxu0 0.0
    %1475 = vmatpush1.xpose.msra.mxu0 0.0
    %1476 = vmatprep.mubr.f32.mxu0 0.0
    %v1477 = vand.u32 %v153, 4294901760
    %v1478 = vsub.f32 %v153, %v1477
    %v1479 = vand.u32 %v1478, 4294901760
    %1480 = vmatmul.mubr.f32.gmra.mrb[0].mxu0 %v1479
    %v1481 = vpop.f32.mrb[0].mxu0
    %v1482 = vadd.f32 %v1400, %v1481
    %v1483 = vpop.f32.mrb[0].mxu0
    %1484 = vmatprep.mubr.f32.mxu0 0.0
    %v1485 = vand.u32 %v156, 4294901760
    %v1486 = vsub.f32 %v156, %v1485
    %v1487 = vand.u32 %v1486, 4294901760
    %1488 = vmatmul.mubr.f32.gmra.mrb[0].mxu0 %v1487
    %v1489 = vpop.f32.mrb[0].mxu0
    %v1490 = vadd.f32 %v1407, %v1489
    %v1491 = vpop.f32.mrb[0].mxu0
    %1492 = vdwg.mxu0
    %1493 = vmatprep.subr.mxu0 0.0
    %v1494 = vand.u32 %v153, 4294901760
    %v1495 = vsub.f32 %v153, %v1494
    %v1496 = vand.u32 %v1495, 4294901760
    %1497 = vmatpush1.xpose.msra.mxu0 %v1496
    %1498 = vmatprep.subr.mxu0 0.0
    %v1499 = vand.u32 %v156, 4294901760
    %v1500 = vsub.f32 %v156, %v1499
    %v1501 = vand.u32 %v1500, 4294901760
    %1502 = vmatpush1.xpose.msra.mxu0 %v1501
    %1503 = vmatprep.subr.mxu0 0.0
    %1504 = vmatpush1.xpose.msra.mxu0 0.0
    %1505 = vmatprep.subr.mxu0 0.0
    %1506 = vmatpush1.xpose.msra.mxu0 0.0
    %1507 = vmatprep.subr.mxu0 0.0
    %1508 = vmatpush1.xpose.msra.mxu0 0.0
    %1509 = vmatprep.subr.mxu0 0.0
    %1510 = vmatpush1.xpose.msra.mxu0 0.0
    %1511 = vmatprep.subr.mxu0 0.0
    %1512 = vmatpush1.xpose.msra.mxu0 0.0
    %1513 = vmatprep.subr.mxu0 0.0
    %1514 = vmatpush1.xpose.msra.mxu0 0.0
    %1515 = vmatprep.subr.mxu0 0.0
    %1516 = vmatpush1.xpose.msra.mxu0 0.0
    %1517 = vmatprep.subr.mxu0 0.0
    %1518 = vmatpush1.xpose.msra.mxu0 0.0
    %1519 = vmatprep.subr.mxu0 0.0
    %1520 = vmatpush1.xpose.msra.mxu0 0.0
    %1521 = vmatprep.subr.mxu0 0.0
    %1522 = vmatpush1.xpose.msra.mxu0 0.0
    %1523 = vmatprep.subr.mxu0 0.0
    %1524 = vmatpush1.xpose.msra.mxu0 0.0
    %1525 = vmatprep.subr.mxu0 0.0
    %1526 = vmatpush1.xpose.msra.mxu0 0.0
    %1527 = vmatprep.subr.mxu0 0.0
    %1528 = vmatpush1.xpose.msra.mxu0 0.0
    %1529 = vmatprep.subr.mxu0 0.0
    %1530 = vmatpush1.xpose.msra.mxu0 0.0
    %1531 = vmatprep.subr.mxu0 0.0
    %1532 = vmatpush1.xpose.msra.mxu0 0.0
    %1533 = vmatprep.subr.mxu0 0.0
    %1534 = vmatpush1.xpose.msra.mxu0 0.0
    %1535 = vmatprep.subr.mxu0 0.0
    %1536 = vmatpush1.xpose.msra.mxu0 0.0
    %1537 = vmatprep.subr.mxu0 0.0
    %1538 = vmatpush1.xpose.msra.mxu0 0.0
    %1539 = vmatprep.subr.mxu0 0.0
    %1540 = vmatpush1.xpose.msra.mxu0 0.0
    %1541 = vmatprep.subr.mxu0 0.0
    %1542 = vmatpush1.xpose.msra.mxu0 0.0
    %1543 = vmatprep.subr.mxu0 0.0
    %1544 = vmatpush1.xpose.msra.mxu0 0.0
    %1545 = vmatprep.subr.mxu0 0.0
    %1546 = vmatpush1.xpose.msra.mxu0 0.0
    %1547 = vmatprep.subr.mxu0 0.0
    %1548 = vmatpush1.xpose.msra.mxu0 0.0
    %1549 = vmatprep.subr.mxu0 0.0
    %1550 = vmatpush1.xpose.msra.mxu0 0.0
    %1551 = vmatprep.subr.mxu0 0.0
    %1552 = vmatpush1.xpose.msra.mxu0 0.0
    %1553 = vmatprep.subr.mxu0 0.0
    %1554 = vmatpush1.xpose.msra.mxu0 0.0
    %1555 = vmatprep.subr.mxu0 0.0
    %1556 = vmatpush1.xpose.msra.mxu0 0.0
    %1557 = vmatprep.subr.mxu0 0.0
    %1558 = vmatpush1.xpose.msra.mxu0 0.0
    %1559 = vmatprep.subr.mxu0 0.0
    %1560 = vmatpush1.xpose.msra.mxu0 0.0
    %1561 = vmatprep.subr.mxu0 0.0
    %1562 = vmatpush1.xpose.msra.mxu0 0.0
    %1563 = vmatprep.mubr.f32.mxu0 0.0
    %v1564 = vand.u32 %v153, 4294901760
    %1565 = vmatmul.mubr.f32.gmra.mrb[0].mxu0 %v1564
    %v1566 = vpop.f32.mrb[0].mxu0
    %v1567 = vadd.f32 %v1482, %v1566
    %v1568 = vpop.f32.mrb[0].mxu0
    %1569 = vmatprep.mubr.f32.mxu0 0.0
    %v1570 = vand.u32 %v156, 4294901760
    %1571 = vmatmul.mubr.f32.gmra.mrb[0].mxu0 %v1570
    %v1572 = vpop.f32.mrb[0].mxu0
    %v1573 = vadd.f32 %v1490, %v1572
    %v1574 = vpop.f32.mrb[0].mxu0
    %1575 = vdwg.mxu0
    %1576 = vmatprep.subr.mxu0 0.0
    %v1577 = vand.u32 %v153, 4294901760
    %1578 = vmatpush1.xpose.msra.mxu0 %v1577
    %1579 = vmatprep.subr.mxu0 0.0
    %v1580 = vand.u32 %v156, 4294901760
    %1581 = vmatpush1.xpose.msra.mxu0 %v1580
    %1582 = vmatprep.subr.mxu0 0.0
    %1583 = vmatpush1.xpose.msra.mxu0 0.0
    %1584 = vmatprep.subr.mxu0 0.0
    %1585 = vmatpush1.xpose.msra.mxu0 0.0
    %1586 = vmatprep.subr.mxu0 0.0
    %1587 = vmatpush1.xpose.msra.mxu0 0.0
    %1588 = vmatprep.subr.mxu0 0.0
    %1589 = vmatpush1.xpose.msra.mxu0 0.0
    %1590 = vmatprep.subr.mxu0 0.0
    %1591 = vmatpush1.xpose.msra.mxu0 0.0
    %1592 = vmatprep.subr.mxu0 0.0
    %1593 = vmatpush1.xpose.msra.mxu0 0.0
    %1594 = vmatprep.subr.mxu0 0.0
    %1595 = vmatpush1.xpose.msra.mxu0 0.0
    %1596 = vmatprep.subr.mxu0 0.0
    %1597 = vmatpush1.xpose.msra.mxu0 0.0
    %1598 = vmatprep.subr.mxu0 0.0
    %1599 = vmatpush1.xpose.msra.mxu0 0.0
    %1600 = vmatprep.subr.mxu0 0.0
    %1601 = vmatpush1.xpose.msra.mxu0 0.0
    %1602 = vmatprep.subr.mxu0 0.0
    %1603 = vmatpush1.xpose.msra.mxu0 0.0
    %1604 = vmatprep.subr.mxu0 0.0
    %1605 = vmatpush1.xpose.msra.mxu0 0.0
    %1606 = vmatprep.subr.mxu0 0.0
    %1607 = vmatpush1.xpose.msra.mxu0 0.0
    %1608 = vmatprep.subr.mxu0 0.0
    %1609 = vmatpush1.xpose.msra.mxu0 0.0
    %1610 = vmatprep.subr.mxu0 0.0
    %1611 = vmatpush1.xpose.msra.mxu0 0.0
    %1612 = vmatprep.subr.mxu0 0.0
    %1613 = vmatpush1.xpose.msra.mxu0 0.0
    %1614 = vmatprep.subr.mxu0 0.0
    %1615 = vmatpush1.xpose.msra.mxu0 0.0
    %1616 = vmatprep.subr.mxu0 0.0
    %1617 = vmatpush1.xpose.msra.mxu0 0.0
    %1618 = vmatprep.subr.mxu0 0.0
    %1619 = vmatpush1.xpose.msra.mxu0 0.0
    %1620 = vmatprep.subr.mxu0 0.0
    %1621 = vmatpush1.xpose.msra.mxu0 0.0
    %1622 = vmatprep.subr.mxu0 0.0
    %1623 = vmatpush1.xpose.msra.mxu0 0.0
    %1624 = vmatprep.subr.mxu0 0.0
    %1625 = vmatpush1.xpose.msra.mxu0 0.0
    %1626 = vmatprep.subr.mxu0 0.0
    %1627 = vmatpush1.xpose.msra.mxu0 0.0
    %1628 = vmatprep.subr.mxu0 0.0
    %1629 = vmatpush1.xpose.msra.mxu0 0.0
    %1630 = vmatprep.subr.mxu0 0.0
    %1631 = vmatpush1.xpose.msra.mxu0 0.0
    %1632 = vmatprep.subr.mxu0 0.0
    %1633 = vmatpush1.xpose.msra.mxu0 0.0
    %1634 = vmatprep.subr.mxu0 0.0
    %1635 = vmatpush1.xpose.msra.mxu0 0.0
    %1636 = vmatprep.subr.mxu0 0.0
    %1637 = vmatpush1.xpose.msra.mxu0 0.0
    %1638 = vmatprep.subr.mxu0 0.0
    %1639 = vmatpush1.xpose.msra.mxu0 0.0
    %1640 = vmatprep.subr.mxu0 0.0
    %1641 = vmatpush1.xpose.msra.mxu0 0.0
    %1642 = vmatprep.mubr.f32.mxu0 0.0
    %v1643 = vand.u32 %v153, 4294901760
    %1644 = vmatmul.mubr.f32.gmra.mrb[0].mxu0 %v1643
    %v1645 = vpop.f32.mrb[0].mxu0
    %v1646 = vadd.f32 %v1567, %v1645
    %v1647 = vpop.f32.mrb[0].mxu0
    %1648 = vmatprep.mubr.f32.mxu0 0.0
    %v1649 = vand.u32 %v156, 4294901760
    %1650 = vmatmul.mubr.f32.gmra.mrb[0].mxu0 %v1649
    %v1651 = vpop.f32.mrb[0].mxu0
    %v1652 = vadd.f32 %v1573, %v1651
    %v1653 = vpop.f32.mrb[0].mxu0
    %1654 = vdwg.mxu0
    %v1655 = vmul.f32 %v149, %v149
    %v1656 = vmul.f32 %v150, %v150
    %v1657 = vsel %vm151, %v1655, 0.0
    %1658 = vadd.xlane.f32.xlu0 %v1657
    %v1659 = vpop.xlane.xlu0 %1658
    %v1660 = vsel %vm151, %v1656, 0.0
    %1661 = vadd.xlane.f32.xlu0 %v1660
    %v1662 = vpop.xlane.xlu0 %1661
    %v1664 = vsel %vm151, 1.0, 0
    %v1667 = vsel %vm151, %v1655, 0
    %v1670 = vsel %vm151, %v1656, 0
    %1672 = vmatprep.subr.mxu0 0.0
    %v1673 = vand.u32 %v1667, 4294901760
    %1674 = vmatpush1.xpose.msra.mxu0 %v1673
    %1675 = vmatprep.subr.mxu0 0.0
    %v1676 = vand.u32 %v1670, 4294901760
    %1677 = vmatpush1.xpose.msra.mxu0 %v1676
    %1678 = vmatprep.subr.mxu0 0.0
    %1679 = vmatpush1.xpose.msra.mxu0 0.0
    %1680 = vmatprep.subr.mxu0 0.0
    %1681 = vmatpush1.xpose.msra.mxu0 0.0
    %1682 = vmatprep.subr.mxu0 0.0
    %1683 = vmatpush1.xpose.msra.mxu0 0.0
    %1684 = vmatprep.subr.mxu0 0.0
    %1685 = vmatpush1.xpose.msra.mxu0 0.0
    %1686 = vmatprep.subr.mxu0 0.0
    %1687 = vmatpush1.xpose.msra.mxu0 0.0
    %1688 = vmatprep.subr.mxu0 0.0
    %1689 = vmatpush1.xpose.msra.mxu0 0.0
    %1690 = vmatprep.subr.mxu0 0.0
    %1691 = vmatpush1.xpose.msra.mxu0 0.0
    %1692 = vmatprep.subr.mxu0 0.0
    %1693 = vmatpush1.xpose.msra.mxu0 0.0
    %1694 = vmatprep.subr.mxu0 0.0
    %1695 = vmatpush1.xpose.msra.mxu0 0.0
    %1696 = vmatprep.subr.mxu0 0.0
    %1697 = vmatpush1.xpose.msra.mxu0 0.0
    %1698 = vmatprep.subr.mxu0 0.0
    %1699 = vmatpush1.xpose.msra.mxu0 0.0
    %1700 = vmatprep.subr.mxu0 0.0
    %1701 = vmatpush1.xpose.msra.mxu0 0.0
    %1702 = vmatprep.subr.mxu0 0.0
    %1703 = vmatpush1.xpose.msra.mxu0 0.0
    %1704 = vmatprep.subr.mxu0 0.0
    %1705 = vmatpush1.xpose.msra.mxu0 0.0
    %1706 = vmatprep.subr.mxu0 0.0
    %1707 = vmatpush1.xpose.msra.mxu0 0.0
    %1708 = vmatprep.subr.mxu0 0.0
    %1709 = vmatpush1.xpose.msra.mxu0 0.0
    %1710 = vmatprep.subr.mxu0 0.0
    %1711 = vmatpush1.xpose.msra.mxu0 0.0
    %1712 = vmatprep.subr.mxu0 0.0
    %1713 = vmatpush1.xpose.msra.mxu0 0.0
    %1714 = vmatprep.subr.mxu0 0.0
    %1715 = vmatpush1.xpose.msra.mxu0 0.0
    %1716 = vmatprep.subr.mxu0 0.0
    %1717 = vmatpush1.xpose.msra.mxu0 0.0
    %1718 = vmatprep.subr.mxu0 0.0
    %1719 = vmatpush1.xpose.msra.mxu0 0.0
    %1720 = vmatprep.subr.mxu0 0.0
    %1721 = vmatpush1.xpose.msra.mxu0 0.0
    %1722 = vmatprep.subr.mxu0 0.0
    %1723 = vmatpush1.xpose.msra.mxu0 0.0
    %1724 = vmatprep.subr.mxu0 0.0
    %1725 = vmatpush1.xpose.msra.mxu0 0.0
    %1726 = vmatprep.subr.mxu0 0.0
    %1727 = vmatpush1.xpose.msra.mxu0 0.0
    %1728 = vmatprep.subr.mxu0 0.0
    %1729 = vmatpush1.xpose.msra.mxu0 0.0
    %1730 = vmatprep.subr.mxu0 0.0
    %1731 = vmatpush1.xpose.msra.mxu0 0.0
    %1732 = vmatprep.subr.mxu0 0.0
    %1733 = vmatpush1.xpose.msra.mxu0 0.0
    %1734 = vmatprep.subr.mxu0 0.0
    %1735 = vmatpush1.xpose.msra.mxu0 0.0
    %1736 = vmatprep.subr.mxu0 0.0
    %1737 = vmatpush1.xpose.msra.mxu0 0.0
    %1738 = vmatprep.mubr.f32.mxu0 0.0
    %v1739 = vand.u32 %v1664, 4294901760
    %v1740 = vsub.f32 %v1664, %v1739
    %v1741 = vand.u32 %v1740, 4294901760
    %v1742 = vsub.f32 %v1740, %v1741
    %v1743 = vand.u32 %v1742, 4294901760
    %1744 = vmatmul.mubr.f32.gmra.mrb[0].mxu0 %v1743
    %v1745 = vpop.f32.mrb[0].mxu0
    %v1746 = vadd.f32 0.0, %v1745
    %v1747 = vpop.f32.mrb[0].mxu0
    %1748 = vdwg.mxu0
    %1749 = vmatprep.subr.mxu0 0.0
    %v1750 = vand.u32 %v1667, 4294901760
    %v1751 = vsub.f32 %v1667, %v1750
    %v1752 = vand.u32 %v1751, 4294901760
    %v1753 = vsub.f32 %v1751, %v1752
    %v1754 = vand.u32 %v1753, 4294901760
    %1755 = vmatpush1.xpose.msra.mxu0 %v1754
    %1756 = vmatprep.subr.mxu0 0.0
    %v1757 = vand.u32 %v1670, 4294901760
    %v1758 = vsub.f32 %v1670, %v1757
    %v1759 = vand.u32 %v1758, 4294901760
    %v1760 = vsub.f32 %v1758, %v1759
    %v1761 = vand.u32 %v1760, 4294901760
    %1762 = vmatpush1.xpose.msra.mxu0 %v1761
    %1763 = vmatprep.subr.mxu0 0.0
    %1764 = vmatpush1.xpose.msra.mxu0 0.0
    %1765 = vmatprep.subr.mxu0 0.0
    %1766 = vmatpush1.xpose.msra.mxu0 0.0
    %1767 = vmatprep.subr.mxu0 0.0
    %1768 = vmatpush1.xpose.msra.mxu0 0.0
    %1769 = vmatprep.subr.mxu0 0.0
    %1770 = vmatpush1.xpose.msra.mxu0 0.0
    %1771 = vmatprep.subr.mxu0 0.0
    %1772 = vmatpush1.xpose.msra.mxu0 0.0
    %1773 = vmatprep.subr.mxu0 0.0
    %1774 = vmatpush1.xpose.msra.mxu0 0.0
    %1775 = vmatprep.subr.mxu0 0.0
    %1776 = vmatpush1.xpose.msra.mxu0 0.0
    %1777 = vmatprep.subr.mxu0 0.0
    %1778 = vmatpush1.xpose.msra.mxu0 0.0
    %1779 = vmatprep.subr.mxu0 0.0
    %1780 = vmatpush1.xpose.msra.mxu0 0.0
    %1781 = vmatprep.subr.mxu0 0.0
    %1782 = vmatpush1.xpose.msra.mxu0 0.0
    %1783 = vmatprep.subr.mxu0 0.0
    %1784 = vmatpush1.xpose.msra.mxu0 0.0
    %1785 = vmatprep.subr.mxu0 0.0
    %1786 = vmatpush1.xpose.msra.mxu0 0.0
    %1787 = vmatprep.subr.mxu0 0.0
    %1788 = vmatpush1.xpose.msra.mxu0 0.0
    %1789 = vmatprep.subr.mxu0 0.0
    %1790 = vmatpush1.xpose.msra.mxu0 0.0
    %1791 = vmatprep.subr.mxu0 0.0
    %1792 = vmatpush1.xpose.msra.mxu0 0.0
    %1793 = vmatprep.subr.mxu0 0.0
    %1794 = vmatpush1.xpose.msra.mxu0 0.0
    %1795 = vmatprep.subr.mxu0 0.0
    %1796 = vmatpush1.xpose.msra.mxu0 0.0
    %1797 = vmatprep.subr.mxu0 0.0
    %1798 = vmatpush1.xpose.msra.mxu0 0.0
    %1799 = vmatprep.subr.mxu0 0.0
    %1800 = vmatpush1.xpose.msra.mxu0 0.0
    %1801 = vmatprep.subr.mxu0 0.0
    %1802 = vmatpush1.xpose.msra.mxu0 0.0
    %1803 = vmatprep.subr.mxu0 0.0
    %1804 = vmatpush1.xpose.msra.mxu0 0.0
    %1805 = vmatprep.subr.mxu0 0.0
    %1806 = vmatpush1.xpose.msra.mxu0 0.0
    %1807 = vmatprep.subr.mxu0 0.0
    %1808 = vmatpush1.xpose.msra.mxu0 0.0
    %1809 = vmatprep.subr.mxu0 0.0
    %1810 = vmatpush1.xpose.msra.mxu0 0.0
    %1811 = vmatprep.subr.mxu0 0.0
    %1812 = vmatpush1.xpose.msra.mxu0 0.0
    %1813 = vmatprep.subr.mxu0 0.0
    %1814 = vmatpush1.xpose.msra.mxu0 0.0
    %1815 = vmatprep.subr.mxu0 0.0
    %1816 = vmatpush1.xpose.msra.mxu0 0.0
    %1817 = vmatprep.subr.mxu0 0.0
    %1818 = vmatpush1.xpose.msra.mxu0 0.0
    %1819 = vmatprep.subr.mxu0 0.0
    %1820 = vmatpush1.xpose.msra.mxu0 0.0
    %1821 = vmatprep.subr.mxu0 0.0
    %1822 = vmatpush1.xpose.msra.mxu0 0.0
    %1823 = vmatprep.mubr.f32.mxu0 0.0
    %v1824 = vand.u32 %v1664, 4294901760
    %1825 = vmatmul.mubr.f32.gmra.mrb[0].mxu0 %v1824
    %v1826 = vpop.f32.mrb[0].mxu0
    %v1827 = vadd.f32 %v1746, %v1826
    %v1828 = vpop.f32.mrb[0].mxu0
    %1829 = vdwg.mxu0
    %1830 = vmatprep.subr.mxu0 0.0
    %v1831 = vand.u32 %v1667, 4294901760
    %v1832 = vsub.f32 %v1667, %v1831
    %1833 = vmatpush1.xpose.msra.mxu0 %v1832
    %1834 = vmatprep.subr.mxu0 0.0
    %v1835 = vand.u32 %v1670, 4294901760
    %v1836 = vsub.f32 %v1670, %v1835
    %1837 = vmatpush1.xpose.msra.mxu0 %v1836
    %1838 = vmatprep.subr.mxu0 0.0
    %1839 = vmatpush1.xpose.msra.mxu0 0.0
    %1840 = vmatprep.subr.mxu0 0.0
    %1841 = vmatpush1.xpose.msra.mxu0 0.0
    %1842 = vmatprep.subr.mxu0 0.0
    %1843 = vmatpush1.xpose.msra.mxu0 0.0
    %1844 = vmatprep.subr.mxu0 0.0
    %1845 = vmatpush1.xpose.msra.mxu0 0.0
    %1846 = vmatprep.subr.mxu0 0.0
    %1847 = vmatpush1.xpose.msra.mxu0 0.0
    %1848 = vmatprep.subr.mxu0 0.0
    %1849 = vmatpush1.xpose.msra.mxu0 0.0
    %1850 = vmatprep.subr.mxu0 0.0
    %1851 = vmatpush1.xpose.msra.mxu0 0.0
    %1852 = vmatprep.subr.mxu0 0.0
    %1853 = vmatpush1.xpose.msra.mxu0 0.0
    %1854 = vmatprep.subr.mxu0 0.0
    %1855 = vmatpush1.xpose.msra.mxu0 0.0
    %1856 = vmatprep.subr.mxu0 0.0
    %1857 = vmatpush1.xpose.msra.mxu0 0.0
    %1858 = vmatprep.subr.mxu0 0.0
    %1859 = vmatpush1.xpose.msra.mxu0 0.0
    %1860 = vmatprep.subr.mxu0 0.0
    %1861 = vmatpush1.xpose.msra.mxu0 0.0
    %1862 = vmatprep.subr.mxu0 0.0
    %1863 = vmatpush1.xpose.msra.mxu0 0.0
    %1864 = vmatprep.subr.mxu0 0.0
    %1865 = vmatpush1.xpose.msra.mxu0 0.0
    %1866 = vmatprep.subr.mxu0 0.0
    %1867 = vmatpush1.xpose.msra.mxu0 0.0
    %1868 = vmatprep.subr.mxu0 0.0
    %1869 = vmatpush1.xpose.msra.mxu0 0.0
    %1870 = vmatprep.subr.mxu0 0.0
    %1871 = vmatpush1.xpose.msra.mxu0 0.0
    %1872 = vmatprep.subr.mxu0 0.0
    %1873 = vmatpush1.xpose.msra.mxu0 0.0
    %1874 = vmatprep.subr.mxu0 0.0
    %1875 = vmatpush1.xpose.msra.mxu0 0.0
    %1876 = vmatprep.subr.mxu0 0.0
    %1877 = vmatpush1.xpose.msra.mxu0 0.0
    %1878 = vmatprep.subr.mxu0 0.0
    %1879 = vmatpush1.xpose.msra.mxu0 0.0
    %1880 = vmatprep.subr.mxu0 0.0
    %1881 = vmatpush1.xpose.msra.mxu0 0.0
    %1882 = vmatprep.subr.mxu0 0.0
    %1883 = vmatpush1.xpose.msra.mxu0 0.0
    %1884 = vmatprep.subr.mxu0 0.0
    %1885 = vmatpush1.xpose.msra.mxu0 0.0
    %1886 = vmatprep.subr.mxu0 0.0
    %1887 = vmatpush1.xpose.msra.mxu0 0.0
    %1888 = vmatprep.subr.mxu0 0.0
    %1889 = vmatpush1.xpose.msra.mxu0 0.0
    %1890 = vmatprep.subr.mxu0 0.0
    %1891 = vmatpush1.xpose.msra.mxu0 0.0
    %1892 = vmatprep.subr.mxu0 0.0
    %1893 = vmatpush1.xpose.msra.mxu0 0.0
    %1894 = vmatprep.subr.mxu0 0.0
    %1895 = vmatpush1.xpose.msra.mxu0 0.0
    %1896 = vmatprep.subr.mxu0 0.0
    %1897 = vmatpush1.xpose.msra.mxu0 0.0
    %1898 = vmatprep.mubr.f32.mxu0 0.0
    %v1899 = vand.u32 %v1664, 4294901760
    %v1900 = vsub.f32 %v1664, %v1899
    %1901 = vmatmul.mubr.f32.gmra.mrb[0].mxu0 %v1900
    %v1902 = vpop.f32.mrb[0].mxu0
    %v1903 = vadd.f32 %v1827, %v1902
    %v1904 = vpop.f32.mrb[0].mxu0
    %1905 = vdwg.mxu0
    %1906 = vmatprep.subr.mxu0 0.0
    %v1907 = vand.u32 %v1667, 4294901760
    %1908 = vmatpush1.xpose.msra.mxu0 %v1907
    %1909 = vmatprep.subr.mxu0 0.0
    %v1910 = vand.u32 %v1670, 4294901760
    %1911 = vmatpush1.xpose.msra.mxu0 %v1910
    %1912 = vmatprep.subr.mxu0 0.0
    %1913 = vmatpush1.xpose.msra.mxu0 0.0
    %1914 = vmatprep.subr.mxu0 0.0
    %1915 = vmatpush1.xpose.msra.mxu0 0.0
    %1916 = vmatprep.subr.mxu0 0.0
    %1917 = vmatpush1.xpose.msra.mxu0 0.0
    %1918 = vmatprep.subr.mxu0 0.0
    %1919 = vmatpush1.xpose.msra.mxu0 0.0
    %1920 = vmatprep.subr.mxu0 0.0
    %1921 = vmatpush1.xpose.msra.mxu0 0.0
    %1922 = vmatprep.subr.mxu0 0.0
    %1923 = vmatpush1.xpose.msra.mxu0 0.0
    %1924 = vmatprep.subr.mxu0 0.0
    %1925 = vmatpush1.xpose.msra.mxu0 0.0
    %1926 = vmatprep.subr.mxu0 0.0
    %1927 = vmatpush1.xpose.msra.mxu0 0.0
    %1928 = vmatprep.subr.mxu0 0.0
    %1929 = vmatpush1.xpose.msra.mxu0 0.0
    %1930 = vmatprep.subr.mxu0 0.0
    %1931 = vmatpush1.xpose.msra.mxu0 0.0
    %1932 = vmatprep.subr.mxu0 0.0
    %1933 = vmatpush1.xpose.msra.mxu0 0.0
    %1934 = vmatprep.subr.mxu0 0.0
    %1935 = vmatpush1.xpose.msra.mxu0 0.0
    %1936 = vmatprep.subr.mxu0 0.0
    %1937 = vmatpush1.xpose.msra.mxu0 0.0
    %1938 = vmatprep.subr.mxu0 0.0
    %1939 = vmatpush1.xpose.msra.mxu0 0.0
    %1940 = vmatprep.subr.mxu0 0.0
    %1941 = vmatpush1.xpose.msra.mxu0 0.0
    %1942 = vmatprep.subr.mxu0 0.0
    %1943 = vmatpush1.xpose.msra.mxu0 0.0
    %1944 = vmatprep.subr.mxu0 0.0
    %1945 = vmatpush1.xpose.msra.mxu0 0.0
    %1946 = vmatprep.subr.mxu0 0.0
    %1947 = vmatpush1.xpose.msra.mxu0 0.0
    %1948 = vmatprep.subr.mxu0 0.0
    %1949 = vmatpush1.xpose.msra.mxu0 0.0
    %1950 = vmatprep.subr.mxu0 0.0
    %1951 = vmatpush1.xpose.msra.mxu0 0.0
    %1952 = vmatprep.subr.mxu0 0.0
    %1953 = vmatpush1.xpose.msra.mxu0 0.0
    %1954 = vmatprep.subr.mxu0 0.0
    %1955 = vmatpush1.xpose.msra.mxu0 0.0
    %1956 = vmatprep.subr.mxu0 0.0
    %1957 = vmatpush1.xpose.msra.mxu0 0.0
    %1958 = vmatprep.subr.mxu0 0.0
    %1959 = vmatpush1.xpose.msra.mxu0 0.0
    %1960 = vmatprep.subr.mxu0 0.0
    %1961 = vmatpush1.xpose.msra.mxu0 0.0
    %1962 = vmatprep.subr.mxu0 0.0
    %1963 = vmatpush1.xpose.msra.mxu0 0.0
    %1964 = vmatprep.subr.mxu0 0.0
    %1965 = vmatpush1.xpose.msra.mxu0 0.0
    %1966 = vmatprep.subr.mxu0 0.0
    %1967 = vmatpush1.xpose.msra.mxu0 0.0
    %1968 = vmatprep.subr.mxu0 0.0
    %1969 = vmatpush1.xpose.msra.mxu0 0.0
    %1970 = vmatprep.subr.mxu0 0.0
    %1971 = vmatpush1.xpose.msra.mxu0 0.0
    %1972 = vmatprep.mubr.f32.mxu0 0.0
    %v1973 = vand.u32 %v1664, 4294901760
    %v1974 = vsub.f32 %v1664, %v1973
    %v1975 = vand.u32 %v1974, 4294901760
    %1976 = vmatmul.mubr.f32.gmra.mrb[0].mxu0 %v1975
    %v1977 = vpop.f32.mrb[0].mxu0
    %v1978 = vadd.f32 %v1903, %v1977
    %v1979 = vpop.f32.mrb[0].mxu0
    %1980 = vdwg.mxu0
    %1981 = vmatprep.subr.mxu0 0.0
    %v1982 = vand.u32 %v1667, 4294901760
    %v1983 = vsub.f32 %v1667, %v1982
    %v1984 = vand.u32 %v1983, 4294901760
    %1985 = vmatpush1.xpose.msra.mxu0 %v1984
    %1986 = vmatprep.subr.mxu0 0.0
    %v1987 = vand.u32 %v1670, 4294901760
    %v1988 = vsub.f32 %v1670, %v1987
    %v1989 = vand.u32 %v1988, 4294901760
    %1990 = vmatpush1.xpose.msra.mxu0 %v1989
    %1991 = vmatprep.subr.mxu0 0.0
    %1992 = vmatpush1.xpose.msra.mxu0 0.0
    %1993 = vmatprep.subr.mxu0 0.0
    %1994 = vmatpush1.xpose.msra.mxu0 0.0
    %1995 = vmatprep.subr.mxu0 0.0
    %1996 = vmatpush1.xpose.msra.mxu0 0.0
    %1997 = vmatprep.subr.mxu0 0.0
    %1998 = vmatpush1.xpose.msra.mxu0 0.0
    %1999 = vmatprep.subr.mxu0 0.0
    %2000 = vmatpush1.xpose.msra.mxu0 0.0
    %2001 = vmatprep.subr.mxu0 0.0
    %2002 = vmatpush1.xpose.msra.mxu0 0.0
    %2003 = vmatprep.subr.mxu0 0.0
    %2004 = vmatpush1.xpose.msra.mxu0 0.0
    %2005 = vmatprep.subr.mxu0 0.0
    %2006 = vmatpush1.xpose.msra.mxu0 0.0
    %2007 = vmatprep.subr.mxu0 0.0
    %2008 = vmatpush1.xpose.msra.mxu0 0.0
    %2009 = vmatprep.subr.mxu0 0.0
    %2010 = vmatpush1.xpose.msra.mxu0 0.0
    %2011 = vmatprep.subr.mxu0 0.0
    %2012 = vmatpush1.xpose.msra.mxu0 0.0
    %2013 = vmatprep.subr.mxu0 0.0
    %2014 = vmatpush1.xpose.msra.mxu0 0.0
    %2015 = vmatprep.subr.mxu0 0.0
    %2016 = vmatpush1.xpose.msra.mxu0 0.0
    %2017 = vmatprep.subr.mxu0 0.0
    %2018 = vmatpush1.xpose.msra.mxu0 0.0
    %2019 = vmatprep.subr.mxu0 0.0
    %2020 = vmatpush1.xpose.msra.mxu0 0.0
    %2021 = vmatprep.subr.mxu0 0.0
    %2022 = vmatpush1.xpose.msra.mxu0 0.0
    %2023 = vmatprep.subr.mxu0 0.0
    %2024 = vmatpush1.xpose.msra.mxu0 0.0
    %2025 = vmatprep.subr.mxu0 0.0
    %2026 = vmatpush1.xpose.msra.mxu0 0.0
    %2027 = vmatprep.subr.mxu0 0.0
    %2028 = vmatpush1.xpose.msra.mxu0 0.0
    %2029 = vmatprep.subr.mxu0 0.0
    %2030 = vmatpush1.xpose.msra.mxu0 0.0
    %2031 = vmatprep.subr.mxu0 0.0
    %2032 = vmatpush1.xpose.msra.mxu0 0.0
    %2033 = vmatprep.subr.mxu0 0.0
    %2034 = vmatpush1.xpose.msra.mxu0 0.0
    %2035 = vmatprep.subr.mxu0 0.0
    %2036 = vmatpush1.xpose.msra.mxu0 0.0
    %2037 = vmatprep.subr.mxu0 0.0
    %2038 = vmatpush1.xpose.msra.mxu0 0.0
    %2039 = vmatprep.subr.mxu0 0.0
    %2040 = vmatpush1.xpose.msra.mxu0 0.0
    %2041 = vmatprep.subr.mxu0 0.0
    %2042 = vmatpush1.xpose.msra.mxu0 0.0
    %2043 = vmatprep.subr.mxu0 0.0
    %2044 = vmatpush1.xpose.msra.mxu0 0.0
    %2045 = vmatprep.subr.mxu0 0.0
    %2046 = vmatpush1.xpose.msra.mxu0 0.0
    %2047 = vmatprep.subr.mxu0 0.0
    %2048 = vmatpush1.xpose.msra.mxu0 0.0
    %2049 = vmatprep.subr.mxu0 0.0
    %2050 = vmatpush1.xpose.msra.mxu0 0.0
    %2051 = vmatprep.mubr.f32.mxu0 0.0
    %v2052 = vand.u32 %v1664, 4294901760
    %2053 = vmatmul.mubr.f32.gmra.mrb[0].mxu0 %v2052
    %v2054 = vpop.f32.mrb[0].mxu0
    %v2055 = vadd.f32 %v1978, %v2054
    %v2056 = vpop.f32.mrb[0].mxu0
    %2057 = vdwg.mxu0
    %2058 = vmatprep.subr.mxu0 0.0
    %v2059 = vand.u32 %v1667, 4294901760
    %2060 = vmatpush1.xpose.msra.mxu0 %v2059
    %2061 = vmatprep.subr.mxu0 0.0
    %v2062 = vand.u32 %v1670, 4294901760
    %2063 = vmatpush1.xpose.msra.mxu0 %v2062
    %2064 = vmatprep.subr.mxu0 0.0
    %2065 = vmatpush1.xpose.msra.mxu0 0.0
    %2066 = vmatprep.subr.mxu0 0.0
    %2067 = vmatpush1.xpose.msra.mxu0 0.0
    %2068 = vmatprep.subr.mxu0 0.0
    %2069 = vmatpush1.xpose.msra.mxu0 0.0
    %2070 = vmatprep.subr.mxu0 0.0
    %2071 = vmatpush1.xpose.msra.mxu0 0.0
    %2072 = vmatprep.subr.mxu0 0.0
    %2073 = vmatpush1.xpose.msra.mxu0 0.0
    %2074 = vmatprep.subr.mxu0 0.0
    %2075 = vmatpush1.xpose.msra.mxu0 0.0
    %2076 = vmatprep.subr.mxu0 0.0
    %2077 = vmatpush1.xpose.msra.mxu0 0.0
    %2078 = vmatprep.subr.mxu0 0.0
    %2079 = vmatpush1.xpose.msra.mxu0 0.0
    %2080 = vmatprep.subr.mxu0 0.0
    %2081 = vmatpush1.xpose.msra.mxu0 0.0
    %2082 = vmatprep.subr.mxu0 0.0
    %2083 = vmatpush1.xpose.msra.mxu0 0.0
    %2084 = vmatprep.subr.mxu0 0.0
    %2085 = vmatpush1.xpose.msra.mxu0 0.0
    %2086 = vmatprep.subr.mxu0 0.0
    %2087 = vmatpush1.xpose.msra.mxu0 0.0
    %2088 = vmatprep.subr.mxu0 0.0
    %2089 = vmatpush1.xpose.msra.mxu0 0.0
    %2090 = vmatprep.subr.mxu0 0.0
    %2091 = vmatpush1.xpose.msra.mxu0 0.0
    %2092 = vmatprep.subr.mxu0 0.0
    %2093 = vmatpush1.xpose.msra.mxu0 0.0
    %2094 = vmatprep.subr.mxu0 0.0
    %2095 = vmatpush1.xpose.msra.mxu0 0.0
    %2096 = vmatprep.subr.mxu0 0.0
    %2097 = vmatpush1.xpose.msra.mxu0 0.0
    %2098 = vmatprep.subr.mxu0 0.0
    %2099 = vmatpush1.xpose.msra.mxu0 0.0
    %2100 = vmatprep.subr.mxu0 0.0
    %2101 = vmatpush1.xpose.msra.mxu0 0.0
    %2102 = vmatprep.subr.mxu0 0.0
    %2103 = vmatpush1.xpose.msra.mxu0 0.0
    %2104 = vmatprep.subr.mxu0 0.0
    %2105 = vmatpush1.xpose.msra.mxu0 0.0
    %2106 = vmatprep.subr.mxu0 0.0
    %2107 = vmatpush1.xpose.msra.mxu0 0.0
    %2108 = vmatprep.subr.mxu0 0.0
    %2109 = vmatpush1.xpose.msra.mxu0 0.0
    %2110 = vmatprep.subr.mxu0 0.0
    %2111 = vmatpush1.xpose.msra.mxu0 0.0
    %2112 = vmatprep.subr.mxu0 0.0
    %2113 = vmatpush1.xpose.msra.mxu0 0.0
    %2114 = vmatprep.subr.mxu0 0.0
    %2115 = vmatpush1.xpose.msra.mxu0 0.0
    %2116 = vmatprep.subr.mxu0 0.0
    %2117 = vmatpush1.xpose.msra.mxu0 0.0
    %2118 = vmatprep.subr.mxu0 0.0
    %2119 = vmatpush1.xpose.msra.mxu0 0.0
    %2120 = vmatprep.subr.mxu0 0.0
    %2121 = vmatpush1.xpose.msra.mxu0 0.0
    %2122 = vmatprep.subr.mxu0 0.0
    %2123 = vmatpush1.xpose.msra.mxu0 0.0
    %2124 = vmatprep.mubr.f32.mxu0 0.0
    %v2125 = vand.u32 %v1664, 4294901760
    %2126 = vmatmul.mubr.f32.gmra.mrb[0].mxu0 %v2125
    %v2127 = vpop.f32.mrb[0].mxu0
    %v2128 = vadd.f32 %v2055, %v2127
    %v2129 = vpop.f32.mrb[0].mxu0
    %2130 = vdwg.mxu0
    %v2131 = vmul.f32 %v1646, 2.0
    %v2132 = vmul.f32 %v1652, 2.0
    %v2133 = vsub.f32 %v2131, %v1659
    %v2134 = vsub.f32 %v2132, %v1662
    %v2135 = vlaneseq
    %v2136 = vshrl.u32 %v2135, 7
    %v2137 = vsub.s32 0, %v2136
    %v2138 = vrot.slane %v2128, %v2137
    %v2139 = vsub.f32 %v2133, %v2138
    %v2140 = vsub.f32 %v2134, %v2138
    %vm2141 = vcmask 130048
    %v2142 = vsel %vm2141, %v2139, -inf
    %2143 = vmax.xlane.f32.xlu0 %v2142
    %v2144 = vpop.xlane.xlu0 %2143
    %v2145 = vsel %vm2141, %v2140, -inf
    %2146 = vmax.xlane.f32.xlu0 %v2145
    %v2147 = vpop.xlane.xlu0 %2146
    %vm2148 = vcmp.eq.f32.partialorder %v2139, %v2144
    %vm2149 = vcmp.eq.f32.partialorder %v2140, %v2147
    %v2150 = vsel %vm2148, %v148, 16.0
    %v2151 = vsel %vm2149, %v148, 16.0
    %v2152 = vsel %vm2141, %v2150, inf
    %2153 = vmin.xlane.f32.xlu0 %v2152
    %v2154 = vpop.xlane.xlu0 %2153
    %v2155 = vsel %vm2141, %v2151, inf
    %2156 = vmin.xlane.f32.xlu0 %v2155
    %v2157 = vpop.xlane.xlu0 %2156
    %vm2158 = vcmp.eq.f32.partialorder %v148, %v2154
    %vm2159 = vcmp.eq.f32.partialorder %v148, %v2157
    %v2160 = vsel %vm2158, 1, 0
    %v2161 = vsel %vm2159, 1, 0
    %v2162 = vcvt.s32.f32 %v2160
    %v2163 = vcvt.s32.f32 %v2161
    %v2164 = vsel %vm2158, -inf, %v2139
    %v2165 = vsel %vm2159, -inf, %v2140
    %v2166 = vsel %vm2141, %v2164, -inf
    %2167 = vmax.xlane.f32.xlu0 %v2166
    %v2168 = vpop.xlane.xlu0 %2167
    %v2169 = vsel %vm2141, %v2165, -inf
    %2170 = vmax.xlane.f32.xlu0 %v2169
    %v2171 = vpop.xlane.xlu0 %2170
    %vm2172 = vcmp.eq.f32.partialorder %v2164, %v2168
    %vm2173 = vcmp.eq.f32.partialorder %v2165, %v2171
    %v2174 = vsel %vm2172, %v148, 16.0
    %v2175 = vsel %vm2173, %v148, 16.0
    %v2176 = vsel %vm2141, %v2174, inf
    %2177 = vmin.xlane.f32.xlu0 %v2176
    %v2178 = vpop.xlane.xlu0 %2177
    %v2179 = vsel %vm2141, %v2175, inf
    %2180 = vmin.xlane.f32.xlu0 %v2179
    %v2181 = vpop.xlane.xlu0 %2180
    %vm2182 = vcmp.eq.f32.partialorder %v148, %v2178
    %vm2183 = vcmp.eq.f32.partialorder %v148, %v2181
    %v2184 = vsel %vm2182, 1, 0
    %v2185 = vsel %vm2183, 1, 0
    %v2186 = vcvt.s32.f32 %v2184
    %v2187 = vcvt.s32.f32 %v2185
    %v2188 = vsel %vm2182, -inf, %v2164
    %v2189 = vsel %vm2183, -inf, %v2165
    %v2190 = vsel %vm2141, %v2188, -inf
    %2191 = vmax.xlane.f32.xlu0 %v2190
    %v2192 = vpop.xlane.xlu0 %2191
    %v2193 = vsel %vm2141, %v2189, -inf
    %2194 = vmax.xlane.f32.xlu0 %v2193
    %v2195 = vpop.xlane.xlu0 %2194
    %vm2196 = vcmp.eq.f32.partialorder %v2188, %v2192
    %vm2197 = vcmp.eq.f32.partialorder %v2189, %v2195
    %v2198 = vsel %vm2196, %v148, 16.0
    %v2199 = vsel %vm2197, %v148, 16.0
    %v2200 = vsel %vm2141, %v2198, inf
    %2201 = vmin.xlane.f32.xlu0 %v2200
    %v2202 = vpop.xlane.xlu0 %2201
    %v2203 = vsel %vm2141, %v2199, inf
    %2204 = vmin.xlane.f32.xlu0 %v2203
    %v2205 = vpop.xlane.xlu0 %2204
    %vm2206 = vcmp.eq.f32.partialorder %v148, %v2202
    %vm2207 = vcmp.eq.f32.partialorder %v148, %v2205
    %v2208 = vsel %vm2206, 1, 0
    %v2209 = vsel %vm2207, 1, 0
    %v2210 = vcvt.s32.f32 %v2208
    %v2211 = vcvt.s32.f32 %v2209
    %v2212 = vsel %vm2206, -inf, %v2188
    %v2213 = vsel %vm2207, -inf, %v2189
    %v2214 = vsel %vm2141, %v2212, -inf
    %2215 = vmax.xlane.f32.xlu0 %v2214
    %v2216 = vpop.xlane.xlu0 %2215
    %v2217 = vsel %vm2141, %v2213, -inf
    %2218 = vmax.xlane.f32.xlu0 %v2217
    %v2219 = vpop.xlane.xlu0 %2218
    %vm2220 = vcmp.eq.f32.partialorder %v2212, %v2216
    %vm2221 = vcmp.eq.f32.partialorder %v2213, %v2219
    %v2222 = vsel %vm2220, %v148, 16.0
    %v2223 = vsel %vm2221, %v148, 16.0
    %v2224 = vsel %vm2141, %v2222, inf
    %2225 = vmin.xlane.f32.xlu0 %v2224
    %v2226 = vpop.xlane.xlu0 %2225
    %v2227 = vsel %vm2141, %v2223, inf
    %2228 = vmin.xlane.f32.xlu0 %v2227
    %v2229 = vpop.xlane.xlu0 %2228
    %vm2230 = vcmp.eq.f32.partialorder %v148, %v2226
    %vm2231 = vcmp.eq.f32.partialorder %v148, %v2229
    %v2232 = vsel %vm2230, 1, 0
    %v2233 = vsel %vm2231, 1, 0
    %v2234 = vcvt.s32.f32 %v2232
    %v2235 = vcvt.s32.f32 %v2233
    %v2236 = vsel %vm2230, -inf, %v2212
    %v2237 = vsel %vm2231, -inf, %v2213
    %v2238 = vsel %vm2141, %v2236, -inf
    %2239 = vmax.xlane.f32.xlu0 %v2238
    %v2240 = vpop.xlane.xlu0 %2239
    %v2241 = vsel %vm2141, %v2237, -inf
    %2242 = vmax.xlane.f32.xlu0 %v2241
    %v2243 = vpop.xlane.xlu0 %2242
    %vm2244 = vcmp.eq.f32.partialorder %v2236, %v2240
    %vm2245 = vcmp.eq.f32.partialorder %v2237, %v2243
    %v2246 = vsel %vm2244, %v148, 16.0
    %v2247 = vsel %vm2245, %v148, 16.0
    %v2248 = vsel %vm2141, %v2246, inf
    %2249 = vmin.xlane.f32.xlu0 %v2248
    %v2250 = vpop.xlane.xlu0 %2249
    %v2251 = vsel %vm2141, %v2247, inf
    %2252 = vmin.xlane.f32.xlu0 %v2251
    %v2253 = vpop.xlane.xlu0 %2252
    %vm2254 = vcmp.eq.f32.partialorder %v148, %v2250
    %vm2255 = vcmp.eq.f32.partialorder %v148, %v2253
    %v2256 = vsel %vm2254, 1, 0
    %v2257 = vsel %vm2255, 1, 0
    %v2258 = vcvt.s32.f32 %v2256
    %v2259 = vcvt.s32.f32 %v2257
    %v2260 = vsel %vm2254, -inf, %v2236
    %v2261 = vsel %vm2255, -inf, %v2237
    %v2262 = vsel %vm2141, %v2260, -inf
    %2263 = vmax.xlane.f32.xlu0 %v2262
    %v2264 = vpop.xlane.xlu0 %2263
    %v2265 = vsel %vm2141, %v2261, -inf
    %2266 = vmax.xlane.f32.xlu0 %v2265
    %v2267 = vpop.xlane.xlu0 %2266
    %vm2268 = vcmp.eq.f32.partialorder %v2260, %v2264
    %vm2269 = vcmp.eq.f32.partialorder %v2261, %v2267
    %v2270 = vsel %vm2268, %v148, 16.0
    %v2271 = vsel %vm2269, %v148, 16.0
    %v2272 = vsel %vm2141, %v2270, inf
    %2273 = vmin.xlane.f32.xlu0 %v2272
    %v2274 = vpop.xlane.xlu0 %2273
    %v2275 = vsel %vm2141, %v2271, inf
    %2276 = vmin.xlane.f32.xlu0 %v2275
    %v2277 = vpop.xlane.xlu0 %2276
    %vm2278 = vcmp.eq.f32.partialorder %v148, %v2274
    %vm2279 = vcmp.eq.f32.partialorder %v148, %v2277
    %v2280 = vsel %vm2278, 1, 0
    %v2281 = vsel %vm2279, 1, 0
    %v2282 = vcvt.s32.f32 %v2280
    %v2283 = vcvt.s32.f32 %v2281
    %v2284 = vsel %vm2278, -inf, %v2260
    %v2285 = vsel %vm2279, -inf, %v2261
    %v2286 = vsel %vm2141, %v2284, -inf
    %2287 = vmax.xlane.f32.xlu0 %v2286
    %v2288 = vpop.xlane.xlu0 %2287
    %v2289 = vsel %vm2141, %v2285, -inf
    %2290 = vmax.xlane.f32.xlu0 %v2289
    %v2291 = vpop.xlane.xlu0 %2290
    %vm2292 = vcmp.eq.f32.partialorder %v2284, %v2288
    %vm2293 = vcmp.eq.f32.partialorder %v2285, %v2291
    %v2294 = vsel %vm2292, %v148, 16.0
    %v2295 = vsel %vm2293, %v148, 16.0
    %v2296 = vsel %vm2141, %v2294, inf
    %2297 = vmin.xlane.f32.xlu0 %v2296
    %v2298 = vpop.xlane.xlu0 %2297
    %v2299 = vsel %vm2141, %v2295, inf
    %2300 = vmin.xlane.f32.xlu0 %v2299
    %v2301 = vpop.xlane.xlu0 %2300
    %vm2302 = vcmp.eq.f32.partialorder %v148, %v2298
    %vm2303 = vcmp.eq.f32.partialorder %v148, %v2301
    %v2304 = vsel %vm2302, 1, 0
    %v2305 = vsel %vm2303, 1, 0
    %v2306 = vcvt.s32.f32 %v2304
    %v2307 = vcvt.s32.f32 %v2305
    %v2308 = vsel %vm2302, -inf, %v2284
    %v2309 = vsel %vm2303, -inf, %v2285
    %v2310 = vsel %vm2141, %v2308, -inf
    %2311 = vmax.xlane.f32.xlu0 %v2310
    %v2312 = vpop.xlane.xlu0 %2311
    %v2313 = vsel %vm2141, %v2309, -inf
    %2314 = vmax.xlane.f32.xlu0 %v2313
    %v2315 = vpop.xlane.xlu0 %2314
    %vm2316 = vcmp.eq.f32.partialorder %v2308, %v2312
    %vm2317 = vcmp.eq.f32.partialorder %v2309, %v2315
    %v2318 = vsel %vm2316, %v148, 16.0
    %v2319 = vsel %vm2317, %v148, 16.0
    %v2320 = vsel %vm2141, %v2318, inf
    %2321 = vmin.xlane.f32.xlu0 %v2320
    %v2322 = vpop.xlane.xlu0 %2321
    %v2323 = vsel %vm2141, %v2319, inf
    %2324 = vmin.xlane.f32.xlu0 %v2323
    %v2325 = vpop.xlane.xlu0 %2324
    %vm2326 = vcmp.eq.f32.partialorder %v148, %v2322
    %vm2327 = vcmp.eq.f32.partialorder %v148, %v2325
    %v2328 = vsel %vm2326, 1, 0
    %v2329 = vsel %vm2327, 1, 0
    %v2330 = vcvt.s32.f32 %v2328
    %v2331 = vcvt.s32.f32 %v2329
    %v2332 = vpack.c.bf16 %v2163, %v2162
    %v2333 = vpack.c.bf16 %v2187, %v2186
    %v2334 = vpack.c.bf16 %v2211, %v2210
    %v2335 = vpack.c.bf16 %v2235, %v2234
    %v2336 = vpack.c.bf16 %v2259, %v2258
    %v2337 = vpack.c.bf16 %v2283, %v2282
    %v2338 = vpack.c.bf16 %v2307, %v2306
    %v2339 = vpack.c.bf16 %v2331, %v2330
    %v2340 = vpack.c.bf16 %v648, %v642
    %v2342 = vsel %vm2141, %v2332, 0
    %v2345 = vsel %vm2141, %v2333, 0
    %v2348 = vsel %vm2141, %v2334, 0
    %v2351 = vsel %vm2141, %v2335, 0
    %v2354 = vsel %vm2141, %v2336, 0
    %v2357 = vsel %vm2141, %v2337, 0
    %v2360 = vsel %vm2141, %v2338, 0
    %v2363 = vsel %vm2141, %v2339, 0
    %2365 = vmatprep.subr.bf16.mxu0 0
    %2366 = vmatpush1.bf16.msra.mxu0 %v2340
    %2367 = vmatprep.subr.bf16.mxu0 0
    %2368 = vmatpush1.bf16.msra.mxu0 0
    %2369 = vmatprep.subr.bf16.mxu0 0
    %2370 = vmatpush1.bf16.msra.mxu0 0
    %2371 = vmatprep.subr.bf16.mxu0 0
    %2372 = vmatpush1.bf16.msra.mxu0 0
    %2373 = vmatprep.subr.bf16.mxu0 0
    %2374 = vmatpush1.bf16.msra.mxu0 0
    %2375 = vmatprep.subr.bf16.mxu0 0
    %2376 = vmatpush1.bf16.msra.mxu0 0
    %2377 = vmatprep.subr.bf16.mxu0 0
    %2378 = vmatpush1.bf16.msra.mxu0 0
    %2379 = vmatprep.subr.bf16.mxu0 0
    %2380 = vmatpush1.bf16.msra.mxu0 0
    %2381 = vmatprep.subr.bf16.mxu0 0
    %2382 = vmatpush1.bf16.msra.mxu0 0
    %2383 = vmatprep.subr.bf16.mxu0 0
    %2384 = vmatpush1.bf16.msra.mxu0 0
    %2385 = vmatprep.subr.bf16.mxu0 0
    %2386 = vmatpush1.bf16.msra.mxu0 0
    %2387 = vmatprep.subr.bf16.mxu0 0
    %2388 = vmatpush1.bf16.msra.mxu0 0
    %2389 = vmatprep.subr.bf16.mxu0 0
    %2390 = vmatpush1.bf16.msra.mxu0 0
    %2391 = vmatprep.subr.bf16.mxu0 0
    %2392 = vmatpush1.bf16.msra.mxu0 0
    %2393 = vmatprep.subr.bf16.mxu0 0
    %2394 = vmatpush1.bf16.msra.mxu0 0
    %2395 = vmatprep.subr.bf16.mxu0 0
    %2396 = vmatpush1.bf16.msra.mxu0 0
    %2397 = vmatprep.mubr.bf16.mxu0 0
    %2398 = vmatmul.mubr.bf16.gmra.mrb[0].mxu0 %v2342
    %v2399 = vpop.f32.mrb[0].mxu0
    %v2400 = vadd.f32 %v1151, %v2399
    %v2401 = vpop.f32.mrb[0].mxu0
    %v2402 = vpop.f32.mrb[0].mxu0
    %v2403 = vadd.f32 %v1152, %v2402
    %v2404 = vpop.f32.mrb[0].mxu0
    %2405 = vmatprep.mubr.bf16.mxu0 0
    %2406 = vmatmul.mubr.bf16.gmra.mrb[0].mxu0 %v2345
    %v2407 = vpop.f32.mrb[0].mxu0
    %v2408 = vadd.f32 %v1151, %v2407
    %v2409 = vpop.f32.mrb[0].mxu0
    %v2410 = vpop.f32.mrb[0].mxu0
    %v2411 = vadd.f32 %v1152, %v2410
    %v2412 = vpop.f32.mrb[0].mxu0
    %2413 = vmatprep.mubr.bf16.mxu0 0
    %2414 = vmatmul.mubr.bf16.gmra.mrb[0].mxu0 %v2348
    %v2415 = vpop.f32.mrb[0].mxu0
    %v2416 = vadd.f32 %v1151, %v2415
    %v2417 = vpop.f32.mrb[0].mxu0
    %v2418 = vpop.f32.mrb[0].mxu0
    %v2419 = vadd.f32 %v1152, %v2418
    %v2420 = vpop.f32.mrb[0].mxu0
    %2421 = vmatprep.mubr.bf16.mxu0 0
    %2422 = vmatmul.mubr.bf16.gmra.mrb[0].mxu0 %v2351
    %v2423 = vpop.f32.mrb[0].mxu0
    %v2424 = vadd.f32 %v1151, %v2423
    %v2425 = vpop.f32.mrb[0].mxu0
    %v2426 = vpop.f32.mrb[0].mxu0
    %v2427 = vadd.f32 %v1152, %v2426
    %v2428 = vpop.f32.mrb[0].mxu0
    %2429 = vmatprep.mubr.bf16.mxu0 0
    %2430 = vmatmul.mubr.bf16.gmra.mrb[0].mxu0 %v2354
    %v2431 = vpop.f32.mrb[0].mxu0
    %v2432 = vadd.f32 %v1151, %v2431
    %v2433 = vpop.f32.mrb[0].mxu0
    %v2434 = vpop.f32.mrb[0].mxu0
    %v2435 = vadd.f32 %v1152, %v2434
    %v2436 = vpop.f32.mrb[0].mxu0
    %2437 = vmatprep.mubr.bf16.mxu0 0
    %2438 = vmatmul.mubr.bf16.gmra.mrb[0].mxu0 %v2357
    %v2439 = vpop.f32.mrb[0].mxu0
    %v2440 = vadd.f32 %v1151, %v2439
    %v2441 = vpop.f32.mrb[0].mxu0
    %v2442 = vpop.f32.mrb[0].mxu0
    %v2443 = vadd.f32 %v1152, %v2442
    %v2444 = vpop.f32.mrb[0].mxu0
    %2445 = vmatprep.mubr.bf16.mxu0 0
    %2446 = vmatmul.mubr.bf16.gmra.mrb[0].mxu0 %v2360
    %v2447 = vpop.f32.mrb[0].mxu0
    %v2448 = vadd.f32 %v1151, %v2447
    %v2449 = vpop.f32.mrb[0].mxu0
    %v2450 = vpop.f32.mrb[0].mxu0
    %v2451 = vadd.f32 %v1152, %v2450
    %v2452 = vpop.f32.mrb[0].mxu0
    %2453 = vmatprep.mubr.bf16.mxu0 0
    %2454 = vmatmul.mubr.bf16.gmra.mrb[0].mxu0 %v2363
    %v2455 = vpop.f32.mrb[0].mxu0
    %v2456 = vadd.f32 %v1151, %v2455
    %v2457 = vpop.f32.mrb[0].mxu0
    %v2458 = vpop.f32.mrb[0].mxu0
    %v2459 = vadd.f32 %v1152, %v2458
    %v2460 = vpop.f32.mrb[0].mxu0
    %2461 = vdwg.mxu0
    %v2462 = vmul.f32 %v2400, 0.2
    %v2463 = vmul.f32 %v2403, 0.2
    %v2464 = vmul.f32 %v2408, 0.2
    %v2465 = vmul.f32 %v2411, 0.2
    %v2466 = vmul.f32 %v2416, 0.2
    %v2467 = vmul.f32 %v2419, 0.2
    %v2468 = vmul.f32 %v2424, 0.2
    %v2469 = vmul.f32 %v2427, 0.2
    %v2470 = vmul.f32 %v2432, 0.2
    %v2471 = vmul.f32 %v2435, 0.2
    %v2472 = vmul.f32 %v2440, 0.2
    %v2473 = vmul.f32 %v2443, 0.2
    %v2474 = vmul.f32 %v2448, 0.2
    %v2475 = vmul.f32 %v2451, 0.2
    %v2476 = vmul.f32 %v2456, 0.2
    %v2477 = vmul.f32 %v2459, 0.2
    %v2478 = vmax.f32 %v2400, %v2462
    %v2479 = vmax.f32 %v2403, %v2463
    %v2480 = vmax.f32 %v2408, %v2464
    %v2481 = vmax.f32 %v2411, %v2465
    %v2482 = vmax.f32 %v2416, %v2466
    %v2483 = vmax.f32 %v2419, %v2467
    %v2484 = vmax.f32 %v2424, %v2468
    %v2485 = vmax.f32 %v2427, %v2469
    %v2486 = vmax.f32 %v2432, %v2470
    %v2487 = vmax.f32 %v2435, %v2471
    %v2488 = vmax.f32 %v2440, %v2472
    %v2489 = vmax.f32 %v2443, %v2473
    %v2490 = vmax.f32 %v2448, %v2474
    %v2491 = vmax.f32 %v2451, %v2475
    %v2492 = vmax.f32 %v2456, %v2476
    %v2493 = vmax.f32 %v2459, %v2477
    %s2494 = scalar_lea.vmem %s0, 16
    %v2495 = vld [vmem:[%s2494] sm:$0xff]
    %v2496 = vld [vmem:[%s2494 + $0x8] sm:$0xff]
    %v2498 = vsel %vm151, %v2495, 0
    %v2501 = vsel %vm151, %v2496, 0
    %2503 = vmatprep.subr.mxu0 0.0
    %v2504 = vand.u32 %v160, 4294901760
    %2505 = vmatpush1.msra.mxu0 %v2504
    %2506 = vmatprep.subr.mxu0 0.0
    %2507 = vmatpush1.msra.mxu0 0.0
    %2508 = vmatprep.subr.mxu0 0.0
    %2509 = vmatpush1.msra.mxu0 0.0
    %2510 = vmatprep.subr.mxu0 0.0
    %2511 = vmatpush1.msra.mxu0 0.0
    %2512 = vmatprep.subr.mxu0 0.0
    %2513 = vmatpush1.msra.mxu0 0.0
    %2514 = vmatprep.subr.mxu0 0.0
    %2515 = vmatpush1.msra.mxu0 0.0
    %2516 = vmatprep.subr.mxu0 0.0
    %2517 = vmatpush1.msra.mxu0 0.0
    %2518 = vmatprep.subr.mxu0 0.0
    %2519 = vmatpush1.msra.mxu0 0.0
    %2520 = vmatprep.subr.mxu0 0.0
    %2521 = vmatpush1.msra.mxu0 0.0
    %2522 = vmatprep.subr.mxu0 0.0
    %2523 = vmatpush1.msra.mxu0 0.0
    %2524 = vmatprep.subr.mxu0 0.0
    %2525 = vmatpush1.msra.mxu0 0.0
    %2526 = vmatprep.subr.mxu0 0.0
    %2527 = vmatpush1.msra.mxu0 0.0
    %2528 = vmatprep.subr.mxu0 0.0
    %2529 = vmatpush1.msra.mxu0 0.0
    %2530 = vmatprep.subr.mxu0 0.0
    %2531 = vmatpush1.msra.mxu0 0.0
    %2532 = vmatprep.subr.mxu0 0.0
    %2533 = vmatpush1.msra.mxu0 0.0
    %2534 = vmatprep.subr.mxu0 0.0
    %2535 = vmatpush1.msra.mxu0 0.0
    %2536 = vmatprep.subr.mxu0 0.0
    %2537 = vmatpush1.msra.mxu0 0.0
    %2538 = vmatprep.subr.mxu0 0.0
    %2539 = vmatpush1.msra.mxu0 0.0
    %2540 = vmatprep.subr.mxu0 0.0
    %2541 = vmatpush1.msra.mxu0 0.0
    %2542 = vmatprep.subr.mxu0 0.0
    %2543 = vmatpush1.msra.mxu0 0.0
    %2544 = vmatprep.subr.mxu0 0.0
    %2545 = vmatpush1.msra.mxu0 0.0
    %2546 = vmatprep.subr.mxu0 0.0
    %2547 = vmatpush1.msra.mxu0 0.0
    %2548 = vmatprep.subr.mxu0 0.0
    %2549 = vmatpush1.msra.mxu0 0.0
    %2550 = vmatprep.subr.mxu0 0.0
    %2551 = vmatpush1.msra.mxu0 0.0
    %2552 = vmatprep.subr.mxu0 0.0
    %2553 = vmatpush1.msra.mxu0 0.0
    %2554 = vmatprep.subr.mxu0 0.0
    %2555 = vmatpush1.msra.mxu0 0.0
    %2556 = vmatprep.subr.mxu0 0.0
    %2557 = vmatpush1.msra.mxu0 0.0
    %2558 = vmatprep.subr.mxu0 0.0
    %2559 = vmatpush1.msra.mxu0 0.0
    %2560 = vmatprep.subr.mxu0 0.0
    %2561 = vmatpush1.msra.mxu0 0.0
    %2562 = vmatprep.subr.mxu0 0.0
    %2563 = vmatpush1.msra.mxu0 0.0
    %2564 = vmatprep.subr.mxu0 0.0
    %2565 = vmatpush1.msra.mxu0 0.0
    %2566 = vmatprep.subr.mxu0 0.0
    %2567 = vmatpush1.msra.mxu0 0.0
    %2568 = vmatprep.mubr.f32.mxu0 0.0
    %v2569 = vand.u32 %v2498, 4294901760
    %v2570 = vsub.f32 %v2498, %v2569
    %v2571 = vand.u32 %v2570, 4294901760
    %v2572 = vsub.f32 %v2570, %v2571
    %v2573 = vand.u32 %v2572, 4294901760
    %2574 = vmatmul.mubr.f32.gmra.mrb[0].mxu0 %v2573
    %v2575 = vpop.f32.mrb[0].mxu0
    %v2576 = vadd.f32 0.0, %v2575
    %v2577 = vpop.f32.mrb[0].mxu0
    %2578 = vmatprep.mubr.f32.mxu0 0.0
    %v2579 = vand.u32 %v2501, 4294901760
    %v2580 = vsub.f32 %v2501, %v2579
    %v2581 = vand.u32 %v2580, 4294901760
    %v2582 = vsub.f32 %v2580, %v2581
    %v2583 = vand.u32 %v2582, 4294901760
    %2584 = vmatmul.mubr.f32.gmra.mrb[0].mxu0 %v2583
    %v2585 = vpop.f32.mrb[0].mxu0
    %v2586 = vadd.f32 0.0, %v2585
    %v2587 = vpop.f32.mrb[0].mxu0
    %2588 = vdwg.mxu0
    %2589 = vmatprep.subr.mxu0 0.0
    %v2590 = vand.u32 %v160, 4294901760
    %v2591 = vsub.f32 %v160, %v2590
    %v2592 = vand.u32 %v2591, 4294901760
    %v2593 = vsub.f32 %v2591, %v2592
    %v2594 = vand.u32 %v2593, 4294901760
    %2595 = vmatpush1.msra.mxu0 %v2594
    %2596 = vmatprep.subr.mxu0 0.0
    %2597 = vmatpush1.msra.mxu0 0.0
    %2598 = vmatprep.subr.mxu0 0.0
    %2599 = vmatpush1.msra.mxu0 0.0
    %2600 = vmatprep.subr.mxu0 0.0
    %2601 = vmatpush1.msra.mxu0 0.0
    %2602 = vmatprep.subr.mxu0 0.0
    %2603 = vmatpush1.msra.mxu0 0.0
    %2604 = vmatprep.subr.mxu0 0.0
    %2605 = vmatpush1.msra.mxu0 0.0
    %2606 = vmatprep.subr.mxu0 0.0
    %2607 = vmatpush1.msra.mxu0 0.0
    %2608 = vmatprep.subr.mxu0 0.0
    %2609 = vmatpush1.msra.mxu0 0.0
    %2610 = vmatprep.subr.mxu0 0.0
    %2611 = vmatpush1.msra.mxu0 0.0
    %2612 = vmatprep.subr.mxu0 0.0
    %2613 = vmatpush1.msra.mxu0 0.0
    %2614 = vmatprep.subr.mxu0 0.0
    %2615 = vmatpush1.msra.mxu0 0.0
    %2616 = vmatprep.subr.mxu0 0.0
    %2617 = vmatpush1.msra.mxu0 0.0
    %2618 = vmatprep.subr.mxu0 0.0
    %2619 = vmatpush1.msra.mxu0 0.0
    %2620 = vmatprep.subr.mxu0 0.0
    %2621 = vmatpush1.msra.mxu0 0.0
    %2622 = vmatprep.subr.mxu0 0.0
    %2623 = vmatpush1.msra.mxu0 0.0
    %2624 = vmatprep.subr.mxu0 0.0
    %2625 = vmatpush1.msra.mxu0 0.0
    %2626 = vmatprep.subr.mxu0 0.0
    %2627 = vmatpush1.msra.mxu0 0.0
    %2628 = vmatprep.subr.mxu0 0.0
    %2629 = vmatpush1.msra.mxu0 0.0
    %2630 = vmatprep.subr.mxu0 0.0
    %2631 = vmatpush1.msra.mxu0 0.0
    %2632 = vmatprep.subr.mxu0 0.0
    %2633 = vmatpush1.msra.mxu0 0.0
    %2634 = vmatprep.subr.mxu0 0.0
    %2635 = vmatpush1.msra.mxu0 0.0
    %2636 = vmatprep.subr.mxu0 0.0
    %2637 = vmatpush1.msra.mxu0 0.0
    %2638 = vmatprep.subr.mxu0 0.0
    %2639 = vmatpush1.msra.mxu0 0.0
    %2640 = vmatprep.subr.mxu0 0.0
    %2641 = vmatpush1.msra.mxu0 0.0
    %2642 = vmatprep.subr.mxu0 0.0
    %2643 = vmatpush1.msra.mxu0 0.0
    %2644 = vmatprep.subr.mxu0 0.0
    %2645 = vmatpush1.msra.mxu0 0.0
    %2646 = vmatprep.subr.mxu0 0.0
    %2647 = vmatpush1.msra.mxu0 0.0
    %2648 = vmatprep.subr.mxu0 0.0
    %2649 = vmatpush1.msra.mxu0 0.0
    %2650 = vmatprep.subr.mxu0 0.0
    %2651 = vmatpush1.msra.mxu0 0.0
    %2652 = vmatprep.subr.mxu0 0.0
    %2653 = vmatpush1.msra.mxu0 0.0
    %2654 = vmatprep.subr.mxu0 0.0
    %2655 = vmatpush1.msra.mxu0 0.0
    %2656 = vmatprep.subr.mxu0 0.0
    %2657 = vmatpush1.msra.mxu0 0.0
    %2658 = vmatprep.mubr.f32.mxu0 0.0
    %v2659 = vand.u32 %v2498, 4294901760
    %2660 = vmatmul.mubr.f32.gmra.mrb[0].mxu0 %v2659
    %v2661 = vpop.f32.mrb[0].mxu0
    %v2662 = vadd.f32 %v2576, %v2661
    %v2663 = vpop.f32.mrb[0].mxu0
    %2664 = vmatprep.mubr.f32.mxu0 0.0
    %v2665 = vand.u32 %v2501, 4294901760
    %2666 = vmatmul.mubr.f32.gmra.mrb[0].mxu0 %v2665
    %v2667 = vpop.f32.mrb[0].mxu0
    %v2668 = vadd.f32 %v2586, %v2667
    %v2669 = vpop.f32.mrb[0].mxu0
    %2670 = vdwg.mxu0
    %2671 = vmatprep.subr.mxu0 0.0
    %v2672 = vand.u32 %v160, 4294901760
    %v2673 = vsub.f32 %v160, %v2672
    %2674 = vmatpush1.msra.mxu0 %v2673
    %2675 = vmatprep.subr.mxu0 0.0
    %2676 = vmatpush1.msra.mxu0 0.0
    %2677 = vmatprep.subr.mxu0 0.0
    %2678 = vmatpush1.msra.mxu0 0.0
    %2679 = vmatprep.subr.mxu0 0.0
    %2680 = vmatpush1.msra.mxu0 0.0
    %2681 = vmatprep.subr.mxu0 0.0
    %2682 = vmatpush1.msra.mxu0 0.0
    %2683 = vmatprep.subr.mxu0 0.0
    %2684 = vmatpush1.msra.mxu0 0.0
    %2685 = vmatprep.subr.mxu0 0.0
    %2686 = vmatpush1.msra.mxu0 0.0
    %2687 = vmatprep.subr.mxu0 0.0
    %2688 = vmatpush1.msra.mxu0 0.0
    %2689 = vmatprep.subr.mxu0 0.0
    %2690 = vmatpush1.msra.mxu0 0.0
    %2691 = vmatprep.subr.mxu0 0.0
    %2692 = vmatpush1.msra.mxu0 0.0
    %2693 = vmatprep.subr.mxu0 0.0
    %2694 = vmatpush1.msra.mxu0 0.0
    %2695 = vmatprep.subr.mxu0 0.0
    %2696 = vmatpush1.msra.mxu0 0.0
    %2697 = vmatprep.subr.mxu0 0.0
    %2698 = vmatpush1.msra.mxu0 0.0
    %2699 = vmatprep.subr.mxu0 0.0
    %2700 = vmatpush1.msra.mxu0 0.0
    %2701 = vmatprep.subr.mxu0 0.0
    %2702 = vmatpush1.msra.mxu0 0.0
    %2703 = vmatprep.subr.mxu0 0.0
    %2704 = vmatpush1.msra.mxu0 0.0
    %2705 = vmatprep.subr.mxu0 0.0
    %2706 = vmatpush1.msra.mxu0 0.0
    %2707 = vmatprep.subr.mxu0 0.0
    %2708 = vmatpush1.msra.mxu0 0.0
    %2709 = vmatprep.subr.mxu0 0.0
    %2710 = vmatpush1.msra.mxu0 0.0
    %2711 = vmatprep.subr.mxu0 0.0
    %2712 = vmatpush1.msra.mxu0 0.0
    %2713 = vmatprep.subr.mxu0 0.0
    %2714 = vmatpush1.msra.mxu0 0.0
    %2715 = vmatprep.subr.mxu0 0.0
    %2716 = vmatpush1.msra.mxu0 0.0
    %2717 = vmatprep.subr.mxu0 0.0
    %2718 = vmatpush1.msra.mxu0 0.0
    %2719 = vmatprep.subr.mxu0 0.0
    %2720 = vmatpush1.msra.mxu0 0.0
    %2721 = vmatprep.subr.mxu0 0.0
    %2722 = vmatpush1.msra.mxu0 0.0
    %2723 = vmatprep.subr.mxu0 0.0
    %2724 = vmatpush1.msra.mxu0 0.0
    %2725 = vmatprep.subr.mxu0 0.0
    %2726 = vmatpush1.msra.mxu0 0.0
    %2727 = vmatprep.subr.mxu0 0.0
    %2728 = vmatpush1.msra.mxu0 0.0
    %2729 = vmatprep.subr.mxu0 0.0
    %2730 = vmatpush1.msra.mxu0 0.0
    %2731 = vmatprep.subr.mxu0 0.0
    %2732 = vmatpush1.msra.mxu0 0.0
    %2733 = vmatprep.subr.mxu0 0.0
    %2734 = vmatpush1.msra.mxu0 0.0
    %2735 = vmatprep.subr.mxu0 0.0
    %2736 = vmatpush1.msra.mxu0 0.0
    %2737 = vmatprep.mubr.f32.mxu0 0.0
    %v2738 = vand.u32 %v2498, 4294901760
    %v2739 = vsub.f32 %v2498, %v2738
    %2740 = vmatmul.mubr.f32.gmra.mrb[0].mxu0 %v2739
    %v2741 = vpop.f32.mrb[0].mxu0
    %v2742 = vadd.f32 %v2662, %v2741
    %v2743 = vpop.f32.mrb[0].mxu0
    %2744 = vmatprep.mubr.f32.mxu0 0.0
    %v2745 = vand.u32 %v2501, 4294901760
    %v2746 = vsub.f32 %v2501, %v2745
    %2747 = vmatmul.mubr.f32.gmra.mrb[0].mxu0 %v2746
    %v2748 = vpop.f32.mrb[0].mxu0
    %v2749 = vadd.f32 %v2668, %v2748
    %v2750 = vpop.f32.mrb[0].mxu0
    %2751 = vdwg.mxu0
    %2752 = vmatprep.subr.mxu0 0.0
    %v2753 = vand.u32 %v160, 4294901760
    %2754 = vmatpush1.msra.mxu0 %v2753
    %2755 = vmatprep.subr.mxu0 0.0
    %2756 = vmatpush1.msra.mxu0 0.0
    %2757 = vmatprep.subr.mxu0 0.0
    %2758 = vmatpush1.msra.mxu0 0.0
    %2759 = vmatprep.subr.mxu0 0.0
    %2760 = vmatpush1.msra.mxu0 0.0
    %2761 = vmatprep.subr.mxu0 0.0
    %2762 = vmatpush1.msra.mxu0 0.0
    %2763 = vmatprep.subr.mxu0 0.0
    %2764 = vmatpush1.msra.mxu0 0.0
    %2765 = vmatprep.subr.mxu0 0.0
    %2766 = vmatpush1.msra.mxu0 0.0
    %2767 = vmatprep.subr.mxu0 0.0
    %2768 = vmatpush1.msra.mxu0 0.0
    %2769 = vmatprep.subr.mxu0 0.0
    %2770 = vmatpush1.msra.mxu0 0.0
    %2771 = vmatprep.subr.mxu0 0.0
    %2772 = vmatpush1.msra.mxu0 0.0
    %2773 = vmatprep.subr.mxu0 0.0
    %2774 = vmatpush1.msra.mxu0 0.0
    %2775 = vmatprep.subr.mxu0 0.0
    %2776 = vmatpush1.msra.mxu0 0.0
    %2777 = vmatprep.subr.mxu0 0.0
    %2778 = vmatpush1.msra.mxu0 0.0
    %2779 = vmatprep.subr.mxu0 0.0
    %2780 = vmatpush1.msra.mxu0 0.0
    %2781 = vmatprep.subr.mxu0 0.0
    %2782 = vmatpush1.msra.mxu0 0.0
    %2783 = vmatprep.subr.mxu0 0.0
    %2784 = vmatpush1.msra.mxu0 0.0
    %2785 = vmatprep.subr.mxu0 0.0
    %2786 = vmatpush1.msra.mxu0 0.0
    %2787 = vmatprep.subr.mxu0 0.0
    %2788 = vmatpush1.msra.mxu0 0.0
    %2789 = vmatprep.subr.mxu0 0.0
    %2790 = vmatpush1.msra.mxu0 0.0
    %2791 = vmatprep.subr.mxu0 0.0
    %2792 = vmatpush1.msra.mxu0 0.0
    %2793 = vmatprep.subr.mxu0 0.0
    %2794 = vmatpush1.msra.mxu0 0.0
    %2795 = vmatprep.subr.mxu0 0.0
    %2796 = vmatpush1.msra.mxu0 0.0
    %2797 = vmatprep.subr.mxu0 0.0
    %2798 = vmatpush1.msra.mxu0 0.0
    %2799 = vmatprep.subr.mxu0 0.0
    %2800 = vmatpush1.msra.mxu0 0.0
    %2801 = vmatprep.subr.mxu0 0.0
    %2802 = vmatpush1.msra.mxu0 0.0
    %2803 = vmatprep.subr.mxu0 0.0
    %2804 = vmatpush1.msra.mxu0 0.0
    %2805 = vmatprep.subr.mxu0 0.0
    %2806 = vmatpush1.msra.mxu0 0.0
    %2807 = vmatprep.subr.mxu0 0.0
    %2808 = vmatpush1.msra.mxu0 0.0
    %2809 = vmatprep.subr.mxu0 0.0
    %2810 = vmatpush1.msra.mxu0 0.0
    %2811 = vmatprep.subr.mxu0 0.0
    %2812 = vmatpush1.msra.mxu0 0.0
    %2813 = vmatprep.subr.mxu0 0.0
    %2814 = vmatpush1.msra.mxu0 0.0
    %2815 = vmatprep.subr.mxu0 0.0
    %2816 = vmatpush1.msra.mxu0 0.0
    %2817 = vmatprep.mubr.f32.mxu0 0.0
    %v2818 = vand.u32 %v2498, 4294901760
    %v2819 = vsub.f32 %v2498, %v2818
    %v2820 = vand.u32 %v2819, 4294901760
    %2821 = vmatmul.mubr.f32.gmra.mrb[0].mxu0 %v2820
    %v2822 = vpop.f32.mrb[0].mxu0
    %v2823 = vadd.f32 %v2742, %v2822
    %v2824 = vpop.f32.mrb[0].mxu0
    %2825 = vmatprep.mubr.f32.mxu0 0.0
    %v2826 = vand.u32 %v2501, 4294901760
    %v2827 = vsub.f32 %v2501, %v2826
    %v2828 = vand.u32 %v2827, 4294901760
    %2829 = vmatmul.mubr.f32.gmra.mrb[0].mxu0 %v2828
    %v2830 = vpop.f32.mrb[0].mxu0
    %v2831 = vadd.f32 %v2749, %v2830
    %v2832 = vpop.f32.mrb[0].mxu0
    %2833 = vdwg.mxu0
    %2834 = vmatprep.subr.mxu0 0.0
    %v2835 = vand.u32 %v160, 4294901760
    %v2836 = vsub.f32 %v160, %v2835
    %v2837 = vand.u32 %v2836, 4294901760
    %2838 = vmatpush1.msra.mxu0 %v2837
    %2839 = vmatprep.subr.mxu0 0.0
    %2840 = vmatpush1.msra.mxu0 0.0
    %2841 = vmatprep.subr.mxu0 0.0
    %2842 = vmatpush1.msra.mxu0 0.0
    %2843 = vmatprep.subr.mxu0 0.0
    %2844 = vmatpush1.msra.mxu0 0.0
    %2845 = vmatprep.subr.mxu0 0.0
    %2846 = vmatpush1.msra.mxu0 0.0
    %2847 = vmatprep.subr.mxu0 0.0
    %2848 = vmatpush1.msra.mxu0 0.0
    %2849 = vmatprep.subr.mxu0 0.0
    %2850 = vmatpush1.msra.mxu0 0.0
    %2851 = vmatprep.subr.mxu0 0.0
    %2852 = vmatpush1.msra.mxu0 0.0
    %2853 = vmatprep.subr.mxu0 0.0
    %2854 = vmatpush1.msra.mxu0 0.0
    %2855 = vmatprep.subr.mxu0 0.0
    %2856 = vmatpush1.msra.mxu0 0.0
    %2857 = vmatprep.subr.mxu0 0.0
    %2858 = vmatpush1.msra.mxu0 0.0
    %2859 = vmatprep.subr.mxu0 0.0
    %2860 = vmatpush1.msra.mxu0 0.0
    %2861 = vmatprep.subr.mxu0 0.0
    %2862 = vmatpush1.msra.mxu0 0.0
    %2863 = vmatprep.subr.mxu0 0.0
    %2864 = vmatpush1.msra.mxu0 0.0
    %2865 = vmatprep.subr.mxu0 0.0
    %2866 = vmatpush1.msra.mxu0 0.0
    %2867 = vmatprep.subr.mxu0 0.0
    %2868 = vmatpush1.msra.mxu0 0.0
    %2869 = vmatprep.subr.mxu0 0.0
    %2870 = vmatpush1.msra.mxu0 0.0
    %2871 = vmatprep.subr.mxu0 0.0
    %2872 = vmatpush1.msra.mxu0 0.0
    %2873 = vmatprep.subr.mxu0 0.0
    %2874 = vmatpush1.msra.mxu0 0.0
    %2875 = vmatprep.subr.mxu0 0.0
    %2876 = vmatpush1.msra.mxu0 0.0
    %2877 = vmatprep.subr.mxu0 0.0
    %2878 = vmatpush1.msra.mxu0 0.0
    %2879 = vmatprep.subr.mxu0 0.0
    %2880 = vmatpush1.msra.mxu0 0.0
    %2881 = vmatprep.subr.mxu0 0.0
    %2882 = vmatpush1.msra.mxu0 0.0
    %2883 = vmatprep.subr.mxu0 0.0
    %2884 = vmatpush1.msra.mxu0 0.0
    %2885 = vmatprep.subr.mxu0 0.0
    %2886 = vmatpush1.msra.mxu0 0.0
    %2887 = vmatprep.subr.mxu0 0.0
    %2888 = vmatpush1.msra.mxu0 0.0
    %2889 = vmatprep.subr.mxu0 0.0
    %2890 = vmatpush1.msra.mxu0 0.0
    %2891 = vmatprep.subr.mxu0 0.0
    %2892 = vmatpush1.msra.mxu0 0.0
    %2893 = vmatprep.subr.mxu0 0.0
    %2894 = vmatpush1.msra.mxu0 0.0
    %2895 = vmatprep.subr.mxu0 0.0
    %2896 = vmatpush1.msra.mxu0 0.0
    %2897 = vmatprep.subr.mxu0 0.0
    %2898 = vmatpush1.msra.mxu0 0.0
    %2899 = vmatprep.subr.mxu0 0.0
    %2900 = vmatpush1.msra.mxu0 0.0
    %2901 = vmatprep.mubr.f32.mxu0 0.0
    %v2902 = vand.u32 %v2498, 4294901760
    %2903 = vmatmul.mubr.f32.gmra.mrb[0].mxu0 %v2902
    %v2904 = vpop.f32.mrb[0].mxu0
    %v2905 = vadd.f32 %v2823, %v2904
    %v2906 = vpop.f32.mrb[0].mxu0
    %2907 = vmatprep.mubr.f32.mxu0 0.0
    %v2908 = vand.u32 %v2501, 4294901760
    %2909 = vmatmul.mubr.f32.gmra.mrb[0].mxu0 %v2908
    %v2910 = vpop.f32.mrb[0].mxu0
    %v2911 = vadd.f32 %v2831, %v2910
    %v2912 = vpop.f32.mrb[0].mxu0
    %2913 = vdwg.mxu0
    %2914 = vmatprep.subr.mxu0 0.0
    %v2915 = vand.u32 %v160, 4294901760
    %2916 = vmatpush1.msra.mxu0 %v2915
    %2917 = vmatprep.subr.mxu0 0.0
    %2918 = vmatpush1.msra.mxu0 0.0
    %2919 = vmatprep.subr.mxu0 0.0
    %2920 = vmatpush1.msra.mxu0 0.0
    %2921 = vmatprep.subr.mxu0 0.0
    %2922 = vmatpush1.msra.mxu0 0.0
    %2923 = vmatprep.subr.mxu0 0.0
    %2924 = vmatpush1.msra.mxu0 0.0
    %2925 = vmatprep.subr.mxu0 0.0
    %2926 = vmatpush1.msra.mxu0 0.0
    %2927 = vmatprep.subr.mxu0 0.0
    %2928 = vmatpush1.msra.mxu0 0.0
    %2929 = vmatprep.subr.mxu0 0.0
    %2930 = vmatpush1.msra.mxu0 0.0
    %2931 = vmatprep.subr.mxu0 0.0
    %2932 = vmatpush1.msra.mxu0 0.0
    %2933 = vmatprep.subr.mxu0 0.0
    %2934 = vmatpush1.msra.mxu0 0.0
    %2935 = vmatprep.subr.mxu0 0.0
    %2936 = vmatpush1.msra.mxu0 0.0
    %2937 = vmatprep.subr.mxu0 0.0
    %2938 = vmatpush1.msra.mxu0 0.0
    %2939 = vmatprep.subr.mxu0 0.0
    %2940 = vmatpush1.msra.mxu0 0.0
    %2941 = vmatprep.subr.mxu0 0.0
    %2942 = vmatpush1.msra.mxu0 0.0
    %2943 = vmatprep.subr.mxu0 0.0
    %2944 = vmatpush1.msra.mxu0 0.0
    %2945 = vmatprep.subr.mxu0 0.0
    %2946 = vmatpush1.msra.mxu0 0.0
    %2947 = vmatprep.subr.mxu0 0.0
    %2948 = vmatpush1.msra.mxu0 0.0
    %2949 = vmatprep.subr.mxu0 0.0
    %2950 = vmatpush1.msra.mxu0 0.0
    %2951 = vmatprep.subr.mxu0 0.0
    %2952 = vmatpush1.msra.mxu0 0.0
    %2953 = vmatprep.subr.mxu0 0.0
    %2954 = vmatpush1.msra.mxu0 0.0
    %2955 = vmatprep.subr.mxu0 0.0
    %2956 = vmatpush1.msra.mxu0 0.0
    %2957 = vmatprep.subr.mxu0 0.0
    %2958 = vmatpush1.msra.mxu0 0.0
    %2959 = vmatprep.subr.mxu0 0.0
    %2960 = vmatpush1.msra.mxu0 0.0
    %2961 = vmatprep.subr.mxu0 0.0
    %2962 = vmatpush1.msra.mxu0 0.0
    %2963 = vmatprep.subr.mxu0 0.0
    %2964 = vmatpush1.msra.mxu0 0.0
    %2965 = vmatprep.subr.mxu0 0.0
    %2966 = vmatpush1.msra.mxu0 0.0
    %2967 = vmatprep.subr.mxu0 0.0
    %2968 = vmatpush1.msra.mxu0 0.0
    %2969 = vmatprep.subr.mxu0 0.0
    %2970 = vmatpush1.msra.mxu0 0.0
    %2971 = vmatprep.subr.mxu0 0.0
    %2972 = vmatpush1.msra.mxu0 0.0
    %2973 = vmatprep.subr.mxu0 0.0
    %2974 = vmatpush1.msra.mxu0 0.0
    %2975 = vmatprep.subr.mxu0 0.0
    %2976 = vmatpush1.msra.mxu0 0.0
    %2977 = vmatprep.subr.mxu0 0.0
    %2978 = vmatpush1.msra.mxu0 0.0
    %2979 = vmatprep.mubr.f32.mxu0 0.0
    %v2980 = vand.u32 %v2498, 4294901760
    %2981 = vmatmul.mubr.f32.gmra.mrb[0].mxu0 %v2980
    %v2982 = vpop.f32.mrb[0].mxu0
    %v2983 = vadd.f32 %v2905, %v2982
    %v2984 = vpop.f32.mrb[0].mxu0
    %2985 = vmatprep.mubr.f32.mxu0 0.0
    %v2986 = vand.u32 %v2501, 4294901760
    %2987 = vmatmul.mubr.f32.gmra.mrb[0].mxu0 %v2986
    %v2988 = vpop.f32.mrb[0].mxu0
    %v2989 = vadd.f32 %v2911, %v2988
    %v2990 = vpop.f32.mrb[0].mxu0
    %2991 = vdwg.mxu0
    %2992 = vmatprep.subr.mxu0 0.0
    %v2993 = vand.u32 %v652, 4294901760
    %2994 = vmatpush1.msra.mxu0 %v2993
    %2995 = vmatprep.subr.mxu0 0.0
    %2996 = vmatpush1.msra.mxu0 0.0
    %2997 = vmatprep.subr.mxu0 0.0
    %2998 = vmatpush1.msra.mxu0 0.0
    %2999 = vmatprep.subr.mxu0 0.0
    %3000 = vmatpush1.msra.mxu0 0.0
    %3001 = vmatprep.subr.mxu0 0.0
    %3002 = vmatpush1.msra.mxu0 0.0
    %3003 = vmatprep.subr.mxu0 0.0
    %3004 = vmatpush1.msra.mxu0 0.0
    %3005 = vmatprep.subr.mxu0 0.0
    %3006 = vmatpush1.msra.mxu0 0.0
    %3007 = vmatprep.subr.mxu0 0.0
    %3008 = vmatpush1.msra.mxu0 0.0
    %3009 = vmatprep.subr.mxu0 0.0
    %3010 = vmatpush1.msra.mxu0 0.0
    %3011 = vmatprep.subr.mxu0 0.0
    %3012 = vmatpush1.msra.mxu0 0.0
    %3013 = vmatprep.subr.mxu0 0.0
    %3014 = vmatpush1.msra.mxu0 0.0
    %3015 = vmatprep.subr.mxu0 0.0
    %3016 = vmatpush1.msra.mxu0 0.0
    %3017 = vmatprep.subr.mxu0 0.0
    %3018 = vmatpush1.msra.mxu0 0.0
    %3019 = vmatprep.subr.mxu0 0.0
    %3020 = vmatpush1.msra.mxu0 0.0
    %3021 = vmatprep.subr.mxu0 0.0
    %3022 = vmatpush1.msra.mxu0 0.0
    %3023 = vmatprep.subr.mxu0 0.0
    %3024 = vmatpush1.msra.mxu0 0.0
    %3025 = vmatprep.subr.mxu0 0.0
    %3026 = vmatpush1.msra.mxu0 0.0
    %3027 = vmatprep.subr.mxu0 0.0
    %3028 = vmatpush1.msra.mxu0 0.0
    %3029 = vmatprep.subr.mxu0 0.0
    %3030 = vmatpush1.msra.mxu0 0.0
    %3031 = vmatprep.subr.mxu0 0.0
    %3032 = vmatpush1.msra.mxu0 0.0
    %3033 = vmatprep.subr.mxu0 0.0
    %3034 = vmatpush1.msra.mxu0 0.0
    %3035 = vmatprep.subr.mxu0 0.0
    %3036 = vmatpush1.msra.mxu0 0.0
    %3037 = vmatprep.subr.mxu0 0.0
    %3038 = vmatpush1.msra.mxu0 0.0
    %3039 = vmatprep.subr.mxu0 0.0
    %3040 = vmatpush1.msra.mxu0 0.0
    %3041 = vmatprep.subr.mxu0 0.0
    %3042 = vmatpush1.msra.mxu0 0.0
    %3043 = vmatprep.subr.mxu0 0.0
    %3044 = vmatpush1.msra.mxu0 0.0
    %3045 = vmatprep.subr.mxu0 0.0
    %3046 = vmatpush1.msra.mxu0 0.0
    %3047 = vmatprep.subr.mxu0 0.0
    %3048 = vmatpush1.msra.mxu0 0.0
    %3049 = vmatprep.subr.mxu0 0.0
    %3050 = vmatpush1.msra.mxu0 0.0
    %3051 = vmatprep.subr.mxu0 0.0
    %3052 = vmatpush1.msra.mxu0 0.0
    %3053 = vmatprep.subr.mxu0 0.0
    %3054 = vmatpush1.msra.mxu0 0.0
    %3055 = vmatprep.subr.mxu0 0.0
    %3056 = vmatpush1.msra.mxu0 0.0
    %3057 = vmatprep.mubr.f32.mxu0 0.0
    %v3058 = vand.u32 %v2498, 4294901760
    %v3059 = vsub.f32 %v2498, %v3058
    %v3060 = vand.u32 %v3059, 4294901760
    %v3061 = vsub.f32 %v3059, %v3060
    %v3062 = vand.u32 %v3061, 4294901760
    %3063 = vmatmul.mubr.f32.gmra.mrb[0].mxu0 %v3062
    %v3064 = vpop.f32.mrb[0].mxu0
    %v3065 = vadd.f32 0.0, %v3064
    %v3066 = vpop.f32.mrb[0].mxu0
    %3067 = vmatprep.mubr.f32.mxu0 0.0
    %v3068 = vand.u32 %v2501, 4294901760
    %v3069 = vsub.f32 %v2501, %v3068
    %v3070 = vand.u32 %v3069, 4294901760
    %v3071 = vsub.f32 %v3069, %v3070
    %v3072 = vand.u32 %v3071, 4294901760
    %3073 = vmatmul.mubr.f32.gmra.mrb[0].mxu0 %v3072
    %v3074 = vpop.f32.mrb[0].mxu0
    %v3075 = vadd.f32 0.0, %v3074
    %v3076 = vpop.f32.mrb[0].mxu0
    %3077 = vdwg.mxu0
    %3078 = vmatprep.subr.mxu0 0.0
    %v3079 = vand.u32 %v652, 4294901760
    %v3080 = vsub.f32 %v652, %v3079
    %v3081 = vand.u32 %v3080, 4294901760
    %v3082 = vsub.f32 %v3080, %v3081
    %v3083 = vand.u32 %v3082, 4294901760
    %3084 = vmatpush1.msra.mxu0 %v3083
    %3085 = vmatprep.subr.mxu0 0.0
    %3086 = vmatpush1.msra.mxu0 0.0
    %3087 = vmatprep.subr.mxu0 0.0
    %3088 = vmatpush1.msra.mxu0 0.0
    %3089 = vmatprep.subr.mxu0 0.0
    %3090 = vmatpush1.msra.mxu0 0.0
    %3091 = vmatprep.subr.mxu0 0.0
    %3092 = vmatpush1.msra.mxu0 0.0
    %3093 = vmatprep.subr.mxu0 0.0
    %3094 = vmatpush1.msra.mxu0 0.0
    %3095 = vmatprep.subr.mxu0 0.0
    %3096 = vmatpush1.msra.mxu0 0.0
    %3097 = vmatprep.subr.mxu0 0.0
    %3098 = vmatpush1.msra.mxu0 0.0
    %3099 = vmatprep.subr.mxu0 0.0
    %3100 = vmatpush1.msra.mxu0 0.0
    %3101 = vmatprep.subr.mxu0 0.0
    %3102 = vmatpush1.msra.mxu0 0.0
    %3103 = vmatprep.subr.mxu0 0.0
    %3104 = vmatpush1.msra.mxu0 0.0
    %3105 = vmatprep.subr.mxu0 0.0
    %3106 = vmatpush1.msra.mxu0 0.0
    %3107 = vmatprep.subr.mxu0 0.0
    %3108 = vmatpush1.msra.mxu0 0.0
    %3109 = vmatprep.subr.mxu0 0.0
    %3110 = vmatpush1.msra.mxu0 0.0
    %3111 = vmatprep.subr.mxu0 0.0
    %3112 = vmatpush1.msra.mxu0 0.0
    %3113 = vmatprep.subr.mxu0 0.0
    %3114 = vmatpush1.msra.mxu0 0.0
    %3115 = vmatprep.subr.mxu0 0.0
    %3116 = vmatpush1.msra.mxu0 0.0
    %3117 = vmatprep.subr.mxu0 0.0
    %3118 = vmatpush1.msra.mxu0 0.0
    %3119 = vmatprep.subr.mxu0 0.0
    %3120 = vmatpush1.msra.mxu0 0.0
    %3121 = vmatprep.subr.mxu0 0.0
    %3122 = vmatpush1.msra.mxu0 0.0
    %3123 = vmatprep.subr.mxu0 0.0
    %3124 = vmatpush1.msra.mxu0 0.0
    %3125 = vmatprep.subr.mxu0 0.0
    %3126 = vmatpush1.msra.mxu0 0.0
    %3127 = vmatprep.subr.mxu0 0.0
    %3128 = vmatpush1.msra.mxu0 0.0
    %3129 = vmatprep.subr.mxu0 0.0
    %3130 = vmatpush1.msra.mxu0 0.0
    %3131 = vmatprep.subr.mxu0 0.0
    %3132 = vmatpush1.msra.mxu0 0.0
    %3133 = vmatprep.subr.mxu0 0.0
    %3134 = vmatpush1.msra.mxu0 0.0
    %3135 = vmatprep.subr.mxu0 0.0
    %3136 = vmatpush1.msra.mxu0 0.0
    %3137 = vmatprep.subr.mxu0 0.0
    %3138 = vmatpush1.msra.mxu0 0.0
    %3139 = vmatprep.subr.mxu0 0.0
    %3140 = vmatpush1.msra.mxu0 0.0
    %3141 = vmatprep.subr.mxu0 0.0
    %3142 = vmatpush1.msra.mxu0 0.0
    %3143 = vmatprep.subr.mxu0 0.0
    %3144 = vmatpush1.msra.mxu0 0.0
    %3145 = vmatprep.subr.mxu0 0.0
    %3146 = vmatpush1.msra.mxu0 0.0
    %3147 = vmatprep.mubr.f32.mxu0 0.0
    %v3148 = vand.u32 %v2498, 4294901760
    %3149 = vmatmul.mubr.f32.gmra.mrb[0].mxu0 %v3148
    %v3150 = vpop.f32.mrb[0].mxu0
    %v3151 = vadd.f32 %v3065, %v3150
    %v3152 = vpop.f32.mrb[0].mxu0
    %3153 = vmatprep.mubr.f32.mxu0 0.0
    %v3154 = vand.u32 %v2501, 4294901760
    %3155 = vmatmul.mubr.f32.gmra.mrb[0].mxu0 %v3154
    %v3156 = vpop.f32.mrb[0].mxu0
    %v3157 = vadd.f32 %v3075, %v3156
    %v3158 = vpop.f32.mrb[0].mxu0
    %3159 = vdwg.mxu0
    %3160 = vmatprep.subr.mxu0 0.0
    %v3161 = vand.u32 %v652, 4294901760
    %v3162 = vsub.f32 %v652, %v3161
    %3163 = vmatpush1.msra.mxu0 %v3162
    %3164 = vmatprep.subr.mxu0 0.0
    %3165 = vmatpush1.msra.mxu0 0.0
    %3166 = vmatprep.subr.mxu0 0.0
    %3167 = vmatpush1.msra.mxu0 0.0
    %3168 = vmatprep.subr.mxu0 0.0
    %3169 = vmatpush1.msra.mxu0 0.0
    %3170 = vmatprep.subr.mxu0 0.0
    %3171 = vmatpush1.msra.mxu0 0.0
    %3172 = vmatprep.subr.mxu0 0.0
    %3173 = vmatpush1.msra.mxu0 0.0
    %3174 = vmatprep.subr.mxu0 0.0
    %3175 = vmatpush1.msra.mxu0 0.0
    %3176 = vmatprep.subr.mxu0 0.0
    %3177 = vmatpush1.msra.mxu0 0.0
    %3178 = vmatprep.subr.mxu0 0.0
    %3179 = vmatpush1.msra.mxu0 0.0
    %3180 = vmatprep.subr.mxu0 0.0
    %3181 = vmatpush1.msra.mxu0 0.0
    %3182 = vmatprep.subr.mxu0 0.0
    %3183 = vmatpush1.msra.mxu0 0.0
    %3184 = vmatprep.subr.mxu0 0.0
    %3185 = vmatpush1.msra.mxu0 0.0
    %3186 = vmatprep.subr.mxu0 0.0
    %3187 = vmatpush1.msra.mxu0 0.0
    %3188 = vmatprep.subr.mxu0 0.0
    %3189 = vmatpush1.msra.mxu0 0.0
    %3190 = vmatprep.subr.mxu0 0.0
    %3191 = vmatpush1.msra.mxu0 0.0
    %3192 = vmatprep.subr.mxu0 0.0
    %3193 = vmatpush1.msra.mxu0 0.0
    %3194 = vmatprep.subr.mxu0 0.0
    %3195 = vmatpush1.msra.mxu0 0.0
    %3196 = vmatprep.subr.mxu0 0.0
    %3197 = vmatpush1.msra.mxu0 0.0
    %3198 = vmatprep.subr.mxu0 0.0
    %3199 = vmatpush1.msra.mxu0 0.0
    %3200 = vmatprep.subr.mxu0 0.0
    %3201 = vmatpush1.msra.mxu0 0.0
    %3202 = vmatprep.subr.mxu0 0.0
    %3203 = vmatpush1.msra.mxu0 0.0
    %3204 = vmatprep.subr.mxu0 0.0
    %3205 = vmatpush1.msra.mxu0 0.0
    %3206 = vmatprep.subr.mxu0 0.0
    %3207 = vmatpush1.msra.mxu0 0.0
    %3208 = vmatprep.subr.mxu0 0.0
    %3209 = vmatpush1.msra.mxu0 0.0
    %3210 = vmatprep.subr.mxu0 0.0
    %3211 = vmatpush1.msra.mxu0 0.0
    %3212 = vmatprep.subr.mxu0 0.0
    %3213 = vmatpush1.msra.mxu0 0.0
    %3214 = vmatprep.subr.mxu0 0.0
    %3215 = vmatpush1.msra.mxu0 0.0
    %3216 = vmatprep.subr.mxu0 0.0
    %3217 = vmatpush1.msra.mxu0 0.0
    %3218 = vmatprep.subr.mxu0 0.0
    %3219 = vmatpush1.msra.mxu0 0.0
    %3220 = vmatprep.subr.mxu0 0.0
    %3221 = vmatpush1.msra.mxu0 0.0
    %3222 = vmatprep.subr.mxu0 0.0
    %3223 = vmatpush1.msra.mxu0 0.0
    %3224 = vmatprep.subr.mxu0 0.0
    %3225 = vmatpush1.msra.mxu0 0.0
    %3226 = vmatprep.mubr.f32.mxu0 0.0
    %v3227 = vand.u32 %v2498, 4294901760
    %v3228 = vsub.f32 %v2498, %v3227
    %3229 = vmatmul.mubr.f32.gmra.mrb[0].mxu0 %v3228
    %v3230 = vpop.f32.mrb[0].mxu0
    %v3231 = vadd.f32 %v3151, %v3230
    %v3232 = vpop.f32.mrb[0].mxu0
    %3233 = vmatprep.mubr.f32.mxu0 0.0
    %v3234 = vand.u32 %v2501, 4294901760
    %v3235 = vsub.f32 %v2501, %v3234
    %3236 = vmatmul.mubr.f32.gmra.mrb[0].mxu0 %v3235
    %v3237 = vpop.f32.mrb[0].mxu0
    %v3238 = vadd.f32 %v3157, %v3237
    %v3239 = vpop.f32.mrb[0].mxu0
    %3240 = vdwg.mxu0
    %3241 = vmatprep.subr.mxu0 0.0
    %v3242 = vand.u32 %v652, 4294901760
    %3243 = vmatpush1.msra.mxu0 %v3242
    %3244 = vmatprep.subr.mxu0 0.0
    %3245 = vmatpush1.msra.mxu0 0.0
    %3246 = vmatprep.subr.mxu0 0.0
    %3247 = vmatpush1.msra.mxu0 0.0
    %3248 = vmatprep.subr.mxu0 0.0
    %3249 = vmatpush1.msra.mxu0 0.0
    %3250 = vmatprep.subr.mxu0 0.0
    %3251 = vmatpush1.msra.mxu0 0.0
    %3252 = vmatprep.subr.mxu0 0.0
    %3253 = vmatpush1.msra.mxu0 0.0
    %3254 = vmatprep.subr.mxu0 0.0
    %3255 = vmatpush1.msra.mxu0 0.0
    %3256 = vmatprep.subr.mxu0 0.0
    %3257 = vmatpush1.msra.mxu0 0.0
    %3258 = vmatprep.subr.mxu0 0.0
    %3259 = vmatpush1.msra.mxu0 0.0
    %3260 = vmatprep.subr.mxu0 0.0
    %3261 = vmatpush1.msra.mxu0 0.0
    %3262 = vmatprep.subr.mxu0 0.0
    %3263 = vmatpush1.msra.mxu0 0.0
    %3264 = vmatprep.subr.mxu0 0.0
    %3265 = vmatpush1.msra.mxu0 0.0
    %3266 = vmatprep.subr.mxu0 0.0
    %3267 = vmatpush1.msra.mxu0 0.0
    %3268 = vmatprep.subr.mxu0 0.0
    %3269 = vmatpush1.msra.mxu0 0.0
    %3270 = vmatprep.subr.mxu0 0.0
    %3271 = vmatpush1.msra.mxu0 0.0
    %3272 = vmatprep.subr.mxu0 0.0
    %3273 = vmatpush1.msra.mxu0 0.0
    %3274 = vmatprep.subr.mxu0 0.0
    %3275 = vmatpush1.msra.mxu0 0.0
    %3276 = vmatprep.subr.mxu0 0.0
    %3277 = vmatpush1.msra.mxu0 0.0
    %3278 = vmatprep.subr.mxu0 0.0
    %3279 = vmatpush1.msra.mxu0 0.0
    %3280 = vmatprep.subr.mxu0 0.0
    %3281 = vmatpush1.msra.mxu0 0.0
    %3282 = vmatprep.subr.mxu0 0.0
    %3283 = vmatpush1.msra.mxu0 0.0
    %3284 = vmatprep.subr.mxu0 0.0
    %3285 = vmatpush1.msra.mxu0 0.0
    %3286 = vmatprep.subr.mxu0 0.0
    %3287 = vmatpush1.msra.mxu0 0.0
    %3288 = vmatprep.subr.mxu0 0.0
    %3289 = vmatpush1.msra.mxu0 0.0
    %3290 = vmatprep.subr.mxu0 0.0
    %3291 = vmatpush1.msra.mxu0 0.0
    %3292 = vmatprep.subr.mxu0 0.0
    %3293 = vmatpush1.msra.mxu0 0.0
    %3294 = vmatprep.subr.mxu0 0.0
    %3295 = vmatpush1.msra.mxu0 0.0
    %3296 = vmatprep.subr.mxu0 0.0
    %3297 = vmatpush1.msra.mxu0 0.0
    %3298 = vmatprep.subr.mxu0 0.0
    %3299 = vmatpush1.msra.mxu0 0.0
    %3300 = vmatprep.subr.mxu0 0.0
    %3301 = vmatpush1.msra.mxu0 0.0
    %3302 = vmatprep.subr.mxu0 0.0
    %3303 = vmatpush1.msra.mxu0 0.0
    %3304 = vmatprep.subr.mxu0 0.0
    %3305 = vmatpush1.msra.mxu0 0.0
    %3306 = vmatprep.mubr.f32.mxu0 0.0
    %v3307 = vand.u32 %v2498, 4294901760
    %v3308 = vsub.f32 %v2498, %v3307
    %v3309 = vand.u32 %v3308, 4294901760
    %3310 = vmatmul.mubr.f32.gmra.mrb[0].mxu0 %v3309
    %v3311 = vpop.f32.mrb[0].mxu0
    %v3312 = vadd.f32 %v3231, %v3311
    %v3313 = vpop.f32.mrb[0].mxu0
    %3314 = vmatprep.mubr.f32.mxu0 0.0
    %v3315 = vand.u32 %v2501, 4294901760
    %v3316 = vsub.f32 %v2501, %v3315
    %v3317 = vand.u32 %v3316, 4294901760
    %3318 = vmatmul.mubr.f32.gmra.mrb[0].mxu0 %v3317
    %v3319 = vpop.f32.mrb[0].mxu0
    %v3320 = vadd.f32 %v3238, %v3319
    %v3321 = vpop.f32.mrb[0].mxu0
    %3322 = vdwg.mxu0
    %3323 = vmatprep.subr.mxu0 0.0
    %v3324 = vand.u32 %v652, 4294901760
    %v3325 = vsub.f32 %v652, %v3324
    %v3326 = vand.u32 %v3325, 4294901760
    %3327 = vmatpush1.msra.mxu0 %v3326
    %3328 = vmatprep.subr.mxu0 0.0
    %3329 = vmatpush1.msra.mxu0 0.0
    %3330 = vmatprep.subr.mxu0 0.0
    %3331 = vmatpush1.msra.mxu0 0.0
    %3332 = vmatprep.subr.mxu0 0.0
    %3333 = vmatpush1.msra.mxu0 0.0
    %3334 = vmatprep.subr.mxu0 0.0
    %3335 = vmatpush1.msra.mxu0 0.0
    %3336 = vmatprep.subr.mxu0 0.0
    %3337 = vmatpush1.msra.mxu0 0.0
    %3338 = vmatprep.subr.mxu0 0.0
    %3339 = vmatpush1.msra.mxu0 0.0
    %3340 = vmatprep.subr.mxu0 0.0
    %3341 = vmatpush1.msra.mxu0 0.0
    %3342 = vmatprep.subr.mxu0 0.0
    %3343 = vmatpush1.msra.mxu0 0.0
    %3344 = vmatprep.subr.mxu0 0.0
    %3345 = vmatpush1.msra.mxu0 0.0
    %3346 = vmatprep.subr.mxu0 0.0
    %3347 = vmatpush1.msra.mxu0 0.0
    %3348 = vmatprep.subr.mxu0 0.0
    %3349 = vmatpush1.msra.mxu0 0.0
    %3350 = vmatprep.subr.mxu0 0.0
    %3351 = vmatpush1.msra.mxu0 0.0
    %3352 = vmatprep.subr.mxu0 0.0
    %3353 = vmatpush1.msra.mxu0 0.0
    %3354 = vmatprep.subr.mxu0 0.0
    %3355 = vmatpush1.msra.mxu0 0.0
    %3356 = vmatprep.subr.mxu0 0.0
    %3357 = vmatpush1.msra.mxu0 0.0
    %3358 = vmatprep.subr.mxu0 0.0
    %3359 = vmatpush1.msra.mxu0 0.0
    %3360 = vmatprep.subr.mxu0 0.0
    %3361 = vmatpush1.msra.mxu0 0.0
    %3362 = vmatprep.subr.mxu0 0.0
    %3363 = vmatpush1.msra.mxu0 0.0
    %3364 = vmatprep.subr.mxu0 0.0
    %3365 = vmatpush1.msra.mxu0 0.0
    %3366 = vmatprep.subr.mxu0 0.0
    %3367 = vmatpush1.msra.mxu0 0.0
    %3368 = vmatprep.subr.mxu0 0.0
    %3369 = vmatpush1.msra.mxu0 0.0
    %3370 = vmatprep.subr.mxu0 0.0
    %3371 = vmatpush1.msra.mxu0 0.0
    %3372 = vmatprep.subr.mxu0 0.0
    %3373 = vmatpush1.msra.mxu0 0.0
    %3374 = vmatprep.subr.mxu0 0.0
    %3375 = vmatpush1.msra.mxu0 0.0
    %3376 = vmatprep.subr.mxu0 0.0
    %3377 = vmatpush1.msra.mxu0 0.0
    %3378 = vmatprep.subr.mxu0 0.0
    %3379 = vmatpush1.msra.mxu0 0.0
    %3380 = vmatprep.subr.mxu0 0.0
    %3381 = vmatpush1.msra.mxu0 0.0
    %3382 = vmatprep.subr.mxu0 0.0
    %3383 = vmatpush1.msra.mxu0 0.0
    %3384 = vmatprep.subr.mxu0 0.0
    %3385 = vmatpush1.msra.mxu0 0.0
    %3386 = vmatprep.subr.mxu0 0.0
    %3387 = vmatpush1.msra.mxu0 0.0
    %3388 = vmatprep.subr.mxu0 0.0
    %3389 = vmatpush1.msra.mxu0 0.0
    %3390 = vmatprep.mubr.f32.mxu0 0.0
    %v3391 = vand.u32 %v2498, 4294901760
    %3392 = vmatmul.mubr.f32.gmra.mrb[0].mxu0 %v3391
    %v3393 = vpop.f32.mrb[0].mxu0
    %v3394 = vadd.f32 %v3312, %v3393
    %v3395 = vpop.f32.mrb[0].mxu0
    %3396 = vmatprep.mubr.f32.mxu0 0.0
    %v3397 = vand.u32 %v2501, 4294901760
    %3398 = vmatmul.mubr.f32.gmra.mrb[0].mxu0 %v3397
    %v3399 = vpop.f32.mrb[0].mxu0
    %v3400 = vadd.f32 %v3320, %v3399
    %v3401 = vpop.f32.mrb[0].mxu0
    %3402 = vdwg.mxu0
    %3403 = vmatprep.subr.mxu0 0.0
    %v3404 = vand.u32 %v652, 4294901760
    %3405 = vmatpush1.msra.mxu0 %v3404
    %3406 = vmatprep.subr.mxu0 0.0
    %3407 = vmatpush1.msra.mxu0 0.0
    %3408 = vmatprep.subr.mxu0 0.0
    %3409 = vmatpush1.msra.mxu0 0.0
    %3410 = vmatprep.subr.mxu0 0.0
    %3411 = vmatpush1.msra.mxu0 0.0
    %3412 = vmatprep.subr.mxu0 0.0
    %3413 = vmatpush1.msra.mxu0 0.0
    %3414 = vmatprep.subr.mxu0 0.0
    %3415 = vmatpush1.msra.mxu0 0.0
    %3416 = vmatprep.subr.mxu0 0.0
    %3417 = vmatpush1.msra.mxu0 0.0
    %3418 = vmatprep.subr.mxu0 0.0
    %3419 = vmatpush1.msra.mxu0 0.0
    %3420 = vmatprep.subr.mxu0 0.0
    %3421 = vmatpush1.msra.mxu0 0.0
    %3422 = vmatprep.subr.mxu0 0.0
    %3423 = vmatpush1.msra.mxu0 0.0
    %3424 = vmatprep.subr.mxu0 0.0
    %3425 = vmatpush1.msra.mxu0 0.0
    %3426 = vmatprep.subr.mxu0 0.0
    %3427 = vmatpush1.msra.mxu0 0.0
    %3428 = vmatprep.subr.mxu0 0.0
    %3429 = vmatpush1.msra.mxu0 0.0
    %3430 = vmatprep.subr.mxu0 0.0
    %3431 = vmatpush1.msra.mxu0 0.0
    %3432 = vmatprep.subr.mxu0 0.0
    %3433 = vmatpush1.msra.mxu0 0.0
    %3434 = vmatprep.subr.mxu0 0.0
    %3435 = vmatpush1.msra.mxu0 0.0
    %3436 = vmatprep.subr.mxu0 0.0
    %3437 = vmatpush1.msra.mxu0 0.0
    %3438 = vmatprep.subr.mxu0 0.0
    %3439 = vmatpush1.msra.mxu0 0.0
    %3440 = vmatprep.subr.mxu0 0.0
    %3441 = vmatpush1.msra.mxu0 0.0
    %3442 = vmatprep.subr.mxu0 0.0
    %3443 = vmatpush1.msra.mxu0 0.0
    %3444 = vmatprep.subr.mxu0 0.0
    %3445 = vmatpush1.msra.mxu0 0.0
    %3446 = vmatprep.subr.mxu0 0.0
    %3447 = vmatpush1.msra.mxu0 0.0
    %3448 = vmatprep.subr.mxu0 0.0
    %3449 = vmatpush1.msra.mxu0 0.0
    %3450 = vmatprep.subr.mxu0 0.0
    %3451 = vmatpush1.msra.mxu0 0.0
    %3452 = vmatprep.subr.mxu0 0.0
    %3453 = vmatpush1.msra.mxu0 0.0
    %3454 = vmatprep.subr.mxu0 0.0
    %3455 = vmatpush1.msra.mxu0 0.0
    %3456 = vmatprep.subr.mxu0 0.0
    %3457 = vmatpush1.msra.mxu0 0.0
    %3458 = vmatprep.subr.mxu0 0.0
    %3459 = vmatpush1.msra.mxu0 0.0
    %3460 = vmatprep.subr.mxu0 0.0
    %3461 = vmatpush1.msra.mxu0 0.0
    %3462 = vmatprep.subr.mxu0 0.0
    %3463 = vmatpush1.msra.mxu0 0.0
    %3464 = vmatprep.subr.mxu0 0.0
    %3465 = vmatpush1.msra.mxu0 0.0
    %3466 = vmatprep.subr.mxu0 0.0
    %3467 = vmatpush1.msra.mxu0 0.0
    %3468 = vmatprep.mubr.f32.mxu0 0.0
    %v3469 = vand.u32 %v2498, 4294901760
    %3470 = vmatmul.mubr.f32.gmra.mrb[0].mxu0 %v3469
    %v3471 = vpop.f32.mrb[0].mxu0
    %v3472 = vadd.f32 %v3394, %v3471
    %v3473 = vpop.f32.mrb[0].mxu0
    %3474 = vmatprep.mubr.f32.mxu0 0.0
    %v3475 = vand.u32 %v2501, 4294901760
    %3476 = vmatmul.mubr.f32.gmra.mrb[0].mxu0 %v3475
    %v3477 = vpop.f32.mrb[0].mxu0
    %v3478 = vadd.f32 %v3400, %v3477
    %v3479 = vpop.f32.mrb[0].mxu0
    %3480 = vdwg.mxu0
    %v3481 = vsub.f32 %v3472, %v2983
    %v3482 = vsub.f32 %v3478, %v2989
    %v3483 = vadd.f32 %v3481, %v1149
    %v3484 = vadd.f32 %v3482, %v1149
    %3485 = vmatprep.subr.mxu0 0.0
    %v3486 = vand.u32 %v2498, 4294901760
    %3487 = vmatpush1.xpose.msra.mxu0 %v3486
    %3488 = vmatprep.subr.mxu0 0.0
    %v3489 = vand.u32 %v2501, 4294901760
    %3490 = vmatpush1.xpose.msra.mxu0 %v3489
    %3491 = vmatprep.subr.mxu0 0.0
    %3492 = vmatpush1.xpose.msra.mxu0 0.0
    %3493 = vmatprep.subr.mxu0 0.0
    %3494 = vmatpush1.xpose.msra.mxu0 0.0
    %3495 = vmatprep.subr.mxu0 0.0
    %3496 = vmatpush1.xpose.msra.mxu0 0.0
    %3497 = vmatprep.subr.mxu0 0.0
    %3498 = vmatpush1.xpose.msra.mxu0 0.0
    %3499 = vmatprep.subr.mxu0 0.0
    %3500 = vmatpush1.xpose.msra.mxu0 0.0
    %3501 = vmatprep.subr.mxu0 0.0
    %3502 = vmatpush1.xpose.msra.mxu0 0.0
    %3503 = vmatprep.subr.mxu0 0.0
    %3504 = vmatpush1.xpose.msra.mxu0 0.0
    %3505 = vmatprep.subr.mxu0 0.0
    %3506 = vmatpush1.xpose.msra.mxu0 0.0
    %3507 = vmatprep.subr.mxu0 0.0
    %3508 = vmatpush1.xpose.msra.mxu0 0.0
    %3509 = vmatprep.subr.mxu0 0.0
    %3510 = vmatpush1.xpose.msra.mxu0 0.0
    %3511 = vmatprep.subr.mxu0 0.0
    %3512 = vmatpush1.xpose.msra.mxu0 0.0
    %3513 = vmatprep.subr.mxu0 0.0
    %3514 = vmatpush1.xpose.msra.mxu0 0.0
    %3515 = vmatprep.subr.mxu0 0.0
    %3516 = vmatpush1.xpose.msra.mxu0 0.0
    %3517 = vmatprep.subr.mxu0 0.0
    %3518 = vmatpush1.xpose.msra.mxu0 0.0
    %3519 = vmatprep.subr.mxu0 0.0
    %3520 = vmatpush1.xpose.msra.mxu0 0.0
    %3521 = vmatprep.subr.mxu0 0.0
    %3522 = vmatpush1.xpose.msra.mxu0 0.0
    %3523 = vmatprep.subr.mxu0 0.0
    %3524 = vmatpush1.xpose.msra.mxu0 0.0
    %3525 = vmatprep.subr.mxu0 0.0
    %3526 = vmatpush1.xpose.msra.mxu0 0.0
    %3527 = vmatprep.subr.mxu0 0.0
    %3528 = vmatpush1.xpose.msra.mxu0 0.0
    %3529 = vmatprep.subr.mxu0 0.0
    %3530 = vmatpush1.xpose.msra.mxu0 0.0
    %3531 = vmatprep.subr.mxu0 0.0
    %3532 = vmatpush1.xpose.msra.mxu0 0.0
    %3533 = vmatprep.subr.mxu0 0.0
    %3534 = vmatpush1.xpose.msra.mxu0 0.0
    %3535 = vmatprep.subr.mxu0 0.0
    %3536 = vmatpush1.xpose.msra.mxu0 0.0
    %3537 = vmatprep.subr.mxu0 0.0
    %3538 = vmatpush1.xpose.msra.mxu0 0.0
    %3539 = vmatprep.subr.mxu0 0.0
    %3540 = vmatpush1.xpose.msra.mxu0 0.0
    %3541 = vmatprep.subr.mxu0 0.0
    %3542 = vmatpush1.xpose.msra.mxu0 0.0
    %3543 = vmatprep.subr.mxu0 0.0
    %3544 = vmatpush1.xpose.msra.mxu0 0.0
    %3545 = vmatprep.subr.mxu0 0.0
    %3546 = vmatpush1.xpose.msra.mxu0 0.0
    %3547 = vmatprep.subr.mxu0 0.0
    %3548 = vmatpush1.xpose.msra.mxu0 0.0
    %3549 = vmatprep.subr.mxu0 0.0
    %3550 = vmatpush1.xpose.msra.mxu0 0.0
    %3551 = vmatprep.mubr.f32.mxu0 0.0
    %v3552 = vand.u32 %v2498, 4294901760
    %v3553 = vsub.f32 %v2498, %v3552
    %v3554 = vand.u32 %v3553, 4294901760
    %v3555 = vsub.f32 %v3553, %v3554
    %v3556 = vand.u32 %v3555, 4294901760
    %3557 = vmatmul.mubr.f32.gmra.mrb[0].mxu0 %v3556
    %v3558 = vpop.f32.mrb[0].mxu0
    %v3559 = vadd.f32 0.0, %v3558
    %v3560 = vpop.f32.mrb[0].mxu0
    %3561 = vmatprep.mubr.f32.mxu0 0.0
    %v3562 = vand.u32 %v2501, 4294901760
    %v3563 = vsub.f32 %v2501, %v3562
    %v3564 = vand.u32 %v3563, 4294901760
    %v3565 = vsub.f32 %v3563, %v3564
    %v3566 = vand.u32 %v3565, 4294901760
    %3567 = vmatmul.mubr.f32.gmra.mrb[0].mxu0 %v3566
    %v3568 = vpop.f32.mrb[0].mxu0
    %v3569 = vadd.f32 0.0, %v3568
    %v3570 = vpop.f32.mrb[0].mxu0
    %3571 = vdwg.mxu0
    %3572 = vmatprep.subr.mxu0 0.0
    %v3573 = vand.u32 %v2498, 4294901760
    %v3574 = vsub.f32 %v2498, %v3573
    %v3575 = vand.u32 %v3574, 4294901760
    %v3576 = vsub.f32 %v3574, %v3575
    %v3577 = vand.u32 %v3576, 4294901760
    %3578 = vmatpush1.xpose.msra.mxu0 %v3577
    %3579 = vmatprep.subr.mxu0 0.0
    %v3580 = vand.u32 %v2501, 4294901760
    %v3581 = vsub.f32 %v2501, %v3580
    %v3582 = vand.u32 %v3581, 4294901760
    %v3583 = vsub.f32 %v3581, %v3582
    %v3584 = vand.u32 %v3583, 4294901760
    %3585 = vmatpush1.xpose.msra.mxu0 %v3584
    %3586 = vmatprep.subr.mxu0 0.0
    %3587 = vmatpush1.xpose.msra.mxu0 0.0
    %3588 = vmatprep.subr.mxu0 0.0
    %3589 = vmatpush1.xpose.msra.mxu0 0.0
    %3590 = vmatprep.subr.mxu0 0.0
    %3591 = vmatpush1.xpose.msra.mxu0 0.0
    %3592 = vmatprep.subr.mxu0 0.0
    %3593 = vmatpush1.xpose.msra.mxu0 0.0
    %3594 = vmatprep.subr.mxu0 0.0
    %3595 = vmatpush1.xpose.msra.mxu0 0.0
    %3596 = vmatprep.subr.mxu0 0.0
    %3597 = vmatpush1.xpose.msra.mxu0 0.0
    %3598 = vmatprep.subr.mxu0 0.0
    %3599 = vmatpush1.xpose.msra.mxu0 0.0
    %3600 = vmatprep.subr.mxu0 0.0
    %3601 = vmatpush1.xpose.msra.mxu0 0.0
    %3602 = vmatprep.subr.mxu0 0.0
    %3603 = vmatpush1.xpose.msra.mxu0 0.0
    %3604 = vmatprep.subr.mxu0 0.0
    %3605 = vmatpush1.xpose.msra.mxu0 0.0
    %3606 = vmatprep.subr.mxu0 0.0
    %3607 = vmatpush1.xpose.msra.mxu0 0.0
    %3608 = vmatprep.subr.mxu0 0.0
    %3609 = vmatpush1.xpose.msra.mxu0 0.0
    %3610 = vmatprep.subr.mxu0 0.0
    %3611 = vmatpush1.xpose.msra.mxu0 0.0
    %3612 = vmatprep.subr.mxu0 0.0
    %3613 = vmatpush1.xpose.msra.mxu0 0.0
    %3614 = vmatprep.subr.mxu0 0.0
    %3615 = vmatpush1.xpose.msra.mxu0 0.0
    %3616 = vmatprep.subr.mxu0 0.0
    %3617 = vmatpush1.xpose.msra.mxu0 0.0
    %3618 = vmatprep.subr.mxu0 0.0
    %3619 = vmatpush1.xpose.msra.mxu0 0.0
    %3620 = vmatprep.subr.mxu0 0.0
    %3621 = vmatpush1.xpose.msra.mxu0 0.0
    %3622 = vmatprep.subr.mxu0 0.0
    %3623 = vmatpush1.xpose.msra.mxu0 0.0
    %3624 = vmatprep.subr.mxu0 0.0
    %3625 = vmatpush1.xpose.msra.mxu0 0.0
    %3626 = vmatprep.subr.mxu0 0.0
    %3627 = vmatpush1.xpose.msra.mxu0 0.0
    %3628 = vmatprep.subr.mxu0 0.0
    %3629 = vmatpush1.xpose.msra.mxu0 0.0
    %3630 = vmatprep.subr.mxu0 0.0
    %3631 = vmatpush1.xpose.msra.mxu0 0.0
    %3632 = vmatprep.subr.mxu0 0.0
    %3633 = vmatpush1.xpose.msra.mxu0 0.0
    %3634 = vmatprep.subr.mxu0 0.0
    %3635 = vmatpush1.xpose.msra.mxu0 0.0
    %3636 = vmatprep.subr.mxu0 0.0
    %3637 = vmatpush1.xpose.msra.mxu0 0.0
    %3638 = vmatprep.subr.mxu0 0.0
    %3639 = vmatpush1.xpose.msra.mxu0 0.0
    %3640 = vmatprep.subr.mxu0 0.0
    %3641 = vmatpush1.xpose.msra.mxu0 0.0
    %3642 = vmatprep.subr.mxu0 0.0
    %3643 = vmatpush1.xpose.msra.mxu0 0.0
    %3644 = vmatprep.subr.mxu0 0.0
    %3645 = vmatpush1.xpose.msra.mxu0 0.0
    %3646 = vmatprep.mubr.f32.mxu0 0.0
    %v3647 = vand.u32 %v2498, 4294901760
    %3648 = vmatmul.mubr.f32.gmra.mrb[0].mxu0 %v3647
    %v3649 = vpop.f32.mrb[0].mxu0
    %v3650 = vadd.f32 %v3559, %v3649
    %v3651 = vpop.f32.mrb[0].mxu0
    %3652 = vmatprep.mubr.f32.mxu0 0.0
    %v3653 = vand.u32 %v2501, 4294901760
    %3654 = vmatmul.mubr.f32.gmra.mrb[0].mxu0 %v3653
    %v3655 = vpop.f32.mrb[0].mxu0
    %v3656 = vadd.f32 %v3569, %v3655
    %v3657 = vpop.f32.mrb[0].mxu0
    %3658 = vdwg.mxu0
    %3659 = vmatprep.subr.mxu0 0.0
    %v3660 = vand.u32 %v2498, 4294901760
    %v3661 = vsub.f32 %v2498, %v3660
    %3662 = vmatpush1.xpose.msra.mxu0 %v3661
    %3663 = vmatprep.subr.mxu0 0.0
    %v3664 = vand.u32 %v2501, 4294901760
    %v3665 = vsub.f32 %v2501, %v3664
    %3666 = vmatpush1.xpose.msra.mxu0 %v3665
    %3667 = vmatprep.subr.mxu0 0.0
    %3668 = vmatpush1.xpose.msra.mxu0 0.0
    %3669 = vmatprep.subr.mxu0 0.0
    %3670 = vmatpush1.xpose.msra.mxu0 0.0
    %3671 = vmatprep.subr.mxu0 0.0
    %3672 = vmatpush1.xpose.msra.mxu0 0.0
    %3673 = vmatprep.subr.mxu0 0.0
    %3674 = vmatpush1.xpose.msra.mxu0 0.0
    %3675 = vmatprep.subr.mxu0 0.0
    %3676 = vmatpush1.xpose.msra.mxu0 0.0
    %3677 = vmatprep.subr.mxu0 0.0
    %3678 = vmatpush1.xpose.msra.mxu0 0.0
    %3679 = vmatprep.subr.mxu0 0.0
    %3680 = vmatpush1.xpose.msra.mxu0 0.0
    %3681 = vmatprep.subr.mxu0 0.0
    %3682 = vmatpush1.xpose.msra.mxu0 0.0
    %3683 = vmatprep.subr.mxu0 0.0
    %3684 = vmatpush1.xpose.msra.mxu0 0.0
    %3685 = vmatprep.subr.mxu0 0.0
    %3686 = vmatpush1.xpose.msra.mxu0 0.0
    %3687 = vmatprep.subr.mxu0 0.0
    %3688 = vmatpush1.xpose.msra.mxu0 0.0
    %3689 = vmatprep.subr.mxu0 0.0
    %3690 = vmatpush1.xpose.msra.mxu0 0.0
    %3691 = vmatprep.subr.mxu0 0.0
    %3692 = vmatpush1.xpose.msra.mxu0 0.0
    %3693 = vmatprep.subr.mxu0 0.0
    %3694 = vmatpush1.xpose.msra.mxu0 0.0
    %3695 = vmatprep.subr.mxu0 0.0
    %3696 = vmatpush1.xpose.msra.mxu0 0.0
    %3697 = vmatprep.subr.mxu0 0.0
    %3698 = vmatpush1.xpose.msra.mxu0 0.0
    %3699 = vmatprep.subr.mxu0 0.0
    %3700 = vmatpush1.xpose.msra.mxu0 0.0
    %3701 = vmatprep.subr.mxu0 0.0
    %3702 = vmatpush1.xpose.msra.mxu0 0.0
    %3703 = vmatprep.subr.mxu0 0.0
    %3704 = vmatpush1.xpose.msra.mxu0 0.0
    %3705 = vmatprep.subr.mxu0 0.0
    %3706 = vmatpush1.xpose.msra.mxu0 0.0
    %3707 = vmatprep.subr.mxu0 0.0
    %3708 = vmatpush1.xpose.msra.mxu0 0.0
    %3709 = vmatprep.subr.mxu0 0.0
    %3710 = vmatpush1.xpose.msra.mxu0 0.0
    %3711 = vmatprep.subr.mxu0 0.0
    %3712 = vmatpush1.xpose.msra.mxu0 0.0
    %3713 = vmatprep.subr.mxu0 0.0
    %3714 = vmatpush1.xpose.msra.mxu0 0.0
    %3715 = vmatprep.subr.mxu0 0.0
    %3716 = vmatpush1.xpose.msra.mxu0 0.0
    %3717 = vmatprep.subr.mxu0 0.0
    %3718 = vmatpush1.xpose.msra.mxu0 0.0
    %3719 = vmatprep.subr.mxu0 0.0
    %3720 = vmatpush1.xpose.msra.mxu0 0.0
    %3721 = vmatprep.subr.mxu0 0.0
    %3722 = vmatpush1.xpose.msra.mxu0 0.0
    %3723 = vmatprep.subr.mxu0 0.0
    %3724 = vmatpush1.xpose.msra.mxu0 0.0
    %3725 = vmatprep.subr.mxu0 0.0
    %3726 = vmatpush1.xpose.msra.mxu0 0.0
    %3727 = vmatprep.mubr.f32.mxu0 0.0
    %v3728 = vand.u32 %v2498, 4294901760
    %v3729 = vsub.f32 %v2498, %v3728
    %3730 = vmatmul.mubr.f32.gmra.mrb[0].mxu0 %v3729
    %v3731 = vpop.f32.mrb[0].mxu0
    %v3732 = vadd.f32 %v3650, %v3731
    %v3733 = vpop.f32.mrb[0].mxu0
    %3734 = vmatprep.mubr.f32.mxu0 0.0
    %v3735 = vand.u32 %v2501, 4294901760
    %v3736 = vsub.f32 %v2501, %v3735
    %3737 = vmatmul.mubr.f32.gmra.mrb[0].mxu0 %v3736
    %v3738 = vpop.f32.mrb[0].mxu0
    %v3739 = vadd.f32 %v3656, %v3738
    %v3740 = vpop.f32.mrb[0].mxu0
    %3741 = vdwg.mxu0
    %3742 = vmatprep.subr.mxu0 0.0
    %v3743 = vand.u32 %v2498, 4294901760
    %3744 = vmatpush1.xpose.msra.mxu0 %v3743
    %3745 = vmatprep.subr.mxu0 0.0
    %v3746 = vand.u32 %v2501, 4294901760
    %3747 = vmatpush1.xpose.msra.mxu0 %v3746
    %3748 = vmatprep.subr.mxu0 0.0
    %3749 = vmatpush1.xpose.msra.mxu0 0.0
    %3750 = vmatprep.subr.mxu0 0.0
    %3751 = vmatpush1.xpose.msra.mxu0 0.0
    %3752 = vmatprep.subr.mxu0 0.0
    %3753 = vmatpush1.xpose.msra.mxu0 0.0
    %3754 = vmatprep.subr.mxu0 0.0
    %3755 = vmatpush1.xpose.msra.mxu0 0.0
    %3756 = vmatprep.subr.mxu0 0.0
    %3757 = vmatpush1.xpose.msra.mxu0 0.0
    %3758 = vmatprep.subr.mxu0 0.0
    %3759 = vmatpush1.xpose.msra.mxu0 0.0
    %3760 = vmatprep.subr.mxu0 0.0
    %3761 = vmatpush1.xpose.msra.mxu0 0.0
    %3762 = vmatprep.subr.mxu0 0.0
    %3763 = vmatpush1.xpose.msra.mxu0 0.0
    %3764 = vmatprep.subr.mxu0 0.0
    %3765 = vmatpush1.xpose.msra.mxu0 0.0
    %3766 = vmatprep.subr.mxu0 0.0
    %3767 = vmatpush1.xpose.msra.mxu0 0.0
    %3768 = vmatprep.subr.mxu0 0.0
    %3769 = vmatpush1.xpose.msra.mxu0 0.0
    %3770 = vmatprep.subr.mxu0 0.0
    %3771 = vmatpush1.xpose.msra.mxu0 0.0
    %3772 = vmatprep.subr.mxu0 0.0
    %3773 = vmatpush1.xpose.msra.mxu0 0.0
    %3774 = vmatprep.subr.mxu0 0.0
    %3775 = vmatpush1.xpose.msra.mxu0 0.0
    %3776 = vmatprep.subr.mxu0 0.0
    %3777 = vmatpush1.xpose.msra.mxu0 0.0
    %3778 = vmatprep.subr.mxu0 0.0
    %3779 = vmatpush1.xpose.msra.mxu0 0.0
    %3780 = vmatprep.subr.mxu0 0.0
    %3781 = vmatpush1.xpose.msra.mxu0 0.0
    %3782 = vmatprep.subr.mxu0 0.0
    %3783 = vmatpush1.xpose.msra.mxu0 0.0
    %3784 = vmatprep.subr.mxu0 0.0
    %3785 = vmatpush1.xpose.msra.mxu0 0.0
    %3786 = vmatprep.subr.mxu0 0.0
    %3787 = vmatpush1.xpose.msra.mxu0 0.0
    %3788 = vmatprep.subr.mxu0 0.0
    %3789 = vmatpush1.xpose.msra.mxu0 0.0
    %3790 = vmatprep.subr.mxu0 0.0
    %3791 = vmatpush1.xpose.msra.mxu0 0.0
    %3792 = vmatprep.subr.mxu0 0.0
    %3793 = vmatpush1.xpose.msra.mxu0 0.0
    %3794 = vmatprep.subr.mxu0 0.0
    %3795 = vmatpush1.xpose.msra.mxu0 0.0
    %3796 = vmatprep.subr.mxu0 0.0
    %3797 = vmatpush1.xpose.msra.mxu0 0.0
    %3798 = vmatprep.subr.mxu0 0.0
    %3799 = vmatpush1.xpose.msra.mxu0 0.0
    %3800 = vmatprep.subr.mxu0 0.0
    %3801 = vmatpush1.xpose.msra.mxu0 0.0
    %3802 = vmatprep.subr.mxu0 0.0
    %3803 = vmatpush1.xpose.msra.mxu0 0.0
    %3804 = vmatprep.subr.mxu0 0.0
    %3805 = vmatpush1.xpose.msra.mxu0 0.0
    %3806 = vmatprep.subr.mxu0 0.0
    %3807 = vmatpush1.xpose.msra.mxu0 0.0
    %3808 = vmatprep.mubr.f32.mxu0 0.0
    %v3809 = vand.u32 %v2498, 4294901760
    %v3810 = vsub.f32 %v2498, %v3809
    %v3811 = vand.u32 %v3810, 4294901760
    %3812 = vmatmul.mubr.f32.gmra.mrb[0].mxu0 %v3811
    %v3813 = vpop.f32.mrb[0].mxu0
    %v3814 = vadd.f32 %v3732, %v3813
    %v3815 = vpop.f32.mrb[0].mxu0
    %3816 = vmatprep.mubr.f32.mxu0 0.0
    %v3817 = vand.u32 %v2501, 4294901760
    %v3818 = vsub.f32 %v2501, %v3817
    %v3819 = vand.u32 %v3818, 4294901760
    %3820 = vmatmul.mubr.f32.gmra.mrb[0].mxu0 %v3819
    %v3821 = vpop.f32.mrb[0].mxu0
    %v3822 = vadd.f32 %v3739, %v3821
    %v3823 = vpop.f32.mrb[0].mxu0
    %3824 = vdwg.mxu0
    %3825 = vmatprep.subr.mxu0 0.0
    %v3826 = vand.u32 %v2498, 4294901760
    %v3827 = vsub.f32 %v2498, %v3826
    %v3828 = vand.u32 %v3827, 4294901760
    %3829 = vmatpush1.xpose.msra.mxu0 %v3828
    %3830 = vmatprep.subr.mxu0 0.0
    %v3831 = vand.u32 %v2501, 4294901760
    %v3832 = vsub.f32 %v2501, %v3831
    %v3833 = vand.u32 %v3832, 4294901760
    %3834 = vmatpush1.xpose.msra.mxu0 %v3833
    %3835 = vmatprep.subr.mxu0 0.0
    %3836 = vmatpush1.xpose.msra.mxu0 0.0
    %3837 = vmatprep.subr.mxu0 0.0
    %3838 = vmatpush1.xpose.msra.mxu0 0.0
    %3839 = vmatprep.subr.mxu0 0.0
    %3840 = vmatpush1.xpose.msra.mxu0 0.0
    %3841 = vmatprep.subr.mxu0 0.0
    %3842 = vmatpush1.xpose.msra.mxu0 0.0
    %3843 = vmatprep.subr.mxu0 0.0
    %3844 = vmatpush1.xpose.msra.mxu0 0.0
    %3845 = vmatprep.subr.mxu0 0.0
    %3846 = vmatpush1.xpose.msra.mxu0 0.0
    %3847 = vmatprep.subr.mxu0 0.0
    %3848 = vmatpush1.xpose.msra.mxu0 0.0
    %3849 = vmatprep.subr.mxu0 0.0
    %3850 = vmatpush1.xpose.msra.mxu0 0.0
    %3851 = vmatprep.subr.mxu0 0.0
    %3852 = vmatpush1.xpose.msra.mxu0 0.0
    %3853 = vmatprep.subr.mxu0 0.0
    %3854 = vmatpush1.xpose.msra.mxu0 0.0
    %3855 = vmatprep.subr.mxu0 0.0
    %3856 = vmatpush1.xpose.msra.mxu0 0.0
    %3857 = vmatprep.subr.mxu0 0.0
    %3858 = vmatpush1.xpose.msra.mxu0 0.0
    %3859 = vmatprep.subr.mxu0 0.0
    %3860 = vmatpush1.xpose.msra.mxu0 0.0
    %3861 = vmatprep.subr.mxu0 0.0
    %3862 = vmatpush1.xpose.msra.mxu0 0.0
    %3863 = vmatprep.subr.mxu0 0.0
    %3864 = vmatpush1.xpose.msra.mxu0 0.0
    %3865 = vmatprep.subr.mxu0 0.0
    %3866 = vmatpush1.xpose.msra.mxu0 0.0
    %3867 = vmatprep.subr.mxu0 0.0
    %3868 = vmatpush1.xpose.msra.mxu0 0.0
    %3869 = vmatprep.subr.mxu0 0.0
    %3870 = vmatpush1.xpose.msra.mxu0 0.0
    %3871 = vmatprep.subr.mxu0 0.0
    %3872 = vmatpush1.xpose.msra.mxu0 0.0
    %3873 = vmatprep.subr.mxu0 0.0
    %3874 = vmatpush1.xpose.msra.mxu0 0.0
    %3875 = vmatprep.subr.mxu0 0.0
    %3876 = vmatpush1.xpose.msra.mxu0 0.0
    %3877 = vmatprep.subr.mxu0 0.0
    %3878 = vmatpush1.xpose.msra.mxu0 0.0
    %3879 = vmatprep.subr.mxu0 0.0
    %3880 = vmatpush1.xpose.msra.mxu0 0.0
    %3881 = vmatprep.subr.mxu0 0.0
    %3882 = vmatpush1.xpose.msra.mxu0 0.0
    %3883 = vmatprep.subr.mxu0 0.0
    %3884 = vmatpush1.xpose.msra.mxu0 0.0
    %3885 = vmatprep.subr.mxu0 0.0
    %3886 = vmatpush1.xpose.msra.mxu0 0.0
    %3887 = vmatprep.subr.mxu0 0.0
    %3888 = vmatpush1.xpose.msra.mxu0 0.0
    %3889 = vmatprep.subr.mxu0 0.0
    %3890 = vmatpush1.xpose.msra.mxu0 0.0
    %3891 = vmatprep.subr.mxu0 0.0
    %3892 = vmatpush1.xpose.msra.mxu0 0.0
    %3893 = vmatprep.subr.mxu0 0.0
    %3894 = vmatpush1.xpose.msra.mxu0 0.0
    %3895 = vmatprep.mubr.f32.mxu0 0.0
    %v3896 = vand.u32 %v2498, 4294901760
    %3897 = vmatmul.mubr.f32.gmra.mrb[0].mxu0 %v3896
    %v3898 = vpop.f32.mrb[0].mxu0
    %v3899 = vadd.f32 %v3814, %v3898
    %v3900 = vpop.f32.mrb[0].mxu0
    %3901 = vmatprep.mubr.f32.mxu0 0.0
    %v3902 = vand.u32 %v2501, 4294901760
    %3903 = vmatmul.mubr.f32.gmra.mrb[0].mxu0 %v3902
    %v3904 = vpop.f32.mrb[0].mxu0
    %v3905 = vadd.f32 %v3822, %v3904
    %v3906 = vpop.f32.mrb[0].mxu0
    %3907 = vdwg.mxu0
    %3908 = vmatprep.subr.mxu0 0.0
    %v3909 = vand.u32 %v2498, 4294901760
    %3910 = vmatpush1.xpose.msra.mxu0 %v3909
    %3911 = vmatprep.subr.mxu0 0.0
    %v3912 = vand.u32 %v2501, 4294901760
    %3913 = vmatpush1.xpose.msra.mxu0 %v3912
    %3914 = vmatprep.subr.mxu0 0.0
    %3915 = vmatpush1.xpose.msra.mxu0 0.0
    %3916 = vmatprep.subr.mxu0 0.0
    %3917 = vmatpush1.xpose.msra.mxu0 0.0
    %3918 = vmatprep.subr.mxu0 0.0
    %3919 = vmatpush1.xpose.msra.mxu0 0.0
    %3920 = vmatprep.subr.mxu0 0.0
    %3921 = vmatpush1.xpose.msra.mxu0 0.0
    %3922 = vmatprep.subr.mxu0 0.0
    %3923 = vmatpush1.xpose.msra.mxu0 0.0
    %3924 = vmatprep.subr.mxu0 0.0
    %3925 = vmatpush1.xpose.msra.mxu0 0.0
    %3926 = vmatprep.subr.mxu0 0.0
    %3927 = vmatpush1.xpose.msra.mxu0 0.0
    %3928 = vmatprep.subr.mxu0 0.0
    %3929 = vmatpush1.xpose.msra.mxu0 0.0
    %3930 = vmatprep.subr.mxu0 0.0
    %3931 = vmatpush1.xpose.msra.mxu0 0.0
    %3932 = vmatprep.subr.mxu0 0.0
    %3933 = vmatpush1.xpose.msra.mxu0 0.0
    %3934 = vmatprep.subr.mxu0 0.0
    %3935 = vmatpush1.xpose.msra.mxu0 0.0
    %3936 = vmatprep.subr.mxu0 0.0
    %3937 = vmatpush1.xpose.msra.mxu0 0.0
    %3938 = vmatprep.subr.mxu0 0.0
    %3939 = vmatpush1.xpose.msra.mxu0 0.0
    %3940 = vmatprep.subr.mxu0 0.0
    %3941 = vmatpush1.xpose.msra.mxu0 0.0
    %3942 = vmatprep.subr.mxu0 0.0
    %3943 = vmatpush1.xpose.msra.mxu0 0.0
    %3944 = vmatprep.subr.mxu0 0.0
    %3945 = vmatpush1.xpose.msra.mxu0 0.0
    %3946 = vmatprep.subr.mxu0 0.0
    %3947 = vmatpush1.xpose.msra.mxu0 0.0
    %3948 = vmatprep.subr.mxu0 0.0
    %3949 = vmatpush1.xpose.msra.mxu0 0.0
    %3950 = vmatprep.subr.mxu0 0.0
    %3951 = vmatpush1.xpose.msra.mxu0 0.0
    %3952 = vmatprep.subr.mxu0 0.0
    %3953 = vmatpush1.xpose.msra.mxu0 0.0
    %3954 = vmatprep.subr.mxu0 0.0
    %3955 = vmatpush1.xpose.msra.mxu0 0.0
    %3956 = vmatprep.subr.mxu0 0.0
    %3957 = vmatpush1.xpose.msra.mxu0 0.0
    %3958 = vmatprep.subr.mxu0 0.0
    %3959 = vmatpush1.xpose.msra.mxu0 0.0
    %3960 = vmatprep.subr.mxu0 0.0
    %3961 = vmatpush1.xpose.msra.mxu0 0.0
    %3962 = vmatprep.subr.mxu0 0.0
    %3963 = vmatpush1.xpose.msra.mxu0 0.0
    %3964 = vmatprep.subr.mxu0 0.0
    %3965 = vmatpush1.xpose.msra.mxu0 0.0
    %3966 = vmatprep.subr.mxu0 0.0
    %3967 = vmatpush1.xpose.msra.mxu0 0.0
    %3968 = vmatprep.subr.mxu0 0.0
    %3969 = vmatpush1.xpose.msra.mxu0 0.0
    %3970 = vmatprep.subr.mxu0 0.0
    %3971 = vmatpush1.xpose.msra.mxu0 0.0
    %3972 = vmatprep.subr.mxu0 0.0
    %3973 = vmatpush1.xpose.msra.mxu0 0.0
    %3974 = vmatprep.mubr.f32.mxu0 0.0
    %v3975 = vand.u32 %v2498, 4294901760
    %3976 = vmatmul.mubr.f32.gmra.mrb[0].mxu0 %v3975
    %v3977 = vpop.f32.mrb[0].mxu0
    %v3978 = vadd.f32 %v3899, %v3977
    %v3979 = vpop.f32.mrb[0].mxu0
    %3980 = vmatprep.mubr.f32.mxu0 0.0
    %v3981 = vand.u32 %v2501, 4294901760
    %3982 = vmatmul.mubr.f32.gmra.mrb[0].mxu0 %v3981
    %v3983 = vpop.f32.mrb[0].mxu0
    %v3984 = vadd.f32 %v3905, %v3983
    %v3985 = vpop.f32.mrb[0].mxu0
    %3986 = vdwg.mxu0
    %v3987 = vmul.f32 %v2495, %v2495
    %v3988 = vmul.f32 %v2496, %v2496
    %v3989 = vsel %vm151, %v3987, 0.0
    %3990 = vadd.xlane.f32.xlu0 %v3989
    %v3991 = vpop.xlane.xlu0 %3990
    %v3992 = vsel %vm151, %v3988, 0.0
    %3993 = vadd.xlane.f32.xlu0 %v3992
    %v3994 = vpop.xlane.xlu0 %3993
    %v3996 = vsel %vm151, %v3987, 0
    %v3999 = vsel %vm151, %v3988, 0
    %4001 = vmatprep.subr.mxu0 0.0
    %v4002 = vand.u32 %v3996, 4294901760
    %4003 = vmatpush1.xpose.msra.mxu0 %v4002
    %4004 = vmatprep.subr.mxu0 0.0
    %v4005 = vand.u32 %v3999, 4294901760
    %4006 = vmatpush1.xpose.msra.mxu0 %v4005
    %4007 = vmatprep.subr.mxu0 0.0
    %4008 = vmatpush1.xpose.msra.mxu0 0.0
    %4009 = vmatprep.subr.mxu0 0.0
    %4010 = vmatpush1.xpose.msra.mxu0 0.0
    %4011 = vmatprep.subr.mxu0 0.0
    %4012 = vmatpush1.xpose.msra.mxu0 0.0
    %4013 = vmatprep.subr.mxu0 0.0
    %4014 = vmatpush1.xpose.msra.mxu0 0.0
    %4015 = vmatprep.subr.mxu0 0.0
    %4016 = vmatpush1.xpose.msra.mxu0 0.0
    %4017 = vmatprep.subr.mxu0 0.0
    %4018 = vmatpush1.xpose.msra.mxu0 0.0
    %4019 = vmatprep.subr.mxu0 0.0
    %4020 = vmatpush1.xpose.msra.mxu0 0.0
    %4021 = vmatprep.subr.mxu0 0.0
    %4022 = vmatpush1.xpose.msra.mxu0 0.0
    %4023 = vmatprep.subr.mxu0 0.0
    %4024 = vmatpush1.xpose.msra.mxu0 0.0
    %4025 = vmatprep.subr.mxu0 0.0
    %4026 = vmatpush1.xpose.msra.mxu0 0.0
    %4027 = vmatprep.subr.mxu0 0.0
    %4028 = vmatpush1.xpose.msra.mxu0 0.0
    %4029 = vmatprep.subr.mxu0 0.0
    %4030 = vmatpush1.xpose.msra.mxu0 0.0
    %4031 = vmatprep.subr.mxu0 0.0
    %4032 = vmatpush1.xpose.msra.mxu0 0.0
    %4033 = vmatprep.subr.mxu0 0.0
    %4034 = vmatpush1.xpose.msra.mxu0 0.0
    %4035 = vmatprep.subr.mxu0 0.0
    %4036 = vmatpush1.xpose.msra.mxu0 0.0
    %4037 = vmatprep.subr.mxu0 0.0
    %4038 = vmatpush1.xpose.msra.mxu0 0.0
    %4039 = vmatprep.subr.mxu0 0.0
    %4040 = vmatpush1.xpose.msra.mxu0 0.0
    %4041 = vmatprep.subr.mxu0 0.0
    %4042 = vmatpush1.xpose.msra.mxu0 0.0
    %4043 = vmatprep.subr.mxu0 0.0
    %4044 = vmatpush1.xpose.msra.mxu0 0.0
    %4045 = vmatprep.subr.mxu0 0.0
    %4046 = vmatpush1.xpose.msra.mxu0 0.0
    %4047 = vmatprep.subr.mxu0 0.0
    %4048 = vmatpush1.xpose.msra.mxu0 0.0
    %4049 = vmatprep.subr.mxu0 0.0
    %4050 = vmatpush1.xpose.msra.mxu0 0.0
    %4051 = vmatprep.subr.mxu0 0.0
    %4052 = vmatpush1.xpose.msra.mxu0 0.0
    %4053 = vmatprep.subr.mxu0 0.0
    %4054 = vmatpush1.xpose.msra.mxu0 0.0
    %4055 = vmatprep.subr.mxu0 0.0
    %4056 = vmatpush1.xpose.msra.mxu0 0.0
    %4057 = vmatprep.subr.mxu0 0.0
    %4058 = vmatpush1.xpose.msra.mxu0 0.0
    %4059 = vmatprep.subr.mxu0 0.0
    %4060 = vmatpush1.xpose.msra.mxu0 0.0
    %4061 = vmatprep.subr.mxu0 0.0
    %4062 = vmatpush1.xpose.msra.mxu0 0.0
    %4063 = vmatprep.subr.mxu0 0.0
    %4064 = vmatpush1.xpose.msra.mxu0 0.0
    %4065 = vmatprep.subr.mxu0 0.0
    %4066 = vmatpush1.xpose.msra.mxu0 0.0
    %4067 = vmatprep.mubr.f32.mxu0 0.0
    %v4068 = vand.u32 %v1664, 4294901760
    %v4069 = vsub.f32 %v1664, %v4068
    %v4070 = vand.u32 %v4069, 4294901760
    %v4071 = vsub.f32 %v4069, %v4070
    %v4072 = vand.u32 %v4071, 4294901760
    %4073 = vmatmul.mubr.f32.gmra.mrb[0].mxu0 %v4072
    %v4074 = vpop.f32.mrb[0].mxu0
    %v4075 = vadd.f32 0.0, %v4074
    %v4076 = vpop.f32.mrb[0].mxu0
    %4077 = vdwg.mxu0
    %4078 = vmatprep.subr.mxu0 0.0
    %v4079 = vand.u32 %v3996, 4294901760
    %v4080 = vsub.f32 %v3996, %v4079
    %v4081 = vand.u32 %v4080, 4294901760
    %v4082 = vsub.f32 %v4080, %v4081
    %v4083 = vand.u32 %v4082, 4294901760
    %4084 = vmatpush1.xpose.msra.mxu0 %v4083
    %4085 = vmatprep.subr.mxu0 0.0
    %v4086 = vand.u32 %v3999, 4294901760
    %v4087 = vsub.f32 %v3999, %v4086
    %v4088 = vand.u32 %v4087, 4294901760
    %v4089 = vsub.f32 %v4087, %v4088
    %v4090 = vand.u32 %v4089, 4294901760
    %4091 = vmatpush1.xpose.msra.mxu0 %v4090
    %4092 = vmatprep.subr.mxu0 0.0
    %4093 = vmatpush1.xpose.msra.mxu0 0.0
    %4094 = vmatprep.subr.mxu0 0.0
    %4095 = vmatpush1.xpose.msra.mxu0 0.0
    %4096 = vmatprep.subr.mxu0 0.0
    %4097 = vmatpush1.xpose.msra.mxu0 0.0
    %4098 = vmatprep.subr.mxu0 0.0
    %4099 = vmatpush1.xpose.msra.mxu0 0.0
    %4100 = vmatprep.subr.mxu0 0.0
    %4101 = vmatpush1.xpose.msra.mxu0 0.0
    %4102 = vmatprep.subr.mxu0 0.0
    %4103 = vmatpush1.xpose.msra.mxu0 0.0
    %4104 = vmatprep.subr.mxu0 0.0
    %4105 = vmatpush1.xpose.msra.mxu0 0.0
    %4106 = vmatprep.subr.mxu0 0.0
    %4107 = vmatpush1.xpose.msra.mxu0 0.0
    %4108 = vmatprep.subr.mxu0 0.0
    %4109 = vmatpush1.xpose.msra.mxu0 0.0
    %4110 = vmatprep.subr.mxu0 0.0
    %4111 = vmatpush1.xpose.msra.mxu0 0.0
    %4112 = vmatprep.subr.mxu0 0.0
    %4113 = vmatpush1.xpose.msra.mxu0 0.0
    %4114 = vmatprep.subr.mxu0 0.0
    %4115 = vmatpush1.xpose.msra.mxu0 0.0
    %4116 = vmatprep.subr.mxu0 0.0
    %4117 = vmatpush1.xpose.msra.mxu0 0.0
    %4118 = vmatprep.subr.mxu0 0.0
    %4119 = vmatpush1.xpose.msra.mxu0 0.0
    %4120 = vmatprep.subr.mxu0 0.0
    %4121 = vmatpush1.xpose.msra.mxu0 0.0
    %4122 = vmatprep.subr.mxu0 0.0
    %4123 = vmatpush1.xpose.msra.mxu0 0.0
    %4124 = vmatprep.subr.mxu0 0.0
    %4125 = vmatpush1.xpose.msra.mxu0 0.0
    %4126 = vmatprep.subr.mxu0 0.0
    %4127 = vmatpush1.xpose.msra.mxu0 0.0
    %4128 = vmatprep.subr.mxu0 0.0
    %4129 = vmatpush1.xpose.msra.mxu0 0.0
    %4130 = vmatprep.subr.mxu0 0.0
    %4131 = vmatpush1.xpose.msra.mxu0 0.0
    %4132 = vmatprep.subr.mxu0 0.0
    %4133 = vmatpush1.xpose.msra.mxu0 0.0
    %4134 = vmatprep.subr.mxu0 0.0
    %4135 = vmatpush1.xpose.msra.mxu0 0.0
    %4136 = vmatprep.subr.mxu0 0.0
    %4137 = vmatpush1.xpose.msra.mxu0 0.0
    %4138 = vmatprep.subr.mxu0 0.0
    %4139 = vmatpush1.xpose.msra.mxu0 0.0
    %4140 = vmatprep.subr.mxu0 0.0
    %4141 = vmatpush1.xpose.msra.mxu0 0.0
    %4142 = vmatprep.subr.mxu0 0.0
    %4143 = vmatpush1.xpose.msra.mxu0 0.0
    %4144 = vmatprep.subr.mxu0 0.0
    %4145 = vmatpush1.xpose.msra.mxu0 0.0
    %4146 = vmatprep.subr.mxu0 0.0
    %4147 = vmatpush1.xpose.msra.mxu0 0.0
    %4148 = vmatprep.subr.mxu0 0.0
    %4149 = vmatpush1.xpose.msra.mxu0 0.0
    %4150 = vmatprep.subr.mxu0 0.0
    %4151 = vmatpush1.xpose.msra.mxu0 0.0
    %4152 = vmatprep.mubr.f32.mxu0 0.0
    %v4153 = vand.u32 %v1664, 4294901760
    %4154 = vmatmul.mubr.f32.gmra.mrb[0].mxu0 %v4153
    %v4155 = vpop.f32.mrb[0].mxu0
    %v4156 = vadd.f32 %v4075, %v4155
    %v4157 = vpop.f32.mrb[0].mxu0
    %4158 = vdwg.mxu0
    %4159 = vmatprep.subr.mxu0 0.0
    %v4160 = vand.u32 %v3996, 4294901760
    %v4161 = vsub.f32 %v3996, %v4160
    %4162 = vmatpush1.xpose.msra.mxu0 %v4161
    %4163 = vmatprep.subr.mxu0 0.0
    %v4164 = vand.u32 %v3999, 4294901760
    %v4165 = vsub.f32 %v3999, %v4164
    %4166 = vmatpush1.xpose.msra.mxu0 %v4165
    %4167 = vmatprep.subr.mxu0 0.0
    %4168 = vmatpush1.xpose.msra.mxu0 0.0
    %4169 = vmatprep.subr.mxu0 0.0
    %4170 = vmatpush1.xpose.msra.mxu0 0.0
    %4171 = vmatprep.subr.mxu0 0.0
    %4172 = vmatpush1.xpose.msra.mxu0 0.0
    %4173 = vmatprep.subr.mxu0 0.0
    %4174 = vmatpush1.xpose.msra.mxu0 0.0
    %4175 = vmatprep.subr.mxu0 0.0
    %4176 = vmatpush1.xpose.msra.mxu0 0.0
    %4177 = vmatprep.subr.mxu0 0.0
    %4178 = vmatpush1.xpose.msra.mxu0 0.0
    %4179 = vmatprep.subr.mxu0 0.0
    %4180 = vmatpush1.xpose.msra.mxu0 0.0
    %4181 = vmatprep.subr.mxu0 0.0
    %4182 = vmatpush1.xpose.msra.mxu0 0.0
    %4183 = vmatprep.subr.mxu0 0.0
    %4184 = vmatpush1.xpose.msra.mxu0 0.0
    %4185 = vmatprep.subr.mxu0 0.0
    %4186 = vmatpush1.xpose.msra.mxu0 0.0
    %4187 = vmatprep.subr.mxu0 0.0
    %4188 = vmatpush1.xpose.msra.mxu0 0.0
    %4189 = vmatprep.subr.mxu0 0.0
    %4190 = vmatpush1.xpose.msra.mxu0 0.0
    %4191 = vmatprep.subr.mxu0 0.0
    %4192 = vmatpush1.xpose.msra.mxu0 0.0
    %4193 = vmatprep.subr.mxu0 0.0
    %4194 = vmatpush1.xpose.msra.mxu0 0.0
    %4195 = vmatprep.subr.mxu0 0.0
    %4196 = vmatpush1.xpose.msra.mxu0 0.0
    %4197 = vmatprep.subr.mxu0 0.0
    %4198 = vmatpush1.xpose.msra.mxu0 0.0
    %4199 = vmatprep.subr.mxu0 0.0
    %4200 = vmatpush1.xpose.msra.mxu0 0.0
    %4201 = vmatprep.subr.mxu0 0.0
    %4202 = vmatpush1.xpose.msra.mxu0 0.0
    %4203 = vmatprep.subr.mxu0 0.0
    %4204 = vmatpush1.xpose.msra.mxu0 0.0
    %4205 = vmatprep.subr.mxu0 0.0
    %4206 = vmatpush1.xpose.msra.mxu0 0.0
    %4207 = vmatprep.subr.mxu0 0.0
    %4208 = vmatpush1.xpose.msra.mxu0 0.0
    %4209 = vmatprep.subr.mxu0 0.0
    %4210 = vmatpush1.xpose.msra.mxu0 0.0
    %4211 = vmatprep.subr.mxu0 0.0
    %4212 = vmatpush1.xpose.msra.mxu0 0.0
    %4213 = vmatprep.subr.mxu0 0.0
    %4214 = vmatpush1.xpose.msra.mxu0 0.0
    %4215 = vmatprep.subr.mxu0 0.0
    %4216 = vmatpush1.xpose.msra.mxu0 0.0
    %4217 = vmatprep.subr.mxu0 0.0
    %4218 = vmatpush1.xpose.msra.mxu0 0.0
    %4219 = vmatprep.subr.mxu0 0.0
    %4220 = vmatpush1.xpose.msra.mxu0 0.0
    %4221 = vmatprep.subr.mxu0 0.0
    %4222 = vmatpush1.xpose.msra.mxu0 0.0
    %4223 = vmatprep.subr.mxu0 0.0
    %4224 = vmatpush1.xpose.msra.mxu0 0.0
    %4225 = vmatprep.subr.mxu0 0.0
    %4226 = vmatpush1.xpose.msra.mxu0 0.0
    %4227 = vmatprep.mubr.f32.mxu0 0.0
    %v4228 = vand.u32 %v1664, 4294901760
    %v4229 = vsub.f32 %v1664, %v4228
    %4230 = vmatmul.mubr.f32.gmra.mrb[0].mxu0 %v4229
    %v4231 = vpop.f32.mrb[0].mxu0
    %v4232 = vadd.f32 %v4156, %v4231
    %v4233 = vpop.f32.mrb[0].mxu0
    %4234 = vdwg.mxu0
    %4235 = vmatprep.subr.mxu0 0.0
    %v4236 = vand.u32 %v3996, 4294901760
    %4237 = vmatpush1.xpose.msra.mxu0 %v4236
    %4238 = vmatprep.subr.mxu0 0.0
    %v4239 = vand.u32 %v3999, 4294901760
    %4240 = vmatpush1.xpose.msra.mxu0 %v4239
    %4241 = vmatprep.subr.mxu0 0.0
    %4242 = vmatpush1.xpose.msra.mxu0 0.0
    %4243 = vmatprep.subr.mxu0 0.0
    %4244 = vmatpush1.xpose.msra.mxu0 0.0
    %4245 = vmatprep.subr.mxu0 0.0
    %4246 = vmatpush1.xpose.msra.mxu0 0.0
    %4247 = vmatprep.subr.mxu0 0.0
    %4248 = vmatpush1.xpose.msra.mxu0 0.0
    %4249 = vmatprep.subr.mxu0 0.0
    %4250 = vmatpush1.xpose.msra.mxu0 0.0
    %4251 = vmatprep.subr.mxu0 0.0
    %4252 = vmatpush1.xpose.msra.mxu0 0.0
    %4253 = vmatprep.subr.mxu0 0.0
    %4254 = vmatpush1.xpose.msra.mxu0 0.0
    %4255 = vmatprep.subr.mxu0 0.0
    %4256 = vmatpush1.xpose.msra.mxu0 0.0
    %4257 = vmatprep.subr.mxu0 0.0
    %4258 = vmatpush1.xpose.msra.mxu0 0.0
    %4259 = vmatprep.subr.mxu0 0.0
    %4260 = vmatpush1.xpose.msra.mxu0 0.0
    %4261 = vmatprep.subr.mxu0 0.0
    %4262 = vmatpush1.xpose.msra.mxu0 0.0
    %4263 = vmatprep.subr.mxu0 0.0
    %4264 = vmatpush1.xpose.msra.mxu0 0.0
    %4265 = vmatprep.subr.mxu0 0.0
    %4266 = vmatpush1.xpose.msra.mxu0 0.0
    %4267 = vmatprep.subr.mxu0 0.0
    %4268 = vmatpush1.xpose.msra.mxu0 0.0
    %4269 = vmatprep.subr.mxu0 0.0
    %4270 = vmatpush1.xpose.msra.mxu0 0.0
    %4271 = vmatprep.subr.mxu0 0.0
    %4272 = vmatpush1.xpose.msra.mxu0 0.0
    %4273 = vmatprep.subr.mxu0 0.0
    %4274 = vmatpush1.xpose.msra.mxu0 0.0
    %4275 = vmatprep.subr.mxu0 0.0
    %4276 = vmatpush1.xpose.msra.mxu0 0.0
    %4277 = vmatprep.subr.mxu0 0.0
    %4278 = vmatpush1.xpose.msra.mxu0 0.0
    %4279 = vmatprep.subr.mxu0 0.0
    %4280 = vmatpush1.xpose.msra.mxu0 0.0
    %4281 = vmatprep.subr.mxu0 0.0
    %4282 = vmatpush1.xpose.msra.mxu0 0.0
    %4283 = vmatprep.subr.mxu0 0.0
    %4284 = vmatpush1.xpose.msra.mxu0 0.0
    %4285 = vmatprep.subr.mxu0 0.0
    %4286 = vmatpush1.xpose.msra.mxu0 0.0
    %4287 = vmatprep.subr.mxu0 0.0
    %4288 = vmatpush1.xpose.msra.mxu0 0.0
    %4289 = vmatprep.subr.mxu0 0.0
    %4290 = vmatpush1.xpose.msra.mxu0 0.0
    %4291 = vmatprep.subr.mxu0 0.0
    %4292 = vmatpush1.xpose.msra.mxu0 0.0
    %4293 = vmatprep.subr.mxu0 0.0
    %4294 = vmatpush1.xpose.msra.mxu0 0.0
    %4295 = vmatprep.subr.mxu0 0.0
    %4296 = vmatpush1.xpose.msra.mxu0 0.0
    %4297 = vmatprep.subr.mxu0 0.0
    %4298 = vmatpush1.xpose.msra.mxu0 0.0
    %4299 = vmatprep.subr.mxu0 0.0
    %4300 = vmatpush1.xpose.msra.mxu0 0.0
    %4301 = vmatprep.mubr.f32.mxu0 0.0
    %v4302 = vand.u32 %v1664, 4294901760
    %v4303 = vsub.f32 %v1664, %v4302
    %v4304 = vand.u32 %v4303, 4294901760
    %4305 = vmatmul.mubr.f32.gmra.mrb[0].mxu0 %v4304
    %v4306 = vpop.f32.mrb[0].mxu0
    %v4307 = vadd.f32 %v4232, %v4306
    %v4308 = vpop.f32.mrb[0].mxu0
    %4309 = vdwg.mxu0
    %4310 = vmatprep.subr.mxu0 0.0
    %v4311 = vand.u32 %v3996, 4294901760
    %v4312 = vsub.f32 %v3996, %v4311
    %v4313 = vand.u32 %v4312, 4294901760
    %4314 = vmatpush1.xpose.msra.mxu0 %v4313
    %4315 = vmatprep.subr.mxu0 0.0
    %v4316 = vand.u32 %v3999, 4294901760
    %v4317 = vsub.f32 %v3999, %v4316
    %v4318 = vand.u32 %v4317, 4294901760
    %4319 = vmatpush1.xpose.msra.mxu0 %v4318
    %4320 = vmatprep.subr.mxu0 0.0
    %4321 = vmatpush1.xpose.msra.mxu0 0.0
    %4322 = vmatprep.subr.mxu0 0.0
    %4323 = vmatpush1.xpose.msra.mxu0 0.0
    %4324 = vmatprep.subr.mxu0 0.0
    %4325 = vmatpush1.xpose.msra.mxu0 0.0
    %4326 = vmatprep.subr.mxu0 0.0
    %4327 = vmatpush1.xpose.msra.mxu0 0.0
    %4328 = vmatprep.subr.mxu0 0.0
    %4329 = vmatpush1.xpose.msra.mxu0 0.0
    %4330 = vmatprep.subr.mxu0 0.0
    %4331 = vmatpush1.xpose.msra.mxu0 0.0
    %4332 = vmatprep.subr.mxu0 0.0
    %4333 = vmatpush1.xpose.msra.mxu0 0.0
    %4334 = vmatprep.subr.mxu0 0.0
    %4335 = vmatpush1.xpose.msra.mxu0 0.0
    %4336 = vmatprep.subr.mxu0 0.0
    %4337 = vmatpush1.xpose.msra.mxu0 0.0
    %4338 = vmatprep.subr.mxu0 0.0
    %4339 = vmatpush1.xpose.msra.mxu0 0.0
    %4340 = vmatprep.subr.mxu0 0.0
    %4341 = vmatpush1.xpose.msra.mxu0 0.0
    %4342 = vmatprep.subr.mxu0 0.0
    %4343 = vmatpush1.xpose.msra.mxu0 0.0
    %4344 = vmatprep.subr.mxu0 0.0
    %4345 = vmatpush1.xpose.msra.mxu0 0.0
    %4346 = vmatprep.subr.mxu0 0.0
    %4347 = vmatpush1.xpose.msra.mxu0 0.0
    %4348 = vmatprep.subr.mxu0 0.0
    %4349 = vmatpush1.xpose.msra.mxu0 0.0
    %4350 = vmatprep.subr.mxu0 0.0
    %4351 = vmatpush1.xpose.msra.mxu0 0.0
    %4352 = vmatprep.subr.mxu0 0.0
    %4353 = vmatpush1.xpose.msra.mxu0 0.0
    %4354 = vmatprep.subr.mxu0 0.0
    %4355 = vmatpush1.xpose.msra.mxu0 0.0
    %4356 = vmatprep.subr.mxu0 0.0
    %4357 = vmatpush1.xpose.msra.mxu0 0.0
    %4358 = vmatprep.subr.mxu0 0.0
    %4359 = vmatpush1.xpose.msra.mxu0 0.0
    %4360 = vmatprep.subr.mxu0 0.0
    %4361 = vmatpush1.xpose.msra.mxu0 0.0
    %4362 = vmatprep.subr.mxu0 0.0
    %4363 = vmatpush1.xpose.msra.mxu0 0.0
    %4364 = vmatprep.subr.mxu0 0.0
    %4365 = vmatpush1.xpose.msra.mxu0 0.0
    %4366 = vmatprep.subr.mxu0 0.0
    %4367 = vmatpush1.xpose.msra.mxu0 0.0
    %4368 = vmatprep.subr.mxu0 0.0
    %4369 = vmatpush1.xpose.msra.mxu0 0.0
    %4370 = vmatprep.subr.mxu0 0.0
    %4371 = vmatpush1.xpose.msra.mxu0 0.0
    %4372 = vmatprep.subr.mxu0 0.0
    %4373 = vmatpush1.xpose.msra.mxu0 0.0
    %4374 = vmatprep.subr.mxu0 0.0
    %4375 = vmatpush1.xpose.msra.mxu0 0.0
    %4376 = vmatprep.subr.mxu0 0.0
    %4377 = vmatpush1.xpose.msra.mxu0 0.0
    %4378 = vmatprep.subr.mxu0 0.0
    %4379 = vmatpush1.xpose.msra.mxu0 0.0
    %4380 = vmatprep.mubr.f32.mxu0 0.0
    %v4381 = vand.u32 %v1664, 4294901760
    %4382 = vmatmul.mubr.f32.gmra.mrb[0].mxu0 %v4381
    %v4383 = vpop.f32.mrb[0].mxu0
    %v4384 = vadd.f32 %v4307, %v4383
    %v4385 = vpop.f32.mrb[0].mxu0
    %4386 = vdwg.mxu0
    %4387 = vmatprep.subr.mxu0 0.0
    %v4388 = vand.u32 %v3996, 4294901760
    %4389 = vmatpush1.xpose.msra.mxu0 %v4388
    %4390 = vmatprep.subr.mxu0 0.0
    %v4391 = vand.u32 %v3999, 4294901760
    %4392 = vmatpush1.xpose.msra.mxu0 %v4391
    %4393 = vmatprep.subr.mxu0 0.0
    %4394 = vmatpush1.xpose.msra.mxu0 0.0
    %4395 = vmatprep.subr.mxu0 0.0
    %4396 = vmatpush1.xpose.msra.mxu0 0.0
    %4397 = vmatprep.subr.mxu0 0.0
    %4398 = vmatpush1.xpose.msra.mxu0 0.0
    %4399 = vmatprep.subr.mxu0 0.0
    %4400 = vmatpush1.xpose.msra.mxu0 0.0
    %4401 = vmatprep.subr.mxu0 0.0
    %4402 = vmatpush1.xpose.msra.mxu0 0.0
    %4403 = vmatprep.subr.mxu0 0.0
    %4404 = vmatpush1.xpose.msra.mxu0 0.0
    %4405 = vmatprep.subr.mxu0 0.0
    %4406 = vmatpush1.xpose.msra.mxu0 0.0
    %4407 = vmatprep.subr.mxu0 0.0
    %4408 = vmatpush1.xpose.msra.mxu0 0.0
    %4409 = vmatprep.subr.mxu0 0.0
    %4410 = vmatpush1.xpose.msra.mxu0 0.0
    %4411 = vmatprep.subr.mxu0 0.0
    %4412 = vmatpush1.xpose.msra.mxu0 0.0
    %4413 = vmatprep.subr.mxu0 0.0
    %4414 = vmatpush1.xpose.msra.mxu0 0.0
    %4415 = vmatprep.subr.mxu0 0.0
    %4416 = vmatpush1.xpose.msra.mxu0 0.0
    %4417 = vmatprep.subr.mxu0 0.0
    %4418 = vmatpush1.xpose.msra.mxu0 0.0
    %4419 = vmatprep.subr.mxu0 0.0
    %4420 = vmatpush1.xpose.msra.mxu0 0.0
    %4421 = vmatprep.subr.mxu0 0.0
    %4422 = vmatpush1.xpose.msra.mxu0 0.0
    %4423 = vmatprep.subr.mxu0 0.0
    %4424 = vmatpush1.xpose.msra.mxu0 0.0
    %4425 = vmatprep.subr.mxu0 0.0
    %4426 = vmatpush1.xpose.msra.mxu0 0.0
    %4427 = vmatprep.subr.mxu0 0.0
    %4428 = vmatpush1.xpose.msra.mxu0 0.0
    %4429 = vmatprep.subr.mxu0 0.0
    %4430 = vmatpush1.xpose.msra.mxu0 0.0
    %4431 = vmatprep.subr.mxu0 0.0
    %4432 = vmatpush1.xpose.msra.mxu0 0.0
    %4433 = vmatprep.subr.mxu0 0.0
    %4434 = vmatpush1.xpose.msra.mxu0 0.0
    %4435 = vmatprep.subr.mxu0 0.0
    %4436 = vmatpush1.xpose.msra.mxu0 0.0
    %4437 = vmatprep.subr.mxu0 0.0
    %4438 = vmatpush1.xpose.msra.mxu0 0.0
    %4439 = vmatprep.subr.mxu0 0.0
    %4440 = vmatpush1.xpose.msra.mxu0 0.0
    %4441 = vmatprep.subr.mxu0 0.0
    %4442 = vmatpush1.xpose.msra.mxu0 0.0
    %4443 = vmatprep.subr.mxu0 0.0
    %4444 = vmatpush1.xpose.msra.mxu0 0.0
    %4445 = vmatprep.subr.mxu0 0.0
    %4446 = vmatpush1.xpose.msra.mxu0 0.0
    %4447 = vmatprep.subr.mxu0 0.0
    %4448 = vmatpush1.xpose.msra.mxu0 0.0
    %4449 = vmatprep.subr.mxu0 0.0
    %4450 = vmatpush1.xpose.msra.mxu0 0.0
    %4451 = vmatprep.subr.mxu0 0.0
    %4452 = vmatpush1.xpose.msra.mxu0 0.0
    %4453 = vmatprep.mubr.f32.mxu0 0.0
    %v4454 = vand.u32 %v1664, 4294901760
    %4455 = vmatmul.mubr.f32.gmra.mrb[0].mxu0 %v4454
    %v4456 = vpop.f32.mrb[0].mxu0
    %v4457 = vadd.f32 %v4384, %v4456
    %v4458 = vpop.f32.mrb[0].mxu0
    %4459 = vdwg.mxu0
    %v4460 = vmul.f32 %v3978, 2.0
    %v4461 = vmul.f32 %v3984, 2.0
    %v4462 = vsub.f32 %v4460, %v3991
    %v4463 = vsub.f32 %v4461, %v3994
    %v4464 = vlaneseq
    %v4465 = vshrl.u32 %v4464, 7
    %v4466 = vsub.s32 0, %v4465
    %v4467 = vrot.slane %v4457, %v4466
    %v4468 = vsub.f32 %v4462, %v4467
    %v4469 = vsub.f32 %v4463, %v4467
    %v4470 = vsel %vm2141, %v4468, -inf
    %4471 = vmax.xlane.f32.xlu0 %v4470
    %v4472 = vpop.xlane.xlu0 %4471
    %v4473 = vsel %vm2141, %v4469, -inf
    %4474 = vmax.xlane.f32.xlu0 %v4473
    %v4475 = vpop.xlane.xlu0 %4474
    %vm4476 = vcmp.eq.f32.partialorder %v4468, %v4472
    %vm4477 = vcmp.eq.f32.partialorder %v4469, %v4475
    %v4478 = vsel %vm4476, %v148, 16.0
    %v4479 = vsel %vm4477, %v148, 16.0
    %v4480 = vsel %vm2141, %v4478, inf
    %4481 = vmin.xlane.f32.xlu0 %v4480
    %v4482 = vpop.xlane.xlu0 %4481
    %v4483 = vsel %vm2141, %v4479, inf
    %4484 = vmin.xlane.f32.xlu0 %v4483
    %v4485 = vpop.xlane.xlu0 %4484
    %vm4486 = vcmp.eq.f32.partialorder %v148, %v4482
    %vm4487 = vcmp.eq.f32.partialorder %v148, %v4485
    %v4488 = vsel %vm4486, 1, 0
    %v4489 = vsel %vm4487, 1, 0
    %v4490 = vcvt.s32.f32 %v4488
    %v4491 = vcvt.s32.f32 %v4489
    %v4492 = vsel %vm4486, -inf, %v4468
    %v4493 = vsel %vm4487, -inf, %v4469
    %v4494 = vsel %vm2141, %v4492, -inf
    %4495 = vmax.xlane.f32.xlu0 %v4494
    %v4496 = vpop.xlane.xlu0 %4495
    %v4497 = vsel %vm2141, %v4493, -inf
    %4498 = vmax.xlane.f32.xlu0 %v4497
    %v4499 = vpop.xlane.xlu0 %4498
    %vm4500 = vcmp.eq.f32.partialorder %v4492, %v4496
    %vm4501 = vcmp.eq.f32.partialorder %v4493, %v4499
    %v4502 = vsel %vm4500, %v148, 16.0
    %v4503 = vsel %vm4501, %v148, 16.0
    %v4504 = vsel %vm2141, %v4502, inf
    %4505 = vmin.xlane.f32.xlu0 %v4504
    %v4506 = vpop.xlane.xlu0 %4505
    %v4507 = vsel %vm2141, %v4503, inf
    %4508 = vmin.xlane.f32.xlu0 %v4507
    %v4509 = vpop.xlane.xlu0 %4508
    %vm4510 = vcmp.eq.f32.partialorder %v148, %v4506
    %vm4511 = vcmp.eq.f32.partialorder %v148, %v4509
    %v4512 = vsel %vm4510, 1, 0
    %v4513 = vsel %vm4511, 1, 0
    %v4514 = vcvt.s32.f32 %v4512
    %v4515 = vcvt.s32.f32 %v4513
    %v4516 = vsel %vm4510, -inf, %v4492
    %v4517 = vsel %vm4511, -inf, %v4493
    %v4518 = vsel %vm2141, %v4516, -inf
    %4519 = vmax.xlane.f32.xlu0 %v4518
    %v4520 = vpop.xlane.xlu0 %4519
    %v4521 = vsel %vm2141, %v4517, -inf
    %4522 = vmax.xlane.f32.xlu0 %v4521
    %v4523 = vpop.xlane.xlu0 %4522
    %vm4524 = vcmp.eq.f32.partialorder %v4516, %v4520
    %vm4525 = vcmp.eq.f32.partialorder %v4517, %v4523
    %v4526 = vsel %vm4524, %v148, 16.0
    %v4527 = vsel %vm4525, %v148, 16.0
    %v4528 = vsel %vm2141, %v4526, inf
    %4529 = vmin.xlane.f32.xlu0 %v4528
    %v4530 = vpop.xlane.xlu0 %4529
    %v4531 = vsel %vm2141, %v4527, inf
    %4532 = vmin.xlane.f32.xlu0 %v4531
    %v4533 = vpop.xlane.xlu0 %4532
    %vm4534 = vcmp.eq.f32.partialorder %v148, %v4530
    %vm4535 = vcmp.eq.f32.partialorder %v148, %v4533
    %v4536 = vsel %vm4534, 1, 0
    %v4537 = vsel %vm4535, 1, 0
    %v4538 = vcvt.s32.f32 %v4536
    %v4539 = vcvt.s32.f32 %v4537
    %v4540 = vsel %vm4534, -inf, %v4516
    %v4541 = vsel %vm4535, -inf, %v4517
    %v4542 = vsel %vm2141, %v4540, -inf
    %4543 = vmax.xlane.f32.xlu0 %v4542
    %v4544 = vpop.xlane.xlu0 %4543
    %v4545 = vsel %vm2141, %v4541, -inf
    %4546 = vmax.xlane.f32.xlu0 %v4545
    %v4547 = vpop.xlane.xlu0 %4546
    %vm4548 = vcmp.eq.f32.partialorder %v4540, %v4544
    %vm4549 = vcmp.eq.f32.partialorder %v4541, %v4547
    %v4550 = vsel %vm4548, %v148, 16.0
    %v4551 = vsel %vm4549, %v148, 16.0
    %v4552 = vsel %vm2141, %v4550, inf
    %4553 = vmin.xlane.f32.xlu0 %v4552
    %v4554 = vpop.xlane.xlu0 %4553
    %v4555 = vsel %vm2141, %v4551, inf
    %4556 = vmin.xlane.f32.xlu0 %v4555
    %v4557 = vpop.xlane.xlu0 %4556
    %vm4558 = vcmp.eq.f32.partialorder %v148, %v4554
    %vm4559 = vcmp.eq.f32.partialorder %v148, %v4557
    %v4560 = vsel %vm4558, 1, 0
    %v4561 = vsel %vm4559, 1, 0
    %v4562 = vcvt.s32.f32 %v4560
    %v4563 = vcvt.s32.f32 %v4561
    %v4564 = vsel %vm4558, -inf, %v4540
    %v4565 = vsel %vm4559, -inf, %v4541
    %v4566 = vsel %vm2141, %v4564, -inf
    %4567 = vmax.xlane.f32.xlu0 %v4566
    %v4568 = vpop.xlane.xlu0 %4567
    %v4569 = vsel %vm2141, %v4565, -inf
    %4570 = vmax.xlane.f32.xlu0 %v4569
    %v4571 = vpop.xlane.xlu0 %4570
    %vm4572 = vcmp.eq.f32.partialorder %v4564, %v4568
    %vm4573 = vcmp.eq.f32.partialorder %v4565, %v4571
    %v4574 = vsel %vm4572, %v148, 16.0
    %v4575 = vsel %vm4573, %v148, 16.0
    %v4576 = vsel %vm2141, %v4574, inf
    %4577 = vmin.xlane.f32.xlu0 %v4576
    %v4578 = vpop.xlane.xlu0 %4577
    %v4579 = vsel %vm2141, %v4575, inf
    %4580 = vmin.xlane.f32.xlu0 %v4579
    %v4581 = vpop.xlane.xlu0 %4580
    %vm4582 = vcmp.eq.f32.partialorder %v148, %v4578
    %vm4583 = vcmp.eq.f32.partialorder %v148, %v4581
    %v4584 = vsel %vm4582, 1, 0
    %v4585 = vsel %vm4583, 1, 0
    %v4586 = vcvt.s32.f32 %v4584
    %v4587 = vcvt.s32.f32 %v4585
    %v4588 = vsel %vm4582, -inf, %v4564
    %v4589 = vsel %vm4583, -inf, %v4565
    %v4590 = vsel %vm2141, %v4588, -inf
    %4591 = vmax.xlane.f32.xlu0 %v4590
    %v4592 = vpop.xlane.xlu0 %4591
    %v4593 = vsel %vm2141, %v4589, -inf
    %4594 = vmax.xlane.f32.xlu0 %v4593
    %v4595 = vpop.xlane.xlu0 %4594
    %vm4596 = vcmp.eq.f32.partialorder %v4588, %v4592
    %vm4597 = vcmp.eq.f32.partialorder %v4589, %v4595
    %v4598 = vsel %vm4596, %v148, 16.0
    %v4599 = vsel %vm4597, %v148, 16.0
    %v4600 = vsel %vm2141, %v4598, inf
    %4601 = vmin.xlane.f32.xlu0 %v4600
    %v4602 = vpop.xlane.xlu0 %4601
    %v4603 = vsel %vm2141, %v4599, inf
    %4604 = vmin.xlane.f32.xlu0 %v4603
    %v4605 = vpop.xlane.xlu0 %4604
    %vm4606 = vcmp.eq.f32.partialorder %v148, %v4602
    %vm4607 = vcmp.eq.f32.partialorder %v148, %v4605
    %v4608 = vsel %vm4606, 1, 0
    %v4609 = vsel %vm4607, 1, 0
    %v4610 = vcvt.s32.f32 %v4608
    %v4611 = vcvt.s32.f32 %v4609
    %v4612 = vsel %vm4606, -inf, %v4588
    %v4613 = vsel %vm4607, -inf, %v4589
    %v4614 = vsel %vm2141, %v4612, -inf
    %4615 = vmax.xlane.f32.xlu0 %v4614
    %v4616 = vpop.xlane.xlu0 %4615
    %v4617 = vsel %vm2141, %v4613, -inf
    %4618 = vmax.xlane.f32.xlu0 %v4617
    %v4619 = vpop.xlane.xlu0 %4618
    %vm4620 = vcmp.eq.f32.partialorder %v4612, %v4616
    %vm4621 = vcmp.eq.f32.partialorder %v4613, %v4619
    %v4622 = vsel %vm4620, %v148, 16.0
    %v4623 = vsel %vm4621, %v148, 16.0
    %v4624 = vsel %vm2141, %v4622, inf
    %4625 = vmin.xlane.f32.xlu0 %v4624
    %v4626 = vpop.xlane.xlu0 %4625
    %v4627 = vsel %vm2141, %v4623, inf
    %4628 = vmin.xlane.f32.xlu0 %v4627
    %v4629 = vpop.xlane.xlu0 %4628
    %vm4630 = vcmp.eq.f32.partialorder %v148, %v4626
    %vm4631 = vcmp.eq.f32.partialorder %v148, %v4629
    %v4632 = vsel %vm4630, 1, 0
    %v4633 = vsel %vm4631, 1, 0
    %v4634 = vcvt.s32.f32 %v4632
    %v4635 = vcvt.s32.f32 %v4633
    %v4636 = vsel %vm4630, -inf, %v4612
    %v4637 = vsel %vm4631, -inf, %v4613
    %v4638 = vsel %vm2141, %v4636, -inf
    %4639 = vmax.xlane.f32.xlu0 %v4638
    %v4640 = vpop.xlane.xlu0 %4639
    %v4641 = vsel %vm2141, %v4637, -inf
    %4642 = vmax.xlane.f32.xlu0 %v4641
    %v4643 = vpop.xlane.xlu0 %4642
    %vm4644 = vcmp.eq.f32.partialorder %v4636, %v4640
    %vm4645 = vcmp.eq.f32.partialorder %v4637, %v4643
    %v4646 = vsel %vm4644, %v148, 16.0
    %v4647 = vsel %vm4645, %v148, 16.0
    %v4648 = vsel %vm2141, %v4646, inf
    %4649 = vmin.xlane.f32.xlu0 %v4648
    %v4650 = vpop.xlane.xlu0 %4649
    %v4651 = vsel %vm2141, %v4647, inf
    %4652 = vmin.xlane.f32.xlu0 %v4651
    %v4653 = vpop.xlane.xlu0 %4652
    %vm4654 = vcmp.eq.f32.partialorder %v148, %v4650
    %vm4655 = vcmp.eq.f32.partialorder %v148, %v4653
    %v4656 = vsel %vm4654, 1, 0
    %v4657 = vsel %vm4655, 1, 0
    %v4658 = vcvt.s32.f32 %v4656
    %v4659 = vcvt.s32.f32 %v4657
    %v4660 = vpack.c.bf16 %v4491, %v4490
    %v4661 = vpack.c.bf16 %v4515, %v4514
    %v4662 = vpack.c.bf16 %v4539, %v4538
    %v4663 = vpack.c.bf16 %v4563, %v4562
    %v4664 = vpack.c.bf16 %v4587, %v4586
    %v4665 = vpack.c.bf16 %v4611, %v4610
    %v4666 = vpack.c.bf16 %v4635, %v4634
    %v4667 = vpack.c.bf16 %v4659, %v4658
    %v4668 = vpack.c.bf16 %v2989, %v2983
    %v4670 = vsel %vm2141, %v4660, 0
    %v4673 = vsel %vm2141, %v4661, 0
    %v4676 = vsel %vm2141, %v4662, 0
    %v4679 = vsel %vm2141, %v4663, 0
    %v4682 = vsel %vm2141, %v4664, 0
    %v4685 = vsel %vm2141, %v4665, 0
    %v4688 = vsel %vm2141, %v4666, 0
    %v4691 = vsel %vm2141, %v4667, 0
    %4693 = vmatprep.subr.bf16.mxu0 0
    %4694 = vmatpush1.bf16.msra.mxu0 %v4668
    %4695 = vmatprep.subr.bf16.mxu0 0
    %4696 = vmatpush1.bf16.msra.mxu0 0
    %4697 = vmatprep.subr.bf16.mxu0 0
    %4698 = vmatpush1.bf16.msra.mxu0 0
    %4699 = vmatprep.subr.bf16.mxu0 0
    %4700 = vmatpush1.bf16.msra.mxu0 0
    %4701 = vmatprep.subr.bf16.mxu0 0
    %4702 = vmatpush1.bf16.msra.mxu0 0
    %4703 = vmatprep.subr.bf16.mxu0 0
    %4704 = vmatpush1.bf16.msra.mxu0 0
    %4705 = vmatprep.subr.bf16.mxu0 0
    %4706 = vmatpush1.bf16.msra.mxu0 0
    %4707 = vmatprep.subr.bf16.mxu0 0
    %4708 = vmatpush1.bf16.msra.mxu0 0
    %4709 = vmatprep.subr.bf16.mxu0 0
    %4710 = vmatpush1.bf16.msra.mxu0 0
    %4711 = vmatprep.subr.bf16.mxu0 0
    %4712 = vmatpush1.bf16.msra.mxu0 0
    %4713 = vmatprep.subr.bf16.mxu0 0
    %4714 = vmatpush1.bf16.msra.mxu0 0
    %4715 = vmatprep.subr.bf16.mxu0 0
    %4716 = vmatpush1.bf16.msra.mxu0 0
    %4717 = vmatprep.subr.bf16.mxu0 0
    %4718 = vmatpush1.bf16.msra.mxu0 0
    %4719 = vmatprep.subr.bf16.mxu0 0
    %4720 = vmatpush1.bf16.msra.mxu0 0
    %4721 = vmatprep.subr.bf16.mxu0 0
    %4722 = vmatpush1.bf16.msra.mxu0 0
    %4723 = vmatprep.subr.bf16.mxu0 0
    %4724 = vmatpush1.bf16.msra.mxu0 0
    %4725 = vmatprep.mubr.bf16.mxu0 0
    %4726 = vmatmul.mubr.bf16.gmra.mrb[0].mxu0 %v4670
    %v4727 = vpop.f32.mrb[0].mxu0
    %v4728 = vadd.f32 %v3483, %v4727
    %v4729 = vpop.f32.mrb[0].mxu0
    %v4730 = vpop.f32.mrb[0].mxu0
    %v4731 = vadd.f32 %v3484, %v4730
    %v4732 = vpop.f32.mrb[0].mxu0
    %4733 = vmatprep.mubr.bf16.mxu0 0
    %4734 = vmatmul.mubr.bf16.gmra.mrb[0].mxu0 %v4673
    %v4735 = vpop.f32.mrb[0].mxu0
    %v4736 = vadd.f32 %v3483, %v4735
    %v4737 = vpop.f32.mrb[0].mxu0
    %v4738 = vpop.f32.mrb[0].mxu0
    %v4739 = vadd.f32 %v3484, %v4738
    %v4740 = vpop.f32.mrb[0].mxu0
    %4741 = vmatprep.mubr.bf16.mxu0 0
    %4742 = vmatmul.mubr.bf16.gmra.mrb[0].mxu0 %v4676
    %v4743 = vpop.f32.mrb[0].mxu0
    %v4744 = vadd.f32 %v3483, %v4743
    %v4745 = vpop.f32.mrb[0].mxu0
    %v4746 = vpop.f32.mrb[0].mxu0
    %v4747 = vadd.f32 %v3484, %v4746
    %v4748 = vpop.f32.mrb[0].mxu0
    %4749 = vmatprep.mubr.bf16.mxu0 0
    %4750 = vmatmul.mubr.bf16.gmra.mrb[0].mxu0 %v4679
    %v4751 = vpop.f32.mrb[0].mxu0
    %v4752 = vadd.f32 %v3483, %v4751
    %v4753 = vpop.f32.mrb[0].mxu0
    %v4754 = vpop.f32.mrb[0].mxu0
    %v4755 = vadd.f32 %v3484, %v4754
    %v4756 = vpop.f32.mrb[0].mxu0
    %4757 = vmatprep.mubr.bf16.mxu0 0
    %4758 = vmatmul.mubr.bf16.gmra.mrb[0].mxu0 %v4682
    %v4759 = vpop.f32.mrb[0].mxu0
    %v4760 = vadd.f32 %v3483, %v4759
    %v4761 = vpop.f32.mrb[0].mxu0
    %v4762 = vpop.f32.mrb[0].mxu0
    %v4763 = vadd.f32 %v3484, %v4762
    %v4764 = vpop.f32.mrb[0].mxu0
    %4765 = vmatprep.mubr.bf16.mxu0 0
    %4766 = vmatmul.mubr.bf16.gmra.mrb[0].mxu0 %v4685
    %v4767 = vpop.f32.mrb[0].mxu0
    %v4768 = vadd.f32 %v3483, %v4767
    %v4769 = vpop.f32.mrb[0].mxu0
    %v4770 = vpop.f32.mrb[0].mxu0
    %v4771 = vadd.f32 %v3484, %v4770
    %v4772 = vpop.f32.mrb[0].mxu0
    %4773 = vmatprep.mubr.bf16.mxu0 0
    %4774 = vmatmul.mubr.bf16.gmra.mrb[0].mxu0 %v4688
    %v4775 = vpop.f32.mrb[0].mxu0
    %v4776 = vadd.f32 %v3483, %v4775
    %v4777 = vpop.f32.mrb[0].mxu0
    %v4778 = vpop.f32.mrb[0].mxu0
    %v4779 = vadd.f32 %v3484, %v4778
    %v4780 = vpop.f32.mrb[0].mxu0
    %4781 = vmatprep.mubr.bf16.mxu0 0
    %4782 = vmatmul.mubr.bf16.gmra.mrb[0].mxu0 %v4691
    %v4783 = vpop.f32.mrb[0].mxu0
    %v4784 = vadd.f32 %v3483, %v4783
    %v4785 = vpop.f32.mrb[0].mxu0
    %v4786 = vpop.f32.mrb[0].mxu0
    %v4787 = vadd.f32 %v3484, %v4786
    %v4788 = vpop.f32.mrb[0].mxu0
    %4789 = vdwg.mxu0
    %v4790 = vmul.f32 %v4728, 0.2
    %v4791 = vmul.f32 %v4731, 0.2
    %v4792 = vmul.f32 %v4736, 0.2
    %v4793 = vmul.f32 %v4739, 0.2
    %v4794 = vmul.f32 %v4744, 0.2
    %v4795 = vmul.f32 %v4747, 0.2
    %v4796 = vmul.f32 %v4752, 0.2
    %v4797 = vmul.f32 %v4755, 0.2
    %v4798 = vmul.f32 %v4760, 0.2
    %v4799 = vmul.f32 %v4763, 0.2
    %v4800 = vmul.f32 %v4768, 0.2
    %v4801 = vmul.f32 %v4771, 0.2
    %v4802 = vmul.f32 %v4776, 0.2
    %v4803 = vmul.f32 %v4779, 0.2
    %v4804 = vmul.f32 %v4784, 0.2
    %v4805 = vmul.f32 %v4787, 0.2
    %v4806 = vmax.f32 %v4728, %v4790
    %v4807 = vmax.f32 %v4731, %v4791
    %v4808 = vmax.f32 %v4736, %v4792
    %v4809 = vmax.f32 %v4739, %v4793
    %v4810 = vmax.f32 %v4744, %v4794
    %v4811 = vmax.f32 %v4747, %v4795
    %v4812 = vmax.f32 %v4752, %v4796
    %v4813 = vmax.f32 %v4755, %v4797
    %v4814 = vmax.f32 %v4760, %v4798
    %v4815 = vmax.f32 %v4763, %v4799
    %v4816 = vmax.f32 %v4768, %v4800
    %v4817 = vmax.f32 %v4771, %v4801
    %v4818 = vmax.f32 %v4776, %v4802
    %v4819 = vmax.f32 %v4779, %v4803
    %v4820 = vmax.f32 %v4784, %v4804
    %v4821 = vmax.f32 %v4787, %v4805
    %v4822 = vpack.c.bf16 %v2479, %v2478
    %v4823 = vpack.c.bf16 %v2481, %v2480
    %v4824 = vpack.c.bf16 %v2483, %v2482
    %v4825 = vpack.c.bf16 %v2485, %v2484
    %v4826 = vpack.c.bf16 %v2487, %v2486
    %v4827 = vpack.c.bf16 %v2489, %v2488
    %v4828 = vpack.c.bf16 %v2491, %v2490
    %v4829 = vpack.c.bf16 %v2493, %v2492
    %v4830 = vpack.c.bf16 %v4807, %v4806
    %v4831 = vpack.c.bf16 %v4809, %v4808
    %v4832 = vpack.c.bf16 %v4811, %v4810
    %v4833 = vpack.c.bf16 %v4813, %v4812
    %v4834 = vpack.c.bf16 %v4815, %v4814
    %v4835 = vpack.c.bf16 %v4817, %v4816
    %v4836 = vpack.c.bf16 %v4819, %v4818
    %v4837 = vpack.c.bf16 %v4821, %v4820
    %v4839 = vlaneseq
    %v4840 = vshrl.u32 %v4839, 7
    %v4841 = vsub.s32 0, %v4840
    %v4842 = vrot.slane %v54, %v4841
    %v4852 = vunpack.c.l.b16 %v46
    %v4853 = vunpack.c.l.b16 %v47
    %v4854 = vunpack.c.l.b16 %v48
    %v4855 = vunpack.c.l.b16 %v49
    %v4856 = vunpack.c.l.b16 %v50
    %v4857 = vunpack.c.l.b16 %v51
    %v4858 = vunpack.c.l.b16 %v52
    %v4859 = vunpack.c.l.b16 %v53
    %v4860 = vpack.c.b16 %v4853, %v4852
    %v4861 = vpack.c.b16 %v4855, %v4854
    %v4862 = vpack.c.b16 %v4857, %v4856
    %v4863 = vpack.c.b16 %v4859, %v4858
    %vm4868 = vcmask 523264
    %v4870 = vsel %vm4868, %v4822, 0
    %v4873 = vsel %vm4868, %v4823, 0
    %v4876 = vsel %vm4868, %v4824, 0
    %v4879 = vsel %vm4868, %v4825, 0
    %v4882 = vsel %vm4868, %v4826, 0
    %v4885 = vsel %vm4868, %v4827, 0
    %v4888 = vsel %vm4868, %v4828, 0
    %v4891 = vsel %vm4868, %v4829, 0
    %v4894 = vsel %vm4868, %v4830, 0
    %v4897 = vsel %vm4868, %v4831, 0
    %v4900 = vsel %vm4868, %v4832, 0
    %v4903 = vsel %vm4868, %v4833, 0
    %v4906 = vsel %vm4868, %v4834, 0
    %v4909 = vsel %vm4868, %v4835, 0
    %v4912 = vsel %vm4868, %v4836, 0
    %v4915 = vsel %vm4868, %v4837, 0
    %4917 = vmatprep.subr.bf16.mxu0 0
    %4918 = vmatpush1.bf16.msra.mxu0 %v4860
    %4919 = vmatprep.subr.bf16.mxu0 0
    %4920 = vmatpush1.bf16.msra.mxu0 %v4861
    %4921 = vmatprep.subr.bf16.mxu0 0
    %4922 = vmatpush1.bf16.msra.mxu0 %v4862
    %4923 = vmatprep.subr.bf16.mxu0 0
    %4924 = vmatpush1.bf16.msra.mxu0 %v4863
    %4925 = vmatprep.subr.bf16.mxu0 0
    %4926 = vmatpush1.bf16.msra.mxu0 0
    %4927 = vmatprep.subr.bf16.mxu0 0
    %4928 = vmatpush1.bf16.msra.mxu0 0
    %4929 = vmatprep.subr.bf16.mxu0 0
    %4930 = vmatpush1.bf16.msra.mxu0 0
    %4931 = vmatprep.subr.bf16.mxu0 0
    %4932 = vmatpush1.bf16.msra.mxu0 0
    %4933 = vmatprep.subr.bf16.mxu0 0
    %4934 = vmatpush1.bf16.msra.mxu0 0
    %4935 = vmatprep.subr.bf16.mxu0 0
    %4936 = vmatpush1.bf16.msra.mxu0 0
    %4937 = vmatprep.subr.bf16.mxu0 0
    %4938 = vmatpush1.bf16.msra.mxu0 0
    %4939 = vmatprep.subr.bf16.mxu0 0
    %4940 = vmatpush1.bf16.msra.mxu0 0
    %4941 = vmatprep.subr.bf16.mxu0 0
    %4942 = vmatpush1.bf16.msra.mxu0 0
    %4943 = vmatprep.subr.bf16.mxu0 0
    %4944 = vmatpush1.bf16.msra.mxu0 0
    %4945 = vmatprep.subr.bf16.mxu0 0
    %4946 = vmatpush1.bf16.msra.mxu0 0
    %4947 = vmatprep.subr.bf16.mxu0 0
    %4948 = vmatpush1.bf16.msra.mxu0 0
    %4949 = vmatprep.mubr.bf16.mxu0 0
    %4950 = vmatmul.mubr.bf16.gmra.mrb[0].mxu0 %v4870
    %v4951 = vpop.f32.mrb[0].mxu0
    %v4952 = vadd.f32 %v4842, %v4951
    %v4953 = vpop.f32.mrb[0].mxu0
    %v4954 = vpop.f32.mrb[0].mxu0
    %v4955 = vadd.f32 %v4842, %v4954
    %v4956 = vpop.f32.mrb[0].mxu0
    %4957 = vmatprep.mubr.bf16.mxu0 0
    %4958 = vmatmul.mubr.bf16.gmra.mrb[0].mxu0 %v4873
    %v4959 = vpop.f32.mrb[0].mxu0
    %v4960 = vadd.f32 %v4842, %v4959
    %v4961 = vpop.f32.mrb[0].mxu0
    %v4962 = vpop.f32.mrb[0].mxu0
    %v4963 = vadd.f32 %v4842, %v4962
    %v4964 = vpop.f32.mrb[0].mxu0
    %4965 = vmatprep.mubr.bf16.mxu0 0
    %4966 = vmatmul.mubr.bf16.gmra.mrb[0].mxu0 %v4876
    %v4967 = vpop.f32.mrb[0].mxu0
    %v4968 = vadd.f32 %v4842, %v4967
    %v4969 = vpop.f32.mrb[0].mxu0
    %v4970 = vpop.f32.mrb[0].mxu0
    %v4971 = vadd.f32 %v4842, %v4970
    %v4972 = vpop.f32.mrb[0].mxu0
    %4973 = vmatprep.mubr.bf16.mxu0 0
    %4974 = vmatmul.mubr.bf16.gmra.mrb[0].mxu0 %v4879
    %v4975 = vpop.f32.mrb[0].mxu0
    %v4976 = vadd.f32 %v4842, %v4975
    %v4977 = vpop.f32.mrb[0].mxu0
    %v4978 = vpop.f32.mrb[0].mxu0
    %v4979 = vadd.f32 %v4842, %v4978
    %v4980 = vpop.f32.mrb[0].mxu0
    %4981 = vmatprep.mubr.bf16.mxu0 0
    %4982 = vmatmul.mubr.bf16.gmra.mrb[0].mxu0 %v4882
    %v4983 = vpop.f32.mrb[0].mxu0
    %v4984 = vadd.f32 %v4842, %v4983
    %v4985 = vpop.f32.mrb[0].mxu0
    %v4986 = vpop.f32.mrb[0].mxu0
    %v4987 = vadd.f32 %v4842, %v4986
    %v4988 = vpop.f32.mrb[0].mxu0
    %4989 = vmatprep.mubr.bf16.mxu0 0
    %4990 = vmatmul.mubr.bf16.gmra.mrb[0].mxu0 %v4885
    %v4991 = vpop.f32.mrb[0].mxu0
    %v4992 = vadd.f32 %v4842, %v4991
    %v4993 = vpop.f32.mrb[0].mxu0
    %v4994 = vpop.f32.mrb[0].mxu0
    %v4995 = vadd.f32 %v4842, %v4994
    %v4996 = vpop.f32.mrb[0].mxu0
    %4997 = vmatprep.mubr.bf16.mxu0 0
    %4998 = vmatmul.mubr.bf16.gmra.mrb[0].mxu0 %v4888
    %v4999 = vpop.f32.mrb[0].mxu0
    %v5000 = vadd.f32 %v4842, %v4999
    %v5001 = vpop.f32.mrb[0].mxu0
    %v5002 = vpop.f32.mrb[0].mxu0
    %v5003 = vadd.f32 %v4842, %v5002
    %v5004 = vpop.f32.mrb[0].mxu0
    %5005 = vmatprep.mubr.bf16.mxu0 0
    %5006 = vmatmul.mubr.bf16.gmra.mrb[0].mxu0 %v4891
    %v5007 = vpop.f32.mrb[0].mxu0
    %v5008 = vadd.f32 %v4842, %v5007
    %v5009 = vpop.f32.mrb[0].mxu0
    %v5010 = vpop.f32.mrb[0].mxu0
    %v5011 = vadd.f32 %v4842, %v5010
    %v5012 = vpop.f32.mrb[0].mxu0
    %5013 = vmatprep.mubr.bf16.mxu0 0
    %5014 = vmatmul.mubr.bf16.gmra.mrb[0].mxu0 %v4894
    %v5015 = vpop.f32.mrb[0].mxu0
    %v5016 = vadd.f32 %v4842, %v5015
    %v5017 = vpop.f32.mrb[0].mxu0
    %v5018 = vpop.f32.mrb[0].mxu0
    %v5019 = vadd.f32 %v4842, %v5018
    %v5020 = vpop.f32.mrb[0].mxu0
    %5021 = vmatprep.mubr.bf16.mxu0 0
    %5022 = vmatmul.mubr.bf16.gmra.mrb[0].mxu0 %v4897
    %v5023 = vpop.f32.mrb[0].mxu0
    %v5024 = vadd.f32 %v4842, %v5023
    %v5025 = vpop.f32.mrb[0].mxu0
    %v5026 = vpop.f32.mrb[0].mxu0
    %v5027 = vadd.f32 %v4842, %v5026
    %v5028 = vpop.f32.mrb[0].mxu0
    %5029 = vmatprep.mubr.bf16.mxu0 0
    %5030 = vmatmul.mubr.bf16.gmra.mrb[0].mxu0 %v4900
    %v5031 = vpop.f32.mrb[0].mxu0
    %v5032 = vadd.f32 %v4842, %v5031
    %v5033 = vpop.f32.mrb[0].mxu0
    %v5034 = vpop.f32.mrb[0].mxu0
    %v5035 = vadd.f32 %v4842, %v5034
    %v5036 = vpop.f32.mrb[0].mxu0
    %5037 = vmatprep.mubr.bf16.mxu0 0
    %5038 = vmatmul.mubr.bf16.gmra.mrb[0].mxu0 %v4903
    %v5039 = vpop.f32.mrb[0].mxu0
    %v5040 = vadd.f32 %v4842, %v5039
    %v5041 = vpop.f32.mrb[0].mxu0
    %v5042 = vpop.f32.mrb[0].mxu0
    %v5043 = vadd.f32 %v4842, %v5042
    %v5044 = vpop.f32.mrb[0].mxu0
    %5045 = vmatprep.mubr.bf16.mxu0 0
    %5046 = vmatmul.mubr.bf16.gmra.mrb[0].mxu0 %v4906
    %v5047 = vpop.f32.mrb[0].mxu0
    %v5048 = vadd.f32 %v4842, %v5047
    %v5049 = vpop.f32.mrb[0].mxu0
    %v5050 = vpop.f32.mrb[0].mxu0
    %v5051 = vadd.f32 %v4842, %v5050
    %v5052 = vpop.f32.mrb[0].mxu0
    %5053 = vmatprep.mubr.bf16.mxu0 0
    %5054 = vmatmul.mubr.bf16.gmra.mrb[0].mxu0 %v4909
    %v5055 = vpop.f32.mrb[0].mxu0
    %v5056 = vadd.f32 %v4842, %v5055
    %v5057 = vpop.f32.mrb[0].mxu0
    %v5058 = vpop.f32.mrb[0].mxu0
    %v5059 = vadd.f32 %v4842, %v5058
    %v5060 = vpop.f32.mrb[0].mxu0
    %5061 = vmatprep.mubr.bf16.mxu0 0
    %5062 = vmatmul.mubr.bf16.gmra.mrb[0].mxu0 %v4912
    %v5063 = vpop.f32.mrb[0].mxu0
    %v5064 = vadd.f32 %v4842, %v5063
    %v5065 = vpop.f32.mrb[0].mxu0
    %v5066 = vpop.f32.mrb[0].mxu0
    %v5067 = vadd.f32 %v4842, %v5066
    %v5068 = vpop.f32.mrb[0].mxu0
    %5069 = vmatprep.mubr.bf16.mxu0 0
    %5070 = vmatmul.mubr.bf16.gmra.mrb[0].mxu0 %v4915
    %v5071 = vpop.f32.mrb[0].mxu0
    %v5072 = vadd.f32 %v4842, %v5071
    %v5073 = vpop.f32.mrb[0].mxu0
    %v5074 = vpop.f32.mrb[0].mxu0
    %v5075 = vadd.f32 %v4842, %v5074
    %v5076 = vpop.f32.mrb[0].mxu0
    %5077 = vdwg.mxu0
    %v5078 = vmul.f32 %v4952, 0.2
    %v5079 = vmul.f32 %v4955, 0.2
    %v5080 = vmul.f32 %v4960, 0.2
    %v5081 = vmul.f32 %v4963, 0.2
    %v5082 = vmul.f32 %v4968, 0.2
    %v5083 = vmul.f32 %v4971, 0.2
    %v5084 = vmul.f32 %v4976, 0.2
    %v5085 = vmul.f32 %v4979, 0.2
    %v5086 = vmul.f32 %v4984, 0.2
    %v5087 = vmul.f32 %v4987, 0.2
    %v5088 = vmul.f32 %v4992, 0.2
    %v5089 = vmul.f32 %v4995, 0.2
    %v5090 = vmul.f32 %v5000, 0.2
    %v5091 = vmul.f32 %v5003, 0.2
    %v5092 = vmul.f32 %v5008, 0.2
    %v5093 = vmul.f32 %v5011, 0.2
    %v5094 = vmul.f32 %v5016, 0.2
    %v5095 = vmul.f32 %v5019, 0.2
    %v5096 = vmul.f32 %v5024, 0.2
    %v5097 = vmul.f32 %v5027, 0.2
    %v5098 = vmul.f32 %v5032, 0.2
    %v5099 = vmul.f32 %v5035, 0.2
    %v5100 = vmul.f32 %v5040, 0.2
    %v5101 = vmul.f32 %v5043, 0.2
    %v5102 = vmul.f32 %v5048, 0.2
    %v5103 = vmul.f32 %v5051, 0.2
    %v5104 = vmul.f32 %v5056, 0.2
    %v5105 = vmul.f32 %v5059, 0.2
    %v5106 = vmul.f32 %v5064, 0.2
    %v5107 = vmul.f32 %v5067, 0.2
    %v5108 = vmul.f32 %v5072, 0.2
    %v5109 = vmul.f32 %v5075, 0.2
    %v5110 = vmax.f32 %v4952, %v5078
    %v5111 = vmax.f32 %v4955, %v5079
    %v5112 = vmax.f32 %v4960, %v5080
    %v5113 = vmax.f32 %v4963, %v5081
    %v5114 = vmax.f32 %v4968, %v5082
    %v5115 = vmax.f32 %v4971, %v5083
    %v5116 = vmax.f32 %v4976, %v5084
    %v5117 = vmax.f32 %v4979, %v5085
    %v5118 = vmax.f32 %v4984, %v5086
    %v5119 = vmax.f32 %v4987, %v5087
    %v5120 = vmax.f32 %v4992, %v5088
    %v5121 = vmax.f32 %v4995, %v5089
    %v5122 = vmax.f32 %v5000, %v5090
    %v5123 = vmax.f32 %v5003, %v5091
    %v5124 = vmax.f32 %v5008, %v5092
    %v5125 = vmax.f32 %v5011, %v5093
    %v5126 = vmax.f32 %v5016, %v5094
    %v5127 = vmax.f32 %v5019, %v5095
    %v5128 = vmax.f32 %v5024, %v5096
    %v5129 = vmax.f32 %v5027, %v5097
    %v5130 = vmax.f32 %v5032, %v5098
    %v5131 = vmax.f32 %v5035, %v5099
    %v5132 = vmax.f32 %v5040, %v5100
    %v5133 = vmax.f32 %v5043, %v5101
    %v5134 = vmax.f32 %v5048, %v5102
    %v5135 = vmax.f32 %v5051, %v5103
    %v5136 = vmax.f32 %v5056, %v5104
    %v5137 = vmax.f32 %v5059, %v5105
    %v5138 = vmax.f32 %v5064, %v5106
    %v5139 = vmax.f32 %v5067, %v5107
    %v5140 = vmax.f32 %v5072, %v5108
    %v5141 = vmax.f32 %v5075, %v5109
    %v5142 = vpack.c.bf16 %v5111, %v5110
    %v5143 = vpack.c.bf16 %v5113, %v5112
    %v5144 = vpack.c.bf16 %v5115, %v5114
    %v5145 = vpack.c.bf16 %v5117, %v5116
    %v5146 = vpack.c.bf16 %v5119, %v5118
    %v5147 = vpack.c.bf16 %v5121, %v5120
    %v5148 = vpack.c.bf16 %v5123, %v5122
    %v5149 = vpack.c.bf16 %v5125, %v5124
    %v5150 = vpack.c.bf16 %v5127, %v5126
    %v5151 = vpack.c.bf16 %v5129, %v5128
    %v5152 = vpack.c.bf16 %v5131, %v5130
    %v5153 = vpack.c.bf16 %v5133, %v5132
    %v5154 = vpack.c.bf16 %v5135, %v5134
    %v5155 = vpack.c.bf16 %v5137, %v5136
    %v5156 = vpack.c.bf16 %v5139, %v5138
    %v5157 = vpack.c.bf16 %v5141, %v5140
    %v5159 = vlaneseq
    %v5160 = vshrl.u32 %v5159, 7
    %v5161 = vsub.s32 0, %v5160
    %v5162 = vrot.slane %v63, %v5161
    %v5172 = vunpack.c.l.b16 %v55
    %v5173 = vunpack.c.l.b16 %v56
    %v5174 = vunpack.c.l.b16 %v57
    %v5175 = vunpack.c.l.b16 %v58
    %v5176 = vunpack.c.l.b16 %v59
    %v5177 = vunpack.c.l.b16 %v60
    %v5178 = vunpack.c.l.b16 %v61
    %v5179 = vunpack.c.l.b16 %v62
    %v5180 = vpack.c.b16 %v5173, %v5172
    %v5181 = vpack.c.b16 %v5175, %v5174
    %v5182 = vpack.c.b16 %v5177, %v5176
    %v5183 = vpack.c.b16 %v5179, %v5178
    %v5189 = vsel %vm4868, %v5142, 0
    %v5192 = vsel %vm4868, %v5143, 0
    %v5195 = vsel %vm4868, %v5144, 0
    %v5198 = vsel %vm4868, %v5145, 0
    %v5201 = vsel %vm4868, %v5146, 0
    %v5204 = vsel %vm4868, %v5147, 0
    %v5207 = vsel %vm4868, %v5148, 0
    %v5210 = vsel %vm4868, %v5149, 0
    %v5213 = vsel %vm4868, %v5150, 0
    %v5216 = vsel %vm4868, %v5151, 0
    %v5219 = vsel %vm4868, %v5152, 0
    %v5222 = vsel %vm4868, %v5153, 0
    %v5225 = vsel %vm4868, %v5154, 0
    %v5228 = vsel %vm4868, %v5155, 0
    %v5231 = vsel %vm4868, %v5156, 0
    %v5234 = vsel %vm4868, %v5157, 0
    %5236 = vmatprep.subr.bf16.mxu0 0
    %5237 = vmatpush1.bf16.msra.mxu0 %v5180
    %5238 = vmatprep.subr.bf16.mxu0 0
    %5239 = vmatpush1.bf16.msra.mxu0 %v5181
    %5240 = vmatprep.subr.bf16.mxu0 0
    %5241 = vmatpush1.bf16.msra.mxu0 %v5182
    %5242 = vmatprep.subr.bf16.mxu0 0
    %5243 = vmatpush1.bf16.msra.mxu0 %v5183
    %5244 = vmatprep.subr.bf16.mxu0 0
    %5245 = vmatpush1.bf16.msra.mxu0 0
    %5246 = vmatprep.subr.bf16.mxu0 0
    %5247 = vmatpush1.bf16.msra.mxu0 0
    %5248 = vmatprep.subr.bf16.mxu0 0
    %5249 = vmatpush1.bf16.msra.mxu0 0
    %5250 = vmatprep.subr.bf16.mxu0 0
    %5251 = vmatpush1.bf16.msra.mxu0 0
    %5252 = vmatprep.subr.bf16.mxu0 0
    %5253 = vmatpush1.bf16.msra.mxu0 0
    %5254 = vmatprep.subr.bf16.mxu0 0
    %5255 = vmatpush1.bf16.msra.mxu0 0
    %5256 = vmatprep.subr.bf16.mxu0 0
    %5257 = vmatpush1.bf16.msra.mxu0 0
    %5258 = vmatprep.subr.bf16.mxu0 0
    %5259 = vmatpush1.bf16.msra.mxu0 0
    %5260 = vmatprep.subr.bf16.mxu0 0
    %5261 = vmatpush1.bf16.msra.mxu0 0
    %5262 = vmatprep.subr.bf16.mxu0 0
    %5263 = vmatpush1.bf16.msra.mxu0 0
    %5264 = vmatprep.subr.bf16.mxu0 0
    %5265 = vmatpush1.bf16.msra.mxu0 0
    %5266 = vmatprep.subr.bf16.mxu0 0
    %5267 = vmatpush1.bf16.msra.mxu0 0
    %5268 = vmatprep.mubr.bf16.mxu0 0
    %5269 = vmatmul.mubr.bf16.gmra.mrb[0].mxu0 %v5189
    %v5270 = vpop.f32.mrb[0].mxu0
    %v5271 = vadd.f32 %v5162, %v5270
    %v5272 = vpop.f32.mrb[0].mxu0
    %v5273 = vpop.f32.mrb[0].mxu0
    %v5274 = vadd.f32 %v5162, %v5273
    %v5275 = vpop.f32.mrb[0].mxu0
    %5276 = vmatprep.mubr.bf16.mxu0 0
    %5277 = vmatmul.mubr.bf16.gmra.mrb[0].mxu0 %v5192
    %v5278 = vpop.f32.mrb[0].mxu0
    %v5279 = vadd.f32 %v5162, %v5278
    %v5280 = vpop.f32.mrb[0].mxu0
    %v5281 = vpop.f32.mrb[0].mxu0
    %v5282 = vadd.f32 %v5162, %v5281
    %v5283 = vpop.f32.mrb[0].mxu0
    %5284 = vmatprep.mubr.bf16.mxu0 0
    %5285 = vmatmul.mubr.bf16.gmra.mrb[0].mxu0 %v5195
    %v5286 = vpop.f32.mrb[0].mxu0
    %v5287 = vadd.f32 %v5162, %v5286
    %v5288 = vpop.f32.mrb[0].mxu0
    %v5289 = vpop.f32.mrb[0].mxu0
    %v5290 = vadd.f32 %v5162, %v5289
    %v5291 = vpop.f32.mrb[0].mxu0
    %5292 = vmatprep.mubr.bf16.mxu0 0
    %5293 = vmatmul.mubr.bf16.gmra.mrb[0].mxu0 %v5198
    %v5294 = vpop.f32.mrb[0].mxu0
    %v5295 = vadd.f32 %v5162, %v5294
    %v5296 = vpop.f32.mrb[0].mxu0
    %v5297 = vpop.f32.mrb[0].mxu0
    %v5298 = vadd.f32 %v5162, %v5297
    %v5299 = vpop.f32.mrb[0].mxu0
    %5300 = vmatprep.mubr.bf16.mxu0 0
    %5301 = vmatmul.mubr.bf16.gmra.mrb[0].mxu0 %v5201
    %v5302 = vpop.f32.mrb[0].mxu0
    %v5303 = vadd.f32 %v5162, %v5302
    %v5304 = vpop.f32.mrb[0].mxu0
    %v5305 = vpop.f32.mrb[0].mxu0
    %v5306 = vadd.f32 %v5162, %v5305
    %v5307 = vpop.f32.mrb[0].mxu0
    %5308 = vmatprep.mubr.bf16.mxu0 0
    %5309 = vmatmul.mubr.bf16.gmra.mrb[0].mxu0 %v5204
    %v5310 = vpop.f32.mrb[0].mxu0
    %v5311 = vadd.f32 %v5162, %v5310
    %v5312 = vpop.f32.mrb[0].mxu0
    %v5313 = vpop.f32.mrb[0].mxu0
    %v5314 = vadd.f32 %v5162, %v5313
    %v5315 = vpop.f32.mrb[0].mxu0
    %5316 = vmatprep.mubr.bf16.mxu0 0
    %5317 = vmatmul.mubr.bf16.gmra.mrb[0].mxu0 %v5207
    %v5318 = vpop.f32.mrb[0].mxu0
    %v5319 = vadd.f32 %v5162, %v5318
    %v5320 = vpop.f32.mrb[0].mxu0
    %v5321 = vpop.f32.mrb[0].mxu0
    %v5322 = vadd.f32 %v5162, %v5321
    %v5323 = vpop.f32.mrb[0].mxu0
    %5324 = vmatprep.mubr.bf16.mxu0 0
    %5325 = vmatmul.mubr.bf16.gmra.mrb[0].mxu0 %v5210
    %v5326 = vpop.f32.mrb[0].mxu0
    %v5327 = vadd.f32 %v5162, %v5326
    %v5328 = vpop.f32.mrb[0].mxu0
    %v5329 = vpop.f32.mrb[0].mxu0
    %v5330 = vadd.f32 %v5162, %v5329
    %v5331 = vpop.f32.mrb[0].mxu0
    %5332 = vmatprep.mubr.bf16.mxu0 0
    %5333 = vmatmul.mubr.bf16.gmra.mrb[0].mxu0 %v5213
    %v5334 = vpop.f32.mrb[0].mxu0
    %v5335 = vadd.f32 %v5162, %v5334
    %v5336 = vpop.f32.mrb[0].mxu0
    %v5337 = vpop.f32.mrb[0].mxu0
    %v5338 = vadd.f32 %v5162, %v5337
    %v5339 = vpop.f32.mrb[0].mxu0
    %5340 = vmatprep.mubr.bf16.mxu0 0
    %5341 = vmatmul.mubr.bf16.gmra.mrb[0].mxu0 %v5216
    %v5342 = vpop.f32.mrb[0].mxu0
    %v5343 = vadd.f32 %v5162, %v5342
    %v5344 = vpop.f32.mrb[0].mxu0
    %v5345 = vpop.f32.mrb[0].mxu0
    %v5346 = vadd.f32 %v5162, %v5345
    %v5347 = vpop.f32.mrb[0].mxu0
    %5348 = vmatprep.mubr.bf16.mxu0 0
    %5349 = vmatmul.mubr.bf16.gmra.mrb[0].mxu0 %v5219
    %v5350 = vpop.f32.mrb[0].mxu0
    %v5351 = vadd.f32 %v5162, %v5350
    %v5352 = vpop.f32.mrb[0].mxu0
    %v5353 = vpop.f32.mrb[0].mxu0
    %v5354 = vadd.f32 %v5162, %v5353
    %v5355 = vpop.f32.mrb[0].mxu0
    %5356 = vmatprep.mubr.bf16.mxu0 0
    %5357 = vmatmul.mubr.bf16.gmra.mrb[0].mxu0 %v5222
    %v5358 = vpop.f32.mrb[0].mxu0
    %v5359 = vadd.f32 %v5162, %v5358
    %v5360 = vpop.f32.mrb[0].mxu0
    %v5361 = vpop.f32.mrb[0].mxu0
    %v5362 = vadd.f32 %v5162, %v5361
    %v5363 = vpop.f32.mrb[0].mxu0
    %5364 = vmatprep.mubr.bf16.mxu0 0
    %5365 = vmatmul.mubr.bf16.gmra.mrb[0].mxu0 %v5225
    %v5366 = vpop.f32.mrb[0].mxu0
    %v5367 = vadd.f32 %v5162, %v5366
    %v5368 = vpop.f32.mrb[0].mxu0
    %v5369 = vpop.f32.mrb[0].mxu0
    %v5370 = vadd.f32 %v5162, %v5369
    %v5371 = vpop.f32.mrb[0].mxu0
    %5372 = vmatprep.mubr.bf16.mxu0 0
    %5373 = vmatmul.mubr.bf16.gmra.mrb[0].mxu0 %v5228
    %v5374 = vpop.f32.mrb[0].mxu0
    %v5375 = vadd.f32 %v5162, %v5374
    %v5376 = vpop.f32.mrb[0].mxu0
    %v5377 = vpop.f32.mrb[0].mxu0
    %v5378 = vadd.f32 %v5162, %v5377
    %v5379 = vpop.f32.mrb[0].mxu0
    %5380 = vmatprep.mubr.bf16.mxu0 0
    %5381 = vmatmul.mubr.bf16.gmra.mrb[0].mxu0 %v5231
    %v5382 = vpop.f32.mrb[0].mxu0
    %v5383 = vadd.f32 %v5162, %v5382
    %v5384 = vpop.f32.mrb[0].mxu0
    %v5385 = vpop.f32.mrb[0].mxu0
    %v5386 = vadd.f32 %v5162, %v5385
    %v5387 = vpop.f32.mrb[0].mxu0
    %5388 = vmatprep.mubr.bf16.mxu0 0
    %5389 = vmatmul.mubr.bf16.gmra.mrb[0].mxu0 %v5234
    %v5390 = vpop.f32.mrb[0].mxu0
    %v5391 = vadd.f32 %v5162, %v5390
    %v5392 = vpop.f32.mrb[0].mxu0
    %v5393 = vpop.f32.mrb[0].mxu0
    %v5394 = vadd.f32 %v5162, %v5393
    %v5395 = vpop.f32.mrb[0].mxu0
    %5396 = vdwg.mxu0
    %v5397 = vmul.f32 %v5271, 0.2
    %v5398 = vmul.f32 %v5274, 0.2
    %v5399 = vmul.f32 %v5279, 0.2
    %v5400 = vmul.f32 %v5282, 0.2
    %v5401 = vmul.f32 %v5287, 0.2
    %v5402 = vmul.f32 %v5290, 0.2
    %v5403 = vmul.f32 %v5295, 0.2
    %v5404 = vmul.f32 %v5298, 0.2
    %v5405 = vmul.f32 %v5303, 0.2
    %v5406 = vmul.f32 %v5306, 0.2
    %v5407 = vmul.f32 %v5311, 0.2
    %v5408 = vmul.f32 %v5314, 0.2
    %v5409 = vmul.f32 %v5319, 0.2
    %v5410 = vmul.f32 %v5322, 0.2
    %v5411 = vmul.f32 %v5327, 0.2
    %v5412 = vmul.f32 %v5330, 0.2
    %v5413 = vmul.f32 %v5335, 0.2
    %v5414 = vmul.f32 %v5338, 0.2
    %v5415 = vmul.f32 %v5343, 0.2
    %v5416 = vmul.f32 %v5346, 0.2
    %v5417 = vmul.f32 %v5351, 0.2
    %v5418 = vmul.f32 %v5354, 0.2
    %v5419 = vmul.f32 %v5359, 0.2
    %v5420 = vmul.f32 %v5362, 0.2
    %v5421 = vmul.f32 %v5367, 0.2
    %v5422 = vmul.f32 %v5370, 0.2
    %v5423 = vmul.f32 %v5375, 0.2
    %v5424 = vmul.f32 %v5378, 0.2
    %v5425 = vmul.f32 %v5383, 0.2
    %v5426 = vmul.f32 %v5386, 0.2
    %v5427 = vmul.f32 %v5391, 0.2
    %v5428 = vmul.f32 %v5394, 0.2
    %v5429 = vmax.f32 %v5271, %v5397
    %v5430 = vmax.f32 %v5274, %v5398
    %v5431 = vmax.f32 %v5279, %v5399
    %v5432 = vmax.f32 %v5282, %v5400
    %v5433 = vmax.f32 %v5287, %v5401
    %v5434 = vmax.f32 %v5290, %v5402
    %v5435 = vmax.f32 %v5295, %v5403
    %v5436 = vmax.f32 %v5298, %v5404
    %v5437 = vmax.f32 %v5303, %v5405
    %v5438 = vmax.f32 %v5306, %v5406
    %v5439 = vmax.f32 %v5311, %v5407
    %v5440 = vmax.f32 %v5314, %v5408
    %v5441 = vmax.f32 %v5319, %v5409
    %v5442 = vmax.f32 %v5322, %v5410
    %v5443 = vmax.f32 %v5327, %v5411
    %v5444 = vmax.f32 %v5330, %v5412
    %v5445 = vmax.f32 %v5335, %v5413
    %v5446 = vmax.f32 %v5338, %v5414
    %v5447 = vmax.f32 %v5343, %v5415
    %v5448 = vmax.f32 %v5346, %v5416
    %v5449 = vmax.f32 %v5351, %v5417
    %v5450 = vmax.f32 %v5354, %v5418
    %v5451 = vmax.f32 %v5359, %v5419
    %v5452 = vmax.f32 %v5362, %v5420
    %v5453 = vmax.f32 %v5367, %v5421
    %v5454 = vmax.f32 %v5370, %v5422
    %v5455 = vmax.f32 %v5375, %v5423
    %v5456 = vmax.f32 %v5378, %v5424
    %v5457 = vmax.f32 %v5383, %v5425
    %v5458 = vmax.f32 %v5386, %v5426
    %v5459 = vmax.f32 %v5391, %v5427
    %v5460 = vmax.f32 %v5394, %v5428
    %v5461 = vpack.c.bf16 %v5430, %v5429
    %v5462 = vpack.c.bf16 %v5432, %v5431
    %v5463 = vpack.c.bf16 %v5434, %v5433
    %v5464 = vpack.c.bf16 %v5436, %v5435
    %v5465 = vpack.c.bf16 %v5438, %v5437
    %v5466 = vpack.c.bf16 %v5440, %v5439
    %v5467 = vpack.c.bf16 %v5442, %v5441
    %v5468 = vpack.c.bf16 %v5444, %v5443
    %v5469 = vpack.c.bf16 %v5446, %v5445
    %v5470 = vpack.c.bf16 %v5448, %v5447
    %v5471 = vpack.c.bf16 %v5450, %v5449
    %v5472 = vpack.c.bf16 %v5452, %v5451
    %v5473 = vpack.c.bf16 %v5454, %v5453
    %v5474 = vpack.c.bf16 %v5456, %v5455
    %v5475 = vpack.c.bf16 %v5458, %v5457
    %v5476 = vpack.c.bf16 %v5460, %v5459
    %v5478 = vlaneseq
    %v5479 = vshrl.u32 %v5478, 7
    %v5480 = vsub.s32 0, %v5479
    %v5481 = vrot.slane %v80, %v5480
    %v5482 = vlaneseq
    %v5483 = vshrl.u32 %v5482, 7
    %v5484 = vsub.s32 1, %v5483
    %v5485 = vrot.slane %v80, %v5484
    %v5504 = vunpack.c.l.b16 %v64
    %v5505 = vunpack.c.h.b16 %v64
    %v5506 = vunpack.c.l.b16 %v65
    %v5507 = vunpack.c.h.b16 %v65
    %v5508 = vunpack.c.l.b16 %v66
    %v5509 = vunpack.c.h.b16 %v66
    %v5510 = vunpack.c.l.b16 %v67
    %v5511 = vunpack.c.h.b16 %v67
    %v5512 = vunpack.c.l.b16 %v68
    %v5513 = vunpack.c.h.b16 %v68
    %v5514 = vunpack.c.l.b16 %v69
    %v5515 = vunpack.c.h.b16 %v69
    %v5516 = vunpack.c.l.b16 %v70
    %v5517 = vunpack.c.h.b16 %v70
    %v5518 = vunpack.c.l.b16 %v71
    %v5519 = vunpack.c.h.b16 %v71
    %v5520 = vunpack.c.l.b16 %v72
    %v5521 = vunpack.c.h.b16 %v72
    %v5522 = vunpack.c.l.b16 %v73
    %v5523 = vunpack.c.h.b16 %v73
    %v5524 = vunpack.c.l.b16 %v74
    %v5525 = vunpack.c.h.b16 %v74
    %v5526 = vunpack.c.l.b16 %v75
    %v5527 = vunpack.c.h.b16 %v75
    %v5528 = vunpack.c.l.b16 %v76
    %v5529 = vunpack.c.h.b16 %v76
    %v5530 = vunpack.c.l.b16 %v77
    %v5531 = vunpack.c.h.b16 %v77
    %v5532 = vunpack.c.l.b16 %v78
    %v5533 = vunpack.c.h.b16 %v78
    %v5534 = vunpack.c.l.b16 %v79
    %v5535 = vunpack.c.h.b16 %v79
    %v5536 = vpack.c.b16 %v5506, %v5504
    %v5537 = vpack.c.b16 %v5507, %v5505
    %v5538 = vpack.c.b16 %v5510, %v5508
    %v5539 = vpack.c.b16 %v5511, %v5509
    %v5540 = vpack.c.b16 %v5514, %v5512
    %v5541 = vpack.c.b16 %v5515, %v5513
    %v5542 = vpack.c.b16 %v5518, %v5516
    %v5543 = vpack.c.b16 %v5519, %v5517
    %v5544 = vpack.c.b16 %v5522, %v5520
    %v5545 = vpack.c.b16 %v5523, %v5521
    %v5546 = vpack.c.b16 %v5526, %v5524
    %v5547 = vpack.c.b16 %v5527, %v5525
    %v5548 = vpack.c.b16 %v5530, %v5528
    %v5549 = vpack.c.b16 %v5531, %v5529
    %v5550 = vpack.c.b16 %v5534, %v5532
    %v5551 = vpack.c.b16 %v5535, %v5533
    %5568 = vmatprep.subr.bf16.mxu0 %v5537
    %5569 = vmatpush1.bf16.msra.mxu0 %v5536
    %5570 = vmatprep.subr.bf16.mxu0 %v5539
    %5571 = vmatpush1.bf16.msra.mxu0 %v5538
    %5572 = vmatprep.subr.bf16.mxu0 %v5541
    %5573 = vmatpush1.bf16.msra.mxu0 %v5540
    %5574 = vmatprep.subr.bf16.mxu0 %v5543
    %5575 = vmatpush1.bf16.msra.mxu0 %v5542
    %5576 = vmatprep.subr.bf16.mxu0 %v5545
    %5577 = vmatpush1.bf16.msra.mxu0 %v5544
    %5578 = vmatprep.subr.bf16.mxu0 %v5547
    %5579 = vmatpush1.bf16.msra.mxu0 %v5546
    %5580 = vmatprep.subr.bf16.mxu0 %v5549
    %5581 = vmatpush1.bf16.msra.mxu0 %v5548
    %5582 = vmatprep.subr.bf16.mxu0 %v5551
    %5583 = vmatpush1.bf16.msra.mxu0 %v5550
    %5584 = vmatprep.subr.bf16.mxu0 0
    %5585 = vmatpush1.bf16.msra.mxu0 0
    %5586 = vmatprep.subr.bf16.mxu0 0
    %5587 = vmatpush1.bf16.msra.mxu0 0
    %5588 = vmatprep.subr.bf16.mxu0 0
    %5589 = vmatpush1.bf16.msra.mxu0 0
    %5590 = vmatprep.subr.bf16.mxu0 0
    %5591 = vmatpush1.bf16.msra.mxu0 0
    %5592 = vmatprep.subr.bf16.mxu0 0
    %5593 = vmatpush1.bf16.msra.mxu0 0
    %5594 = vmatprep.subr.bf16.mxu0 0
    %5595 = vmatpush1.bf16.msra.mxu0 0
    %5596 = vmatprep.subr.bf16.mxu0 0
    %5597 = vmatpush1.bf16.msra.mxu0 0
    %5598 = vmatprep.subr.bf16.mxu0 0
    %5599 = vmatpush1.bf16.msra.mxu0 0
    %5600 = vmatprep.mubr.bf16.mxu0 0
    %5601 = vmatmul.mubr.bf16.gmra.mrb[0].mxu0 %v5461
    %v5602 = vpop.f32.mrb[0].mxu0
    %v5603 = vadd.f32 %v5481, %v5602
    %v5604 = vpop.f32.mrb[0].mxu0
    %v5605 = vadd.f32 %v5485, %v5604
    %v5606 = vpop.f32.mrb[0].mxu0
    %v5607 = vadd.f32 %v5481, %v5606
    %v5608 = vpop.f32.mrb[0].mxu0
    %v5609 = vadd.f32 %v5485, %v5608
    %5610 = vmatprep.mubr.bf16.mxu0 0
    %5611 = vmatmul.mubr.bf16.gmra.mrb[0].mxu0 %v5462
    %v5612 = vpop.f32.mrb[0].mxu0
    %v5613 = vadd.f32 %v5481, %v5612
    %v5614 = vpop.f32.mrb[0].mxu0
    %v5615 = vadd.f32 %v5485, %v5614
    %v5616 = vpop.f32.mrb[0].mxu0
    %v5617 = vadd.f32 %v5481, %v5616
    %v5618 = vpop.f32.mrb[0].mxu0
    %v5619 = vadd.f32 %v5485, %v5618
    %5620 = vmatprep.mubr.bf16.mxu0 0
    %5621 = vmatmul.mubr.bf16.gmra.mrb[0].mxu0 %v5463
    %v5622 = vpop.f32.mrb[0].mxu0
    %v5623 = vadd.f32 %v5481, %v5622
    %v5624 = vpop.f32.mrb[0].mxu0
    %v5625 = vadd.f32 %v5485, %v5624
    %v5626 = vpop.f32.mrb[0].mxu0
    %v5627 = vadd.f32 %v5481, %v5626
    %v5628 = vpop.f32.mrb[0].mxu0
    %v5629 = vadd.f32 %v5485, %v5628
    %5630 = vmatprep.mubr.bf16.mxu0 0
    %5631 = vmatmul.mubr.bf16.gmra.mrb[0].mxu0 %v5464
    %v5632 = vpop.f32.mrb[0].mxu0
    %v5633 = vadd.f32 %v5481, %v5632
    %v5634 = vpop.f32.mrb[0].mxu0
    %v5635 = vadd.f32 %v5485, %v5634
    %v5636 = vpop.f32.mrb[0].mxu0
    %v5637 = vadd.f32 %v5481, %v5636
    %v5638 = vpop.f32.mrb[0].mxu0
    %v5639 = vadd.f32 %v5485, %v5638
    %5640 = vmatprep.mubr.bf16.mxu0 0
    %5641 = vmatmul.mubr.bf16.gmra.mrb[0].mxu0 %v5465
    %v5642 = vpop.f32.mrb[0].mxu0
    %v5643 = vadd.f32 %v5481, %v5642
    %v5644 = vpop.f32.mrb[0].mxu0
    %v5645 = vadd.f32 %v5485, %v5644
    %v5646 = vpop.f32.mrb[0].mxu0
    %v5647 = vadd.f32 %v5481, %v5646
    %v5648 = vpop.f32.mrb[0].mxu0
    %v5649 = vadd.f32 %v5485, %v5648
    %5650 = vmatprep.mubr.bf16.mxu0 0
    %5651 = vmatmul.mubr.bf16.gmra.mrb[0].mxu0 %v5466
    %v5652 = vpop.f32.mrb[0].mxu0
    %v5653 = vadd.f32 %v5481, %v5652
    %v5654 = vpop.f32.mrb[0].mxu0
    %v5655 = vadd.f32 %v5485, %v5654
    %v5656 = vpop.f32.mrb[0].mxu0
    %v5657 = vadd.f32 %v5481, %v5656
    %v5658 = vpop.f32.mrb[0].mxu0
    %v5659 = vadd.f32 %v5485, %v5658
    %5660 = vmatprep.mubr.bf16.mxu0 0
    %5661 = vmatmul.mubr.bf16.gmra.mrb[0].mxu0 %v5467
    %v5662 = vpop.f32.mrb[0].mxu0
    %v5663 = vadd.f32 %v5481, %v5662
    %v5664 = vpop.f32.mrb[0].mxu0
    %v5665 = vadd.f32 %v5485, %v5664
    %v5666 = vpop.f32.mrb[0].mxu0
    %v5667 = vadd.f32 %v5481, %v5666
    %v5668 = vpop.f32.mrb[0].mxu0
    %v5669 = vadd.f32 %v5485, %v5668
    %5670 = vmatprep.mubr.bf16.mxu0 0
    %5671 = vmatmul.mubr.bf16.gmra.mrb[0].mxu0 %v5468
    %v5672 = vpop.f32.mrb[0].mxu0
    %v5673 = vadd.f32 %v5481, %v5672
    %v5674 = vpop.f32.mrb[0].mxu0
    %v5675 = vadd.f32 %v5485, %v5674
    %v5676 = vpop.f32.mrb[0].mxu0
    %v5677 = vadd.f32 %v5481, %v5676
    %v5678 = vpop.f32.mrb[0].mxu0
    %v5679 = vadd.f32 %v5485, %v5678
    %5680 = vmatprep.mubr.bf16.mxu0 0
    %5681 = vmatmul.mubr.bf16.gmra.mrb[0].mxu0 %v5469
    %v5682 = vpop.f32.mrb[0].mxu0
    %v5683 = vadd.f32 %v5481, %v5682
    %v5684 = vpop.f32.mrb[0].mxu0
    %v5685 = vadd.f32 %v5485, %v5684
    %v5686 = vpop.f32.mrb[0].mxu0
    %v5687 = vadd.f32 %v5481, %v5686
    %v5688 = vpop.f32.mrb[0].mxu0
    %v5689 = vadd.f32 %v5485, %v5688
    %5690 = vmatprep.mubr.bf16.mxu0 0
    %5691 = vmatmul.mubr.bf16.gmra.mrb[0].mxu0 %v5470
    %v5692 = vpop.f32.mrb[0].mxu0
    %v5693 = vadd.f32 %v5481, %v5692
    %v5694 = vpop.f32.mrb[0].mxu0
    %v5695 = vadd.f32 %v5485, %v5694
    %v5696 = vpop.f32.mrb[0].mxu0
    %v5697 = vadd.f32 %v5481, %v5696
    %v5698 = vpop.f32.mrb[0].mxu0
    %v5699 = vadd.f32 %v5485, %v5698
    %5700 = vmatprep.mubr.bf16.mxu0 0
    %5701 = vmatmul.mubr.bf16.gmra.mrb[0].mxu0 %v5471
    %v5702 = vpop.f32.mrb[0].mxu0
    %v5703 = vadd.f32 %v5481, %v5702
    %v5704 = vpop.f32.mrb[0].mxu0
    %v5705 = vadd.f32 %v5485, %v5704
    %v5706 = vpop.f32.mrb[0].mxu0
    %v5707 = vadd.f32 %v5481, %v5706
    %v5708 = vpop.f32.mrb[0].mxu0
    %v5709 = vadd.f32 %v5485, %v5708
    %5710 = vmatprep.mubr.bf16.mxu0 0
    %5711 = vmatmul.mubr.bf16.gmra.mrb[0].mxu0 %v5472
    %v5712 = vpop.f32.mrb[0].mxu0
    %v5713 = vadd.f32 %v5481, %v5712
    %v5714 = vpop.f32.mrb[0].mxu0
    %v5715 = vadd.f32 %v5485, %v5714
    %v5716 = vpop.f32.mrb[0].mxu0
    %v5717 = vadd.f32 %v5481, %v5716
    %v5718 = vpop.f32.mrb[0].mxu0
    %v5719 = vadd.f32 %v5485, %v5718
    %5720 = vmatprep.mubr.bf16.mxu0 0
    %5721 = vmatmul.mubr.bf16.gmra.mrb[0].mxu0 %v5473
    %v5722 = vpop.f32.mrb[0].mxu0
    %v5723 = vadd.f32 %v5481, %v5722
    %v5724 = vpop.f32.mrb[0].mxu0
    %v5725 = vadd.f32 %v5485, %v5724
    %v5726 = vpop.f32.mrb[0].mxu0
    %v5727 = vadd.f32 %v5481, %v5726
    %v5728 = vpop.f32.mrb[0].mxu0
    %v5729 = vadd.f32 %v5485, %v5728
    %5730 = vmatprep.mubr.bf16.mxu0 0
    %5731 = vmatmul.mubr.bf16.gmra.mrb[0].mxu0 %v5474
    %v5732 = vpop.f32.mrb[0].mxu0
    %v5733 = vadd.f32 %v5481, %v5732
    %v5734 = vpop.f32.mrb[0].mxu0
    %v5735 = vadd.f32 %v5485, %v5734
    %v5736 = vpop.f32.mrb[0].mxu0
    %v5737 = vadd.f32 %v5481, %v5736
    %v5738 = vpop.f32.mrb[0].mxu0
    %v5739 = vadd.f32 %v5485, %v5738
    %5740 = vmatprep.mubr.bf16.mxu0 0
    %5741 = vmatmul.mubr.bf16.gmra.mrb[0].mxu0 %v5475
    %v5742 = vpop.f32.mrb[0].mxu0
    %v5743 = vadd.f32 %v5481, %v5742
    %v5744 = vpop.f32.mrb[0].mxu0
    %v5745 = vadd.f32 %v5485, %v5744
    %v5746 = vpop.f32.mrb[0].mxu0
    %v5747 = vadd.f32 %v5481, %v5746
    %v5748 = vpop.f32.mrb[0].mxu0
    %v5749 = vadd.f32 %v5485, %v5748
    %5750 = vmatprep.mubr.bf16.mxu0 0
    %5751 = vmatmul.mubr.bf16.gmra.mrb[0].mxu0 %v5476
    %v5752 = vpop.f32.mrb[0].mxu0
    %v5753 = vadd.f32 %v5481, %v5752
    %v5754 = vpop.f32.mrb[0].mxu0
    %v5755 = vadd.f32 %v5485, %v5754
    %v5756 = vpop.f32.mrb[0].mxu0
    %v5757 = vadd.f32 %v5481, %v5756
    %v5758 = vpop.f32.mrb[0].mxu0
    %v5759 = vadd.f32 %v5485, %v5758
    %5760 = vdwg.mxu0
    %v5761 = vmul.f32 %v5603, 0.2
    %v5762 = vmul.f32 %v5605, 0.2
    %v5763 = vmul.f32 %v5607, 0.2
    %v5764 = vmul.f32 %v5609, 0.2
    %v5765 = vmul.f32 %v5613, 0.2
    %v5766 = vmul.f32 %v5615, 0.2
    %v5767 = vmul.f32 %v5617, 0.2
    %v5768 = vmul.f32 %v5619, 0.2
    %v5769 = vmul.f32 %v5623, 0.2
    %v5770 = vmul.f32 %v5625, 0.2
    %v5771 = vmul.f32 %v5627, 0.2
    %v5772 = vmul.f32 %v5629, 0.2
    %v5773 = vmul.f32 %v5633, 0.2
    %v5774 = vmul.f32 %v5635, 0.2
    %v5775 = vmul.f32 %v5637, 0.2
    %v5776 = vmul.f32 %v5639, 0.2
    %v5777 = vmul.f32 %v5643, 0.2
    %v5778 = vmul.f32 %v5645, 0.2
    %v5779 = vmul.f32 %v5647, 0.2
    %v5780 = vmul.f32 %v5649, 0.2
    %v5781 = vmul.f32 %v5653, 0.2
    %v5782 = vmul.f32 %v5655, 0.2
    %v5783 = vmul.f32 %v5657, 0.2
    %v5784 = vmul.f32 %v5659, 0.2
    %v5785 = vmul.f32 %v5663, 0.2
    %v5786 = vmul.f32 %v5665, 0.2
    %v5787 = vmul.f32 %v5667, 0.2
    %v5788 = vmul.f32 %v5669, 0.2
    %v5789 = vmul.f32 %v5673, 0.2
    %v5790 = vmul.f32 %v5675, 0.2
    %v5791 = vmul.f32 %v5677, 0.2
    %v5792 = vmul.f32 %v5679, 0.2
    %v5793 = vmul.f32 %v5683, 0.2
    %v5794 = vmul.f32 %v5685, 0.2
    %v5795 = vmul.f32 %v5687, 0.2
    %v5796 = vmul.f32 %v5689, 0.2
    %v5797 = vmul.f32 %v5693, 0.2
    %v5798 = vmul.f32 %v5695, 0.2
    %v5799 = vmul.f32 %v5697, 0.2
    %v5800 = vmul.f32 %v5699, 0.2
    %v5801 = vmul.f32 %v5703, 0.2
    %v5802 = vmul.f32 %v5705, 0.2
    %v5803 = vmul.f32 %v5707, 0.2
    %v5804 = vmul.f32 %v5709, 0.2
    %v5805 = vmul.f32 %v5713, 0.2
    %v5806 = vmul.f32 %v5715, 0.2
    %v5807 = vmul.f32 %v5717, 0.2
    %v5808 = vmul.f32 %v5719, 0.2
    %v5809 = vmul.f32 %v5723, 0.2
    %v5810 = vmul.f32 %v5725, 0.2
    %v5811 = vmul.f32 %v5727, 0.2
    %v5812 = vmul.f32 %v5729, 0.2
    %v5813 = vmul.f32 %v5733, 0.2
    %v5814 = vmul.f32 %v5735, 0.2
    %v5815 = vmul.f32 %v5737, 0.2
    %v5816 = vmul.f32 %v5739, 0.2
    %v5817 = vmul.f32 %v5743, 0.2
    %v5818 = vmul.f32 %v5745, 0.2
    %v5819 = vmul.f32 %v5747, 0.2
    %v5820 = vmul.f32 %v5749, 0.2
    %v5821 = vmul.f32 %v5753, 0.2
    %v5822 = vmul.f32 %v5755, 0.2
    %v5823 = vmul.f32 %v5757, 0.2
    %v5824 = vmul.f32 %v5759, 0.2
    %v5825 = vmax.f32 %v5603, %v5761
    %v5826 = vmax.f32 %v5605, %v5762
    %v5827 = vmax.f32 %v5607, %v5763
    %v5828 = vmax.f32 %v5609, %v5764
    %v5829 = vmax.f32 %v5613, %v5765
    %v5830 = vmax.f32 %v5615, %v5766
    %v5831 = vmax.f32 %v5617, %v5767
    %v5832 = vmax.f32 %v5619, %v5768
    %v5833 = vmax.f32 %v5623, %v5769
    %v5834 = vmax.f32 %v5625, %v5770
    %v5835 = vmax.f32 %v5627, %v5771
    %v5836 = vmax.f32 %v5629, %v5772
    %v5837 = vmax.f32 %v5633, %v5773
    %v5838 = vmax.f32 %v5635, %v5774
    %v5839 = vmax.f32 %v5637, %v5775
    %v5840 = vmax.f32 %v5639, %v5776
    %v5841 = vmax.f32 %v5643, %v5777
    %v5842 = vmax.f32 %v5645, %v5778
    %v5843 = vmax.f32 %v5647, %v5779
    %v5844 = vmax.f32 %v5649, %v5780
    %v5845 = vmax.f32 %v5653, %v5781
    %v5846 = vmax.f32 %v5655, %v5782
    %v5847 = vmax.f32 %v5657, %v5783
    %v5848 = vmax.f32 %v5659, %v5784
    %v5849 = vmax.f32 %v5663, %v5785
    %v5850 = vmax.f32 %v5665, %v5786
    %v5851 = vmax.f32 %v5667, %v5787
    %v5852 = vmax.f32 %v5669, %v5788
    %v5853 = vmax.f32 %v5673, %v5789
    %v5854 = vmax.f32 %v5675, %v5790
    %v5855 = vmax.f32 %v5677, %v5791
    %v5856 = vmax.f32 %v5679, %v5792
    %v5857 = vmax.f32 %v5683, %v5793
    %v5858 = vmax.f32 %v5685, %v5794
    %v5859 = vmax.f32 %v5687, %v5795
    %v5860 = vmax.f32 %v5689, %v5796
    %v5861 = vmax.f32 %v5693, %v5797
    %v5862 = vmax.f32 %v5695, %v5798
    %v5863 = vmax.f32 %v5697, %v5799
    %v5864 = vmax.f32 %v5699, %v5800
    %v5865 = vmax.f32 %v5703, %v5801
    %v5866 = vmax.f32 %v5705, %v5802
    %v5867 = vmax.f32 %v5707, %v5803
    %v5868 = vmax.f32 %v5709, %v5804
    %v5869 = vmax.f32 %v5713, %v5805
    %v5870 = vmax.f32 %v5715, %v5806
    %v5871 = vmax.f32 %v5717, %v5807
    %v5872 = vmax.f32 %v5719, %v5808
    %v5873 = vmax.f32 %v5723, %v5809
    %v5874 = vmax.f32 %v5725, %v5810
    %v5875 = vmax.f32 %v5727, %v5811
    %v5876 = vmax.f32 %v5729, %v5812
    %v5877 = vmax.f32 %v5733, %v5813
    %v5878 = vmax.f32 %v5735, %v5814
    %v5879 = vmax.f32 %v5737, %v5815
    %v5880 = vmax.f32 %v5739, %v5816
    %v5881 = vmax.f32 %v5743, %v5817
    %v5882 = vmax.f32 %v5745, %v5818
    %v5883 = vmax.f32 %v5747, %v5819
    %v5884 = vmax.f32 %v5749, %v5820
    %v5885 = vmax.f32 %v5753, %v5821
    %v5886 = vmax.f32 %v5755, %v5822
    %v5887 = vmax.f32 %v5757, %v5823
    %v5888 = vmax.f32 %v5759, %v5824
    %v5889 = vmax.f32 %v2478, %v2480
    %v5890 = vmax.f32 %v2479, %v2481
    %v5891 = vmax.f32 %v5889, %v2482
    %v5892 = vmax.f32 %v5890, %v2483
    %v5893 = vmax.f32 %v5891, %v2484
    %v5894 = vmax.f32 %v5892, %v2485
    %v5895 = vmax.f32 %v5893, %v2486
    %v5896 = vmax.f32 %v5894, %v2487
    %v5897 = vmax.f32 %v5895, %v2488
    %v5898 = vmax.f32 %v5896, %v2489
    %v5899 = vmax.f32 %v5897, %v2490
    %v5900 = vmax.f32 %v5898, %v2491
    %v5901 = vmax.f32 %v5899, %v2492
    %v5902 = vmax.f32 %v5900, %v2493
    %v5903 = vmax.f32 %v4806, %v4808
    %v5904 = vmax.f32 %v4807, %v4809
    %v5905 = vmax.f32 %v5903, %v4810
    %v5906 = vmax.f32 %v5904, %v4811
    %v5907 = vmax.f32 %v5905, %v4812
    %v5908 = vmax.f32 %v5906, %v4813
    %v5909 = vmax.f32 %v5907, %v4814
    %v5910 = vmax.f32 %v5908, %v4815
    %v5911 = vmax.f32 %v5909, %v4816
    %v5912 = vmax.f32 %v5910, %v4817
    %v5913 = vmax.f32 %v5911, %v4818
    %v5914 = vmax.f32 %v5912, %v4819
    %v5915 = vmax.f32 %v5913, %v4820
    %v5916 = vmax.f32 %v5914, %v4821
    %v5917 = vmax.f32 %v5110, %v5112
    %v5918 = vmax.f32 %v5111, %v5113
    %v5919 = vmax.f32 %v5917, %v5114
    %v5920 = vmax.f32 %v5918, %v5115
    %v5921 = vmax.f32 %v5919, %v5116
    %v5922 = vmax.f32 %v5920, %v5117
    %v5923 = vmax.f32 %v5921, %v5118
    %v5924 = vmax.f32 %v5922, %v5119
    %v5925 = vmax.f32 %v5923, %v5120
    %v5926 = vmax.f32 %v5924, %v5121
    %v5927 = vmax.f32 %v5925, %v5122
    %v5928 = vmax.f32 %v5926, %v5123
    %v5929 = vmax.f32 %v5927, %v5124
    %v5930 = vmax.f32 %v5928, %v5125
    %v5931 = vmax.f32 %v5126, %v5128
    %v5932 = vmax.f32 %v5127, %v5129
    %v5933 = vmax.f32 %v5931, %v5130
    %v5934 = vmax.f32 %v5932, %v5131
    %v5935 = vmax.f32 %v5933, %v5132
    %v5936 = vmax.f32 %v5934, %v5133
    %v5937 = vmax.f32 %v5935, %v5134
    %v5938 = vmax.f32 %v5936, %v5135
    %v5939 = vmax.f32 %v5937, %v5136
    %v5940 = vmax.f32 %v5938, %v5137
    %v5941 = vmax.f32 %v5939, %v5138
    %v5942 = vmax.f32 %v5940, %v5139
    %v5943 = vmax.f32 %v5941, %v5140
    %v5944 = vmax.f32 %v5942, %v5141
    %v5945 = vmax.f32 %v5429, %v5431
    %v5946 = vmax.f32 %v5430, %v5432
    %v5947 = vmax.f32 %v5945, %v5433
    %v5948 = vmax.f32 %v5946, %v5434
    %v5949 = vmax.f32 %v5947, %v5435
    %v5950 = vmax.f32 %v5948, %v5436
    %v5951 = vmax.f32 %v5949, %v5437
    %v5952 = vmax.f32 %v5950, %v5438
    %v5953 = vmax.f32 %v5951, %v5439
    %v5954 = vmax.f32 %v5952, %v5440
    %v5955 = vmax.f32 %v5953, %v5441
    %v5956 = vmax.f32 %v5954, %v5442
    %v5957 = vmax.f32 %v5955, %v5443
    %v5958 = vmax.f32 %v5956, %v5444
    %v5959 = vmax.f32 %v5445, %v5447
    %v5960 = vmax.f32 %v5446, %v5448
    %v5961 = vmax.f32 %v5959, %v5449
    %v5962 = vmax.f32 %v5960, %v5450
    %v5963 = vmax.f32 %v5961, %v5451
    %v5964 = vmax.f32 %v5962, %v5452
    %v5965 = vmax.f32 %v5963, %v5453
    %v5966 = vmax.f32 %v5964, %v5454
    %v5967 = vmax.f32 %v5965, %v5455
    %v5968 = vmax.f32 %v5966, %v5456
    %v5969 = vmax.f32 %v5967, %v5457
    %v5970 = vmax.f32 %v5968, %v5458
    %v5971 = vmax.f32 %v5969, %v5459
    %v5972 = vmax.f32 %v5970, %v5460
    %v5973 = vmax.f32 %v5825, %v5829
    %v5974 = vmax.f32 %v5826, %v5830
    %v5975 = vmax.f32 %v5827, %v5831
    %v5976 = vmax.f32 %v5828, %v5832
    %v5977 = vmax.f32 %v5973, %v5833
    %v5978 = vmax.f32 %v5974, %v5834
    %v5979 = vmax.f32 %v5975, %v5835
    %v5980 = vmax.f32 %v5976, %v5836
    %v5981 = vmax.f32 %v5977, %v5837
    %v5982 = vmax.f32 %v5978, %v5838
    %v5983 = vmax.f32 %v5979, %v5839
    %v5984 = vmax.f32 %v5980, %v5840
    %v5985 = vmax.f32 %v5981, %v5841
    %v5986 = vmax.f32 %v5982, %v5842
    %v5987 = vmax.f32 %v5983, %v5843
    %v5988 = vmax.f32 %v5984, %v5844
    %v5989 = vmax.f32 %v5985, %v5845
    %v5990 = vmax.f32 %v5986, %v5846
    %v5991 = vmax.f32 %v5987, %v5847
    %v5992 = vmax.f32 %v5988, %v5848
    %v5993 = vmax.f32 %v5989, %v5849
    %v5994 = vmax.f32 %v5990, %v5850
    %v5995 = vmax.f32 %v5991, %v5851
    %v5996 = vmax.f32 %v5992, %v5852
    %v5997 = vmax.f32 %v5993, %v5853
    %v5998 = vmax.f32 %v5994, %v5854
    %v5999 = vmax.f32 %v5995, %v5855
    %v6000 = vmax.f32 %v5996, %v5856
    %v6001 = vmax.f32 %v5857, %v5861
    %v6002 = vmax.f32 %v5858, %v5862
    %v6003 = vmax.f32 %v5859, %v5863
    %v6004 = vmax.f32 %v5860, %v5864
    %v6005 = vmax.f32 %v6001, %v5865
    %v6006 = vmax.f32 %v6002, %v5866
    %v6007 = vmax.f32 %v6003, %v5867
    %v6008 = vmax.f32 %v6004, %v5868
    %v6009 = vmax.f32 %v6005, %v5869
    %v6010 = vmax.f32 %v6006, %v5870
    %v6011 = vmax.f32 %v6007, %v5871
    %v6012 = vmax.f32 %v6008, %v5872
    %v6013 = vmax.f32 %v6009, %v5873
    %v6014 = vmax.f32 %v6010, %v5874
    %v6015 = vmax.f32 %v6011, %v5875
    %v6016 = vmax.f32 %v6012, %v5876
    %v6017 = vmax.f32 %v6013, %v5877
    %v6018 = vmax.f32 %v6014, %v5878
    %v6019 = vmax.f32 %v6015, %v5879
    %v6020 = vmax.f32 %v6016, %v5880
    %v6021 = vmax.f32 %v6017, %v5881
    %v6022 = vmax.f32 %v6018, %v5882
    %v6023 = vmax.f32 %v6019, %v5883
    %v6024 = vmax.f32 %v6020, %v5884
    %v6025 = vmax.f32 %v6021, %v5885
    %v6026 = vmax.f32 %v6022, %v5886
    %v6027 = vmax.f32 %v6023, %v5887
    %v6028 = vmax.f32 %v6024, %v5888
    %6033 = vrot.lane.b32.xlu0 %v5929, 64
    %v6034 = vpop.permute.xlu0 %6033
    %6035 = vrot.lane.b32.xlu0 %v5930, 64
    %v6036 = vpop.permute.xlu0 %6035
    %6037 = vrot.lane.b32.xlu0 %v5943, 64
    %v6038 = vpop.permute.xlu0 %6037
    %6039 = vrot.lane.b32.xlu0 %v5944, 64
    %v6040 = vpop.permute.xlu0 %6039
    %v6045 = vsel %vm4868, %v5901, %v6034
    %v6046 = vsel %vm4868, %v5902, %v6036
    %v6047 = vsel %vm4868, %v5915, %v6038
    %v6048 = vsel %vm4868, %v5916, %v6040
    %v6049 = vpack.c.bf16 %v6046, %v6045
    %v6050 = vpack.c.bf16 %v5958, %v5957
    %v6051 = vpack.c.bf16 %v5999, %v5997
    %v6052 = vpack.c.bf16 %v6000, %v5998
    %v6053 = vpack.c.bf16 %v6048, %v6047
    %v6054 = vpack.c.bf16 %v5972, %v5971
    %v6055 = vpack.c.bf16 %v6027, %v6025
    %v6056 = vpack.c.bf16 %v6028, %v6026
    %v6058 = vlaneseq
    %v6059 = vshrl.u32 %v6058, 7
    %v6060 = vsub.s32 0, %v6059
    %v6061 = vrot.slane %v145, %v6060
    %v6127 = vunpack.c.l.b16 %v81
    %v6128 = vunpack.c.l.b16 %v82
    %v6129 = vunpack.c.l.b16 %v83
    %v6130 = vunpack.c.l.b16 %v84
    %v6131 = vunpack.c.l.b16 %v85
    %v6132 = vunpack.c.l.b16 %v86
    %v6133 = vunpack.c.l.b16 %v87
    %v6134 = vunpack.c.l.b16 %v88
    %v6135 = vunpack.c.l.b16 %v89
    %v6136 = vunpack.c.l.b16 %v90
    %v6137 = vunpack.c.l.b16 %v91
    %v6138 = vunpack.c.l.b16 %v92
    %v6139 = vunpack.c.l.b16 %v93
    %v6140 = vunpack.c.l.b16 %v94
    %v6141 = vunpack.c.l.b16 %v95
    %v6142 = vunpack.c.l.b16 %v96
    %v6143 = vunpack.c.l.b16 %v97
    %v6144 = vunpack.c.l.b16 %v98
    %v6145 = vunpack.c.l.b16 %v99
    %v6146 = vunpack.c.l.b16 %v100
    %v6147 = vunpack.c.l.b16 %v101
    %v6148 = vunpack.c.l.b16 %v102
    %v6149 = vunpack.c.l.b16 %v103
    %v6150 = vunpack.c.l.b16 %v104
    %v6151 = vunpack.c.l.b16 %v105
    %v6152 = vunpack.c.l.b16 %v106
    %v6153 = vunpack.c.l.b16 %v107
    %v6154 = vunpack.c.l.b16 %v108
    %v6155 = vunpack.c.l.b16 %v109
    %v6156 = vunpack.c.l.b16 %v110
    %v6157 = vunpack.c.l.b16 %v111
    %v6158 = vunpack.c.l.b16 %v112
    %v6159 = vunpack.c.l.b16 %v113
    %v6160 = vunpack.c.l.b16 %v114
    %v6161 = vunpack.c.l.b16 %v115
    %v6162 = vunpack.c.l.b16 %v116
    %v6163 = vunpack.c.l.b16 %v117
    %v6164 = vunpack.c.l.b16 %v118
    %v6165 = vunpack.c.l.b16 %v119
    %v6166 = vunpack.c.l.b16 %v120
    %v6167 = vunpack.c.l.b16 %v121
    %v6168 = vunpack.c.l.b16 %v122
    %v6169 = vunpack.c.l.b16 %v123
    %v6170 = vunpack.c.l.b16 %v124
    %v6171 = vunpack.c.l.b16 %v125
    %v6172 = vunpack.c.l.b16 %v126
    %v6173 = vunpack.c.l.b16 %v127
    %v6174 = vunpack.c.l.b16 %v128
    %v6175 = vunpack.c.l.b16 %v129
    %v6176 = vunpack.c.l.b16 %v130
    %v6177 = vunpack.c.l.b16 %v131
    %v6178 = vunpack.c.l.b16 %v132
    %v6179 = vunpack.c.l.b16 %v133
    %v6180 = vunpack.c.l.b16 %v134
    %v6181 = vunpack.c.l.b16 %v135
    %v6182 = vunpack.c.l.b16 %v136
    %v6183 = vunpack.c.l.b16 %v137
    %v6184 = vunpack.c.l.b16 %v138
    %v6185 = vunpack.c.l.b16 %v139
    %v6186 = vunpack.c.l.b16 %v140
    %v6187 = vunpack.c.l.b16 %v141
    %v6188 = vunpack.c.l.b16 %v142
    %v6189 = vunpack.c.l.b16 %v143
    %v6190 = vunpack.c.l.b16 %v144
    %v6191 = vpack.c.b16 %v6128, %v6127
    %v6192 = vpack.c.b16 %v6130, %v6129
    %v6193 = vpack.c.b16 %v6132, %v6131
    %v6194 = vpack.c.b16 %v6134, %v6133
    %v6195 = vpack.c.b16 %v6136, %v6135
    %v6196 = vpack.c.b16 %v6138, %v6137
    %v6197 = vpack.c.b16 %v6140, %v6139
    %v6198 = vpack.c.b16 %v6142, %v6141
    %v6199 = vpack.c.b16 %v6144, %v6143
    %v6200 = vpack.c.b16 %v6146, %v6145
    %v6201 = vpack.c.b16 %v6148, %v6147
    %v6202 = vpack.c.b16 %v6150, %v6149
    %v6203 = vpack.c.b16 %v6152, %v6151
    %v6204 = vpack.c.b16 %v6154, %v6153
    %v6205 = vpack.c.b16 %v6156, %v6155
    %v6206 = vpack.c.b16 %v6158, %v6157
    %v6207 = vpack.c.b16 %v6160, %v6159
    %v6208 = vpack.c.b16 %v6162, %v6161
    %v6209 = vpack.c.b16 %v6164, %v6163
    %v6210 = vpack.c.b16 %v6166, %v6165
    %v6211 = vpack.c.b16 %v6168, %v6167
    %v6212 = vpack.c.b16 %v6170, %v6169
    %v6213 = vpack.c.b16 %v6172, %v6171
    %v6214 = vpack.c.b16 %v6174, %v6173
    %v6215 = vpack.c.b16 %v6176, %v6175
    %v6216 = vpack.c.b16 %v6178, %v6177
    %v6217 = vpack.c.b16 %v6180, %v6179
    %v6218 = vpack.c.b16 %v6182, %v6181
    %v6219 = vpack.c.b16 %v6184, %v6183
    %v6220 = vpack.c.b16 %v6186, %v6185
    %v6221 = vpack.c.b16 %v6188, %v6187
    %v6222 = vpack.c.b16 %v6190, %v6189
    %6255 = vmatprep.subr.bf16.mxu0 0
    %6256 = vmatpush1.bf16.msra.mxu0 %v6191
    %6257 = vmatprep.subr.bf16.mxu0 0
    %6258 = vmatpush1.bf16.msra.mxu0 %v6192
    %6259 = vmatprep.subr.bf16.mxu0 0
    %6260 = vmatpush1.bf16.msra.mxu0 %v6193
    %6261 = vmatprep.subr.bf16.mxu0 0
    %6262 = vmatpush1.bf16.msra.mxu0 %v6194
    %6263 = vmatprep.subr.bf16.mxu0 0
    %6264 = vmatpush1.bf16.msra.mxu0 %v6195
    %6265 = vmatprep.subr.bf16.mxu0 0
    %6266 = vmatpush1.bf16.msra.mxu0 %v6196
    %6267 = vmatprep.subr.bf16.mxu0 0
    %6268 = vmatpush1.bf16.msra.mxu0 %v6197
    %6269 = vmatprep.subr.bf16.mxu0 0
    %6270 = vmatpush1.bf16.msra.mxu0 %v6198
    %6271 = vmatprep.subr.bf16.mxu0 0
    %6272 = vmatpush1.bf16.msra.mxu0 %v6199
    %6273 = vmatprep.subr.bf16.mxu0 0
    %6274 = vmatpush1.bf16.msra.mxu0 %v6200
    %6275 = vmatprep.subr.bf16.mxu0 0
    %6276 = vmatpush1.bf16.msra.mxu0 %v6201
    %6277 = vmatprep.subr.bf16.mxu0 0
    %6278 = vmatpush1.bf16.msra.mxu0 %v6202
    %6279 = vmatprep.subr.bf16.mxu0 0
    %6280 = vmatpush1.bf16.msra.mxu0 %v6203
    %6281 = vmatprep.subr.bf16.mxu0 0
    %6282 = vmatpush1.bf16.msra.mxu0 %v6204
    %6283 = vmatprep.subr.bf16.mxu0 0
    %6284 = vmatpush1.bf16.msra.mxu0 %v6205
    %6285 = vmatprep.subr.bf16.mxu0 0
    %6286 = vmatpush1.bf16.msra.mxu0 %v6206
    %6287 = vmatprep.mubr.bf16.mxu0 %v6050
    %6288 = vmatmul.mubr.bf16.gmra.mrb[0].mxu0 %v6049
    %v6289 = vpop.f32.mrb[0].mxu0
    %v6290 = vadd.f32 %v6061, %v6289
    %v6291 = vpop.f32.mrb[0].mxu0
    %v6292 = vpop.f32.mrb[0].mxu0
    %v6293 = vadd.f32 %v6061, %v6292
    %v6294 = vpop.f32.mrb[0].mxu0
    %6295 = vmatprep.mubr.bf16.mxu0 %v6054
    %6296 = vmatmul.mubr.bf16.gmra.mrb[0].mxu0 %v6053
    %v6297 = vpop.f32.mrb[0].mxu0
    %v6298 = vadd.f32 %v6061, %v6297
    %v6299 = vpop.f32.mrb[0].mxu0
    %v6300 = vpop.f32.mrb[0].mxu0
    %v6301 = vadd.f32 %v6061, %v6300
    %v6302 = vpop.f32.mrb[0].mxu0
    %6303 = vdwg.mxu0
    %6304 = vmatprep.subr.bf16.mxu0 0
    %6305 = vmatpush1.bf16.msra.mxu0 %v6207
    %6306 = vmatprep.subr.bf16.mxu0 0
    %6307 = vmatpush1.bf16.msra.mxu0 %v6208
    %6308 = vmatprep.subr.bf16.mxu0 0
    %6309 = vmatpush1.bf16.msra.mxu0 %v6209
    %6310 = vmatprep.subr.bf16.mxu0 0
    %6311 = vmatpush1.bf16.msra.mxu0 %v6210
    %6312 = vmatprep.subr.bf16.mxu0 0
    %6313 = vmatpush1.bf16.msra.mxu0 %v6211
    %6314 = vmatprep.subr.bf16.mxu0 0
    %6315 = vmatpush1.bf16.msra.mxu0 %v6212
    %6316 = vmatprep.subr.bf16.mxu0 0
    %6317 = vmatpush1.bf16.msra.mxu0 %v6213
    %6318 = vmatprep.subr.bf16.mxu0 0
    %6319 = vmatpush1.bf16.msra.mxu0 %v6214
    %6320 = vmatprep.subr.bf16.mxu0 0
    %6321 = vmatpush1.bf16.msra.mxu0 %v6215
    %6322 = vmatprep.subr.bf16.mxu0 0
    %6323 = vmatpush1.bf16.msra.mxu0 %v6216
    %6324 = vmatprep.subr.bf16.mxu0 0
    %6325 = vmatpush1.bf16.msra.mxu0 %v6217
    %6326 = vmatprep.subr.bf16.mxu0 0
    %6327 = vmatpush1.bf16.msra.mxu0 %v6218
    %6328 = vmatprep.subr.bf16.mxu0 0
    %6329 = vmatpush1.bf16.msra.mxu0 %v6219
    %6330 = vmatprep.subr.bf16.mxu0 0
    %6331 = vmatpush1.bf16.msra.mxu0 %v6220
    %6332 = vmatprep.subr.bf16.mxu0 0
    %6333 = vmatpush1.bf16.msra.mxu0 %v6221
    %6334 = vmatprep.subr.bf16.mxu0 0
    %6335 = vmatpush1.bf16.msra.mxu0 %v6222
    %6336 = vmatprep.mubr.bf16.mxu0 %v6052
    %6337 = vmatmul.mubr.bf16.gmra.mrb[0].mxu0 %v6051
    %v6338 = vpop.f32.mrb[0].mxu0
    %v6339 = vadd.f32 %v6290, %v6338
    %v6340 = vpop.f32.mrb[0].mxu0
    %v6341 = vpop.f32.mrb[0].mxu0
    %v6342 = vadd.f32 %v6293, %v6341
    %v6343 = vpop.f32.mrb[0].mxu0
    %6344 = vmatprep.mubr.bf16.mxu0 %v6056
    %6345 = vmatmul.mubr.bf16.gmra.mrb[0].mxu0 %v6055
    %v6346 = vpop.f32.mrb[0].mxu0
    %v6347 = vadd.f32 %v6298, %v6346
    %v6348 = vpop.f32.mrb[0].mxu0
    %v6349 = vpop.f32.mrb[0].mxu0
    %v6350 = vadd.f32 %v6301, %v6349
    %v6351 = vpop.f32.mrb[0].mxu0
    %6352 = vdwg.mxu0
    %v6353 = vmul.f32 %v6339, 0.2
    %v6354 = vmul.f32 %v6342, 0.2
    %v6355 = vmul.f32 %v6347, 0.2
    %v6356 = vmul.f32 %v6350, 0.2
    %v6357 = vmax.f32 %v6339, %v6353
    %v6358 = vmax.f32 %v6342, %v6354
    %v6359 = vmax.f32 %v6347, %v6355
    %v6360 = vmax.f32 %v6350, %v6356
    %6361 = vst [vmem:[#allocation2] sm:$0xff] %v6357
    %6362 = vst [vmem:[#allocation2 + $0x8] sm:$0xff] %v6358
    %s6363 = scalar_lea.vmem [#allocation2], 16
    %6364 = vst [vmem:[%s6363] sm:$0xff] %v6359
    %6365 = vst [vmem:[%s6363 + $0x8] sm:$0xff] %v6360
    // Predicated region
    $region50: #{dgcnn_forward.1} parent=1 // pred_check
      _
    $region51: #{dgcnn_forward.1} parent=1 // pred_check_branch
      %6367 = sbr.rel (0) target = $region53
    $region52: #{dgcnn_forward.1} parent=1 // pred_region
      %s6369 = ssub.s32 512, 512
      %6370 = vsyncadd [#allocation3], %s6369
      %s6371 = sshll.u32 [#allocation2], 4
      %s6372 = int_to_ptr.vmem [resolvable:$true] %s6371
      %6377 = dma.vmem_to_hbm [thread:$0]  %s6372, 512, %s12, [#allocation3], 128, 128, 8
    $region53: #{dgcnn_forward.1} parent=1 // pred_fallthru
      _
    // Predicated region
    $region54: #{dgcnn_forward.1} parent=1 // pred_check
      _
    $region55: #{dgcnn_forward.1} parent=1 // pred_check_branch
      %6379 = sbr.rel (0) target = $region57
    $region56: #{dgcnn_forward.1} parent=1 // pred_region
      %6380 = dma.done [#allocation3], 512
    $region57: #{dgcnn_forward.1} parent=1 // pred_fallthru
      _
    %6381 = vsyncpa [#allocation3], 1

</llo_original>
